<compile_context>
chip_gen: v5e
topology: v5e:2x2
jax: 0.10.0
libtpu: 0.0.40
codegen_flags: <defaults>
</compile_context>

<pallas_src>
import functools

import jax
import jax.numpy as jnp
from jax.experimental import pallas as pl
from jax.experimental.pallas import tpu as pltpu


_K7 = 147        # 7*7*3 true contraction depth of conv1
_K7_PAD = 192    # zero-padded contraction depth fed to the MXU
_CMID = 128      # 64 true channels padded to a full lane tile
_COUT = 256      # bottleneck output channels (no padding needed)


# ----------------------------------------------------------------------------- #
# Fused whole-head kernel (one image per grid step)
# ----------------------------------------------------------------------------- #

def _head_kernel(p_ref, c1w_ref, c1b_ref, *rest, hh, ww):
    """conv1 (single K-wide matmul) + BN + ReLU -> fused 3x3/s2 maxpool -> 3 bottlenecks.

    rest = 20 weight/bias refs (block0: w1,b1,w2,b2,w3,b3,wd,bd; blocks 1,2: w1..b3),
           then the output ref and one bf16 VMEM scratch used for all padded-tap reads.
    """
    o_ref = rest[-2]
    scr_ref = rest[-1]
    wr = rest[:-2]

    f32 = jnp.float32
    bf16 = jnp.bfloat16
    m = hh * ww

    # Zero the scratch once per image; afterwards only its 1-wide zero border is relied on
    # (the interior is fully overwritten before every group of tap reads).
    scr_ref[...] = jnp.zeros_like(scr_ref)

    def pad_store(val):                       # write an (hh, ww, 128) tile into the interior
        scr_ref[pl.ds(1, hh), pl.ds(1, ww), :] = val.astype(bf16)

    def pad_read(i, j):                       # read an (hh, ww, 128) shifted window
        return scr_ref[pl.ds(i, hh), pl.ds(j, ww), :]

    # ---------------- conv1 + (BN folded into weight/bias) + ReLU: one MXU matmul ----------
    y = jnp.dot(p_ref[0], c1w_ref[...], preferred_element_type=f32)      # (4m, 128)
    y = jnp.maximum(y + c1b_ref[...], 0.0).astype(bf16)

    # ---------------- 3x3 / stride-2 / pad-1 max pool (group layout, post-ReLU so 0 == -inf)
    g00 = y[0 * m:1 * m, :].reshape(hh, ww, _CMID)    # conv1[2qr+0, 2qc+0]
    g01 = y[1 * m:2 * m, :].reshape(hh, ww, _CMID)    # conv1[2qr+0, 2qc+1]
    g10 = y[2 * m:3 * m, :].reshape(hh, ww, _CMID)    # conv1[2qr+1, 2qc+0]
    g11 = y[3 * m:4 * m, :].reshape(hh, ww, _CMID)    # conv1[2qr+1, 2qc+1]

    mx = jnp.maximum(jnp.maximum(g00, g01), jnp.maximum(g10, g11))
    pad_store(g01)
    mx = jnp.maximum(mx, pad_read(1, 0))              # g01[qr, qc-1]
    pad_store(g10)
    mx = jnp.maximum(mx, pad_read(0, 1))              # g10[qr-1, qc]
    pad_store(g11)
    mx = jnp.maximum(mx, pad_read(1, 0))              # g11[qr, qc-1]
    mx = jnp.maximum(mx, pad_read(0, 1))              # g11[qr-1, qc]
    mx = jnp.maximum(mx, pad_read(0, 0))              # g11[qr-1, qc-1]
    x = mx.reshape(m, _CMID)                          # (m, 128) bf16, true channels 0..63

    # ---------------- layer1: three fused bottleneck blocks --------------------------------
    idx = 0
    xf = None
    for b in range(3):
        w1, b1, w2, b2, w3, b3 = wr[idx:idx + 6]
        idx += 6
        if b == 0:
            wd, bd = wr[idx:idx + 2]
            idx += 2

        # 1x1 -> BN -> ReLU
        t1 = jnp.dot(x, w1[...], preferred_element_type=f32)
        t1 = jnp.maximum(t1 + b1[...], 0.0)                               # (m, 128) f32

        # 3x3 / pad 1: gather 9 shifted taps from the zero-bordered scratch, concatenate
        # along lanes and run ONE K = 9*128 matmul (accumulation stays in the MXU).
        pad_store(t1.reshape(hh, ww, _CMID))
        taps = [pad_read(i, j).reshape(m, _CMID)
                for i in range(3) for j in range(3)]
        slab = jnp.concatenate(taps, axis=-1)                             # (m, 1152) bf16
        t2 = jnp.dot(slab, w2[...], preferred_element_type=f32)
        t2 = jnp.maximum(t2 + b2[...], 0.0).astype(bf16)                  # (m, 128)

        # 1x1 -> BN
        t3 = jnp.dot(t2, w3[...], preferred_element_type=f32) + b3[...]   # (m, 256) f32

        # residual branch
        if b == 0:
            res = jnp.dot(x, wd[...], preferred_element_type=f32) + bd[...]
        else:
            res = x.astype(f32)

        xf = jnp.maximum(t3 + res, 0.0)                                   # (m, 256) f32
        x = xf.astype(bf16)

    o_ref[0] = xf.reshape(hh, ww, _COUT).astype(o_ref.dtype)


# ----------------------------------------------------------------------------- #
# pallas_call wrapper
# ----------------------------------------------------------------------------- #

def _const_index_map(ndim):
    return lambda i: (0,) * ndim


def head_pallas(patches, c1w, c1b, blocks, *, hh, ww):
    """patches: (N, 4*hh*ww, K_PAD) bf16 group-ordered conv1 patches -> (N, hh, ww, 256) f32."""
    n = patches.shape[0]
    flat = []
    for blk in blocks:
        flat += [blk["w1"], blk["b1"], blk["w2"], blk["b2"], blk["w3"], blk["b3"]]
        if "wd" in blk:
            flat += [blk["wd"], blk["bd"]]
    args = [patches, c1w, c1b] + flat

    in_specs = [pl.BlockSpec((1,) + patches.shape[1:], lambda i: (i, 0, 0))]
    for a in args[1:]:
        in_specs.append(pl.BlockSpec(a.shape, _const_index_map(a.ndim)))

    m = hh * ww
    flops = 2 * 4 * m * _K7_PAD * _CMID
    for blk in blocks:
        cin = blk["w1"].shape[0]
        flops += 2 * m * (cin * _CMID + 9 * _CMID * _CMID + _CMID * _COUT)
        if "wd" in blk:
            flops += 2 * m * cin * _COUT
    flops *= n
    bytes_accessed = int(sum(int(a.size) * jnp.dtype(a.dtype).itemsize for a in args)
                         + n * m * _COUT * 4)

    wpad = max(8, ((ww + 2 + 7) // 8) * 8)   # scratch width padded to a sublane multiple

    return pl.pallas_call(
        functools.partial(_head_kernel, hh=hh, ww=ww),
        out_shape=jax.ShapeDtypeStruct((n, hh, ww, _COUT), jnp.float32),
        grid_spec=pltpu.PrefetchScalarGridSpec(
            num_scalar_prefetch=0,
            grid=(n,),
            in_specs=in_specs,
            out_specs=pl.BlockSpec((1, hh, ww, _COUT), lambda i: (i, 0, 0, 0)),
            scratch_shapes=[pltpu.VMEM((hh + 2, wpad, _CMID), jnp.bfloat16)],
        ),
        compiler_params=pltpu.CompilerParams(dimension_semantics=("parallel",)),
        cost_estimate=pl.CostEstimate(flops=flops, transcendentals=0,
                                      bytes_accessed=bytes_accessed),
    )(*args)


# ----------------------------------------------------------------------------- #
# parameter creation (random frozen weights; BN folded: scale into weights, bias kept)
# ----------------------------------------------------------------------------- #

def _fold_bn(key, c, c_pad):
    k1, k2, k3, k4 = jax.random.split(key, 4)
    gamma = 1.0 + 0.1 * jax.random.normal(k1, (c,))
    beta = 0.1 * jax.random.normal(k2, (c,))
    mean = 0.1 * jax.random.normal(k3, (c,))
    var = 1.0 + 0.1 * jnp.abs(jax.random.normal(k4, (c,)))
    scale = gamma / jnp.sqrt(var + 1e-5)
    bias = beta - mean * scale
    bias = jnp.pad(bias, (0, c_pad - c)).reshape(1, c_pad).astype(jnp.float32)
    return scale.astype(jnp.float32), bias


def _conv1_params(key):
    kw, kb = jax.random.split(key)
    w = 0.05 * jax.random.normal(kw, (7, 7, 3, 64))
    scale, bias = _fold_bn(kb, 64, _CMID)
    w = (w * scale).reshape(_K7, 64)
    w = jnp.pad(w, ((0, _K7_PAD - _K7), (0, _CMID - 64)))
    return w.astype(jnp.bfloat16), bias


def _block_params(key, cin, cin_pad, has_down):
    ks = jax.random.split(key, 8)
    blk = {}

    w1 = 0.05 * jax.random.normal(ks[0], (cin, 64))
    s1, blk["b1"] = _fold_bn(ks[1], 64, _CMID)
    blk["w1"] = jnp.pad(w1 * s1, ((0, cin_pad - cin), (0, _CMID - 64))).astype(jnp.bfloat16)

    w2 = 0.05 * jax.random.normal(ks[2], (3, 3, 64, 64))
    s2, blk["b2"] = _fold_bn(ks[3], 64, _CMID)
    w2 = jnp.pad(w2 * s2, ((0, 0), (0, 0), (0, _CMID - 64), (0, _CMID - 64)))
    blk["w2"] = w2.reshape(9 * _CMID, _CMID).astype(jnp.bfloat16)

    w3 = 0.05 * jax.random.normal(ks[4], (64, _COUT))
    s3, blk["b3"] = _fold_bn(ks[5], _COUT, _COUT)
    blk["w3"] = jnp.pad(w3 * s3, ((0, _CMID - 64), (0, 0))).astype(jnp.bfloat16)

    if has_down:
        wd = 0.05 * jax.random.normal(ks[6], (cin, _COUT))
        sd, blk["bd"] = _fold_bn(ks[7], _COUT, _COUT)
        blk["wd"] = jnp.pad(wd * sd, ((0, cin_pad - cin), (0, 0))).astype(jnp.bfloat16)
    return blk


def init_params(key):
    ks = jax.random.split(key, 4)
    c1w, c1b = _conv1_params(ks[0])
    blocks = [
        _block_params(ks[1], 64, _CMID, True),     # ResNet-101 layer1 = 3 bottlenecks
        _block_params(ks[2], 256, 256, False),
        _block_params(ks[3], 256, 256, False),
    ]
    return {"c1w": c1w, "c1b": c1b, "blocks": blocks}


# ----------------------------------------------------------------------------- #
# forward
# ----------------------------------------------------------------------------- #

def head_forward(x_nchw, params):
    x = jnp.transpose(x_nchw, (0, 2, 3, 1)).astype(jnp.float32)     # NCHW -> NHWC
    n, h, w, c = x.shape
    assert c == 3 and h % 4 == 0 and w % 4 == 0
    oh, ow = h // 2, w // 2                                         # conv1 output spatial
    hh, ww = h // 4, w // 4                                         # post-maxpool spatial

    # conv1 patch extraction (im2col for 7x7/s2/p3), ordered into 4 parity groups
    # g(dr,dc)[qr,qc] = conv1_out[2*qr+dr, 2*qc+dc] so the fused pool needs no strided access.
    xp = jnp.pad(x, ((0, 0), (3, 3), (3, 3), (0, 0)))
    taps = [xp[:, i:i + 2 * oh - 1:2, j:j + 2 * ow - 1:2, :]
            for i in range(7) for j in range(7)]
    p = jnp.concatenate(taps, axis=-1)                              # (N, oh, ow, 147)
    p = p.reshape(n, hh, 2, ww, 2, _K7)
    p = p.transpose(0, 2, 4, 1, 3, 5).reshape(n, 4 * hh * ww, _K7)
    p = jnp.pad(p, ((0, 0), (0, 0), (0, _K7_PAD - _K7))).astype(jnp.bfloat16)

    y = head_pallas(p, params["c1w"], params["c1b"], params["blocks"], hh=hh, ww=ww)
    return jnp.transpose(y, (0, 3, 1, 2))                           # NHWC -> NCHW


# ----------------------------------------------------------------------------- #
# main
# ----------------------------------------------------------------------------- #

if __name__ == "__main__":
    key = jax.random.PRNGKey(0)
    kp, kx = jax.random.split(key)
    params = init_params(kp)
    x = jax.random.normal(kx, (2, 3, 32, 32), dtype=jnp.float32)    # NCHW input

    fwd = jax.jit(head_forward)
    out = jax.block_until_ready(fwd(x, params))
    assert out.shape == (2, 256, 8, 8), out.shape
    assert out.dtype == jnp.float32, out.dtype
    print("KERNEL_OK")
</pallas_src>

<mosaic_0001>
module attributes {stable_mosaic.version = 11 : i64} {
  func.func @_head_kernel(%arg0: i32, %arg1: memref<1x256x192xbf16, #tpu.memory_space<vmem>>, %arg2: memref<192x128xbf16, #tpu.memory_space<vmem>>, %arg3: memref<1x128xf32, #tpu.memory_space<vmem>>, %arg4: memref<128x128xbf16, #tpu.memory_space<vmem>>, %arg5: memref<1x128xf32, #tpu.memory_space<vmem>>, %arg6: memref<1152x128xbf16, #tpu.memory_space<vmem>>, %arg7: memref<1x128xf32, #tpu.memory_space<vmem>>, %arg8: memref<128x256xbf16, #tpu.memory_space<vmem>>, %arg9: memref<1x256xf32, #tpu.memory_space<vmem>>, %arg10: memref<128x256xbf16, #tpu.memory_space<vmem>>, %arg11: memref<1x256xf32, #tpu.memory_space<vmem>>, %arg12: memref<256x128xbf16, #tpu.memory_space<vmem>>, %arg13: memref<1x128xf32, #tpu.memory_space<vmem>>, %arg14: memref<1152x128xbf16, #tpu.memory_space<vmem>>, %arg15: memref<1x128xf32, #tpu.memory_space<vmem>>, %arg16: memref<128x256xbf16, #tpu.memory_space<vmem>>, %arg17: memref<1x256xf32, #tpu.memory_space<vmem>>, %arg18: memref<256x128xbf16, #tpu.memory_space<vmem>>, %arg19: memref<1x128xf32, #tpu.memory_space<vmem>>, %arg20: memref<1152x128xbf16, #tpu.memory_space<vmem>>, %arg21: memref<1x128xf32, #tpu.memory_space<vmem>>, %arg22: memref<128x256xbf16, #tpu.memory_space<vmem>>, %arg23: memref<1x256xf32, #tpu.memory_space<vmem>>, %arg24: memref<1x8x8x256xf32, #tpu.memory_space<vmem>>, %arg25: memref<10x16x128xbf16, #tpu.memory_space<vmem>>) attributes {dimension_semantics = [#tpu.dimension_semantics<parallel>], iteration_bounds = array<i64: 2>, scalar_prefetch = 0 : i64, scratch_operands = 1 : i64, tpu.core_type = #tpu.core_type<tc>, window_params = [{transform_indices = @transform_0, window_bounds = array<i64: 1, 256, 192>}, {pipeline_mode = #tpu.pipeline_mode<synchronous>, transform_indices = @transform_1, window_bounds = array<i64: 192, 128>}, {pipeline_mode = #tpu.pipeline_mode<synchronous>, transform_indices = @transform_2, window_bounds = array<i64: 1, 128>}, {pipeline_mode = #tpu.pipeline_mode<synchronous>, transform_indices = @transform_3, window_bounds = array<i64: 128, 128>}, {pipeline_mode = #tpu.pipeline_mode<synchronous>, transform_indices = @transform_4, window_bounds = array<i64: 1, 128>}, {pipeline_mode = #tpu.pipeline_mode<synchronous>, transform_indices = @transform_5, window_bounds = array<i64: 1152, 128>}, {pipeline_mode = #tpu.pipeline_mode<synchronous>, transform_indices = @transform_6, window_bounds = array<i64: 1, 128>}, {pipeline_mode = #tpu.pipeline_mode<synchronous>, transform_indices = @transform_7, window_bounds = array<i64: 128, 256>}, {pipeline_mode = #tpu.pipeline_mode<synchronous>, transform_indices = @transform_8, window_bounds = array<i64: 1, 256>}, {pipeline_mode = #tpu.pipeline_mode<synchronous>, transform_indices = @transform_9, window_bounds = array<i64: 128, 256>}, {pipeline_mode = #tpu.pipeline_mode<synchronous>, transform_indices = @transform_10, window_bounds = array<i64: 1, 256>}, {pipeline_mode = #tpu.pipeline_mode<synchronous>, transform_indices = @transform_11, window_bounds = array<i64: 256, 128>}, {pipeline_mode = #tpu.pipeline_mode<synchronous>, transform_indices = @transform_12, window_bounds = array<i64: 1, 128>}, {pipeline_mode = #tpu.pipeline_mode<synchronous>, transform_indices = @transform_13, window_bounds = array<i64: 1152, 128>}, {pipeline_mode = #tpu.pipeline_mode<synchronous>, transform_indices = @transform_14, window_bounds = array<i64: 1, 128>}, {pipeline_mode = #tpu.pipeline_mode<synchronous>, transform_indices = @transform_15, window_bounds = array<i64: 128, 256>}, {pipeline_mode = #tpu.pipeline_mode<synchronous>, transform_indices = @transform_16, window_bounds = array<i64: 1, 256>}, {pipeline_mode = #tpu.pipeline_mode<synchronous>, transform_indices = @transform_17, window_bounds = array<i64: 256, 128>}, {pipeline_mode = #tpu.pipeline_mode<synchronous>, transform_indices = @transform_18, window_bounds = array<i64: 1, 128>}, {pipeline_mode = #tpu.pipeline_mode<synchronous>, transform_indices = @transform_19, window_bounds = array<i64: 1152, 128>}, {pipeline_mode = #tpu.pipeline_mode<synchronous>, transform_indices = @transform_20, window_bounds = array<i64: 1, 128>}, {pipeline_mode = #tpu.pipeline_mode<synchronous>, transform_indices = @transform_21, window_bounds = array<i64: 128, 256>}, {pipeline_mode = #tpu.pipeline_mode<synchronous>, transform_indices = @transform_22, window_bounds = array<i64: 1, 256>}, {transform_indices = @transform_23, window_bounds = array<i64: 1, 8, 8, 256>}]} {
    %cst = arith.constant 0.000000e+00 : bf16
    %0 = vector.broadcast %cst : bf16 to vector<10x16x128xbf16>
    %c0 = arith.constant 0 : index
    %c0_0 = arith.constant 0 : index
    %c0_1 = arith.constant 0 : index
    %1 = vector.load %arg25[%c0, %c0_0, %c0_1] : memref<10x16x128xbf16, #tpu.memory_space<vmem>>, vector<10x16x128xbf16>
    tpu.vector_store %arg25[%c0, %c0_0, %c0_1], %0 {strides = array<i32>} : memref<10x16x128xbf16, #tpu.memory_space<vmem>>, vector<10x16x128xbf16>,
    %c0_2 = arith.constant 0 : index
    %c0_3 = arith.constant 0 : index
    %c0_4 = arith.constant 0 : index
    %2 = vector.load %arg1[%c0_2, %c0_3, %c0_4] : memref<1x256x192xbf16, #tpu.memory_space<vmem>>, vector<1x256x192xbf16>
    %3 = vector.shape_cast %2 : vector<1x256x192xbf16> to vector<256x192xbf16>
    %c0_5 = arith.constant 0 : index
    %c0_6 = arith.constant 0 : index
    %4 = vector.load %arg2[%c0_5, %c0_6] : memref<192x128xbf16, #tpu.memory_space<vmem>>, vector<192x128xbf16>
    %cst_7 = arith.constant dense<0.000000e+00> : vector<256x128xf32>
    %5 = tpu.matmul %3, %4, %cst_7 {dimension_numbers = #tpu.dot_dimension_numbers<[1], [0], [0], [1], [0, 0, 1, 1], [], []>} : vector<256x192xbf16>, vector<192x128xbf16>, vector<256x128xf32> -> vector<256x128xf32>
    %c0_8 = arith.constant 0 : index
    %c0_9 = arith.constant 0 : index
    %6 = vector.load %arg3[%c0_8, %c0_9] : memref<1x128xf32, #tpu.memory_space<vmem>>, vector<1x128xf32>
    %7 = vector.broadcast %6 : vector<1x128xf32> to vector<256x128xf32>
    %8 = arith.addf %5, %7 : vector<256x128xf32>
    %cst_10 = arith.constant 0.000000e+00 : f32
    %9 = vector.broadcast %cst_10 : f32 to vector<256x128xf32>
    %10 = arith.maximumf %8, %9 : vector<256x128xf32>
    %11 = arith.truncf %10 : vector<256x128xf32> to vector<256x128xbf16>
    %12 = vector.extract_strided_slice %11 {offsets = [0, 0], sizes = [64, 128], strides = [1, 1]} : vector<256x128xbf16> to vector<64x128xbf16>
    %13 = vector.shape_cast %12 : vector<64x128xbf16> to vector<8x8x128xbf16>
    %14 = vector.extract_strided_slice %11 {offsets = [64, 0], sizes = [64, 128], strides = [1, 1]} : vector<256x128xbf16> to vector<64x128xbf16>
    %15 = vector.shape_cast %14 : vector<64x128xbf16> to vector<8x8x128xbf16>
    %16 = vector.extract_strided_slice %11 {offsets = [128, 0], sizes = [64, 128], strides = [1, 1]} : vector<256x128xbf16> to vector<64x128xbf16>
    %17 = vector.shape_cast %16 : vector<64x128xbf16> to vector<8x8x128xbf16>
    %18 = vector.extract_strided_slice %11 {offsets = [192, 0], sizes = [64, 128], strides = [1, 1]} : vector<256x128xbf16> to vector<64x128xbf16>
    %19 = vector.shape_cast %18 : vector<64x128xbf16> to vector<8x8x128xbf16>
    %20 = arith.maximumf %13, %15 : vector<8x8x128xbf16>
    %21 = arith.maximumf %17, %19 : vector<8x8x128xbf16>
    %22 = arith.maximumf %20, %21 : vector<8x8x128xbf16>
    %c1 = arith.constant 1 : index
    %c1_11 = arith.constant 1 : index
    %c0_12 = arith.constant 0 : index
    %23 = vector.load %arg25[%c1, %c1_11, %c0_12] : memref<10x16x128xbf16, #tpu.memory_space<vmem>>, vector<8x8x128xbf16>
    tpu.vector_store %arg25[%c1, %c1_11, %c0_12], %15 {strides = array<i32>} : memref<10x16x128xbf16, #tpu.memory_space<vmem>>, vector<8x8x128xbf16>,
    %c1_13 = arith.constant 1 : index
    %c0_14 = arith.constant 0 : index
    %c0_15 = arith.constant 0 : index
    %24 = vector.load %arg25[%c1_13, %c0_14, %c0_15] : memref<10x16x128xbf16, #tpu.memory_space<vmem>>, vector<8x8x128xbf16>
    %25 = arith.maximumf %22, %24 : vector<8x8x128xbf16>
    %c1_16 = arith.constant 1 : index
    %c1_17 = arith.constant 1 : index
    %c0_18 = arith.constant 0 : index
    %26 = vector.load %arg25[%c1_16, %c1_17, %c0_18] : memref<10x16x128xbf16, #tpu.memory_space<vmem>>, vector<8x8x128xbf16>
    tpu.vector_store %arg25[%c1_16, %c1_17, %c0_18], %17 {strides = array<i32>} : memref<10x16x128xbf16, #tpu.memory_space<vmem>>, vector<8x8x128xbf16>,
    %c0_19 = arith.constant 0 : index
    %c1_20 = arith.constant 1 : index
    %c0_21 = arith.constant 0 : index
    %27 = vector.load %arg25[%c0_19, %c1_20, %c0_21] : memref<10x16x128xbf16, #tpu.memory_space<vmem>>, vector<8x8x128xbf16>
    %28 = arith.maximumf %25, %27 : vector<8x8x128xbf16>
    %c1_22 = arith.constant 1 : index
    %c1_23 = arith.constant 1 : index
    %c0_24 = arith.constant 0 : index
    %29 = vector.load %arg25[%c1_22, %c1_23, %c0_24] : memref<10x16x128xbf16, #tpu.memory_space<vmem>>, vector<8x8x128xbf16>
    tpu.vector_store %arg25[%c1_22, %c1_23, %c0_24], %19 {strides = array<i32>} : memref<10x16x128xbf16, #tpu.memory_space<vmem>>, vector<8x8x128xbf16>,
    %c1_25 = arith.constant 1 : index
    %c0_26 = arith.constant 0 : index
    %c0_27 = arith.constant 0 : index
    %30 = vector.load %arg25[%c1_25, %c0_26, %c0_27] : memref<10x16x128xbf16, #tpu.memory_space<vmem>>, vector<8x8x128xbf16>
    %31 = arith.maximumf %28, %30 : vector<8x8x128xbf16>
    %c0_28 = arith.constant 0 : index
    %c1_29 = arith.constant 1 : index
    %c0_30 = arith.constant 0 : index
    %32 = vector.load %arg25[%c0_28, %c1_29, %c0_30] : memref<10x16x128xbf16, #tpu.memory_space<vmem>>, vector<8x8x128xbf16>
    %33 = arith.maximumf %31, %32 : vector<8x8x128xbf16>
    %c0_31 = arith.constant 0 : index
    %c0_32 = arith.constant 0 : index
    %c0_33 = arith.constant 0 : index
    %34 = vector.load %arg25[%c0_31, %c0_32, %c0_33] : memref<10x16x128xbf16, #tpu.memory_space<vmem>>, vector<8x8x128xbf16>
    %35 = arith.maximumf %33, %34 : vector<8x8x128xbf16>
    %36 = vector.shape_cast %35 : vector<8x8x128xbf16> to vector<64x128xbf16>
    %c0_34 = arith.constant 0 : index
    %c0_35 = arith.constant 0 : index
    %37 = vector.load %arg4[%c0_34, %c0_35] : memref<128x128xbf16, #tpu.memory_space<vmem>>, vector<128x128xbf16>
    %cst_36 = arith.constant dense<0.000000e+00> : vector<64x128xf32>
    %38 = tpu.matmul %36, %37, %cst_36 {dimension_numbers = #tpu.dot_dimension_numbers<[1], [0], [0], [1], [0, 0, 1, 1], [], []>} : vector<64x128xbf16>, vector<128x128xbf16>, vector<64x128xf32> -> vector<64x128xf32>
    %c0_37 = arith.constant 0 : index
    %c0_38 = arith.constant 0 : index
    %39 = vector.load %arg5[%c0_37, %c0_38] : memref<1x128xf32, #tpu.memory_space<vmem>>, vector<1x128xf32>
    %40 = vector.broadcast %39 : vector<1x128xf32> to vector<64x128xf32>
    %41 = arith.addf %38, %40 : vector<64x128xf32>
    %cst_39 = arith.constant 0.000000e+00 : f32
    %42 = vector.broadcast %cst_39 : f32 to vector<64x128xf32>
    %43 = arith.maximumf %41, %42 : vector<64x128xf32>
    %44 = vector.shape_cast %43 : vector<64x128xf32> to vector<8x8x128xf32>
    %45 = arith.truncf %44 : vector<8x8x128xf32> to vector<8x8x128xbf16>
    %c1_40 = arith.constant 1 : index
    %c1_41 = arith.constant 1 : index
    %c0_42 = arith.constant 0 : index
    %46 = vector.load %arg25[%c1_40, %c1_41, %c0_42] : memref<10x16x128xbf16, #tpu.memory_space<vmem>>, vector<8x8x128xbf16>
    tpu.vector_store %arg25[%c1_40, %c1_41, %c0_42], %45 {strides = array<i32>} : memref<10x16x128xbf16, #tpu.memory_space<vmem>>, vector<8x8x128xbf16>,
    %c0_43 = arith.constant 0 : index
    %c0_44 = arith.constant 0 : index
    %c0_45 = arith.constant 0 : index
    %47 = vector.load %arg25[%c0_43, %c0_44, %c0_45] : memref<10x16x128xbf16, #tpu.memory_space<vmem>>, vector<8x8x128xbf16>
    %48 = vector.shape_cast %47 : vector<8x8x128xbf16> to vector<64x128xbf16>
    %c0_46 = arith.constant 0 : index
    %c1_47 = arith.constant 1 : index
    %c0_48 = arith.constant 0 : index
    %49 = vector.load %arg25[%c0_46, %c1_47, %c0_48] : memref<10x16x128xbf16, #tpu.memory_space<vmem>>, vector<8x8x128xbf16>
    %50 = vector.shape_cast %49 : vector<8x8x128xbf16> to vector<64x128xbf16>
    %c0_49 = arith.constant 0 : index
    %c2 = arith.constant 2 : index
    %c0_50 = arith.constant 0 : index
    %51 = vector.load %arg25[%c0_49, %c2, %c0_50] : memref<10x16x128xbf16, #tpu.memory_space<vmem>>, vector<8x8x128xbf16>
    %52 = vector.shape_cast %51 : vector<8x8x128xbf16> to vector<64x128xbf16>
    %c1_51 = arith.constant 1 : index
    %c0_52 = arith.constant 0 : index
    %c0_53 = arith.constant 0 : index
    %53 = vector.load %arg25[%c1_51, %c0_52, %c0_53] : memref<10x16x128xbf16, #tpu.memory_space<vmem>>, vector<8x8x128xbf16>
    %54 = vector.shape_cast %53 : vector<8x8x128xbf16> to vector<64x128xbf16>
    %c1_54 = arith.constant 1 : index
    %c1_55 = arith.constant 1 : index
    %c0_56 = arith.constant 0 : index
    %55 = vector.load %arg25[%c1_54, %c1_55, %c0_56] : memref<10x16x128xbf16, #tpu.memory_space<vmem>>, vector<8x8x128xbf16>
    %56 = vector.shape_cast %55 : vector<8x8x128xbf16> to vector<64x128xbf16>
    %c1_57 = arith.constant 1 : index
    %c2_58 = arith.constant 2 : index
    %c0_59 = arith.constant 0 : index
    %57 = vector.load %arg25[%c1_57, %c2_58, %c0_59] : memref<10x16x128xbf16, #tpu.memory_space<vmem>>, vector<8x8x128xbf16>
    %58 = vector.shape_cast %57 : vector<8x8x128xbf16> to vector<64x128xbf16>
    %c2_60 = arith.constant 2 : index
    %c0_61 = arith.constant 0 : index
    %c0_62 = arith.constant 0 : index
    %59 = vector.load %arg25[%c2_60, %c0_61, %c0_62] : memref<10x16x128xbf16, #tpu.memory_space<vmem>>, vector<8x8x128xbf16>
    %60 = vector.shape_cast %59 : vector<8x8x128xbf16> to vector<64x128xbf16>
    %c2_63 = arith.constant 2 : index
    %c1_64 = arith.constant 1 : index
    %c0_65 = arith.constant 0 : index
    %61 = vector.load %arg25[%c2_63, %c1_64, %c0_65] : memref<10x16x128xbf16, #tpu.memory_space<vmem>>, vector<8x8x128xbf16>
    %62 = vector.shape_cast %61 : vector<8x8x128xbf16> to vector<64x128xbf16>
    %c2_66 = arith.constant 2 : index
    %c2_67 = arith.constant 2 : index
    %c0_68 = arith.constant 0 : index
    %63 = vector.load %arg25[%c2_66, %c2_67, %c0_68] : memref<10x16x128xbf16, #tpu.memory_space<vmem>>, vector<8x8x128xbf16>
    %64 = vector.shape_cast %63 : vector<8x8x128xbf16> to vector<64x128xbf16>
    %65 = tpu.concatenate %48, %50, %52, %54, %56, %58, %60, %62, %64 in 1 : vector<64x128xbf16>, vector<64x128xbf16>, vector<64x128xbf16>, vector<64x128xbf16>, vector<64x128xbf16>, vector<64x128xbf16>, vector<64x128xbf16>, vector<64x128xbf16>, vector<64x128xbf16> -> vector<64x1152xbf16>
    %c0_69 = arith.constant 0 : index
    %c0_70 = arith.constant 0 : index
    %66 = vector.load %arg6[%c0_69, %c0_70] : memref<1152x128xbf16, #tpu.memory_space<vmem>>, vector<1152x128xbf16>
    %cst_71 = arith.constant dense<0.000000e+00> : vector<64x128xf32>
    %67 = tpu.matmul %65, %66, %cst_71 {dimension_numbers = #tpu.dot_dimension_numbers<[1], [0], [0], [1], [0, 0, 1, 1], [], []>} : vector<64x1152xbf16>, vector<1152x128xbf16>, vector<64x128xf32> -> vector<64x128xf32>
    %c0_72 = arith.constant 0 : index
    %c0_73 = arith.constant 0 : index
    %68 = vector.load %arg7[%c0_72, %c0_73] : memref<1x128xf32, #tpu.memory_space<vmem>>, vector<1x128xf32>
    %69 = vector.broadcast %68 : vector<1x128xf32> to vector<64x128xf32>
    %70 = arith.addf %67, %69 : vector<64x128xf32>
    %cst_74 = arith.constant 0.000000e+00 : f32
    %71 = vector.broadcast %cst_74 : f32 to vector<64x128xf32>
    %72 = arith.maximumf %70, %71 : vector<64x128xf32>
    %73 = arith.truncf %72 : vector<64x128xf32> to vector<64x128xbf16>
    %c0_75 = arith.constant 0 : index
    %c0_76 = arith.constant 0 : index
    %74 = vector.load %arg8[%c0_75, %c0_76] : memref<128x256xbf16, #tpu.memory_space<vmem>>, vector<128x256xbf16>
    %cst_77 = arith.constant dense<0.000000e+00> : vector<64x256xf32>
    %75 = tpu.matmul %73, %74, %cst_77 {dimension_numbers = #tpu.dot_dimension_numbers<[1], [0], [0], [1], [0, 0, 1, 1], [], []>} : vector<64x128xbf16>, vector<128x256xbf16>, vector<64x256xf32> -> vector<64x256xf32>
    %c0_78 = arith.constant 0 : index
    %c0_79 = arith.constant 0 : index
    %76 = vector.load %arg9[%c0_78, %c0_79] : memref<1x256xf32, #tpu.memory_space<vmem>>, vector<1x256xf32>
    %77 = vector.broadcast %76 : vector<1x256xf32> to vector<64x256xf32>
    %78 = arith.addf %75, %77 : vector<64x256xf32>
    %c0_80 = arith.constant 0 : index
    %c0_81 = arith.constant 0 : index
    %79 = vector.load %arg10[%c0_80, %c0_81] : memref<128x256xbf16, #tpu.memory_space<vmem>>, vector<128x256xbf16>
    %cst_82 = arith.constant dense<0.000000e+00> : vector<64x256xf32>
    %80 = tpu.matmul %36, %79, %cst_82 {dimension_numbers = #tpu.dot_dimension_numbers<[1], [0], [0], [1], [0, 0, 1, 1], [], []>} : vector<64x128xbf16>, vector<128x256xbf16>, vector<64x256xf32> -> vector<64x256xf32>
    %c0_83 = arith.constant 0 : index
    %c0_84 = arith.constant 0 : index
    %81 = vector.load %arg11[%c0_83, %c0_84] : memref<1x256xf32, #tpu.memory_space<vmem>>, vector<1x256xf32>
    %82 = vector.broadcast %81 : vector<1x256xf32> to vector<64x256xf32>
    %83 = arith.addf %80, %82 : vector<64x256xf32>
    %84 = arith.addf %78, %83 : vector<64x256xf32>
    %cst_85 = arith.constant 0.000000e+00 : f32
    %85 = vector.broadcast %cst_85 : f32 to vector<64x256xf32>
    %86 = arith.maximumf %84, %85 : vector<64x256xf32>
    %87 = arith.truncf %86 : vector<64x256xf32> to vector<64x256xbf16>
    %c0_86 = arith.constant 0 : index
    %c0_87 = arith.constant 0 : index
    %88 = vector.load %arg12[%c0_86, %c0_87] : memref<256x128xbf16, #tpu.memory_space<vmem>>, vector<256x128xbf16>
    %cst_88 = arith.constant dense<0.000000e+00> : vector<64x128xf32>
    %89 = tpu.matmul %87, %88, %cst_88 {dimension_numbers = #tpu.dot_dimension_numbers<[1], [0], [0], [1], [0, 0, 1, 1], [], []>} : vector<64x256xbf16>, vector<256x128xbf16>, vector<64x128xf32> -> vector<64x128xf32>
    %c0_89 = arith.constant 0 : index
    %c0_90 = arith.constant 0 : index
    %90 = vector.load %arg13[%c0_89, %c0_90] : memref<1x128xf32, #tpu.memory_space<vmem>>, vector<1x128xf32>
    %91 = vector.broadcast %90 : vector<1x128xf32> to vector<64x128xf32>
    %92 = arith.addf %89, %91 : vector<64x128xf32>
    %cst_91 = arith.constant 0.000000e+00 : f32
    %93 = vector.broadcast %cst_91 : f32 to vector<64x128xf32>
    %94 = arith.maximumf %92, %93 : vector<64x128xf32>
    %95 = vector.shape_cast %94 : vector<64x128xf32> to vector<8x8x128xf32>
    %96 = arith.truncf %95 : vector<8x8x128xf32> to vector<8x8x128xbf16>
    %c1_92 = arith.constant 1 : index
    %c1_93 = arith.constant 1 : index
    %c0_94 = arith.constant 0 : index
    %97 = vector.load %arg25[%c1_92, %c1_93, %c0_94] : memref<10x16x128xbf16, #tpu.memory_space<vmem>>, vector<8x8x128xbf16>
    tpu.vector_store %arg25[%c1_92, %c1_93, %c0_94], %96 {strides = array<i32>} : memref<10x16x128xbf16, #tpu.memory_space<vmem>>, vector<8x8x128xbf16>,
    %c0_95 = arith.constant 0 : index
    %c0_96 = arith.constant 0 : index
    %c0_97 = arith.constant 0 : index
    %98 = vector.load %arg25[%c0_95, %c0_96, %c0_97] : memref<10x16x128xbf16, #tpu.memory_space<vmem>>, vector<8x8x128xbf16>
    %99 = vector.shape_cast %98 : vector<8x8x128xbf16> to vector<64x128xbf16>
    %c0_98 = arith.constant 0 : index
    %c1_99 = arith.constant 1 : index
    %c0_100 = arith.constant 0 : index
    %100 = vector.load %arg25[%c0_98, %c1_99, %c0_100] : memref<10x16x128xbf16, #tpu.memory_space<vmem>>, vector<8x8x128xbf16>
    %101 = vector.shape_cast %100 : vector<8x8x128xbf16> to vector<64x128xbf16>
    %c0_101 = arith.constant 0 : index
    %c2_102 = arith.constant 2 : index
    %c0_103 = arith.constant 0 : index
    %102 = vector.load %arg25[%c0_101, %c2_102, %c0_103] : memref<10x16x128xbf16, #tpu.memory_space<vmem>>, vector<8x8x128xbf16>
    %103 = vector.shape_cast %102 : vector<8x8x128xbf16> to vector<64x128xbf16>
    %c1_104 = arith.constant 1 : index
    %c0_105 = arith.constant 0 : index
    %c0_106 = arith.constant 0 : index
    %104 = vector.load %arg25[%c1_104, %c0_105, %c0_106] : memref<10x16x128xbf16, #tpu.memory_space<vmem>>, vector<8x8x128xbf16>
    %105 = vector.shape_cast %104 : vector<8x8x128xbf16> to vector<64x128xbf16>
    %c1_107 = arith.constant 1 : index
    %c1_108 = arith.constant 1 : index
    %c0_109 = arith.constant 0 : index
    %106 = vector.load %arg25[%c1_107, %c1_108, %c0_109] : memref<10x16x128xbf16, #tpu.memory_space<vmem>>, vector<8x8x128xbf16>
    %107 = vector.shape_cast %106 : vector<8x8x128xbf16> to vector<64x128xbf16>
    %c1_110 = arith.constant 1 : index
    %c2_111 = arith.constant 2 : index
    %c0_112 = arith.constant 0 : index
    %108 = vector.load %arg25[%c1_110, %c2_111, %c0_112] : memref<10x16x128xbf16, #tpu.memory_space<vmem>>, vector<8x8x128xbf16>
    %109 = vector.shape_cast %108 : vector<8x8x128xbf16> to vector<64x128xbf16>
    %c2_113 = arith.constant 2 : index
    %c0_114 = arith.constant 0 : index
    %c0_115 = arith.constant 0 : index
    %110 = vector.load %arg25[%c2_113, %c0_114, %c0_115] : memref<10x16x128xbf16, #tpu.memory_space<vmem>>, vector<8x8x128xbf16>
    %111 = vector.shape_cast %110 : vector<8x8x128xbf16> to vector<64x128xbf16>
    %c2_116 = arith.constant 2 : index
    %c1_117 = arith.constant 1 : index
    %c0_118 = arith.constant 0 : index
    %112 = vector.load %arg25[%c2_116, %c1_117, %c0_118] : memref<10x16x128xbf16, #tpu.memory_space<vmem>>, vector<8x8x128xbf16>
    %113 = vector.shape_cast %112 : vector<8x8x128xbf16> to vector<64x128xbf16>
    %c2_119 = arith.constant 2 : index
    %c2_120 = arith.constant 2 : index
    %c0_121 = arith.constant 0 : index
    %114 = vector.load %arg25[%c2_119, %c2_120, %c0_121] : memref<10x16x128xbf16, #tpu.memory_space<vmem>>, vector<8x8x128xbf16>
    %115 = vector.shape_cast %114 : vector<8x8x128xbf16> to vector<64x128xbf16>
    %116 = tpu.concatenate %99, %101, %103, %105, %107, %109, %111, %113, %115 in 1 : vector<64x128xbf16>, vector<64x128xbf16>, vector<64x128xbf16>, vector<64x128xbf16>, vector<64x128xbf16>, vector<64x128xbf16>, vector<64x128xbf16>, vector<64x128xbf16>, vector<64x128xbf16> -> vector<64x1152xbf16>
    %c0_122 = arith.constant 0 : index
    %c0_123 = arith.constant 0 : index
    %117 = vector.load %arg14[%c0_122, %c0_123] : memref<1152x128xbf16, #tpu.memory_space<vmem>>, vector<1152x128xbf16>
    %cst_124 = arith.constant dense<0.000000e+00> : vector<64x128xf32>
    %118 = tpu.matmul %116, %117, %cst_124 {dimension_numbers = #tpu.dot_dimension_numbers<[1], [0], [0], [1], [0, 0, 1, 1], [], []>} : vector<64x1152xbf16>, vector<1152x128xbf16>, vector<64x128xf32> -> vector<64x128xf32>
    %c0_125 = arith.constant 0 : index
    %c0_126 = arith.constant 0 : index
    %119 = vector.load %arg15[%c0_125, %c0_126] : memref<1x128xf32, #tpu.memory_space<vmem>>, vector<1x128xf32>
    %120 = vector.broadcast %119 : vector<1x128xf32> to vector<64x128xf32>
    %121 = arith.addf %118, %120 : vector<64x128xf32>
    %cst_127 = arith.constant 0.000000e+00 : f32
    %122 = vector.broadcast %cst_127 : f32 to vector<64x128xf32>
    %123 = arith.maximumf %121, %122 : vector<64x128xf32>
    %124 = arith.truncf %123 : vector<64x128xf32> to vector<64x128xbf16>
    %c0_128 = arith.constant 0 : index
    %c0_129 = arith.constant 0 : index
    %125 = vector.load %arg16[%c0_128, %c0_129] : memref<128x256xbf16, #tpu.memory_space<vmem>>, vector<128x256xbf16>
    %cst_130 = arith.constant dense<0.000000e+00> : vector<64x256xf32>
    %126 = tpu.matmul %124, %125, %cst_130 {dimension_numbers = #tpu.dot_dimension_numbers<[1], [0], [0], [1], [0, 0, 1, 1], [], []>} : vector<64x128xbf16>, vector<128x256xbf16>, vector<64x256xf32> -> vector<64x256xf32>
    %c0_131 = arith.constant 0 : index
    %c0_132 = arith.constant 0 : index
    %127 = vector.load %arg17[%c0_131, %c0_132] : memref<1x256xf32, #tpu.memory_space<vmem>>, vector<1x256xf32>
    %128 = vector.broadcast %127 : vector<1x256xf32> to vector<64x256xf32>
    %129 = arith.addf %126, %128 : vector<64x256xf32>
    %130 = arith.extf %87 : vector<64x256xbf16> to vector<64x256xf32>
    %131 = arith.addf %129, %130 : vector<64x256xf32>
    %cst_133 = arith.constant 0.000000e+00 : f32
    %132 = vector.broadcast %cst_133 : f32 to vector<64x256xf32>
    %133 = arith.maximumf %131, %132 : vector<64x256xf32>
    %134 = arith.truncf %133 : vector<64x256xf32> to vector<64x256xbf16>
    %c0_134 = arith.constant 0 : index
    %c0_135 = arith.constant 0 : index
    %135 = vector.load %arg18[%c0_134, %c0_135] : memref<256x128xbf16, #tpu.memory_space<vmem>>, vector<256x128xbf16>
    %cst_136 = arith.constant dense<0.000000e+00> : vector<64x128xf32>
    %136 = tpu.matmul %134, %135, %cst_136 {dimension_numbers = #tpu.dot_dimension_numbers<[1], [0], [0], [1], [0, 0, 1, 1], [], []>} : vector<64x256xbf16>, vector<256x128xbf16>, vector<64x128xf32> -> vector<64x128xf32>
    %c0_137 = arith.constant 0 : index
    %c0_138 = arith.constant 0 : index
    %137 = vector.load %arg19[%c0_137, %c0_138] : memref<1x128xf32, #tpu.memory_space<vmem>>, vector<1x128xf32>
    %138 = vector.broadcast %137 : vector<1x128xf32> to vector<64x128xf32>
    %139 = arith.addf %136, %138 : vector<64x128xf32>
    %cst_139 = arith.constant 0.000000e+00 : f32
    %140 = vector.broadcast %cst_139 : f32 to vector<64x128xf32>
    %141 = arith.maximumf %139, %140 : vector<64x128xf32>
    %142 = vector.shape_cast %141 : vector<64x128xf32> to vector<8x8x128xf32>
    %143 = arith.truncf %142 : vector<8x8x128xf32> to vector<8x8x128xbf16>
    %c1_140 = arith.constant 1 : index
    %c1_141 = arith.constant 1 : index
    %c0_142 = arith.constant 0 : index
    %144 = vector.load %arg25[%c1_140, %c1_141, %c0_142] : memref<10x16x128xbf16, #tpu.memory_space<vmem>>, vector<8x8x128xbf16>
    tpu.vector_store %arg25[%c1_140, %c1_141, %c0_142], %143 {strides = array<i32>} : memref<10x16x128xbf16, #tpu.memory_space<vmem>>, vector<8x8x128xbf16>,
    %c0_143 = arith.constant 0 : index
    %c0_144 = arith.constant 0 : index
    %c0_145 = arith.constant 0 : index
    %145 = vector.load %arg25[%c0_143, %c0_144, %c0_145] : memref<10x16x128xbf16, #tpu.memory_space<vmem>>, vector<8x8x128xbf16>
    %146 = vector.shape_cast %145 : vector<8x8x128xbf16> to vector<64x128xbf16>
    %c0_146 = arith.constant 0 : index
    %c1_147 = arith.constant 1 : index
    %c0_148 = arith.constant 0 : index
    %147 = vector.load %arg25[%c0_146, %c1_147, %c0_148] : memref<10x16x128xbf16, #tpu.memory_space<vmem>>, vector<8x8x128xbf16>
    %148 = vector.shape_cast %147 : vector<8x8x128xbf16> to vector<64x128xbf16>
    %c0_149 = arith.constant 0 : index
    %c2_150 = arith.constant 2 : index
    %c0_151 = arith.constant 0 : index
    %149 = vector.load %arg25[%c0_149, %c2_150, %c0_151] : memref<10x16x128xbf16, #tpu.memory_space<vmem>>, vector<8x8x128xbf16>
    %150 = vector.shape_cast %149 : vector<8x8x128xbf16> to vector<64x128xbf16>
    %c1_152 = arith.constant 1 : index
    %c0_153 = arith.constant 0 : index
    %c0_154 = arith.constant 0 : index
    %151 = vector.load %arg25[%c1_152, %c0_153, %c0_154] : memref<10x16x128xbf16, #tpu.memory_space<vmem>>, vector<8x8x128xbf16>
    %152 = vector.shape_cast %151 : vector<8x8x128xbf16> to vector<64x128xbf16>
    %c1_155 = arith.constant 1 : index
    %c1_156 = arith.constant 1 : index
    %c0_157 = arith.constant 0 : index
    %153 = vector.load %arg25[%c1_155, %c1_156, %c0_157] : memref<10x16x128xbf16, #tpu.memory_space<vmem>>, vector<8x8x128xbf16>
    %154 = vector.shape_cast %153 : vector<8x8x128xbf16> to vector<64x128xbf16>
    %c1_158 = arith.constant 1 : index
    %c2_159 = arith.constant 2 : index
    %c0_160 = arith.constant 0 : index
    %155 = vector.load %arg25[%c1_158, %c2_159, %c0_160] : memref<10x16x128xbf16, #tpu.memory_space<vmem>>, vector<8x8x128xbf16>
    %156 = vector.shape_cast %155 : vector<8x8x128xbf16> to vector<64x128xbf16>
    %c2_161 = arith.constant 2 : index
    %c0_162 = arith.constant 0 : index
    %c0_163 = arith.constant 0 : index
    %157 = vector.load %arg25[%c2_161, %c0_162, %c0_163] : memref<10x16x128xbf16, #tpu.memory_space<vmem>>, vector<8x8x128xbf16>
    %158 = vector.shape_cast %157 : vector<8x8x128xbf16> to vector<64x128xbf16>
    %c2_164 = arith.constant 2 : index
    %c1_165 = arith.constant 1 : index
    %c0_166 = arith.constant 0 : index
    %159 = vector.load %arg25[%c2_164, %c1_165, %c0_166] : memref<10x16x128xbf16, #tpu.memory_space<vmem>>, vector<8x8x128xbf16>
    %160 = vector.shape_cast %159 : vector<8x8x128xbf16> to vector<64x128xbf16>
    %c2_167 = arith.constant 2 : index
    %c2_168 = arith.constant 2 : index
    %c0_169 = arith.constant 0 : index
    %161 = vector.load %arg25[%c2_167, %c2_168, %c0_169] : memref<10x16x128xbf16, #tpu.memory_space<vmem>>, vector<8x8x128xbf16>
    %162 = vector.shape_cast %161 : vector<8x8x128xbf16> to vector<64x128xbf16>
    %163 = tpu.concatenate %146, %148, %150, %152, %154, %156, %158, %160, %162 in 1 : vector<64x128xbf16>, vector<64x128xbf16>, vector<64x128xbf16>, vector<64x128xbf16>, vector<64x128xbf16>, vector<64x128xbf16>, vector<64x128xbf16>, vector<64x128xbf16>, vector<64x128xbf16> -> vector<64x1152xbf16>
    %c0_170 = arith.constant 0 : index
    %c0_171 = arith.constant 0 : index
    %164 = vector.load %arg20[%c0_170, %c0_171] : memref<1152x128xbf16, #tpu.memory_space<vmem>>, vector<1152x128xbf16>
    %cst_172 = arith.constant dense<0.000000e+00> : vector<64x128xf32>
    %165 = tpu.matmul %163, %164, %cst_172 {dimension_numbers = #tpu.dot_dimension_numbers<[1], [0], [0], [1], [0, 0, 1, 1], [], []>} : vector<64x1152xbf16>, vector<1152x128xbf16>, vector<64x128xf32> -> vector<64x128xf32>
    %c0_173 = arith.constant 0 : index
    %c0_174 = arith.constant 0 : index
    %166 = vector.load %arg21[%c0_173, %c0_174] : memref<1x128xf32, #tpu.memory_space<vmem>>, vector<1x128xf32>
    %167 = vector.broadcast %166 : vector<1x128xf32> to vector<64x128xf32>
    %168 = arith.addf %165, %167 : vector<64x128xf32>
    %cst_175 = arith.constant 0.000000e+00 : f32
    %169 = vector.broadcast %cst_175 : f32 to vector<64x128xf32>
    %170 = arith.maximumf %168, %169 : vector<64x128xf32>
    %171 = arith.truncf %170 : vector<64x128xf32> to vector<64x128xbf16>
    %c0_176 = arith.constant 0 : index
    %c0_177 = arith.constant 0 : index
    %172 = vector.load %arg22[%c0_176, %c0_177] : memref<128x256xbf16, #tpu.memory_space<vmem>>, vector<128x256xbf16>
    %cst_178 = arith.constant dense<0.000000e+00> : vector<64x256xf32>
    %173 = tpu.matmul %171, %172, %cst_178 {dimension_numbers = #tpu.dot_dimension_numbers<[1], [0], [0], [1], [0, 0, 1, 1], [], []>} : vector<64x128xbf16>, vector<128x256xbf16>, vector<64x256xf32> -> vector<64x256xf32>
    %c0_179 = arith.constant 0 : index
    %c0_180 = arith.constant 0 : index
    %174 = vector.load %arg23[%c0_179, %c0_180] : memref<1x256xf32, #tpu.memory_space<vmem>>, vector<1x256xf32>
    %175 = vector.broadcast %174 : vector<1x256xf32> to vector<64x256xf32>
    %176 = arith.addf %173, %175 : vector<64x256xf32>
    %177 = arith.extf %134 : vector<64x256xbf16> to vector<64x256xf32>
    %178 = arith.addf %176, %177 : vector<64x256xf32>
    %cst_181 = arith.constant 0.000000e+00 : f32
    %179 = vector.broadcast %cst_181 : f32 to vector<64x256xf32>
    %180 = arith.maximumf %178, %179 : vector<64x256xf32>
    %181 = vector.shape_cast %180 : vector<64x256xf32> to vector<8x8x256xf32>
    %c0_182 = arith.constant 0 : index
    %c0_183 = arith.constant 0 : index
    %c0_184 = arith.constant 0 : index
    %c0_185 = arith.constant 0 : index
    %182 = vector.load %arg24[%c0_182, %c0_183, %c0_184, %c0_185] : memref<1x8x8x256xf32, #tpu.memory_space<vmem>>, vector<1x8x8x256xf32>
    %183 = vector.shape_cast %182 : vector<1x8x8x256xf32> to vector<8x8x256xf32>
    %184 = vector.shape_cast %181 : vector<8x8x256xf32> to vector<1x8x8x256xf32>
    tpu.vector_store %arg24[%c0_182, %c0_183, %c0_184, %c0_185], %184 {strides = array<i32>} : memref<1x8x8x256xf32, #tpu.memory_space<vmem>>, vector<1x8x8x256xf32>,
    return
  }
  func.func @transform_0(%arg0: i32) -> (i32, i32, i32) {
    %c0_i32 = arith.constant 0 : i32
    %c0_i32_0 = arith.constant 0 : i32
    %c0_i32_1 = arith.constant 0 : i32
    return %arg0, %c0_i32, %c0_i32_0 : i32, i32, i32
  }
  func.func @transform_1(%arg0: i32) -> (i32, i32) {
    %c0_i32 = arith.constant 0 : i32
    %c0_i32_0 = arith.constant 0 : i32
    %c0_i32_1 = arith.constant 0 : i32
    return %c0_i32, %c0_i32_0 : i32, i32
  }
  func.func @transform_2(%arg0: i32) -> (i32, i32) {
    %c0_i32 = arith.constant 0 : i32
    %c0_i32_0 = arith.constant 0 : i32
    %c0_i32_1 = arith.constant 0 : i32
    return %c0_i32, %c0_i32_0 : i32, i32
  }
  func.func @transform_3(%arg0: i32) -> (i32, i32) {
    %c0_i32 = arith.constant 0 : i32
    %c0_i32_0 = arith.constant 0 : i32
    %c0_i32_1 = arith.constant 0 : i32
    return %c0_i32, %c0_i32_0 : i32, i32
  }
  func.func @transform_4(%arg0: i32) -> (i32, i32) {
    %c0_i32 = arith.constant 0 : i32
    %c0_i32_0 = arith.constant 0 : i32
    %c0_i32_1 = arith.constant 0 : i32
    return %c0_i32, %c0_i32_0 : i32, i32
  }
  func.func @transform_5(%arg0: i32) -> (i32, i32) {
    %c0_i32 = arith.constant 0 : i32
    %c0_i32_0 = arith.constant 0 : i32
    %c0_i32_1 = arith.constant 0 : i32
    return %c0_i32, %c0_i32_0 : i32, i32
  }
  func.func @transform_6(%arg0: i32) -> (i32, i32) {
    %c0_i32 = arith.constant 0 : i32
    %c0_i32_0 = arith.constant 0 : i32
    %c0_i32_1 = arith.constant 0 : i32
    return %c0_i32, %c0_i32_0 : i32, i32
  }
  func.func @transform_7(%arg0: i32) -> (i32, i32) {
    %c0_i32 = arith.constant 0 : i32
    %c0_i32_0 = arith.constant 0 : i32
    %c0_i32_1 = arith.constant 0 : i32
    return %c0_i32, %c0_i32_0 : i32, i32
  }
  func.func @transform_8(%arg0: i32) -> (i32, i32) {
    %c0_i32 = arith.constant 0 : i32
    %c0_i32_0 = arith.constant 0 : i32
    %c0_i32_1 = arith.constant 0 : i32
    return %c0_i32, %c0_i32_0 : i32, i32
  }
  func.func @transform_9(%arg0: i32) -> (i32, i32) {
    %c0_i32 = arith.constant 0 : i32
    %c0_i32_0 = arith.constant 0 : i32
    %c0_i32_1 = arith.constant 0 : i32
    return %c0_i32, %c0_i32_0 : i32, i32
  }
  func.func @transform_10(%arg0: i32) -> (i32, i32) {
    %c0_i32 = arith.constant 0 : i32
    %c0_i32_0 = arith.constant 0 : i32
    %c0_i32_1 = arith.constant 0 : i32
    return %c0_i32, %c0_i32_0 : i32, i32
  }
  func.func @transform_11(%arg0: i32) -> (i32, i32) {
    %c0_i32 = arith.constant 0 : i32
    %c0_i32_0 = arith.constant 0 : i32
    %c0_i32_1 = arith.constant 0 : i32
    return %c0_i32, %c0_i32_0 : i32, i32
  }
  func.func @transform_12(%arg0: i32) -> (i32, i32) {
    %c0_i32 = arith.constant 0 : i32
    %c0_i32_0 = arith.constant 0 : i32
    %c0_i32_1 = arith.constant 0 : i32
    return %c0_i32, %c0_i32_0 : i32, i32
  }
  func.func @transform_13(%arg0: i32) -> (i32, i32) {
    %c0_i32 = arith.constant 0 : i32
    %c0_i32_0 = arith.constant 0 : i32
    %c0_i32_1 = arith.constant 0 : i32
    return %c0_i32, %c0_i32_0 : i32, i32
  }
  func.func @transform_14(%arg0: i32) -> (i32, i32) {
    %c0_i32 = arith.constant 0 : i32
    %c0_i32_0 = arith.constant 0 : i32
    %c0_i32_1 = arith.constant 0 : i32
    return %c0_i32, %c0_i32_0 : i32, i32
  }
  func.func @transform_15(%arg0: i32) -> (i32, i32) {
    %c0_i32 = arith.constant 0 : i32
    %c0_i32_0 = arith.constant 0 : i32
    %c0_i32_1 = arith.constant 0 : i32
    return %c0_i32, %c0_i32_0 : i32, i32
  }
  func.func @transform_16(%arg0: i32) -> (i32, i32) {
    %c0_i32 = arith.constant 0 : i32
    %c0_i32_0 = arith.constant 0 : i32
    %c0_i32_1 = arith.constant 0 : i32
    return %c0_i32, %c0_i32_0 : i32, i32
  }
  func.func @transform_17(%arg0: i32) -> (i32, i32) {
    %c0_i32 = arith.constant 0 : i32
    %c0_i32_0 = arith.constant 0 : i32
    %c0_i32_1 = arith.constant 0 : i32
    return %c0_i32, %c0_i32_0 : i32, i32
  }
  func.func @transform_18(%arg0: i32) -> (i32, i32) {
    %c0_i32 = arith.constant 0 : i32
    %c0_i32_0 = arith.constant 0 : i32
    %c0_i32_1 = arith.constant 0 : i32
    return %c0_i32, %c0_i32_0 : i32, i32
  }
  func.func @transform_19(%arg0: i32) -> (i32, i32) {
    %c0_i32 = arith.constant 0 : i32
    %c0_i32_0 = arith.constant 0 : i32
    %c0_i32_1 = arith.constant 0 : i32
    return %c0_i32, %c0_i32_0 : i32, i32
  }
  func.func @transform_20(%arg0: i32) -> (i32, i32) {
    %c0_i32 = arith.constant 0 : i32
    %c0_i32_0 = arith.constant 0 : i32
    %c0_i32_1 = arith.constant 0 : i32
    return %c0_i32, %c0_i32_0 : i32, i32
  }
  func.func @transform_21(%arg0: i32) -> (i32, i32) {
    %c0_i32 = arith.constant 0 : i32
    %c0_i32_0 = arith.constant 0 : i32
    %c0_i32_1 = arith.constant 0 : i32
    return %c0_i32, %c0_i32_0 : i32, i32
  }
  func.func @transform_22(%arg0: i32) -> (i32, i32) {
    %c0_i32 = arith.constant 0 : i32
    %c0_i32_0 = arith.constant 0 : i32
    %c0_i32_1 = arith.constant 0 : i32
    return %c0_i32, %c0_i32_0 : i32, i32
  }
  func.func @transform_23(%arg0: i32) -> (i32, i32, i32, i32) {
    %c0_i32 = arith.constant 0 : i32
    %c0_i32_0 = arith.constant 0 : i32
    %c0_i32_1 = arith.constant 0 : i32
    %c0_i32_2 = arith.constant 0 : i32
    return %arg0, %c0_i32, %c0_i32_0, %c0_i32_1 : i32, i32, i32, i32
  }
}

</mosaic_0001>

<llo_original>
// kernel: head_forward.1
$region0: #{head_forward.1}
  #allocation0 [shape = 'u32[]', space=smem, size = 0x4, offset = 0x4, fixed_abs, tag = 'smem constant byte address 0x4 - core index']
  #allocation1 [shape = 'u32[72,128]{1,0:T(1,128)}', space=vmem, size = 0x9000, scoped, tag = 'internal scratch']
  #allocation2 [shape = 'bf16[10,16,128]{2,1,0:T(8,128)(2,1)}', space=vmem, size = 0xa000, scoped, tag = 'scratch operand']
  %s0 = inlined_call_operand.vmem [shape: bf16[2,256,192], index: 0, kind: input, shape index: {}]
  %s1 = inlined_call_operand.vmem [shape: bf16[192,128], index: 1, kind: input, shape index: {}]
  %s2 = inlined_call_operand.vmem [shape: f32[1,128], index: 2, kind: input, shape index: {}]
  %s3 = inlined_call_operand.vmem [shape: bf16[128,128], index: 3, kind: input, shape index: {}]
  %s4 = inlined_call_operand.vmem [shape: f32[1,128], index: 4, kind: input, shape index: {}]
  %s5 = inlined_call_operand.vmem [shape: bf16[1152,128], index: 5, kind: input, shape index: {}]
  %s6 = inlined_call_operand.vmem [shape: f32[1,128], index: 6, kind: input, shape index: {}]
  %s7 = inlined_call_operand.vmem [shape: bf16[128,256], index: 7, kind: input, shape index: {}]
  %s8 = inlined_call_operand.vmem [shape: f32[1,256], index: 8, kind: input, shape index: {}]
  %s9 = inlined_call_operand.vmem [shape: bf16[128,256], index: 9, kind: input, shape index: {}]
  %s10 = inlined_call_operand.vmem [shape: f32[1,256], index: 10, kind: input, shape index: {}]
  %s11 = inlined_call_operand.vmem [shape: bf16[256,128], index: 11, kind: input, shape index: {}]
  %s12 = inlined_call_operand.vmem [shape: f32[1,128], index: 12, kind: input, shape index: {}]
  %s13 = inlined_call_operand.vmem [shape: bf16[1152,128], index: 13, kind: input, shape index: {}]
  %s14 = inlined_call_operand.vmem [shape: f32[1,128], index: 14, kind: input, shape index: {}]
  %s15 = inlined_call_operand.vmem [shape: bf16[128,256], index: 15, kind: input, shape index: {}]
  %s16 = inlined_call_operand.vmem [shape: f32[1,256], index: 16, kind: input, shape index: {}]
  %s17 = inlined_call_operand.vmem [shape: bf16[256,128], index: 17, kind: input, shape index: {}]
  %s18 = inlined_call_operand.vmem [shape: f32[1,128], index: 18, kind: input, shape index: {}]
  %s19 = inlined_call_operand.vmem [shape: bf16[1152,128], index: 19, kind: input, shape index: {}]
  %s20 = inlined_call_operand.vmem [shape: f32[1,128], index: 20, kind: input, shape index: {}]
  %s21 = inlined_call_operand.vmem [shape: bf16[128,256], index: 21, kind: input, shape index: {}]
  %s22 = inlined_call_operand.vmem [shape: f32[1,256], index: 22, kind: input, shape index: {}]
  %s23 = inlined_call_operand.hbm [shape: f32[2,8,8,256], index: 23, kind: output, shape index: {}]
  %s24 = sld [smem:[#allocation0]]
  $region125: #{head_forward.1} parent=0
    _
  %s26 = ssub.s32 1, %s24
  %s27 = scalar_select 0, %s26, %s24
  $region1: #{head_forward.1} parent=0
    #allocation3 [shape = 'u8[131072]{0}', space=vmem, size = 0x20000, scoped, tag = 'output window, operand 0']
    #allocation4 [shape = 's32[2]{0}', space=sflag, size = 0x8, scoped, tag = 'scoped memory for head_forward.1']
    %28 = vsyncpa [#allocation4], 0
    %s29 = scalar_lea.sflag [#allocation4], 1
    %30 = vsyncpa %s29, 0
    loop: start=0, step=1, limit=4
    $region2: #{head_forward.1} parent=1 // loop_pre_header
      _
    $region3: #{head_forward.1} parent=1 // loop_header
      %s32 = sphi 0, %s36
      %p33 = scmp.ge.s32.totalorder %s32, 4
      %s42 = sphi 0, %s44
      %s45 = sphi 0, %s42
      %s46 = sphi 0, %s45
      %s62 = sphi 0, %s46
      %s66 = sphi 0, %s66
      %s68 = sphi 0, %s66
      %s69 = sphi 0, %s68
      %s83 = sphi 0, %s69
      %s87 = sphi 0, %s87
      %s89 = sphi 0, %s87
      %s90 = sphi 0, %s89
      %s104 = sphi 0, %s90
      %s108 = sphi 0, %s108
      %s110 = sphi 0, %s108
      %s111 = sphi 0, %s110
      %s125 = sphi 0, %s111
      %s129 = sphi 0, %s129
      %s131 = sphi 0, %s129
      %s132 = sphi 0, %s131
      %s146 = sphi 0, %s132
      %s150 = sphi 0, %s150
      %s152 = sphi 0, %s150
      %s153 = sphi 0, %s152
      %s167 = sphi 0, %s153
      %s171 = sphi 0, %s171
      %s173 = sphi 0, %s171
      %s174 = sphi 0, %s173
      %s188 = sphi 0, %s174
      %s192 = sphi 0, %s192
      %s194 = sphi 0, %s192
      %s195 = sphi 0, %s194
      %s209 = sphi 0, %s195
      %s213 = sphi 0, %s213
      %s215 = sphi 0, %s213
      %s216 = sphi 0, %s215
      %s230 = sphi 0, %s216
      %s234 = sphi 0, %s234
      %s236 = sphi 0, %s234
      %s237 = sphi 0, %s236
      %s251 = sphi 0, %s237
      %s255 = sphi 0, %s255
      %s257 = sphi 0, %s255
      %s258 = sphi 0, %s257
      %s272 = sphi 0, %s258
      %s276 = sphi 0, %s276
      %s278 = sphi 0, %s276
      %s279 = sphi 0, %s278
      %s293 = sphi 0, %s279
      %s297 = sphi 0, %s297
      %s299 = sphi 0, %s297
      %s300 = sphi 0, %s299
      %s314 = sphi 0, %s300
      %s318 = sphi 0, %s318
      %s320 = sphi 0, %s318
      %s321 = sphi 0, %s320
      %s335 = sphi 0, %s321
      %s339 = sphi 0, %s339
      %s341 = sphi 0, %s339
      %s342 = sphi 0, %s341
      %s356 = sphi 0, %s342
      %s360 = sphi 0, %s360
      %s362 = sphi 0, %s360
      %s363 = sphi 0, %s362
      %s377 = sphi 0, %s363
      %s381 = sphi 0, %s381
      %s383 = sphi 0, %s381
      %s384 = sphi 0, %s383
      %s398 = sphi 0, %s384
      %s402 = sphi 0, %s402
      %s404 = sphi 0, %s402
      %s405 = sphi 0, %s404
      %s419 = sphi 0, %s405
      %s423 = sphi 0, %s423
      %s425 = sphi 0, %s423
      %s426 = sphi 0, %s425
      %s440 = sphi 0, %s426
      %s444 = sphi 0, %s444
      %s446 = sphi 0, %s444
      %s447 = sphi 0, %s446
      %s461 = sphi 0, %s447
      %s465 = sphi 0, %s465
      %s467 = sphi 0, %s465
      %s468 = sphi 0, %s467
      %s482 = sphi 0, %s468
      %s486 = sphi 0, %s486
      %s488 = sphi 0, %s486
      %s489 = sphi 0, %s488
      %s503 = sphi 0, %s489
      %s507 = sphi 0, %s507
      %s509 = sphi 0, %s507
      %s510 = sphi 0, %s509
      %s524 = sphi 0, %s510
      %s530 = sphi 0, %s532
      %s533 = sphi 0, %s530
      %s534 = sphi 0, %s533
      %s550 = sphi 0, %s534
    $region4: #{head_forward.1} parent=1 // loop_header_branch
      %35 = sbr.rel (%p33) target = $region8
    $region5: #{head_forward.1} parent=1 // loop_body
      %s37 = ssub.s32 %s32, 1
      %s38 = ssub.s32 %s32, 2
      %s39 = sadd.s32 %s32, 1
      %s40 = ssub.s32 %s32, %s39
      %p41 = scmp.eq.s32.totalorder %s40, 0
      %s43 = sadd.s32 %s42, 1
      %s44 = scalar_select %p41, %s42, %s43
      %p47 = pneg %p41
      %p48 = scmp.eq.s32.totalorder %s32, 1
      %p49 = por %p47, %p48
      %p50 = scmp.ne.s32.totalorder %s42, %s45
      %p51 = scmp.eq.s32.totalorder %s32, 0
      %p52 = por %p50, %p51
      %p53 = scmp.ne.s32.totalorder %s42, %s45
      %p54 = scmp.eq.s32.totalorder %s37, 1
      %p55 = por %p53, %p54
      %p56 = scmp.ne.s32.totalorder %s45, %s46
      %p57 = scmp.eq.s32.totalorder %s37, 0
      %p58 = por %p56, %p57
      %p59 = scmp.ne.s32.totalorder %s45, %s46
      %p60 = scmp.eq.s32.totalorder %s38, 1
      %p61 = por %p59, %p60
      %p63 = scmp.ne.s32.totalorder %s46, %s62
      %p64 = scmp.eq.s32.totalorder %s38, 0
      %p65 = por %p63, %p64
      %s67 = sadd.s32 %s66, 1
      %p70 = scmp.eq.s32.totalorder %s32, 1
      %p71 = scmp.ne.s32.totalorder %s66, %s68
      %p72 = scmp.eq.s32.totalorder %s32, 0
      %p73 = por %p71, %p72
      %p74 = scmp.ne.s32.totalorder %s66, %s68
      %p75 = scmp.eq.s32.totalorder %s37, 1
      %p76 = por %p74, %p75
      %p77 = scmp.ne.s32.totalorder %s68, %s69
      %p78 = scmp.eq.s32.totalorder %s37, 0
      %p79 = por %p77, %p78
      %p80 = scmp.ne.s32.totalorder %s68, %s69
      %p81 = scmp.eq.s32.totalorder %s38, 1
      %p82 = por %p80, %p81
      %p84 = scmp.ne.s32.totalorder %s69, %s83
      %p85 = scmp.eq.s32.totalorder %s38, 0
      %p86 = por %p84, %p85
      %s88 = sadd.s32 %s87, 1
      %p91 = scmp.eq.s32.totalorder %s32, 1
      %p92 = scmp.ne.s32.totalorder %s87, %s89
      %p93 = scmp.eq.s32.totalorder %s32, 0
      %p94 = por %p92, %p93
      %p95 = scmp.ne.s32.totalorder %s87, %s89
      %p96 = scmp.eq.s32.totalorder %s37, 1
      %p97 = por %p95, %p96
      %p98 = scmp.ne.s32.totalorder %s89, %s90
      %p99 = scmp.eq.s32.totalorder %s37, 0
      %p100 = por %p98, %p99
      %p101 = scmp.ne.s32.totalorder %s89, %s90
      %p102 = scmp.eq.s32.totalorder %s38, 1
      %p103 = por %p101, %p102
      %p105 = scmp.ne.s32.totalorder %s90, %s104
      %p106 = scmp.eq.s32.totalorder %s38, 0
      %p107 = por %p105, %p106
      %s109 = sadd.s32 %s108, 1
      %p112 = scmp.eq.s32.totalorder %s32, 1
      %p113 = scmp.ne.s32.totalorder %s108, %s110
      %p114 = scmp.eq.s32.totalorder %s32, 0
      %p115 = por %p113, %p114
      %p116 = scmp.ne.s32.totalorder %s108, %s110
      %p117 = scmp.eq.s32.totalorder %s37, 1
      %p118 = por %p116, %p117
      %p119 = scmp.ne.s32.totalorder %s110, %s111
      %p120 = scmp.eq.s32.totalorder %s37, 0
      %p121 = por %p119, %p120
      %p122 = scmp.ne.s32.totalorder %s110, %s111
      %p123 = scmp.eq.s32.totalorder %s38, 1
      %p124 = por %p122, %p123
      %p126 = scmp.ne.s32.totalorder %s111, %s125
      %p127 = scmp.eq.s32.totalorder %s38, 0
      %p128 = por %p126, %p127
      %s130 = sadd.s32 %s129, 1
      %p133 = scmp.eq.s32.totalorder %s32, 1
      %p134 = scmp.ne.s32.totalorder %s129, %s131
      %p135 = scmp.eq.s32.totalorder %s32, 0
      %p136 = por %p134, %p135
      %p137 = scmp.ne.s32.totalorder %s129, %s131
      %p138 = scmp.eq.s32.totalorder %s37, 1
      %p139 = por %p137, %p138
      %p140 = scmp.ne.s32.totalorder %s131, %s132
      %p141 = scmp.eq.s32.totalorder %s37, 0
      %p142 = por %p140, %p141
      %p143 = scmp.ne.s32.totalorder %s131, %s132
      %p144 = scmp.eq.s32.totalorder %s38, 1
      %p145 = por %p143, %p144
      %p147 = scmp.ne.s32.totalorder %s132, %s146
      %p148 = scmp.eq.s32.totalorder %s38, 0
      %p149 = por %p147, %p148
      %s151 = sadd.s32 %s150, 1
      %p154 = scmp.eq.s32.totalorder %s32, 1
      %p155 = scmp.ne.s32.totalorder %s150, %s152
      %p156 = scmp.eq.s32.totalorder %s32, 0
      %p157 = por %p155, %p156
      %p158 = scmp.ne.s32.totalorder %s150, %s152
      %p159 = scmp.eq.s32.totalorder %s37, 1
      %p160 = por %p158, %p159
      %p161 = scmp.ne.s32.totalorder %s152, %s153
      %p162 = scmp.eq.s32.totalorder %s37, 0
      %p163 = por %p161, %p162
      %p164 = scmp.ne.s32.totalorder %s152, %s153
      %p165 = scmp.eq.s32.totalorder %s38, 1
      %p166 = por %p164, %p165
      %p168 = scmp.ne.s32.totalorder %s153, %s167
      %p169 = scmp.eq.s32.totalorder %s38, 0
      %p170 = por %p168, %p169
      %s172 = sadd.s32 %s171, 1
      %p175 = scmp.eq.s32.totalorder %s32, 1
      %p176 = scmp.ne.s32.totalorder %s171, %s173
      %p177 = scmp.eq.s32.totalorder %s32, 0
      %p178 = por %p176, %p177
      %p179 = scmp.ne.s32.totalorder %s171, %s173
      %p180 = scmp.eq.s32.totalorder %s37, 1
      %p181 = por %p179, %p180
      %p182 = scmp.ne.s32.totalorder %s173, %s174
      %p183 = scmp.eq.s32.totalorder %s37, 0
      %p184 = por %p182, %p183
      %p185 = scmp.ne.s32.totalorder %s173, %s174
      %p186 = scmp.eq.s32.totalorder %s38, 1
      %p187 = por %p185, %p186
      %p189 = scmp.ne.s32.totalorder %s174, %s188
      %p190 = scmp.eq.s32.totalorder %s38, 0
      %p191 = por %p189, %p190
      %s193 = sadd.s32 %s192, 1
      %p196 = scmp.eq.s32.totalorder %s32, 1
      %p197 = scmp.ne.s32.totalorder %s192, %s194
      %p198 = scmp.eq.s32.totalorder %s32, 0
      %p199 = por %p197, %p198
      %p200 = scmp.ne.s32.totalorder %s192, %s194
      %p201 = scmp.eq.s32.totalorder %s37, 1
      %p202 = por %p200, %p201
      %p203 = scmp.ne.s32.totalorder %s194, %s195
      %p204 = scmp.eq.s32.totalorder %s37, 0
      %p205 = por %p203, %p204
      %p206 = scmp.ne.s32.totalorder %s194, %s195
      %p207 = scmp.eq.s32.totalorder %s38, 1
      %p208 = por %p206, %p207
      %p210 = scmp.ne.s32.totalorder %s195, %s209
      %p211 = scmp.eq.s32.totalorder %s38, 0
      %p212 = por %p210, %p211
      %s214 = sadd.s32 %s213, 1
      %p217 = scmp.eq.s32.totalorder %s32, 1
      %p218 = scmp.ne.s32.totalorder %s213, %s215
      %p219 = scmp.eq.s32.totalorder %s32, 0
      %p220 = por %p218, %p219
      %p221 = scmp.ne.s32.totalorder %s213, %s215
      %p222 = scmp.eq.s32.totalorder %s37, 1
      %p223 = por %p221, %p222
      %p224 = scmp.ne.s32.totalorder %s215, %s216
      %p225 = scmp.eq.s32.totalorder %s37, 0
      %p226 = por %p224, %p225
      %p227 = scmp.ne.s32.totalorder %s215, %s216
      %p228 = scmp.eq.s32.totalorder %s38, 1
      %p229 = por %p227, %p228
      %p231 = scmp.ne.s32.totalorder %s216, %s230
      %p232 = scmp.eq.s32.totalorder %s38, 0
      %p233 = por %p231, %p232
      %s235 = sadd.s32 %s234, 1
      %p238 = scmp.eq.s32.totalorder %s32, 1
      %p239 = scmp.ne.s32.totalorder %s234, %s236
      %p240 = scmp.eq.s32.totalorder %s32, 0
      %p241 = por %p239, %p240
      %p242 = scmp.ne.s32.totalorder %s234, %s236
      %p243 = scmp.eq.s32.totalorder %s37, 1
      %p244 = por %p242, %p243
      %p245 = scmp.ne.s32.totalorder %s236, %s237
      %p246 = scmp.eq.s32.totalorder %s37, 0
      %p247 = por %p245, %p246
      %p248 = scmp.ne.s32.totalorder %s236, %s237
      %p249 = scmp.eq.s32.totalorder %s38, 1
      %p250 = por %p248, %p249
      %p252 = scmp.ne.s32.totalorder %s237, %s251
      %p253 = scmp.eq.s32.totalorder %s38, 0
      %p254 = por %p252, %p253
      %s256 = sadd.s32 %s255, 1
      %p259 = scmp.eq.s32.totalorder %s32, 1
      %p260 = scmp.ne.s32.totalorder %s255, %s257
      %p261 = scmp.eq.s32.totalorder %s32, 0
      %p262 = por %p260, %p261
      %p263 = scmp.ne.s32.totalorder %s255, %s257
      %p264 = scmp.eq.s32.totalorder %s37, 1
      %p265 = por %p263, %p264
      %p266 = scmp.ne.s32.totalorder %s257, %s258
      %p267 = scmp.eq.s32.totalorder %s37, 0
      %p268 = por %p266, %p267
      %p269 = scmp.ne.s32.totalorder %s257, %s258
      %p270 = scmp.eq.s32.totalorder %s38, 1
      %p271 = por %p269, %p270
      %p273 = scmp.ne.s32.totalorder %s258, %s272
      %p274 = scmp.eq.s32.totalorder %s38, 0
      %p275 = por %p273, %p274
      %s277 = sadd.s32 %s276, 1
      %p280 = scmp.eq.s32.totalorder %s32, 1
      %p281 = scmp.ne.s32.totalorder %s276, %s278
      %p282 = scmp.eq.s32.totalorder %s32, 0
      %p283 = por %p281, %p282
      %p284 = scmp.ne.s32.totalorder %s276, %s278
      %p285 = scmp.eq.s32.totalorder %s37, 1
      %p286 = por %p284, %p285
      %p287 = scmp.ne.s32.totalorder %s278, %s279
      %p288 = scmp.eq.s32.totalorder %s37, 0
      %p289 = por %p287, %p288
      %p290 = scmp.ne.s32.totalorder %s278, %s279
      %p291 = scmp.eq.s32.totalorder %s38, 1
      %p292 = por %p290, %p291
      %p294 = scmp.ne.s32.totalorder %s279, %s293
      %p295 = scmp.eq.s32.totalorder %s38, 0
      %p296 = por %p294, %p295
      %s298 = sadd.s32 %s297, 1
      %p301 = scmp.eq.s32.totalorder %s32, 1
      %p302 = scmp.ne.s32.totalorder %s297, %s299
      %p303 = scmp.eq.s32.totalorder %s32, 0
      %p304 = por %p302, %p303
      %p305 = scmp.ne.s32.totalorder %s297, %s299
      %p306 = scmp.eq.s32.totalorder %s37, 1
      %p307 = por %p305, %p306
      %p308 = scmp.ne.s32.totalorder %s299, %s300
      %p309 = scmp.eq.s32.totalorder %s37, 0
      %p310 = por %p308, %p309
      %p311 = scmp.ne.s32.totalorder %s299, %s300
      %p312 = scmp.eq.s32.totalorder %s38, 1
      %p313 = por %p311, %p312
      %p315 = scmp.ne.s32.totalorder %s300, %s314
      %p316 = scmp.eq.s32.totalorder %s38, 0
      %p317 = por %p315, %p316
      %s319 = sadd.s32 %s318, 1
      %p322 = scmp.eq.s32.totalorder %s32, 1
      %p323 = scmp.ne.s32.totalorder %s318, %s320
      %p324 = scmp.eq.s32.totalorder %s32, 0
      %p325 = por %p323, %p324
      %p326 = scmp.ne.s32.totalorder %s318, %s320
      %p327 = scmp.eq.s32.totalorder %s37, 1
      %p328 = por %p326, %p327
      %p329 = scmp.ne.s32.totalorder %s320, %s321
      %p330 = scmp.eq.s32.totalorder %s37, 0
      %p331 = por %p329, %p330
      %p332 = scmp.ne.s32.totalorder %s320, %s321
      %p333 = scmp.eq.s32.totalorder %s38, 1
      %p334 = por %p332, %p333
      %p336 = scmp.ne.s32.totalorder %s321, %s335
      %p337 = scmp.eq.s32.totalorder %s38, 0
      %p338 = por %p336, %p337
      %s340 = sadd.s32 %s339, 1
      %p343 = scmp.eq.s32.totalorder %s32, 1
      %p344 = scmp.ne.s32.totalorder %s339, %s341
      %p345 = scmp.eq.s32.totalorder %s32, 0
      %p346 = por %p344, %p345
      %p347 = scmp.ne.s32.totalorder %s339, %s341
      %p348 = scmp.eq.s32.totalorder %s37, 1
      %p349 = por %p347, %p348
      %p350 = scmp.ne.s32.totalorder %s341, %s342
      %p351 = scmp.eq.s32.totalorder %s37, 0
      %p352 = por %p350, %p351
      %p353 = scmp.ne.s32.totalorder %s341, %s342
      %p354 = scmp.eq.s32.totalorder %s38, 1
      %p355 = por %p353, %p354
      %p357 = scmp.ne.s32.totalorder %s342, %s356
      %p358 = scmp.eq.s32.totalorder %s38, 0
      %p359 = por %p357, %p358
      %s361 = sadd.s32 %s360, 1
      %p364 = scmp.eq.s32.totalorder %s32, 1
      %p365 = scmp.ne.s32.totalorder %s360, %s362
      %p366 = scmp.eq.s32.totalorder %s32, 0
      %p367 = por %p365, %p366
      %p368 = scmp.ne.s32.totalorder %s360, %s362
      %p369 = scmp.eq.s32.totalorder %s37, 1
      %p370 = por %p368, %p369
      %p371 = scmp.ne.s32.totalorder %s362, %s363
      %p372 = scmp.eq.s32.totalorder %s37, 0
      %p373 = por %p371, %p372
      %p374 = scmp.ne.s32.totalorder %s362, %s363
      %p375 = scmp.eq.s32.totalorder %s38, 1
      %p376 = por %p374, %p375
      %p378 = scmp.ne.s32.totalorder %s363, %s377
      %p379 = scmp.eq.s32.totalorder %s38, 0
      %p380 = por %p378, %p379
      %s382 = sadd.s32 %s381, 1
      %p385 = scmp.eq.s32.totalorder %s32, 1
      %p386 = scmp.ne.s32.totalorder %s381, %s383
      %p387 = scmp.eq.s32.totalorder %s32, 0
      %p388 = por %p386, %p387
      %p389 = scmp.ne.s32.totalorder %s381, %s383
      %p390 = scmp.eq.s32.totalorder %s37, 1
      %p391 = por %p389, %p390
      %p392 = scmp.ne.s32.totalorder %s383, %s384
      %p393 = scmp.eq.s32.totalorder %s37, 0
      %p394 = por %p392, %p393
      %p395 = scmp.ne.s32.totalorder %s383, %s384
      %p396 = scmp.eq.s32.totalorder %s38, 1
      %p397 = por %p395, %p396
      %p399 = scmp.ne.s32.totalorder %s384, %s398
      %p400 = scmp.eq.s32.totalorder %s38, 0
      %p401 = por %p399, %p400
      %s403 = sadd.s32 %s402, 1
      %p406 = scmp.eq.s32.totalorder %s32, 1
      %p407 = scmp.ne.s32.totalorder %s402, %s404
      %p408 = scmp.eq.s32.totalorder %s32, 0
      %p409 = por %p407, %p408
      %p410 = scmp.ne.s32.totalorder %s402, %s404
      %p411 = scmp.eq.s32.totalorder %s37, 1
      %p412 = por %p410, %p411
      %p413 = scmp.ne.s32.totalorder %s404, %s405
      %p414 = scmp.eq.s32.totalorder %s37, 0
      %p415 = por %p413, %p414
      %p416 = scmp.ne.s32.totalorder %s404, %s405
      %p417 = scmp.eq.s32.totalorder %s38, 1
      %p418 = por %p416, %p417
      %p420 = scmp.ne.s32.totalorder %s405, %s419
      %p421 = scmp.eq.s32.totalorder %s38, 0
      %p422 = por %p420, %p421
      %s424 = sadd.s32 %s423, 1
      %p427 = scmp.eq.s32.totalorder %s32, 1
      %p428 = scmp.ne.s32.totalorder %s423, %s425
      %p429 = scmp.eq.s32.totalorder %s32, 0
      %p430 = por %p428, %p429
      %p431 = scmp.ne.s32.totalorder %s423, %s425
      %p432 = scmp.eq.s32.totalorder %s37, 1
      %p433 = por %p431, %p432
      %p434 = scmp.ne.s32.totalorder %s425, %s426
      %p435 = scmp.eq.s32.totalorder %s37, 0
      %p436 = por %p434, %p435
      %p437 = scmp.ne.s32.totalorder %s425, %s426
      %p438 = scmp.eq.s32.totalorder %s38, 1
      %p439 = por %p437, %p438
      %p441 = scmp.ne.s32.totalorder %s426, %s440
      %p442 = scmp.eq.s32.totalorder %s38, 0
      %p443 = por %p441, %p442
      %s445 = sadd.s32 %s444, 1
      %p448 = scmp.eq.s32.totalorder %s32, 1
      %p449 = scmp.ne.s32.totalorder %s444, %s446
      %p450 = scmp.eq.s32.totalorder %s32, 0
      %p451 = por %p449, %p450
      %p452 = scmp.ne.s32.totalorder %s444, %s446
      %p453 = scmp.eq.s32.totalorder %s37, 1
      %p454 = por %p452, %p453
      %p455 = scmp.ne.s32.totalorder %s446, %s447
      %p456 = scmp.eq.s32.totalorder %s37, 0
      %p457 = por %p455, %p456
      %p458 = scmp.ne.s32.totalorder %s446, %s447
      %p459 = scmp.eq.s32.totalorder %s38, 1
      %p460 = por %p458, %p459
      %p462 = scmp.ne.s32.totalorder %s447, %s461
      %p463 = scmp.eq.s32.totalorder %s38, 0
      %p464 = por %p462, %p463
      %s466 = sadd.s32 %s465, 1
      %p469 = scmp.eq.s32.totalorder %s32, 1
      %p470 = scmp.ne.s32.totalorder %s465, %s467
      %p471 = scmp.eq.s32.totalorder %s32, 0
      %p472 = por %p470, %p471
      %p473 = scmp.ne.s32.totalorder %s465, %s467
      %p474 = scmp.eq.s32.totalorder %s37, 1
      %p475 = por %p473, %p474
      %p476 = scmp.ne.s32.totalorder %s467, %s468
      %p477 = scmp.eq.s32.totalorder %s37, 0
      %p478 = por %p476, %p477
      %p479 = scmp.ne.s32.totalorder %s467, %s468
      %p480 = scmp.eq.s32.totalorder %s38, 1
      %p481 = por %p479, %p480
      %p483 = scmp.ne.s32.totalorder %s468, %s482
      %p484 = scmp.eq.s32.totalorder %s38, 0
      %p485 = por %p483, %p484
      %s487 = sadd.s32 %s486, 1
      %p490 = scmp.eq.s32.totalorder %s32, 1
      %p491 = scmp.ne.s32.totalorder %s486, %s488
      %p492 = scmp.eq.s32.totalorder %s32, 0
      %p493 = por %p491, %p492
      %p494 = scmp.ne.s32.totalorder %s486, %s488
      %p495 = scmp.eq.s32.totalorder %s37, 1
      %p496 = por %p494, %p495
      %p497 = scmp.ne.s32.totalorder %s488, %s489
      %p498 = scmp.eq.s32.totalorder %s37, 0
      %p499 = por %p497, %p498
      %p500 = scmp.ne.s32.totalorder %s488, %s489
      %p501 = scmp.eq.s32.totalorder %s38, 1
      %p502 = por %p500, %p501
      %p504 = scmp.ne.s32.totalorder %s489, %s503
      %p505 = scmp.eq.s32.totalorder %s38, 0
      %p506 = por %p504, %p505
      %s508 = sadd.s32 %s507, 1
      %p511 = scmp.eq.s32.totalorder %s32, 1
      %p512 = scmp.ne.s32.totalorder %s507, %s509
      %p513 = scmp.eq.s32.totalorder %s32, 0
      %p514 = por %p512, %p513
      %p515 = scmp.ne.s32.totalorder %s507, %s509
      %p516 = scmp.eq.s32.totalorder %s37, 1
      %p517 = por %p515, %p516
      %p518 = scmp.ne.s32.totalorder %s509, %s510
      %p519 = scmp.eq.s32.totalorder %s37, 0
      %p520 = por %p518, %p519
      %p521 = scmp.ne.s32.totalorder %s509, %s510
      %p522 = scmp.eq.s32.totalorder %s38, 1
      %p523 = por %p521, %p522
      %p525 = scmp.ne.s32.totalorder %s510, %s524
      %p526 = scmp.eq.s32.totalorder %s38, 0
      %p527 = por %p525, %p526
      %s528 = ssub.s32 %s32, %s39
      %p529 = scmp.eq.s32.totalorder %s528, 0
      %s531 = sadd.s32 %s530, 1
      %s532 = scalar_select %p529, %s530, %s531
      %p535 = pneg %p529
      %p536 = scmp.eq.s32.totalorder %s32, 1
      %p537 = por %p535, %p536
      %p538 = scmp.ne.s32.totalorder %s530, %s533
      %p539 = scmp.eq.s32.totalorder %s32, 0
      %p540 = por %p538, %p539
      %p541 = scmp.ne.s32.totalorder %s530, %s533
      %p542 = scmp.eq.s32.totalorder %s37, 1
      %p543 = por %p541, %p542
      %p544 = scmp.ne.s32.totalorder %s533, %s534
      %p545 = scmp.eq.s32.totalorder %s37, 0
      %p546 = por %p544, %p545
      %p547 = scmp.ne.s32.totalorder %s533, %s534
      %p548 = scmp.eq.s32.totalorder %s38, 1
      %p549 = por %p547, %p548
      %p551 = scmp.ne.s32.totalorder %s534, %s550
      %p552 = scmp.eq.s32.totalorder %s38, 0
      %p553 = por %p551, %p552
      %p554 = scmp.le.s32.totalorder 1, %s32
      %p555 = scmp.lt.s32.totalorder %s32, 3
      %p556 = pnand %p554, %p555
      %p557 = pneg %p556
      // Predicated region
      $region9: #{head_forward.1} parent=5 // pred_check
        _
      $region10: #{head_forward.1} parent=5 // pred_check_branch
        %559 = sbr.rel (%p556) target = $region12
      $region11: #{head_forward.1} parent=5 // pred_region
        %s560 = ssub.s32 %s32, 1
        // Predicated region
        $region13: #{head_forward.1} parent=11 // pred_check
          %p561 = pneg %p79
        $region14: #{head_forward.1} parent=11 // pred_check_branch
          %563 = sbr.rel (%p561) target = $region16
        $region15: #{head_forward.1} parent=11 // pred_region
          _
        $region16: #{head_forward.1} parent=11 // pred_fallthru
          _
        // Predicated region
        $region17: #{head_forward.1} parent=11 // pred_check
          %p564 = pneg %p100
        $region18: #{head_forward.1} parent=11 // pred_check_branch
          %566 = sbr.rel (%p564) target = $region20
        $region19: #{head_forward.1} parent=11 // pred_region
          _
        $region20: #{head_forward.1} parent=11 // pred_fallthru
          _
        // Predicated region
        $region21: #{head_forward.1} parent=11 // pred_check
          %p567 = pneg %p121
        $region22: #{head_forward.1} parent=11 // pred_check_branch
          %569 = sbr.rel (%p567) target = $region24
        $region23: #{head_forward.1} parent=11 // pred_region
          _
        $region24: #{head_forward.1} parent=11 // pred_fallthru
          _
        // Predicated region
        $region25: #{head_forward.1} parent=11 // pred_check
          %p570 = pneg %p142
        $region26: #{head_forward.1} parent=11 // pred_check_branch
          %572 = sbr.rel (%p570) target = $region28
        $region27: #{head_forward.1} parent=11 // pred_region
          _
        $region28: #{head_forward.1} parent=11 // pred_fallthru
          _
        // Predicated region
        $region29: #{head_forward.1} parent=11 // pred_check
          %p573 = pneg %p163
        $region30: #{head_forward.1} parent=11 // pred_check_branch
          %575 = sbr.rel (%p573) target = $region32
        $region31: #{head_forward.1} parent=11 // pred_region
          _
        $region32: #{head_forward.1} parent=11 // pred_fallthru
          _
        // Predicated region
        $region33: #{head_forward.1} parent=11 // pred_check
          %p576 = pneg %p184
        $region34: #{head_forward.1} parent=11 // pred_check_branch
          %578 = sbr.rel (%p576) target = $region36
        $region35: #{head_forward.1} parent=11 // pred_region
          _
        $region36: #{head_forward.1} parent=11 // pred_fallthru
          _
        // Predicated region
        $region37: #{head_forward.1} parent=11 // pred_check
          %p579 = pneg %p205
        $region38: #{head_forward.1} parent=11 // pred_check_branch
          %581 = sbr.rel (%p579) target = $region40
        $region39: #{head_forward.1} parent=11 // pred_region
          _
        $region40: #{head_forward.1} parent=11 // pred_fallthru
          _
        // Predicated region
        $region41: #{head_forward.1} parent=11 // pred_check
          %p582 = pneg %p226
        $region42: #{head_forward.1} parent=11 // pred_check_branch
          %584 = sbr.rel (%p582) target = $region44
        $region43: #{head_forward.1} parent=11 // pred_region
          _
        $region44: #{head_forward.1} parent=11 // pred_fallthru
          _
        // Predicated region
        $region45: #{head_forward.1} parent=11 // pred_check
          %p585 = pneg %p247
        $region46: #{head_forward.1} parent=11 // pred_check_branch
          %587 = sbr.rel (%p585) target = $region48
        $region47: #{head_forward.1} parent=11 // pred_region
          _
        $region48: #{head_forward.1} parent=11 // pred_fallthru
          _
        // Predicated region
        $region49: #{head_forward.1} parent=11 // pred_check
          %p588 = pneg %p268
        $region50: #{head_forward.1} parent=11 // pred_check_branch
          %590 = sbr.rel (%p588) target = $region52
        $region51: #{head_forward.1} parent=11 // pred_region
          _
        $region52: #{head_forward.1} parent=11 // pred_fallthru
          _
        // Predicated region
        $region53: #{head_forward.1} parent=11 // pred_check
          %p591 = pneg %p289
        $region54: #{head_forward.1} parent=11 // pred_check_branch
          %593 = sbr.rel (%p591) target = $region56
        $region55: #{head_forward.1} parent=11 // pred_region
          _
        $region56: #{head_forward.1} parent=11 // pred_fallthru
          _
        // Predicated region
        $region57: #{head_forward.1} parent=11 // pred_check
          %p594 = pneg %p310
        $region58: #{head_forward.1} parent=11 // pred_check_branch
          %596 = sbr.rel (%p594) target = $region60
        $region59: #{head_forward.1} parent=11 // pred_region
          _
        $region60: #{head_forward.1} parent=11 // pred_fallthru
          _
        // Predicated region
        $region61: #{head_forward.1} parent=11 // pred_check
          %p597 = pneg %p331
        $region62: #{head_forward.1} parent=11 // pred_check_branch
          %599 = sbr.rel (%p597) target = $region64
        $region63: #{head_forward.1} parent=11 // pred_region
          _
        $region64: #{head_forward.1} parent=11 // pred_fallthru
          _
        // Predicated region
        $region65: #{head_forward.1} parent=11 // pred_check
          %p600 = pneg %p352
        $region66: #{head_forward.1} parent=11 // pred_check_branch
          %602 = sbr.rel (%p600) target = $region68
        $region67: #{head_forward.1} parent=11 // pred_region
          _
        $region68: #{head_forward.1} parent=11 // pred_fallthru
          _
        // Predicated region
        $region69: #{head_forward.1} parent=11 // pred_check
          %p603 = pneg %p373
        $region70: #{head_forward.1} parent=11 // pred_check_branch
          %605 = sbr.rel (%p603) target = $region72
        $region71: #{head_forward.1} parent=11 // pred_region
          _
        $region72: #{head_forward.1} parent=11 // pred_fallthru
          _
        // Predicated region
        $region73: #{head_forward.1} parent=11 // pred_check
          %p606 = pneg %p394
        $region74: #{head_forward.1} parent=11 // pred_check_branch
          %608 = sbr.rel (%p606) target = $region76
        $region75: #{head_forward.1} parent=11 // pred_region
          _
        $region76: #{head_forward.1} parent=11 // pred_fallthru
          _
        // Predicated region
        $region77: #{head_forward.1} parent=11 // pred_check
          %p609 = pneg %p415
        $region78: #{head_forward.1} parent=11 // pred_check_branch
          %611 = sbr.rel (%p609) target = $region80
        $region79: #{head_forward.1} parent=11 // pred_region
          _
        $region80: #{head_forward.1} parent=11 // pred_fallthru
          _
        // Predicated region
        $region81: #{head_forward.1} parent=11 // pred_check
          %p612 = pneg %p436
        $region82: #{head_forward.1} parent=11 // pred_check_branch
          %614 = sbr.rel (%p612) target = $region84
        $region83: #{head_forward.1} parent=11 // pred_region
          _
        $region84: #{head_forward.1} parent=11 // pred_fallthru
          _
        // Predicated region
        $region85: #{head_forward.1} parent=11 // pred_check
          %p615 = pneg %p457
        $region86: #{head_forward.1} parent=11 // pred_check_branch
          %617 = sbr.rel (%p615) target = $region88
        $region87: #{head_forward.1} parent=11 // pred_region
          _
        $region88: #{head_forward.1} parent=11 // pred_fallthru
          _
        // Predicated region
        $region89: #{head_forward.1} parent=11 // pred_check
          %p618 = pneg %p478
        $region90: #{head_forward.1} parent=11 // pred_check_branch
          %620 = sbr.rel (%p618) target = $region92
        $region91: #{head_forward.1} parent=11 // pred_region
          _
        $region92: #{head_forward.1} parent=11 // pred_fallthru
          _
        // Predicated region
        $region93: #{head_forward.1} parent=11 // pred_check
          %p621 = pneg %p499
        $region94: #{head_forward.1} parent=11 // pred_check_branch
          %623 = sbr.rel (%p621) target = $region96
        $region95: #{head_forward.1} parent=11 // pred_region
          _
        $region96: #{head_forward.1} parent=11 // pred_fallthru
          _
        // Predicated region
        $region97: #{head_forward.1} parent=11 // pred_check
          %p624 = pneg %p520
        $region98: #{head_forward.1} parent=11 // pred_check_branch
          %626 = sbr.rel (%p624) target = $region100
        $region99: #{head_forward.1} parent=11 // pred_region
          _
        $region100: #{head_forward.1} parent=11 // pred_fallthru
          _
      $region12: #{head_forward.1} parent=5 // pred_fallthru
        _
      %p627 = scmp.lt.s32.totalorder %s32, 2
      // Predicated region
      $region101: #{head_forward.1} parent=5 // pred_check
        %p628 = pneg %p627
      $region102: #{head_forward.1} parent=5 // pred_check_branch
        %630 = sbr.rel (%p628) target = $region104
      $region103: #{head_forward.1} parent=5 // pred_region
        // Predicated region
        $region105: #{head_forward.1} parent=103 // pred_check
          %p631 = pneg %p52
        $region106: #{head_forward.1} parent=103 // pred_check_branch
          %633 = sbr.rel (%p631) target = $region108
        $region107: #{head_forward.1} parent=103 // pred_region
          %p634 = scmp.lt.s32.totalorder %s32, 1
          %s635 = scalar_select %p634, %s32, 1
          %s636 = smul.addr %s635, 64
          %s637 = smul.addr %s636, 4
          %s638 = scalar_lea.vmem %s0, %s637
        $region108: #{head_forward.1} parent=103 // pred_fallthru
          _
      $region104: #{head_forward.1} parent=5 // pred_fallthru
        _
      %p639 = scmp.le.s32.totalorder 1, %s32
      %p640 = scmp.lt.s32.totalorder %s32, 3
      %p641 = pnand %p639, %p640
      %p642 = pneg %p641
      // Predicated region
      $region109: #{head_forward.1} parent=5 // pred_check
        _
      $region110: #{head_forward.1} parent=5 // pred_check_branch
        %644 = sbr.rel (%p641) target = $region112
      $region111: #{head_forward.1} parent=5 // pred_region
        %s645 = ssub.s32 %s32, 1
        %p646 = scmp.lt.s32.totalorder %s37, 1
        %s647 = scalar_select %p646, %s37, 1
        %s648 = smul.addr %s647, 64
        %s649 = smul.addr %s648, 4
        %s650 = scalar_lea.vmem %s0, %s649
        %p651 = pneg %p58
        %p652 = pneg %p55
        %p653 = pneg %p79
        %p654 = pneg %p76
        %p655 = pneg %p100
        %p656 = pneg %p97
        %p657 = pneg %p121
        %p658 = pneg %p118
        %p659 = pneg %p142
        %p660 = pneg %p139
        %p661 = pneg %p163
        %p662 = pneg %p160
        %p663 = pneg %p184
        %p664 = pneg %p181
        %p665 = pneg %p205
        %p666 = pneg %p202
        %p667 = pneg %p226
        %p668 = pneg %p223
        %p669 = pneg %p247
        %p670 = pneg %p244
        %p671 = pneg %p268
        %p672 = pneg %p265
        %p673 = pneg %p289
        %p674 = pneg %p286
        %p675 = pneg %p310
        %p676 = pneg %p307
        %p677 = pneg %p331
        %p678 = pneg %p328
        %p679 = pneg %p352
        %p680 = pneg %p349
        %p681 = pneg %p373
        %p682 = pneg %p370
        %p683 = pneg %p394
        %p684 = pneg %p391
        %p685 = pneg %p415
        %p686 = pneg %p412
        %p687 = pneg %p436
        %p688 = pneg %p433
        %p689 = pneg %p457
        %p690 = pneg %p454
        %p691 = pneg %p478
        %p692 = pneg %p475
        %p693 = pneg %p499
        %p694 = pneg %p496
        %p695 = pneg %p520
        %p696 = pneg %p517
        %p697 = pneg %p546
        %p698 = pneg %p543
        %s699 = sand.u32 %s533, 1
        %s700 = scalar_lea.sflag [#allocation4], %s699
        %s701 = sand.u32 %s533, 1
        %s702 = smul.addr %s701, 128
        %s703 = scalar_lea.vmem [#allocation3], %s702
        %p704 = scmp.lt.s32.totalorder %s37, 1
        %s705 = scalar_select %p704, %s37, 1
        %s706 = smul.addr %s705, 64
        %s707 = smul.addr %s706, 4
        %s708 = scalar_lea.vmem %s0, %s707
        %710 = vst [vmem:[#allocation2] sm:$0xf] 0
        %711 = vst [vmem:[#allocation2 + $0x4] sm:$0xf] 0
        %712 = vst [vmem:[#allocation2 + $0x8] sm:$0xf] 0
        %713 = vst [vmem:[#allocation2 + $0xc] sm:$0xf] 0
        %714 = vst [vmem:[#allocation2 + $0x10] sm:$0xf] 0
        %715 = vst [vmem:[#allocation2 + $0x14] sm:$0xf] 0
        %716 = vst [vmem:[#allocation2 + $0x18] sm:$0xf] 0
        %717 = vst [vmem:[#allocation2 + $0x1c] sm:$0xf] 0
        %718 = vst [vmem:[#allocation2 + $0x20] sm:$0xf] 0
        %719 = vst [vmem:[#allocation2 + $0x24] sm:$0xf] 0
        %720 = vst [vmem:[#allocation2 + $0x28] sm:$0xf] 0
        %721 = vst [vmem:[#allocation2 + $0x2c] sm:$0xf] 0
        %722 = vst [vmem:[#allocation2 + $0x30] sm:$0xf] 0
        %723 = vst [vmem:[#allocation2 + $0x34] sm:$0xf] 0
        %724 = vst [vmem:[#allocation2 + $0x38] sm:$0xf] 0
        %725 = vst [vmem:[#allocation2 + $0x3c] sm:$0xf] 0
        %726 = vst [vmem:[#allocation2 + $0x40] sm:$0xf] 0
        %727 = vst [vmem:[#allocation2 + $0x44] sm:$0xf] 0
        %728 = vst [vmem:[#allocation2 + $0x48] sm:$0xf] 0
        %729 = vst [vmem:[#allocation2 + $0x4c] sm:$0xf] 0
        %v730 = vld [vmem:[%s708] sm:$0xff]
        %v731 = vld [vmem:[%s708 + $0x8] sm:$0xff]
        %v732 = vld [vmem:[%s708 + $0x10] sm:$0xff]
        %v733 = vld [vmem:[%s708 + $0x18] sm:$0xff]
        %v734 = vld [vmem:[%s708 + $0x20] sm:$0xff]
        %v735 = vld [vmem:[%s708 + $0x28] sm:$0xff]
        %v736 = vld [vmem:[%s708 + $0x30] sm:$0xff]
        %v737 = vld [vmem:[%s708 + $0x38] sm:$0xff]
        %v738 = vld [vmem:[%s708 + $0x40] sm:$0xff]
        %v739 = vld [vmem:[%s708 + $0x48] sm:$0xff]
        %v740 = vld [vmem:[%s708 + $0x50] sm:$0xff]
        %v741 = vld [vmem:[%s708 + $0x58] sm:$0xff]
        %v742 = vld [vmem:[%s708 + $0x60] sm:$0xff]
        %v743 = vld [vmem:[%s708 + $0x68] sm:$0xff]
        %v744 = vld [vmem:[%s708 + $0x70] sm:$0xff]
        %v745 = vld [vmem:[%s708 + $0x78] sm:$0xff]
        %v746 = vld [vmem:[%s708 + $0x80] sm:$0xff]
        %v747 = vld [vmem:[%s708 + $0x88] sm:$0xff]
        %v748 = vld [vmem:[%s708 + $0x90] sm:$0xff]
        %v749 = vld [vmem:[%s708 + $0x98] sm:$0xff]
        %v750 = vld [vmem:[%s708 + $0xa0] sm:$0xff]
        %v751 = vld [vmem:[%s708 + $0xa8] sm:$0xff]
        %v752 = vld [vmem:[%s708 + $0xb0] sm:$0xff]
        %v753 = vld [vmem:[%s708 + $0xb8] sm:$0xff]
        %v754 = vld [vmem:[%s708 + $0xc0] sm:$0xff]
        %v755 = vld [vmem:[%s708 + $0xc8] sm:$0xff]
        %v756 = vld [vmem:[%s708 + $0xd0] sm:$0xff]
        %v757 = vld [vmem:[%s708 + $0xd8] sm:$0xff]
        %v758 = vld [vmem:[%s708 + $0xe0] sm:$0xff]
        %v759 = vld [vmem:[%s708 + $0xe8] sm:$0xff]
        %v760 = vld [vmem:[%s708 + $0xf0] sm:$0xff]
        %v761 = vld [vmem:[%s708 + $0xf8] sm:$0xff]
        %v762 = vld [vmem:[%s1] sm:$0xf]
        %v763 = vld [vmem:[%s1 + $0x4] sm:$0xf]
        %v764 = vld [vmem:[%s1 + $0x8] sm:$0xf]
        %v765 = vld [vmem:[%s1 + $0xc] sm:$0xf]
        %v766 = vld [vmem:[%s1 + $0x10] sm:$0xf]
        %v767 = vld [vmem:[%s1 + $0x14] sm:$0xf]
        %v768 = vld [vmem:[%s1 + $0x18] sm:$0xf]
        %v769 = vld [vmem:[%s1 + $0x1c] sm:$0xf]
        %v770 = vld [vmem:[%s1 + $0x20] sm:$0xf]
        %v771 = vld [vmem:[%s1 + $0x24] sm:$0xf]
        %v772 = vld [vmem:[%s1 + $0x28] sm:$0xf]
        %v773 = vld [vmem:[%s1 + $0x2c] sm:$0xf]
        %v774 = vld [vmem:[%s1 + $0x30] sm:$0xf]
        %v775 = vld [vmem:[%s1 + $0x34] sm:$0xf]
        %v776 = vld [vmem:[%s1 + $0x38] sm:$0xf]
        %v777 = vld [vmem:[%s1 + $0x3c] sm:$0xf]
        %v778 = vld [vmem:[%s1 + $0x40] sm:$0xf]
        %v779 = vld [vmem:[%s1 + $0x44] sm:$0xf]
        %v780 = vld [vmem:[%s1 + $0x48] sm:$0xf]
        %v781 = vld [vmem:[%s1 + $0x4c] sm:$0xf]
        %v782 = vld [vmem:[%s1 + $0x50] sm:$0xf]
        %v783 = vld [vmem:[%s1 + $0x54] sm:$0xf]
        %v784 = vld [vmem:[%s1 + $0x58] sm:$0xf]
        %v785 = vld [vmem:[%s1 + $0x5c] sm:$0xf]
        %v786 = vld [vmem:[%s2] sm:$0x1]
        %v788 = vperm.slane %v786, 0
        %v822 = vunpack.c.l.b16 %v730
        %v823 = vunpack.c.h.b16 %v730
        %v824 = vunpack.c.l.b16 %v731
        %v825 = vunpack.c.h.b16 %v731
        %v826 = vunpack.c.l.b16 %v732
        %v827 = vunpack.c.h.b16 %v732
        %v828 = vunpack.c.l.b16 %v733
        %v829 = vunpack.c.h.b16 %v733
        %v830 = vunpack.c.l.b16 %v734
        %v831 = vunpack.c.h.b16 %v734
        %v832 = vunpack.c.l.b16 %v735
        %v833 = vunpack.c.h.b16 %v735
        %v834 = vunpack.c.l.b16 %v736
        %v835 = vunpack.c.h.b16 %v736
        %v836 = vunpack.c.l.b16 %v737
        %v837 = vunpack.c.h.b16 %v737
        %v838 = vunpack.c.l.b16 %v738
        %v839 = vunpack.c.h.b16 %v738
        %v840 = vunpack.c.l.b16 %v739
        %v841 = vunpack.c.h.b16 %v739
        %v842 = vunpack.c.l.b16 %v740
        %v843 = vunpack.c.h.b16 %v740
        %v844 = vunpack.c.l.b16 %v741
        %v845 = vunpack.c.h.b16 %v741
        %v846 = vunpack.c.l.b16 %v742
        %v847 = vunpack.c.h.b16 %v742
        %v848 = vunpack.c.l.b16 %v743
        %v849 = vunpack.c.h.b16 %v743
        %v850 = vunpack.c.l.b16 %v744
        %v851 = vunpack.c.h.b16 %v744
        %v852 = vunpack.c.l.b16 %v745
        %v853 = vunpack.c.h.b16 %v745
        %v854 = vunpack.c.l.b16 %v746
        %v855 = vunpack.c.h.b16 %v746
        %v856 = vunpack.c.l.b16 %v747
        %v857 = vunpack.c.h.b16 %v747
        %v858 = vunpack.c.l.b16 %v748
        %v859 = vunpack.c.h.b16 %v748
        %v860 = vunpack.c.l.b16 %v749
        %v861 = vunpack.c.h.b16 %v749
        %v862 = vunpack.c.l.b16 %v750
        %v863 = vunpack.c.h.b16 %v750
        %v864 = vunpack.c.l.b16 %v751
        %v865 = vunpack.c.h.b16 %v751
        %v866 = vunpack.c.l.b16 %v752
        %v867 = vunpack.c.h.b16 %v752
        %v868 = vunpack.c.l.b16 %v753
        %v869 = vunpack.c.h.b16 %v753
        %v870 = vunpack.c.l.b16 %v754
        %v871 = vunpack.c.h.b16 %v754
        %v872 = vunpack.c.l.b16 %v755
        %v873 = vunpack.c.h.b16 %v755
        %v874 = vunpack.c.l.b16 %v756
        %v875 = vunpack.c.h.b16 %v756
        %v876 = vunpack.c.l.b16 %v757
        %v877 = vunpack.c.h.b16 %v757
        %v878 = vunpack.c.l.b16 %v758
        %v879 = vunpack.c.h.b16 %v758
        %v880 = vunpack.c.l.b16 %v759
        %v881 = vunpack.c.h.b16 %v759
        %v882 = vunpack.c.l.b16 %v760
        %v883 = vunpack.c.h.b16 %v760
        %v884 = vunpack.c.l.b16 %v761
        %v885 = vunpack.c.h.b16 %v761
        %v886 = vpack.c.b16 %v824, %v822
        %v887 = vpack.c.b16 %v825, %v823
        %v888 = vpack.c.b16 %v828, %v826
        %v889 = vpack.c.b16 %v829, %v827
        %v890 = vpack.c.b16 %v832, %v830
        %v891 = vpack.c.b16 %v833, %v831
        %v892 = vpack.c.b16 %v836, %v834
        %v893 = vpack.c.b16 %v837, %v835
        %v894 = vpack.c.b16 %v840, %v838
        %v895 = vpack.c.b16 %v841, %v839
        %v896 = vpack.c.b16 %v844, %v842
        %v897 = vpack.c.b16 %v845, %v843
        %v898 = vpack.c.b16 %v848, %v846
        %v899 = vpack.c.b16 %v849, %v847
        %v900 = vpack.c.b16 %v852, %v850
        %v901 = vpack.c.b16 %v853, %v851
        %v902 = vpack.c.b16 %v856, %v854
        %v903 = vpack.c.b16 %v857, %v855
        %v904 = vpack.c.b16 %v860, %v858
        %v905 = vpack.c.b16 %v861, %v859
        %v906 = vpack.c.b16 %v864, %v862
        %v907 = vpack.c.b16 %v865, %v863
        %v908 = vpack.c.b16 %v868, %v866
        %v909 = vpack.c.b16 %v869, %v867
        %v910 = vpack.c.b16 %v872, %v870
        %v911 = vpack.c.b16 %v873, %v871
        %v912 = vpack.c.b16 %v876, %v874
        %v913 = vpack.c.b16 %v877, %v875
        %v914 = vpack.c.b16 %v880, %v878
        %v915 = vpack.c.b16 %v881, %v879
        %v916 = vpack.c.b16 %v884, %v882
        %v917 = vpack.c.b16 %v885, %v883
        %v958 = vunpack.c.l.b16 %v762
        %v959 = vunpack.c.l.b16 %v763
        %v960 = vunpack.c.l.b16 %v764
        %v961 = vunpack.c.l.b16 %v765
        %v962 = vunpack.c.l.b16 %v766
        %v963 = vunpack.c.l.b16 %v767
        %v964 = vunpack.c.l.b16 %v768
        %v965 = vunpack.c.l.b16 %v769
        %v966 = vunpack.c.l.b16 %v770
        %v967 = vunpack.c.l.b16 %v771
        %v968 = vunpack.c.l.b16 %v772
        %v969 = vunpack.c.l.b16 %v773
        %v970 = vunpack.c.l.b16 %v774
        %v971 = vunpack.c.l.b16 %v775
        %v972 = vunpack.c.l.b16 %v776
        %v973 = vunpack.c.l.b16 %v777
        %v974 = vunpack.c.l.b16 %v778
        %v975 = vunpack.c.l.b16 %v779
        %v976 = vunpack.c.l.b16 %v780
        %v977 = vunpack.c.l.b16 %v781
        %v978 = vunpack.c.l.b16 %v782
        %v979 = vunpack.c.l.b16 %v783
        %v980 = vunpack.c.l.b16 %v784
        %v981 = vunpack.c.l.b16 %v785
        %v982 = vpack.c.b16 %v959, %v958
        %v983 = vpack.c.b16 %v961, %v960
        %v984 = vpack.c.b16 %v963, %v962
        %v985 = vpack.c.b16 %v965, %v964
        %v986 = vpack.c.b16 %v967, %v966
        %v987 = vpack.c.b16 %v969, %v968
        %v988 = vpack.c.b16 %v971, %v970
        %v989 = vpack.c.b16 %v973, %v972
        %v990 = vpack.c.b16 %v975, %v974
        %v991 = vpack.c.b16 %v977, %v976
        %v992 = vpack.c.b16 %v979, %v978
        %v993 = vpack.c.b16 %v981, %v980
        %vm1006 = vcmask 523264
        %v1008 = vsel %vm1006, %v887, 0
        %v1011 = vsel %vm1006, %v889, 0
        %v1014 = vsel %vm1006, %v891, 0
        %v1017 = vsel %vm1006, %v893, 0
        %v1020 = vsel %vm1006, %v895, 0
        %v1023 = vsel %vm1006, %v897, 0
        %v1026 = vsel %vm1006, %v899, 0
        %v1029 = vsel %vm1006, %v901, 0
        %v1032 = vsel %vm1006, %v903, 0
        %v1035 = vsel %vm1006, %v905, 0
        %v1038 = vsel %vm1006, %v907, 0
        %v1041 = vsel %vm1006, %v909, 0
        %v1044 = vsel %vm1006, %v911, 0
        %v1047 = vsel %vm1006, %v913, 0
        %v1050 = vsel %vm1006, %v915, 0
        %v1053 = vsel %vm1006, %v917, 0
        %1055 = vmatpush.bf16.msra.mxu0 %v989
        %1056 = vmatpush.bf16.msra.mxu0 %v988
        %1057 = vmatpush.bf16.msra.mxu0 %v987
        %1058 = vmatpush.bf16.msra.mxu0 %v986
        %1059 = vmatpush.bf16.msra.mxu0 %v985
        %1060 = vmatpush.bf16.msra.mxu0 %v984
        %1061 = vmatpush.bf16.msra.mxu0 %v983
        %1062 = vmatpush.bf16.msra.mxu0 %v982
        %1063 = vmatmul.bf16.gmra.mxu0 %v886
        %v1064 = vpop.f32.mrf.mxu0
        %v1065 = vadd.f32 %v788, %v1064
        %v1066 = vpop.f32.mrf.mxu0
        %v1067 = vadd.f32 %v788, %v1066
        %1068 = vmatmul.bf16.gmra.mxu0 %v888
        %v1069 = vpop.f32.mrf.mxu0
        %v1070 = vadd.f32 %v788, %v1069
        %v1071 = vpop.f32.mrf.mxu0
        %v1072 = vadd.f32 %v788, %v1071
        %1073 = vmatmul.bf16.gmra.mxu0 %v890
        %v1074 = vpop.f32.mrf.mxu0
        %v1075 = vadd.f32 %v788, %v1074
        %v1076 = vpop.f32.mrf.mxu0
        %v1077 = vadd.f32 %v788, %v1076
        %1078 = vmatmul.bf16.gmra.mxu0 %v892
        %v1079 = vpop.f32.mrf.mxu0
        %v1080 = vadd.f32 %v788, %v1079
        %v1081 = vpop.f32.mrf.mxu0
        %v1082 = vadd.f32 %v788, %v1081
        %1083 = vmatmul.bf16.gmra.mxu0 %v894
        %v1084 = vpop.f32.mrf.mxu0
        %v1085 = vadd.f32 %v788, %v1084
        %v1086 = vpop.f32.mrf.mxu0
        %v1087 = vadd.f32 %v788, %v1086
        %1088 = vmatmul.bf16.gmra.mxu0 %v896
        %v1089 = vpop.f32.mrf.mxu0
        %v1090 = vadd.f32 %v788, %v1089
        %v1091 = vpop.f32.mrf.mxu0
        %v1092 = vadd.f32 %v788, %v1091
        %1093 = vmatmul.bf16.gmra.mxu0 %v898
        %v1094 = vpop.f32.mrf.mxu0
        %v1095 = vadd.f32 %v788, %v1094
        %v1096 = vpop.f32.mrf.mxu0
        %v1097 = vadd.f32 %v788, %v1096
        %1098 = vmatmul.bf16.gmra.mxu0 %v900
        %v1099 = vpop.f32.mrf.mxu0
        %v1100 = vadd.f32 %v788, %v1099
        %v1101 = vpop.f32.mrf.mxu0
        %v1102 = vadd.f32 %v788, %v1101
        %1103 = vmatmul.bf16.gmra.mxu0 %v902
        %v1104 = vpop.f32.mrf.mxu0
        %v1105 = vadd.f32 %v788, %v1104
        %v1106 = vpop.f32.mrf.mxu0
        %v1107 = vadd.f32 %v788, %v1106
        %1108 = vmatmul.bf16.gmra.mxu0 %v904
        %v1109 = vpop.f32.mrf.mxu0
        %v1110 = vadd.f32 %v788, %v1109
        %v1111 = vpop.f32.mrf.mxu0
        %v1112 = vadd.f32 %v788, %v1111
        %1113 = vmatmul.bf16.gmra.mxu0 %v906
        %v1114 = vpop.f32.mrf.mxu0
        %v1115 = vadd.f32 %v788, %v1114
        %v1116 = vpop.f32.mrf.mxu0
        %v1117 = vadd.f32 %v788, %v1116
        %1118 = vmatmul.bf16.gmra.mxu0 %v908
        %v1119 = vpop.f32.mrf.mxu0
        %v1120 = vadd.f32 %v788, %v1119
        %v1121 = vpop.f32.mrf.mxu0
        %v1122 = vadd.f32 %v788, %v1121
        %1123 = vmatmul.bf16.gmra.mxu0 %v910
        %v1124 = vpop.f32.mrf.mxu0
        %v1125 = vadd.f32 %v788, %v1124
        %v1126 = vpop.f32.mrf.mxu0
        %v1127 = vadd.f32 %v788, %v1126
        %1128 = vmatmul.bf16.gmra.mxu0 %v912
        %v1129 = vpop.f32.mrf.mxu0
        %v1130 = vadd.f32 %v788, %v1129
        %v1131 = vpop.f32.mrf.mxu0
        %v1132 = vadd.f32 %v788, %v1131
        %1133 = vmatmul.bf16.gmra.mxu0 %v914
        %v1134 = vpop.f32.mrf.mxu0
        %v1135 = vadd.f32 %v788, %v1134
        %v1136 = vpop.f32.mrf.mxu0
        %v1137 = vadd.f32 %v788, %v1136
        %1138 = vmatmul.bf16.gmra.mxu0 %v916
        %v1139 = vpop.f32.mrf.mxu0
        %v1140 = vadd.f32 %v788, %v1139
        %v1141 = vpop.f32.mrf.mxu0
        %v1142 = vadd.f32 %v788, %v1141
        %1143 = vdwg.mxu0
        %1144 = vmatpush.bf16.msra.mxu0 0
        %1145 = vmatpush.bf16.msra.mxu0 0
        %1146 = vmatpush.bf16.msra.mxu0 0
        %1147 = vmatpush.bf16.msra.mxu0 0
        %1148 = vmatpush.bf16.msra.mxu0 %v993
        %1149 = vmatpush.bf16.msra.mxu0 %v992
        %1150 = vmatpush.bf16.msra.mxu0 %v991
        %1151 = vmatpush.bf16.msra.mxu0 %v990
        %1152 = vmatmul.bf16.gmra.mxu0 %v1008
        %v1153 = vpop.f32.mrf.mxu0
        %v1154 = vadd.f32 %v1065, %v1153
        %v1155 = vpop.f32.mrf.mxu0
        %v1156 = vadd.f32 %v1067, %v1155
        %1157 = vmatmul.bf16.gmra.mxu0 %v1011
        %v1158 = vpop.f32.mrf.mxu0
        %v1159 = vadd.f32 %v1070, %v1158
        %v1160 = vpop.f32.mrf.mxu0
        %v1161 = vadd.f32 %v1072, %v1160
        %1162 = vmatmul.bf16.gmra.mxu0 %v1014
        %v1163 = vpop.f32.mrf.mxu0
        %v1164 = vadd.f32 %v1075, %v1163
        %v1165 = vpop.f32.mrf.mxu0
        %v1166 = vadd.f32 %v1077, %v1165
        %1167 = vmatmul.bf16.gmra.mxu0 %v1017
        %v1168 = vpop.f32.mrf.mxu0
        %v1169 = vadd.f32 %v1080, %v1168
        %v1170 = vpop.f32.mrf.mxu0
        %v1171 = vadd.f32 %v1082, %v1170
        %1172 = vmatmul.bf16.gmra.mxu0 %v1020
        %v1173 = vpop.f32.mrf.mxu0
        %v1174 = vadd.f32 %v1085, %v1173
        %v1175 = vpop.f32.mrf.mxu0
        %v1176 = vadd.f32 %v1087, %v1175
        %1177 = vmatmul.bf16.gmra.mxu0 %v1023
        %v1178 = vpop.f32.mrf.mxu0
        %v1179 = vadd.f32 %v1090, %v1178
        %v1180 = vpop.f32.mrf.mxu0
        %v1181 = vadd.f32 %v1092, %v1180
        %1182 = vmatmul.bf16.gmra.mxu0 %v1026
        %v1183 = vpop.f32.mrf.mxu0
        %v1184 = vadd.f32 %v1095, %v1183
        %v1185 = vpop.f32.mrf.mxu0
        %v1186 = vadd.f32 %v1097, %v1185
        %1187 = vmatmul.bf16.gmra.mxu0 %v1029
        %v1188 = vpop.f32.mrf.mxu0
        %v1189 = vadd.f32 %v1100, %v1188
        %v1190 = vpop.f32.mrf.mxu0
        %v1191 = vadd.f32 %v1102, %v1190
        %1192 = vmatmul.bf16.gmra.mxu0 %v1032
        %v1193 = vpop.f32.mrf.mxu0
        %v1194 = vadd.f32 %v1105, %v1193
        %v1195 = vpop.f32.mrf.mxu0
        %v1196 = vadd.f32 %v1107, %v1195
        %1197 = vmatmul.bf16.gmra.mxu0 %v1035
        %v1198 = vpop.f32.mrf.mxu0
        %v1199 = vadd.f32 %v1110, %v1198
        %v1200 = vpop.f32.mrf.mxu0
        %v1201 = vadd.f32 %v1112, %v1200
        %1202 = vmatmul.bf16.gmra.mxu0 %v1038
        %v1203 = vpop.f32.mrf.mxu0
        %v1204 = vadd.f32 %v1115, %v1203
        %v1205 = vpop.f32.mrf.mxu0
        %v1206 = vadd.f32 %v1117, %v1205
        %1207 = vmatmul.bf16.gmra.mxu0 %v1041
        %v1208 = vpop.f32.mrf.mxu0
        %v1209 = vadd.f32 %v1120, %v1208
        %v1210 = vpop.f32.mrf.mxu0
        %v1211 = vadd.f32 %v1122, %v1210
        %1212 = vmatmul.bf16.gmra.mxu0 %v1044
        %v1213 = vpop.f32.mrf.mxu0
        %v1214 = vadd.f32 %v1125, %v1213
        %v1215 = vpop.f32.mrf.mxu0
        %v1216 = vadd.f32 %v1127, %v1215
        %1217 = vmatmul.bf16.gmra.mxu0 %v1047
        %v1218 = vpop.f32.mrf.mxu0
        %v1219 = vadd.f32 %v1130, %v1218
        %v1220 = vpop.f32.mrf.mxu0
        %v1221 = vadd.f32 %v1132, %v1220
        %1222 = vmatmul.bf16.gmra.mxu0 %v1050
        %v1223 = vpop.f32.mrf.mxu0
        %v1224 = vadd.f32 %v1135, %v1223
        %v1225 = vpop.f32.mrf.mxu0
        %v1226 = vadd.f32 %v1137, %v1225
        %1227 = vmatmul.bf16.gmra.mxu0 %v1053
        %v1228 = vpop.f32.mrf.mxu0
        %v1229 = vadd.f32 %v1140, %v1228
        %v1230 = vpop.f32.mrf.mxu0
        %v1231 = vadd.f32 %v1142, %v1230
        %1232 = vdwg.mxu0
        %v1233 = vmax.f32 %v1154, 0.0
        %v1234 = vmax.f32 %v1156, 0.0
        %v1235 = vmax.f32 %v1159, 0.0
        %v1236 = vmax.f32 %v1161, 0.0
        %v1237 = vmax.f32 %v1164, 0.0
        %v1238 = vmax.f32 %v1166, 0.0
        %v1239 = vmax.f32 %v1169, 0.0
        %v1240 = vmax.f32 %v1171, 0.0
        %v1241 = vmax.f32 %v1174, 0.0
        %v1242 = vmax.f32 %v1176, 0.0
        %v1243 = vmax.f32 %v1179, 0.0
        %v1244 = vmax.f32 %v1181, 0.0
        %v1245 = vmax.f32 %v1184, 0.0
        %v1246 = vmax.f32 %v1186, 0.0
        %v1247 = vmax.f32 %v1189, 0.0
        %v1248 = vmax.f32 %v1191, 0.0
        %v1249 = vmax.f32 %v1194, 0.0
        %v1250 = vmax.f32 %v1196, 0.0
        %v1251 = vmax.f32 %v1199, 0.0
        %v1252 = vmax.f32 %v1201, 0.0
        %v1253 = vmax.f32 %v1204, 0.0
        %v1254 = vmax.f32 %v1206, 0.0
        %v1255 = vmax.f32 %v1209, 0.0
        %v1256 = vmax.f32 %v1211, 0.0
        %v1257 = vmax.f32 %v1214, 0.0
        %v1258 = vmax.f32 %v1216, 0.0
        %v1259 = vmax.f32 %v1219, 0.0
        %v1260 = vmax.f32 %v1221, 0.0
        %v1261 = vmax.f32 %v1224, 0.0
        %v1262 = vmax.f32 %v1226, 0.0
        %v1263 = vmax.f32 %v1229, 0.0
        %v1264 = vmax.f32 %v1231, 0.0
        %v1265 = vpack.c.bf16 %v1233, %v1233
        %v1266 = vpack.c.bf16 %v1234, %v1234
        %v1267 = vpack.c.bf16 %v1235, %v1235
        %v1268 = vpack.c.bf16 %v1236, %v1236
        %v1269 = vpack.c.bf16 %v1237, %v1237
        %v1270 = vpack.c.bf16 %v1238, %v1238
        %v1271 = vpack.c.bf16 %v1239, %v1239
        %v1272 = vpack.c.bf16 %v1240, %v1240
        %v1273 = vpack.c.bf16 %v1241, %v1241
        %v1274 = vpack.c.bf16 %v1242, %v1242
        %v1275 = vpack.c.bf16 %v1243, %v1243
        %v1276 = vpack.c.bf16 %v1244, %v1244
        %v1277 = vpack.c.bf16 %v1245, %v1245
        %v1278 = vpack.c.bf16 %v1246, %v1246
        %v1279 = vpack.c.bf16 %v1247, %v1247
        %v1280 = vpack.c.bf16 %v1248, %v1248
        %v1281 = vpack.c.bf16 %v1249, %v1249
        %v1282 = vpack.c.bf16 %v1250, %v1250
        %v1283 = vpack.c.bf16 %v1251, %v1251
        %v1284 = vpack.c.bf16 %v1252, %v1252
        %v1285 = vpack.c.bf16 %v1253, %v1253
        %v1286 = vpack.c.bf16 %v1254, %v1254
        %v1287 = vpack.c.bf16 %v1255, %v1255
        %v1288 = vpack.c.bf16 %v1256, %v1256
        %v1289 = vpack.c.bf16 %v1257, %v1257
        %v1290 = vpack.c.bf16 %v1258, %v1258
        %v1291 = vpack.c.bf16 %v1259, %v1259
        %v1292 = vpack.c.bf16 %v1260, %v1260
        %v1293 = vpack.c.bf16 %v1261, %v1261
        %v1294 = vpack.c.bf16 %v1262, %v1262
        %v1295 = vpack.c.bf16 %v1263, %v1263
        %v1296 = vpack.c.bf16 %v1264, %v1264
        %v1297 = vunpack.c.l.bf16 %v1265
        %v1298 = vunpack.c.l.bf16 %v1266
        %v1299 = vunpack.c.l.bf16 %v1267
        %v1300 = vunpack.c.l.bf16 %v1268
        %v1301 = vunpack.c.l.bf16 %v1269
        %v1302 = vunpack.c.l.bf16 %v1270
        %v1303 = vunpack.c.l.bf16 %v1271
        %v1304 = vunpack.c.l.bf16 %v1272
        %v1305 = vunpack.c.l.bf16 %v1273
        %v1306 = vunpack.c.l.bf16 %v1274
        %v1307 = vunpack.c.l.bf16 %v1275
        %v1308 = vunpack.c.l.bf16 %v1276
        %v1309 = vunpack.c.l.bf16 %v1277
        %v1310 = vunpack.c.l.bf16 %v1278
        %v1311 = vunpack.c.l.bf16 %v1279
        %v1312 = vunpack.c.l.bf16 %v1280
        %v1313 = vmax.f32 %v1297, %v1305
        %v1314 = vmax.f32 %v1298, %v1306
        %v1315 = vmax.f32 %v1299, %v1307
        %v1316 = vmax.f32 %v1300, %v1308
        %v1317 = vmax.f32 %v1301, %v1309
        %v1318 = vmax.f32 %v1302, %v1310
        %v1319 = vmax.f32 %v1303, %v1311
        %v1320 = vmax.f32 %v1304, %v1312
        %v1321 = vpack.c.bf16 %v1313, %v1313
        %v1322 = vpack.c.bf16 %v1314, %v1314
        %v1323 = vpack.c.bf16 %v1315, %v1315
        %v1324 = vpack.c.bf16 %v1316, %v1316
        %v1325 = vpack.c.bf16 %v1317, %v1317
        %v1326 = vpack.c.bf16 %v1318, %v1318
        %v1327 = vpack.c.bf16 %v1319, %v1319
        %v1328 = vpack.c.bf16 %v1320, %v1320
        %v1329 = vunpack.c.l.bf16 %v1281
        %v1330 = vunpack.c.l.bf16 %v1282
        %v1331 = vunpack.c.l.bf16 %v1283
        %v1332 = vunpack.c.l.bf16 %v1284
        %v1333 = vunpack.c.l.bf16 %v1285
        %v1334 = vunpack.c.l.bf16 %v1286
        %v1335 = vunpack.c.l.bf16 %v1287
        %v1336 = vunpack.c.l.bf16 %v1288
        %v1337 = vunpack.c.l.bf16 %v1289
        %v1338 = vunpack.c.l.bf16 %v1290
        %v1339 = vunpack.c.l.bf16 %v1291
        %v1340 = vunpack.c.l.bf16 %v1292
        %v1341 = vunpack.c.l.bf16 %v1293
        %v1342 = vunpack.c.l.bf16 %v1294
        %v1343 = vunpack.c.l.bf16 %v1295
        %v1344 = vunpack.c.l.bf16 %v1296
        %v1345 = vmax.f32 %v1329, %v1337
        %v1346 = vmax.f32 %v1330, %v1338
        %v1347 = vmax.f32 %v1331, %v1339
        %v1348 = vmax.f32 %v1332, %v1340
        %v1349 = vmax.f32 %v1333, %v1341
        %v1350 = vmax.f32 %v1334, %v1342
        %v1351 = vmax.f32 %v1335, %v1343
        %v1352 = vmax.f32 %v1336, %v1344
        %v1353 = vpack.c.bf16 %v1345, %v1345
        %v1354 = vpack.c.bf16 %v1346, %v1346
        %v1355 = vpack.c.bf16 %v1347, %v1347
        %v1356 = vpack.c.bf16 %v1348, %v1348
        %v1357 = vpack.c.bf16 %v1349, %v1349
        %v1358 = vpack.c.bf16 %v1350, %v1350
        %v1359 = vpack.c.bf16 %v1351, %v1351
        %v1360 = vpack.c.bf16 %v1352, %v1352
        %v1361 = vunpack.c.l.bf16 %v1321
        %v1362 = vunpack.c.l.bf16 %v1322
        %v1363 = vunpack.c.l.bf16 %v1323
        %v1364 = vunpack.c.l.bf16 %v1324
        %v1365 = vunpack.c.l.bf16 %v1325
        %v1366 = vunpack.c.l.bf16 %v1326
        %v1367 = vunpack.c.l.bf16 %v1327
        %v1368 = vunpack.c.l.bf16 %v1328
        %v1369 = vunpack.c.l.bf16 %v1353
        %v1370 = vunpack.c.l.bf16 %v1354
        %v1371 = vunpack.c.l.bf16 %v1355
        %v1372 = vunpack.c.l.bf16 %v1356
        %v1373 = vunpack.c.l.bf16 %v1357
        %v1374 = vunpack.c.l.bf16 %v1358
        %v1375 = vunpack.c.l.bf16 %v1359
        %v1376 = vunpack.c.l.bf16 %v1360
        %v1377 = vmax.f32 %v1361, %v1369
        %v1378 = vmax.f32 %v1362, %v1370
        %v1379 = vmax.f32 %v1363, %v1371
        %v1380 = vmax.f32 %v1364, %v1372
        %v1381 = vmax.f32 %v1365, %v1373
        %v1382 = vmax.f32 %v1366, %v1374
        %v1383 = vmax.f32 %v1367, %v1375
        %v1384 = vmax.f32 %v1368, %v1376
        %v1385 = vpack.c.bf16 %v1377, %v1377
        %v1386 = vpack.c.bf16 %v1378, %v1378
        %v1387 = vpack.c.bf16 %v1379, %v1379
        %v1388 = vpack.c.bf16 %v1380, %v1380
        %v1389 = vpack.c.bf16 %v1381, %v1381
        %v1390 = vpack.c.bf16 %v1382, %v1382
        %v1391 = vpack.c.bf16 %v1383, %v1383
        %v1392 = vpack.c.bf16 %v1384, %v1384
        %v1394 = vshrl.u32 %v1273, 16
        %v1396 = vrot.slane %v1394, 7
        %v1397 = vshll.u32 %v1273, 16
        %v1399 = vor.u32 %v1396, %v1397
        %v1400 = vrot.slane %v1396, 4
        %v1402 = vshrl.u32 %v1274, 16
        %v1404 = vrot.slane %v1402, 7
        %v1405 = vshll.u32 %v1274, 16
        %v1407 = vor.u32 %v1404, %v1405
        %v1408 = vrot.slane %v1404, 4
        %v1410 = vshrl.u32 %v1275, 16
        %v1412 = vrot.slane %v1410, 7
        %v1413 = vshll.u32 %v1275, 16
        %v1415 = vor.u32 %v1412, %v1413
        %v1416 = vrot.slane %v1412, 4
        %v1418 = vshrl.u32 %v1276, 16
        %v1420 = vrot.slane %v1418, 7
        %v1421 = vshll.u32 %v1276, 16
        %v1423 = vor.u32 %v1420, %v1421
        %v1424 = vrot.slane %v1420, 4
        %v1426 = vshrl.u32 %v1277, 16
        %v1428 = vrot.slane %v1426, 7
        %v1429 = vshll.u32 %v1277, 16
        %v1431 = vor.u32 %v1428, %v1429
        %v1432 = vrot.slane %v1428, 4
        %v1434 = vshrl.u32 %v1278, 16
        %v1436 = vrot.slane %v1434, 7
        %v1437 = vshll.u32 %v1278, 16
        %v1439 = vor.u32 %v1436, %v1437
        %v1440 = vrot.slane %v1436, 4
        %v1442 = vshrl.u32 %v1279, 16
        %v1444 = vrot.slane %v1442, 7
        %v1445 = vshll.u32 %v1279, 16
        %v1447 = vor.u32 %v1444, %v1445
        %v1448 = vrot.slane %v1444, 4
        %v1450 = vshrl.u32 %v1280, 16
        %v1452 = vrot.slane %v1450, 7
        %v1453 = vshll.u32 %v1280, 16
        %v1455 = vor.u32 %v1452, %v1453
        %v1456 = vrot.slane %v1452, 4
        %s1473 = scalar_lea.vmem [#allocation2], 8
        %vm1474 = vcmask 1043456
        %vm1475 = vsmask.f32 7938
        %vm1476 = vmand %vm1474, %vm1475
        %v1477 = vld [vmem:[%s1473] sm:$0xf]
        %v1478 = vsel %vm1476, %v1399, %v1477
        %1479 = vst [vmem:[%s1473] sm:$0xf] %v1478
        %vm1480 = vcmask 1040384
        %vm1481 = vsmask.f32 256
        %vm1482 = vmand %vm1480, %vm1481
        %v1483 = vld [vmem:[%s1473 + $0x4] sm:$0x1]
        %v1484 = vsel %vm1482, %v1400, %v1483
        %1485 = vst [vmem:[%s1473 + $0x4] sm:$0x1] %v1484
        %v1486 = vld [vmem:[%s1473 + $0x8] sm:$0xf]
        %v1487 = vsel %vm1476, %v1407, %v1486
        %1488 = vst [vmem:[%s1473 + $0x8] sm:$0xf] %v1487
        %v1489 = vld [vmem:[%s1473 + $0xc] sm:$0x1]
        %v1490 = vsel %vm1482, %v1408, %v1489
        %1491 = vst [vmem:[%s1473 + $0xc] sm:$0x1] %v1490
        %v1492 = vld [vmem:[%s1473 + $0x10] sm:$0xf]
        %v1493 = vsel %vm1476, %v1415, %v1492
        %1494 = vst [vmem:[%s1473 + $0x10] sm:$0xf] %v1493
        %v1495 = vld [vmem:[%s1473 + $0x14] sm:$0x1]
        %v1496 = vsel %vm1482, %v1416, %v1495
        %1497 = vst [vmem:[%s1473 + $0x14] sm:$0x1] %v1496
        %v1498 = vld [vmem:[%s1473 + $0x18] sm:$0xf]
        %v1499 = vsel %vm1476, %v1423, %v1498
        %1500 = vst [vmem:[%s1473 + $0x18] sm:$0xf] %v1499
        %v1501 = vld [vmem:[%s1473 + $0x1c] sm:$0x1]
        %v1502 = vsel %vm1482, %v1424, %v1501
        %1503 = vst [vmem:[%s1473 + $0x1c] sm:$0x1] %v1502
        %v1504 = vld [vmem:[%s1473 + $0x20] sm:$0xf]
        %v1505 = vsel %vm1476, %v1431, %v1504
        %1506 = vst [vmem:[%s1473 + $0x20] sm:$0xf] %v1505
        %v1507 = vld [vmem:[%s1473 + $0x24] sm:$0x1]
        %v1508 = vsel %vm1482, %v1432, %v1507
        %1509 = vst [vmem:[%s1473 + $0x24] sm:$0x1] %v1508
        %v1510 = vld [vmem:[%s1473 + $0x28] sm:$0xf]
        %v1511 = vsel %vm1476, %v1439, %v1510
        %1512 = vst [vmem:[%s1473 + $0x28] sm:$0xf] %v1511
        %v1513 = vld [vmem:[%s1473 + $0x2c] sm:$0x1]
        %v1514 = vsel %vm1482, %v1440, %v1513
        %1515 = vst [vmem:[%s1473 + $0x2c] sm:$0x1] %v1514
        %v1516 = vld [vmem:[%s1473 + $0x30] sm:$0xf]
        %v1517 = vsel %vm1476, %v1447, %v1516
        %1518 = vst [vmem:[%s1473 + $0x30] sm:$0xf] %v1517
        %v1519 = vld [vmem:[%s1473 + $0x34] sm:$0x1]
        %v1520 = vsel %vm1482, %v1448, %v1519
        %1521 = vst [vmem:[%s1473 + $0x34] sm:$0x1] %v1520
        %v1522 = vld [vmem:[%s1473 + $0x38] sm:$0xf]
        %v1523 = vsel %vm1476, %v1455, %v1522
        %1524 = vst [vmem:[%s1473 + $0x38] sm:$0xf] %v1523
        %v1525 = vld [vmem:[%s1473 + $0x3c] sm:$0x1]
        %v1526 = vsel %vm1482, %v1456, %v1525
        %1527 = vst [vmem:[%s1473 + $0x3c] sm:$0x1] %v1526
        %v1528 = vld [vmem:[%s1473] sm:$0xf]
        %v1529 = vld [vmem:[%s1473 + $0x8] sm:$0xf]
        %v1530 = vld [vmem:[%s1473 + $0x10] sm:$0xf]
        %v1531 = vld [vmem:[%s1473 + $0x18] sm:$0xf]
        %v1532 = vld [vmem:[%s1473 + $0x20] sm:$0xf]
        %v1533 = vld [vmem:[%s1473 + $0x28] sm:$0xf]
        %v1534 = vld [vmem:[%s1473 + $0x30] sm:$0xf]
        %v1535 = vld [vmem:[%s1473 + $0x38] sm:$0xf]
        %v1536 = vunpack.c.l.bf16 %v1385
        %v1537 = vunpack.c.l.bf16 %v1386
        %v1538 = vunpack.c.l.bf16 %v1387
        %v1539 = vunpack.c.l.bf16 %v1388
        %v1540 = vunpack.c.l.bf16 %v1389
        %v1541 = vunpack.c.l.bf16 %v1390
        %v1542 = vunpack.c.l.bf16 %v1391
        %v1543 = vunpack.c.l.bf16 %v1392
        %v1544 = vunpack.c.l.bf16 %v1528
        %v1545 = vunpack.c.l.bf16 %v1529
        %v1546 = vunpack.c.l.bf16 %v1530
        %v1547 = vunpack.c.l.bf16 %v1531
        %v1548 = vunpack.c.l.bf16 %v1532
        %v1549 = vunpack.c.l.bf16 %v1533
        %v1550 = vunpack.c.l.bf16 %v1534
        %v1551 = vunpack.c.l.bf16 %v1535
        %v1552 = vmax.f32 %v1536, %v1544
        %v1553 = vmax.f32 %v1537, %v1545
        %v1554 = vmax.f32 %v1538, %v1546
        %v1555 = vmax.f32 %v1539, %v1547
        %v1556 = vmax.f32 %v1540, %v1548
        %v1557 = vmax.f32 %v1541, %v1549
        %v1558 = vmax.f32 %v1542, %v1550
        %v1559 = vmax.f32 %v1543, %v1551
        %v1560 = vpack.c.bf16 %v1552, %v1552
        %v1561 = vpack.c.bf16 %v1553, %v1553
        %v1562 = vpack.c.bf16 %v1554, %v1554
        %v1563 = vpack.c.bf16 %v1555, %v1555
        %v1564 = vpack.c.bf16 %v1556, %v1556
        %v1565 = vpack.c.bf16 %v1557, %v1557
        %v1566 = vpack.c.bf16 %v1558, %v1558
        %v1567 = vpack.c.bf16 %v1559, %v1559
        %v1569 = vshrl.u32 %v1281, 16
        %v1571 = vrot.slane %v1569, 7
        %v1572 = vshll.u32 %v1281, 16
        %v1574 = vor.u32 %v1571, %v1572
        %v1575 = vrot.slane %v1571, 4
        %v1577 = vshrl.u32 %v1282, 16
        %v1579 = vrot.slane %v1577, 7
        %v1580 = vshll.u32 %v1282, 16
        %v1582 = vor.u32 %v1579, %v1580
        %v1583 = vrot.slane %v1579, 4
        %v1585 = vshrl.u32 %v1283, 16
        %v1587 = vrot.slane %v1585, 7
        %v1588 = vshll.u32 %v1283, 16
        %v1590 = vor.u32 %v1587, %v1588
        %v1591 = vrot.slane %v1587, 4
        %v1593 = vshrl.u32 %v1284, 16
        %v1595 = vrot.slane %v1593, 7
        %v1596 = vshll.u32 %v1284, 16
        %v1598 = vor.u32 %v1595, %v1596
        %v1599 = vrot.slane %v1595, 4
        %v1601 = vshrl.u32 %v1285, 16
        %v1603 = vrot.slane %v1601, 7
        %v1604 = vshll.u32 %v1285, 16
        %v1606 = vor.u32 %v1603, %v1604
        %v1607 = vrot.slane %v1603, 4
        %v1609 = vshrl.u32 %v1286, 16
        %v1611 = vrot.slane %v1609, 7
        %v1612 = vshll.u32 %v1286, 16
        %v1614 = vor.u32 %v1611, %v1612
        %v1615 = vrot.slane %v1611, 4
        %v1617 = vshrl.u32 %v1287, 16
        %v1619 = vrot.slane %v1617, 7
        %v1620 = vshll.u32 %v1287, 16
        %v1622 = vor.u32 %v1619, %v1620
        %v1623 = vrot.slane %v1619, 4
        %v1625 = vshrl.u32 %v1288, 16
        %v1627 = vrot.slane %v1625, 7
        %v1628 = vshll.u32 %v1288, 16
        %v1630 = vor.u32 %v1627, %v1628
        %v1631 = vrot.slane %v1627, 4
        %v1648 = vsel %vm1476, %v1574, %v1528
        %1649 = vst [vmem:[%s1473] sm:$0xf] %v1648
        %v1650 = vld [vmem:[%s1473 + $0x4] sm:$0x1]
        %v1651 = vsel %vm1482, %v1575, %v1650
        %1652 = vst [vmem:[%s1473 + $0x4] sm:$0x1] %v1651
        %v1653 = vld [vmem:[%s1473 + $0x8] sm:$0xf]
        %v1654 = vsel %vm1476, %v1582, %v1653
        %1655 = vst [vmem:[%s1473 + $0x8] sm:$0xf] %v1654
        %v1656 = vld [vmem:[%s1473 + $0xc] sm:$0x1]
        %v1657 = vsel %vm1482, %v1583, %v1656
        %1658 = vst [vmem:[%s1473 + $0xc] sm:$0x1] %v1657
        %v1659 = vld [vmem:[%s1473 + $0x10] sm:$0xf]
        %v1660 = vsel %vm1476, %v1590, %v1659
        %1661 = vst [vmem:[%s1473 + $0x10] sm:$0xf] %v1660
        %v1662 = vld [vmem:[%s1473 + $0x14] sm:$0x1]
        %v1663 = vsel %vm1482, %v1591, %v1662
        %1664 = vst [vmem:[%s1473 + $0x14] sm:$0x1] %v1663
        %v1665 = vld [vmem:[%s1473 + $0x18] sm:$0xf]
        %v1666 = vsel %vm1476, %v1598, %v1665
        %1667 = vst [vmem:[%s1473 + $0x18] sm:$0xf] %v1666
        %v1668 = vld [vmem:[%s1473 + $0x1c] sm:$0x1]
        %v1669 = vsel %vm1482, %v1599, %v1668
        %1670 = vst [vmem:[%s1473 + $0x1c] sm:$0x1] %v1669
        %v1671 = vld [vmem:[%s1473 + $0x20] sm:$0xf]
        %v1672 = vsel %vm1476, %v1606, %v1671
        %1673 = vst [vmem:[%s1473 + $0x20] sm:$0xf] %v1672
        %v1674 = vld [vmem:[%s1473 + $0x24] sm:$0x1]
        %v1675 = vsel %vm1482, %v1607, %v1674
        %1676 = vst [vmem:[%s1473 + $0x24] sm:$0x1] %v1675
        %v1677 = vld [vmem:[%s1473 + $0x28] sm:$0xf]
        %v1678 = vsel %vm1476, %v1614, %v1677
        %1679 = vst [vmem:[%s1473 + $0x28] sm:$0xf] %v1678
        %v1680 = vld [vmem:[%s1473 + $0x2c] sm:$0x1]
        %v1681 = vsel %vm1482, %v1615, %v1680
        %1682 = vst [vmem:[%s1473 + $0x2c] sm:$0x1] %v1681
        %v1683 = vld [vmem:[%s1473 + $0x30] sm:$0xf]
        %v1684 = vsel %vm1476, %v1622, %v1683
        %1685 = vst [vmem:[%s1473 + $0x30] sm:$0xf] %v1684
        %v1686 = vld [vmem:[%s1473 + $0x34] sm:$0x1]
        %v1687 = vsel %vm1482, %v1623, %v1686
        %1688 = vst [vmem:[%s1473 + $0x34] sm:$0x1] %v1687
        %v1689 = vld [vmem:[%s1473 + $0x38] sm:$0xf]
        %v1690 = vsel %vm1476, %v1630, %v1689
        %1691 = vst [vmem:[%s1473 + $0x38] sm:$0xf] %v1690
        %v1692 = vld [vmem:[%s1473 + $0x3c] sm:$0x1]
        %v1693 = vsel %vm1482, %v1631, %v1692
        %1694 = vst [vmem:[%s1473 + $0x3c] sm:$0x1] %v1693
        %v1695 = vld [vmem:[#allocation2] sm:$0xf]
        %v1696 = vld [vmem:[#allocation2 + $0x4] sm:$0x1]
        %v1697 = vld [vmem:[#allocation2 + $0x8] sm:$0xf]
        %v1698 = vld [vmem:[#allocation2 + $0xc] sm:$0x1]
        %v1699 = vld [vmem:[#allocation2 + $0x10] sm:$0xf]
        %v1700 = vld [vmem:[#allocation2 + $0x14] sm:$0x1]
        %v1701 = vld [vmem:[#allocation2 + $0x18] sm:$0xf]
        %v1702 = vld [vmem:[#allocation2 + $0x1c] sm:$0x1]
        %v1703 = vld [vmem:[#allocation2 + $0x20] sm:$0xf]
        %v1704 = vld [vmem:[#allocation2 + $0x24] sm:$0x1]
        %v1705 = vld [vmem:[#allocation2 + $0x28] sm:$0xf]
        %v1706 = vld [vmem:[#allocation2 + $0x2c] sm:$0x1]
        %v1707 = vld [vmem:[#allocation2 + $0x30] sm:$0xf]
        %v1708 = vld [vmem:[#allocation2 + $0x34] sm:$0x1]
        %v1709 = vld [vmem:[#allocation2 + $0x38] sm:$0xf]
        %v1710 = vld [vmem:[#allocation2 + $0x3c] sm:$0x1]
        %v1711 = vunpack.c.l.bf16 %v1560
        %v1712 = vunpack.c.l.bf16 %v1561
        %v1713 = vunpack.c.l.bf16 %v1562
        %v1714 = vunpack.c.l.bf16 %v1563
        %v1715 = vunpack.c.l.bf16 %v1564
        %v1716 = vunpack.c.l.bf16 %v1565
        %v1717 = vunpack.c.l.bf16 %v1566
        %v1718 = vunpack.c.l.bf16 %v1567
        %v1719 = vunpack.c.l.bf16 %v1695
        %v1720 = vunpack.c.l.bf16 %v1696
        %v1721 = vunpack.c.l.bf16 %v1697
        %v1722 = vunpack.c.l.bf16 %v1698
        %v1723 = vunpack.c.l.bf16 %v1699
        %v1724 = vunpack.c.l.bf16 %v1700
        %v1725 = vunpack.c.l.bf16 %v1701
        %v1726 = vunpack.c.l.bf16 %v1702
        %v1727 = vunpack.c.l.bf16 %v1703
        %v1728 = vunpack.c.l.bf16 %v1704
        %v1729 = vunpack.c.l.bf16 %v1705
        %v1730 = vunpack.c.l.bf16 %v1706
        %v1731 = vunpack.c.l.bf16 %v1707
        %v1732 = vunpack.c.l.bf16 %v1708
        %v1733 = vunpack.c.l.bf16 %v1709
        %v1734 = vunpack.c.l.bf16 %v1710
        %vm1751 = vcmask 1046528
        %v1752 = vrot.slane %v1719, 1
        %v1753 = vrot.slane %v1720, 1
        %v1754 = vsel %vm1751, %v1752, %v1753
        %v1755 = vrot.slane %v1721, 1
        %v1756 = vrot.slane %v1722, 1
        %v1757 = vsel %vm1751, %v1755, %v1756
        %v1758 = vrot.slane %v1723, 1
        %v1759 = vrot.slane %v1724, 1
        %v1760 = vsel %vm1751, %v1758, %v1759
        %v1761 = vrot.slane %v1725, 1
        %v1762 = vrot.slane %v1726, 1
        %v1763 = vsel %vm1751, %v1761, %v1762
        %v1764 = vrot.slane %v1727, 1
        %v1765 = vrot.slane %v1728, 1
        %v1766 = vsel %vm1751, %v1764, %v1765
        %v1767 = vrot.slane %v1729, 1
        %v1768 = vrot.slane %v1730, 1
        %v1769 = vsel %vm1751, %v1767, %v1768
        %v1770 = vrot.slane %v1731, 1
        %v1771 = vrot.slane %v1732, 1
        %v1772 = vsel %vm1751, %v1770, %v1771
        %v1773 = vrot.slane %v1733, 1
        %v1774 = vrot.slane %v1734, 1
        %v1775 = vsel %vm1751, %v1773, %v1774
        %v1784 = vmax.f32 %v1711, %v1754
        %v1785 = vmax.f32 %v1712, %v1757
        %v1786 = vmax.f32 %v1713, %v1760
        %v1787 = vmax.f32 %v1714, %v1763
        %v1788 = vmax.f32 %v1715, %v1766
        %v1789 = vmax.f32 %v1716, %v1769
        %v1790 = vmax.f32 %v1717, %v1772
        %v1791 = vmax.f32 %v1718, %v1775
        %v1792 = vpack.c.bf16 %v1784, %v1784
        %v1793 = vpack.c.bf16 %v1785, %v1785
        %v1794 = vpack.c.bf16 %v1786, %v1786
        %v1795 = vpack.c.bf16 %v1787, %v1787
        %v1796 = vpack.c.bf16 %v1788, %v1788
        %v1797 = vpack.c.bf16 %v1789, %v1789
        %v1798 = vpack.c.bf16 %v1790, %v1790
        %v1799 = vpack.c.bf16 %v1791, %v1791
        %v1801 = vshrl.u32 %v1289, 16
        %v1803 = vrot.slane %v1801, 7
        %v1804 = vshll.u32 %v1289, 16
        %v1806 = vor.u32 %v1803, %v1804
        %v1807 = vrot.slane %v1803, 4
        %v1809 = vshrl.u32 %v1290, 16
        %v1811 = vrot.slane %v1809, 7
        %v1812 = vshll.u32 %v1290, 16
        %v1814 = vor.u32 %v1811, %v1812
        %v1815 = vrot.slane %v1811, 4
        %v1817 = vshrl.u32 %v1291, 16
        %v1819 = vrot.slane %v1817, 7
        %v1820 = vshll.u32 %v1291, 16
        %v1822 = vor.u32 %v1819, %v1820
        %v1823 = vrot.slane %v1819, 4
        %v1825 = vshrl.u32 %v1292, 16
        %v1827 = vrot.slane %v1825, 7
        %v1828 = vshll.u32 %v1292, 16
        %v1830 = vor.u32 %v1827, %v1828
        %v1831 = vrot.slane %v1827, 4
        %v1833 = vshrl.u32 %v1293, 16
        %v1835 = vrot.slane %v1833, 7
        %v1836 = vshll.u32 %v1293, 16
        %v1838 = vor.u32 %v1835, %v1836
        %v1839 = vrot.slane %v1835, 4
        %v1841 = vshrl.u32 %v1294, 16
        %v1843 = vrot.slane %v1841, 7
        %v1844 = vshll.u32 %v1294, 16
        %v1846 = vor.u32 %v1843, %v1844
        %v1847 = vrot.slane %v1843, 4
        %v1849 = vshrl.u32 %v1295, 16
        %v1851 = vrot.slane %v1849, 7
        %v1852 = vshll.u32 %v1295, 16
        %v1854 = vor.u32 %v1851, %v1852
        %v1855 = vrot.slane %v1851, 4
        %v1857 = vshrl.u32 %v1296, 16
        %v1859 = vrot.slane %v1857, 7
        %v1860 = vshll.u32 %v1296, 16
        %v1862 = vor.u32 %v1859, %v1860
        %v1863 = vrot.slane %v1859, 4
        %v1880 = vld [vmem:[%s1473] sm:$0xf]
        %v1881 = vsel %vm1476, %v1806, %v1880
        %1882 = vst [vmem:[%s1473] sm:$0xf] %v1881
        %v1883 = vld [vmem:[%s1473 + $0x4] sm:$0x1]
        %v1884 = vsel %vm1482, %v1807, %v1883
        %1885 = vst [vmem:[%s1473 + $0x4] sm:$0x1] %v1884
        %v1886 = vld [vmem:[%s1473 + $0x8] sm:$0xf]
        %v1887 = vsel %vm1476, %v1814, %v1886
        %1888 = vst [vmem:[%s1473 + $0x8] sm:$0xf] %v1887
        %v1889 = vld [vmem:[%s1473 + $0xc] sm:$0x1]
        %v1890 = vsel %vm1482, %v1815, %v1889
        %1891 = vst [vmem:[%s1473 + $0xc] sm:$0x1] %v1890
        %v1892 = vld [vmem:[%s1473 + $0x10] sm:$0xf]
        %v1893 = vsel %vm1476, %v1822, %v1892
        %1894 = vst [vmem:[%s1473 + $0x10] sm:$0xf] %v1893
        %v1895 = vld [vmem:[%s1473 + $0x14] sm:$0x1]
        %v1896 = vsel %vm1482, %v1823, %v1895
        %1897 = vst [vmem:[%s1473 + $0x14] sm:$0x1] %v1896
        %v1898 = vld [vmem:[%s1473 + $0x18] sm:$0xf]
        %v1899 = vsel %vm1476, %v1830, %v1898
        %1900 = vst [vmem:[%s1473 + $0x18] sm:$0xf] %v1899
        %v1901 = vld [vmem:[%s1473 + $0x1c] sm:$0x1]
        %v1902 = vsel %vm1482, %v1831, %v1901
        %1903 = vst [vmem:[%s1473 + $0x1c] sm:$0x1] %v1902
        %v1904 = vld [vmem:[%s1473 + $0x20] sm:$0xf]
        %v1905 = vsel %vm1476, %v1838, %v1904
        %1906 = vst [vmem:[%s1473 + $0x20] sm:$0xf] %v1905
        %v1907 = vld [vmem:[%s1473 + $0x24] sm:$0x1]
        %v1908 = vsel %vm1482, %v1839, %v1907
        %1909 = vst [vmem:[%s1473 + $0x24] sm:$0x1] %v1908
        %v1910 = vld [vmem:[%s1473 + $0x28] sm:$0xf]
        %v1911 = vsel %vm1476, %v1846, %v1910
        %1912 = vst [vmem:[%s1473 + $0x28] sm:$0xf] %v1911
        %v1913 = vld [vmem:[%s1473 + $0x2c] sm:$0x1]
        %v1914 = vsel %vm1482, %v1847, %v1913
        %1915 = vst [vmem:[%s1473 + $0x2c] sm:$0x1] %v1914
        %v1916 = vld [vmem:[%s1473 + $0x30] sm:$0xf]
        %v1917 = vsel %vm1476, %v1854, %v1916
        %1918 = vst [vmem:[%s1473 + $0x30] sm:$0xf] %v1917
        %v1919 = vld [vmem:[%s1473 + $0x34] sm:$0x1]
        %v1920 = vsel %vm1482, %v1855, %v1919
        %1921 = vst [vmem:[%s1473 + $0x34] sm:$0x1] %v1920
        %v1922 = vld [vmem:[%s1473 + $0x38] sm:$0xf]
        %v1923 = vsel %vm1476, %v1862, %v1922
        %1924 = vst [vmem:[%s1473 + $0x38] sm:$0xf] %v1923
        %v1925 = vld [vmem:[%s1473 + $0x3c] sm:$0x1]
        %v1926 = vsel %vm1482, %v1863, %v1925
        %1927 = vst [vmem:[%s1473 + $0x3c] sm:$0x1] %v1926
        %v1928 = vld [vmem:[%s1473] sm:$0xf]
        %v1929 = vld [vmem:[%s1473 + $0x8] sm:$0xf]
        %v1930 = vld [vmem:[%s1473 + $0x10] sm:$0xf]
        %v1931 = vld [vmem:[%s1473 + $0x18] sm:$0xf]
        %v1932 = vld [vmem:[%s1473 + $0x20] sm:$0xf]
        %v1933 = vld [vmem:[%s1473 + $0x28] sm:$0xf]
        %v1934 = vld [vmem:[%s1473 + $0x30] sm:$0xf]
        %v1935 = vld [vmem:[%s1473 + $0x38] sm:$0xf]
        %v1936 = vunpack.c.l.bf16 %v1792
        %v1937 = vunpack.c.l.bf16 %v1793
        %v1938 = vunpack.c.l.bf16 %v1794
        %v1939 = vunpack.c.l.bf16 %v1795
        %v1940 = vunpack.c.l.bf16 %v1796
        %v1941 = vunpack.c.l.bf16 %v1797
        %v1942 = vunpack.c.l.bf16 %v1798
        %v1943 = vunpack.c.l.bf16 %v1799
        %v1944 = vunpack.c.l.bf16 %v1928
        %v1945 = vunpack.c.l.bf16 %v1929
        %v1946 = vunpack.c.l.bf16 %v1930
        %v1947 = vunpack.c.l.bf16 %v1931
        %v1948 = vunpack.c.l.bf16 %v1932
        %v1949 = vunpack.c.l.bf16 %v1933
        %v1950 = vunpack.c.l.bf16 %v1934
        %v1951 = vunpack.c.l.bf16 %v1935
        %v1952 = vmax.f32 %v1936, %v1944
        %v1953 = vmax.f32 %v1937, %v1945
        %v1954 = vmax.f32 %v1938, %v1946
        %v1955 = vmax.f32 %v1939, %v1947
        %v1956 = vmax.f32 %v1940, %v1948
        %v1957 = vmax.f32 %v1941, %v1949
        %v1958 = vmax.f32 %v1942, %v1950
        %v1959 = vmax.f32 %v1943, %v1951
        %v1960 = vpack.c.bf16 %v1952, %v1952
        %v1961 = vpack.c.bf16 %v1953, %v1953
        %v1962 = vpack.c.bf16 %v1954, %v1954
        %v1963 = vpack.c.bf16 %v1955, %v1955
        %v1964 = vpack.c.bf16 %v1956, %v1956
        %v1965 = vpack.c.bf16 %v1957, %v1957
        %v1966 = vpack.c.bf16 %v1958, %v1958
        %v1967 = vpack.c.bf16 %v1959, %v1959
        %v1968 = vld [vmem:[#allocation2] sm:$0xf]
        %v1969 = vld [vmem:[#allocation2 + $0x4] sm:$0x1]
        %v1970 = vld [vmem:[#allocation2 + $0x8] sm:$0xf]
        %v1971 = vld [vmem:[#allocation2 + $0xc] sm:$0x1]
        %v1972 = vld [vmem:[#allocation2 + $0x10] sm:$0xf]
        %v1973 = vld [vmem:[#allocation2 + $0x14] sm:$0x1]
        %v1974 = vld [vmem:[#allocation2 + $0x18] sm:$0xf]
        %v1975 = vld [vmem:[#allocation2 + $0x1c] sm:$0x1]
        %v1976 = vld [vmem:[#allocation2 + $0x20] sm:$0xf]
        %v1977 = vld [vmem:[#allocation2 + $0x24] sm:$0x1]
        %v1978 = vld [vmem:[#allocation2 + $0x28] sm:$0xf]
        %v1979 = vld [vmem:[#allocation2 + $0x2c] sm:$0x1]
        %v1980 = vld [vmem:[#allocation2 + $0x30] sm:$0xf]
        %v1981 = vld [vmem:[#allocation2 + $0x34] sm:$0x1]
        %v1982 = vld [vmem:[#allocation2 + $0x38] sm:$0xf]
        %v1983 = vld [vmem:[#allocation2 + $0x3c] sm:$0x1]
        %v1984 = vunpack.c.l.bf16 %v1960
        %v1985 = vunpack.c.l.bf16 %v1961
        %v1986 = vunpack.c.l.bf16 %v1962
        %v1987 = vunpack.c.l.bf16 %v1963
        %v1988 = vunpack.c.l.bf16 %v1964
        %v1989 = vunpack.c.l.bf16 %v1965
        %v1990 = vunpack.c.l.bf16 %v1966
        %v1991 = vunpack.c.l.bf16 %v1967
        %v1992 = vunpack.c.l.bf16 %v1968
        %v1993 = vunpack.c.l.bf16 %v1969
        %v1994 = vunpack.c.l.bf16 %v1970
        %v1995 = vunpack.c.l.bf16 %v1971
        %v1996 = vunpack.c.l.bf16 %v1972
        %v1997 = vunpack.c.l.bf16 %v1973
        %v1998 = vunpack.c.l.bf16 %v1974
        %v1999 = vunpack.c.l.bf16 %v1975
        %v2000 = vunpack.c.l.bf16 %v1976
        %v2001 = vunpack.c.l.bf16 %v1977
        %v2002 = vunpack.c.l.bf16 %v1978
        %v2003 = vunpack.c.l.bf16 %v1979
        %v2004 = vunpack.c.l.bf16 %v1980
        %v2005 = vunpack.c.l.bf16 %v1981
        %v2006 = vunpack.c.l.bf16 %v1982
        %v2007 = vunpack.c.l.bf16 %v1983
        %v2024 = vrot.slane %v1992, 1
        %v2025 = vrot.slane %v1993, 1
        %v2026 = vsel %vm1751, %v2024, %v2025
        %v2027 = vrot.slane %v1994, 1
        %v2028 = vrot.slane %v1995, 1
        %v2029 = vsel %vm1751, %v2027, %v2028
        %v2030 = vrot.slane %v1996, 1
        %v2031 = vrot.slane %v1997, 1
        %v2032 = vsel %vm1751, %v2030, %v2031
        %v2033 = vrot.slane %v1998, 1
        %v2034 = vrot.slane %v1999, 1
        %v2035 = vsel %vm1751, %v2033, %v2034
        %v2036 = vrot.slane %v2000, 1
        %v2037 = vrot.slane %v2001, 1
        %v2038 = vsel %vm1751, %v2036, %v2037
        %v2039 = vrot.slane %v2002, 1
        %v2040 = vrot.slane %v2003, 1
        %v2041 = vsel %vm1751, %v2039, %v2040
        %v2042 = vrot.slane %v2004, 1
        %v2043 = vrot.slane %v2005, 1
        %v2044 = vsel %vm1751, %v2042, %v2043
        %v2045 = vrot.slane %v2006, 1
        %v2046 = vrot.slane %v2007, 1
        %v2047 = vsel %vm1751, %v2045, %v2046
        %v2056 = vmax.f32 %v1984, %v2026
        %v2057 = vmax.f32 %v1985, %v2029
        %v2058 = vmax.f32 %v1986, %v2032
        %v2059 = vmax.f32 %v1987, %v2035
        %v2060 = vmax.f32 %v1988, %v2038
        %v2061 = vmax.f32 %v1989, %v2041
        %v2062 = vmax.f32 %v1990, %v2044
        %v2063 = vmax.f32 %v1991, %v2047
        %v2064 = vpack.c.bf16 %v2056, %v2056
        %v2065 = vpack.c.bf16 %v2057, %v2057
        %v2066 = vpack.c.bf16 %v2058, %v2058
        %v2067 = vpack.c.bf16 %v2059, %v2059
        %v2068 = vpack.c.bf16 %v2060, %v2060
        %v2069 = vpack.c.bf16 %v2061, %v2061
        %v2070 = vpack.c.bf16 %v2062, %v2062
        %v2071 = vpack.c.bf16 %v2063, %v2063
        %v2072 = vunpack.c.l.bf16 %v2064
        %v2073 = vunpack.c.l.bf16 %v2065
        %v2074 = vunpack.c.l.bf16 %v2066
        %v2075 = vunpack.c.l.bf16 %v2067
        %v2076 = vunpack.c.l.bf16 %v2068
        %v2077 = vunpack.c.l.bf16 %v2069
        %v2078 = vunpack.c.l.bf16 %v2070
        %v2079 = vunpack.c.l.bf16 %v2071
        %v2080 = vmax.f32 %v2072, %v1992
        %v2081 = vmax.f32 %v2073, %v1994
        %v2082 = vmax.f32 %v2074, %v1996
        %v2083 = vmax.f32 %v2075, %v1998
        %v2084 = vmax.f32 %v2076, %v2000
        %v2085 = vmax.f32 %v2077, %v2002
        %v2086 = vmax.f32 %v2078, %v2004
        %v2087 = vmax.f32 %v2079, %v2006
        %v2088 = vpack.c.bf16 %v2080, %v2080
        %v2089 = vpack.c.bf16 %v2081, %v2081
        %v2090 = vpack.c.bf16 %v2082, %v2082
        %v2091 = vpack.c.bf16 %v2083, %v2083
        %v2092 = vpack.c.bf16 %v2084, %v2084
        %v2093 = vpack.c.bf16 %v2085, %v2085
        %v2094 = vpack.c.bf16 %v2086, %v2086
        %v2095 = vpack.c.bf16 %v2087, %v2087
        %v2096 = vld [vmem:[%s3] sm:$0xf]
        %v2097 = vld [vmem:[%s3 + $0x4] sm:$0xf]
        %v2098 = vld [vmem:[%s3 + $0x8] sm:$0xf]
        %v2099 = vld [vmem:[%s3 + $0xc] sm:$0xf]
        %v2100 = vld [vmem:[%s3 + $0x10] sm:$0xf]
        %v2101 = vld [vmem:[%s3 + $0x14] sm:$0xf]
        %v2102 = vld [vmem:[%s3 + $0x18] sm:$0xf]
        %v2103 = vld [vmem:[%s3 + $0x1c] sm:$0xf]
        %v2104 = vld [vmem:[%s3 + $0x20] sm:$0xf]
        %v2105 = vld [vmem:[%s3 + $0x24] sm:$0xf]
        %v2106 = vld [vmem:[%s3 + $0x28] sm:$0xf]
        %v2107 = vld [vmem:[%s3 + $0x2c] sm:$0xf]
        %v2108 = vld [vmem:[%s3 + $0x30] sm:$0xf]
        %v2109 = vld [vmem:[%s3 + $0x34] sm:$0xf]
        %v2110 = vld [vmem:[%s3 + $0x38] sm:$0xf]
        %v2111 = vld [vmem:[%s3 + $0x3c] sm:$0xf]
        %v2112 = vld [vmem:[%s4] sm:$0x1]
        %v2114 = vperm.slane %v2112, 0
        %v2124 = vunpack.c.l.b16 %v2088
        %v2125 = vunpack.c.l.b16 %v2089
        %v2126 = vunpack.c.l.b16 %v2090
        %v2127 = vunpack.c.l.b16 %v2091
        %v2128 = vunpack.c.l.b16 %v2092
        %v2129 = vunpack.c.l.b16 %v2093
        %v2130 = vunpack.c.l.b16 %v2094
        %v2131 = vunpack.c.l.b16 %v2095
        %v2132 = vpack.c.b16 %v2125, %v2124
        %v2133 = vpack.c.b16 %v2127, %v2126
        %v2134 = vpack.c.b16 %v2129, %v2128
        %v2135 = vpack.c.b16 %v2131, %v2130
        %v2156 = vunpack.c.l.b16 %v2096
        %v2157 = vunpack.c.l.b16 %v2097
        %v2158 = vunpack.c.l.b16 %v2098
        %v2159 = vunpack.c.l.b16 %v2099
        %v2160 = vunpack.c.l.b16 %v2100
        %v2161 = vunpack.c.l.b16 %v2101
        %v2162 = vunpack.c.l.b16 %v2102
        %v2163 = vunpack.c.l.b16 %v2103
        %v2164 = vunpack.c.l.b16 %v2104
        %v2165 = vunpack.c.l.b16 %v2105
        %v2166 = vunpack.c.l.b16 %v2106
        %v2167 = vunpack.c.l.b16 %v2107
        %v2168 = vunpack.c.l.b16 %v2108
        %v2169 = vunpack.c.l.b16 %v2109
        %v2170 = vunpack.c.l.b16 %v2110
        %v2171 = vunpack.c.l.b16 %v2111
        %v2172 = vpack.c.b16 %v2157, %v2156
        %v2173 = vpack.c.b16 %v2159, %v2158
        %v2174 = vpack.c.b16 %v2161, %v2160
        %v2175 = vpack.c.b16 %v2163, %v2162
        %v2176 = vpack.c.b16 %v2165, %v2164
        %v2177 = vpack.c.b16 %v2167, %v2166
        %v2178 = vpack.c.b16 %v2169, %v2168
        %v2179 = vpack.c.b16 %v2171, %v2170
        %2188 = vmatpush.bf16.msra.mxu0 %v2179
        %2189 = vmatpush.bf16.msra.mxu0 %v2178
        %2190 = vmatpush.bf16.msra.mxu0 %v2177
        %2191 = vmatpush.bf16.msra.mxu0 %v2176
        %2192 = vmatpush.bf16.msra.mxu0 %v2175
        %2193 = vmatpush.bf16.msra.mxu0 %v2174
        %2194 = vmatpush.bf16.msra.mxu0 %v2173
        %2195 = vmatpush.bf16.msra.mxu0 %v2172
        %2196 = vmatmul.bf16.gmra.mxu0 %v2132
        %v2197 = vpop.f32.mrf.mxu0
        %v2198 = vadd.f32 %v2114, %v2197
        %v2199 = vpop.f32.mrf.mxu0
        %v2200 = vadd.f32 %v2114, %v2199
        %2201 = vmatmul.bf16.gmra.mxu0 %v2133
        %v2202 = vpop.f32.mrf.mxu0
        %v2203 = vadd.f32 %v2114, %v2202
        %v2204 = vpop.f32.mrf.mxu0
        %v2205 = vadd.f32 %v2114, %v2204
        %2206 = vmatmul.bf16.gmra.mxu0 %v2134
        %v2207 = vpop.f32.mrf.mxu0
        %v2208 = vadd.f32 %v2114, %v2207
        %v2209 = vpop.f32.mrf.mxu0
        %v2210 = vadd.f32 %v2114, %v2209
        %2211 = vmatmul.bf16.gmra.mxu0 %v2135
        %v2212 = vpop.f32.mrf.mxu0
        %v2213 = vadd.f32 %v2114, %v2212
        %v2214 = vpop.f32.mrf.mxu0
        %v2215 = vadd.f32 %v2114, %v2214
        %2216 = vdwg.mxu0
        %v2217 = vmax.f32 %v2198, 0.0
        %v2218 = vmax.f32 %v2200, 0.0
        %v2219 = vmax.f32 %v2203, 0.0
        %v2220 = vmax.f32 %v2205, 0.0
        %v2221 = vmax.f32 %v2208, 0.0
        %v2222 = vmax.f32 %v2210, 0.0
        %v2223 = vmax.f32 %v2213, 0.0
        %v2224 = vmax.f32 %v2215, 0.0
        %v2225 = vpack.c.bf16 %v2217, %v2217
        %v2226 = vpack.c.bf16 %v2218, %v2218
        %v2227 = vpack.c.bf16 %v2219, %v2219
        %v2228 = vpack.c.bf16 %v2220, %v2220
        %v2229 = vpack.c.bf16 %v2221, %v2221
        %v2230 = vpack.c.bf16 %v2222, %v2222
        %v2231 = vpack.c.bf16 %v2223, %v2223
        %v2232 = vpack.c.bf16 %v2224, %v2224
        %v2234 = vshrl.u32 %v2225, 16
        %v2236 = vrot.slane %v2234, 7
        %v2237 = vshll.u32 %v2225, 16
        %v2239 = vor.u32 %v2236, %v2237
        %v2240 = vrot.slane %v2236, 4
        %v2242 = vshrl.u32 %v2226, 16
        %v2244 = vrot.slane %v2242, 7
        %v2245 = vshll.u32 %v2226, 16
        %v2247 = vor.u32 %v2244, %v2245
        %v2248 = vrot.slane %v2244, 4
        %v2250 = vshrl.u32 %v2227, 16
        %v2252 = vrot.slane %v2250, 7
        %v2253 = vshll.u32 %v2227, 16
        %v2255 = vor.u32 %v2252, %v2253
        %v2256 = vrot.slane %v2252, 4
        %v2258 = vshrl.u32 %v2228, 16
        %v2260 = vrot.slane %v2258, 7
        %v2261 = vshll.u32 %v2228, 16
        %v2263 = vor.u32 %v2260, %v2261
        %v2264 = vrot.slane %v2260, 4
        %v2266 = vshrl.u32 %v2229, 16
        %v2268 = vrot.slane %v2266, 7
        %v2269 = vshll.u32 %v2229, 16
        %v2271 = vor.u32 %v2268, %v2269
        %v2272 = vrot.slane %v2268, 4
        %v2274 = vshrl.u32 %v2230, 16
        %v2276 = vrot.slane %v2274, 7
        %v2277 = vshll.u32 %v2230, 16
        %v2279 = vor.u32 %v2276, %v2277
        %v2280 = vrot.slane %v2276, 4
        %v2282 = vshrl.u32 %v2231, 16
        %v2284 = vrot.slane %v2282, 7
        %v2285 = vshll.u32 %v2231, 16
        %v2287 = vor.u32 %v2284, %v2285
        %v2288 = vrot.slane %v2284, 4
        %v2290 = vshrl.u32 %v2232, 16
        %v2292 = vrot.slane %v2290, 7
        %v2293 = vshll.u32 %v2232, 16
        %v2295 = vor.u32 %v2292, %v2293
        %v2296 = vrot.slane %v2292, 4
        %v2313 = vld [vmem:[%s1473] sm:$0xf]
        %v2314 = vsel %vm1476, %v2239, %v2313
        %2315 = vst [vmem:[%s1473] sm:$0xf] %v2314
        %v2316 = vld [vmem:[%s1473 + $0x4] sm:$0x1]
        %v2317 = vsel %vm1482, %v2240, %v2316
        %2318 = vst [vmem:[%s1473 + $0x4] sm:$0x1] %v2317
        %v2319 = vld [vmem:[%s1473 + $0x8] sm:$0xf]
        %v2320 = vsel %vm1476, %v2247, %v2319
        %2321 = vst [vmem:[%s1473 + $0x8] sm:$0xf] %v2320
        %v2322 = vld [vmem:[%s1473 + $0xc] sm:$0x1]
        %v2323 = vsel %vm1482, %v2248, %v2322
        %2324 = vst [vmem:[%s1473 + $0xc] sm:$0x1] %v2323
        %v2325 = vld [vmem:[%s1473 + $0x10] sm:$0xf]
        %v2326 = vsel %vm1476, %v2255, %v2325
        %2327 = vst [vmem:[%s1473 + $0x10] sm:$0xf] %v2326
        %v2328 = vld [vmem:[%s1473 + $0x14] sm:$0x1]
        %v2329 = vsel %vm1482, %v2256, %v2328
        %2330 = vst [vmem:[%s1473 + $0x14] sm:$0x1] %v2329
        %v2331 = vld [vmem:[%s1473 + $0x18] sm:$0xf]
        %v2332 = vsel %vm1476, %v2263, %v2331
        %2333 = vst [vmem:[%s1473 + $0x18] sm:$0xf] %v2332
        %v2334 = vld [vmem:[%s1473 + $0x1c] sm:$0x1]
        %v2335 = vsel %vm1482, %v2264, %v2334
        %2336 = vst [vmem:[%s1473 + $0x1c] sm:$0x1] %v2335
        %v2337 = vld [vmem:[%s1473 + $0x20] sm:$0xf]
        %v2338 = vsel %vm1476, %v2271, %v2337
        %2339 = vst [vmem:[%s1473 + $0x20] sm:$0xf] %v2338
        %v2340 = vld [vmem:[%s1473 + $0x24] sm:$0x1]
        %v2341 = vsel %vm1482, %v2272, %v2340
        %2342 = vst [vmem:[%s1473 + $0x24] sm:$0x1] %v2341
        %v2343 = vld [vmem:[%s1473 + $0x28] sm:$0xf]
        %v2344 = vsel %vm1476, %v2279, %v2343
        %2345 = vst [vmem:[%s1473 + $0x28] sm:$0xf] %v2344
        %v2346 = vld [vmem:[%s1473 + $0x2c] sm:$0x1]
        %v2347 = vsel %vm1482, %v2280, %v2346
        %2348 = vst [vmem:[%s1473 + $0x2c] sm:$0x1] %v2347
        %v2349 = vld [vmem:[%s1473 + $0x30] sm:$0xf]
        %v2350 = vsel %vm1476, %v2287, %v2349
        %2351 = vst [vmem:[%s1473 + $0x30] sm:$0xf] %v2350
        %v2352 = vld [vmem:[%s1473 + $0x34] sm:$0x1]
        %v2353 = vsel %vm1482, %v2288, %v2352
        %2354 = vst [vmem:[%s1473 + $0x34] sm:$0x1] %v2353
        %v2355 = vld [vmem:[%s1473 + $0x38] sm:$0xf]
        %v2356 = vsel %vm1476, %v2295, %v2355
        %2357 = vst [vmem:[%s1473 + $0x38] sm:$0xf] %v2356
        %v2358 = vld [vmem:[%s1473 + $0x3c] sm:$0x1]
        %v2359 = vsel %vm1482, %v2296, %v2358
        %2360 = vst [vmem:[%s1473 + $0x3c] sm:$0x1] %v2359
        %v2361 = vld [vmem:[#allocation2] sm:$0xf]
        %v2362 = vld [vmem:[#allocation2 + $0x8] sm:$0xf]
        %v2363 = vld [vmem:[#allocation2 + $0x10] sm:$0xf]
        %v2364 = vld [vmem:[#allocation2 + $0x18] sm:$0xf]
        %v2365 = vld [vmem:[#allocation2 + $0x20] sm:$0xf]
        %v2366 = vld [vmem:[#allocation2 + $0x28] sm:$0xf]
        %v2367 = vld [vmem:[#allocation2 + $0x30] sm:$0xf]
        %v2368 = vld [vmem:[#allocation2 + $0x38] sm:$0xf]
        %v2369 = vld [vmem:[#allocation2 + $0x4] sm:$0x1]
        %v2370 = vld [vmem:[#allocation2 + $0xc] sm:$0x1]
        %v2371 = vld [vmem:[#allocation2 + $0x14] sm:$0x1]
        %v2372 = vld [vmem:[#allocation2 + $0x1c] sm:$0x1]
        %v2373 = vld [vmem:[#allocation2 + $0x24] sm:$0x1]
        %v2374 = vld [vmem:[#allocation2 + $0x2c] sm:$0x1]
        %v2375 = vld [vmem:[#allocation2 + $0x34] sm:$0x1]
        %v2376 = vld [vmem:[#allocation2 + $0x3c] sm:$0x1]
        %vm2377 = vsmask.f32 3328
        %vm2378 = vsmask.f32 7440
        %vm2379 = vmor %vm2377, %vm2378
        %v2381 = vshrl.u32 %v2361, 16
        %v2383 = vrot.slane %v2381, 4
        %v2384 = vshll.u32 %v2361, 16
        %v2386 = vrot.slane %v2384, 5
        %v2387 = vor.u32 %v2383, %v2386
        %v2388 = vrot.slane %v2387, 4
        %v2390 = vshll.u32 %v2369, 16
        %v2392 = vrot.slane %v2390, 5
        %v2393 = vsel %vm2379, %v2388, %v2392
        %v2395 = vshrl.u32 %v2362, 16
        %v2397 = vrot.slane %v2395, 4
        %v2398 = vshll.u32 %v2362, 16
        %v2400 = vrot.slane %v2398, 5
        %v2401 = vor.u32 %v2397, %v2400
        %v2402 = vrot.slane %v2401, 4
        %v2404 = vshll.u32 %v2370, 16
        %v2406 = vrot.slane %v2404, 5
        %v2407 = vsel %vm2379, %v2402, %v2406
        %v2409 = vshrl.u32 %v2363, 16
        %v2411 = vrot.slane %v2409, 4
        %v2412 = vshll.u32 %v2363, 16
        %v2414 = vrot.slane %v2412, 5
        %v2415 = vor.u32 %v2411, %v2414
        %v2416 = vrot.slane %v2415, 4
        %v2418 = vshll.u32 %v2371, 16
        %v2420 = vrot.slane %v2418, 5
        %v2421 = vsel %vm2379, %v2416, %v2420
        %v2423 = vshrl.u32 %v2364, 16
        %v2425 = vrot.slane %v2423, 4
        %v2426 = vshll.u32 %v2364, 16
        %v2428 = vrot.slane %v2426, 5
        %v2429 = vor.u32 %v2425, %v2428
        %v2430 = vrot.slane %v2429, 4
        %v2432 = vshll.u32 %v2372, 16
        %v2434 = vrot.slane %v2432, 5
        %v2435 = vsel %vm2379, %v2430, %v2434
        %v2437 = vshrl.u32 %v2365, 16
        %v2439 = vrot.slane %v2437, 4
        %v2440 = vshll.u32 %v2365, 16
        %v2442 = vrot.slane %v2440, 5
        %v2443 = vor.u32 %v2439, %v2442
        %v2444 = vrot.slane %v2443, 4
        %v2446 = vshll.u32 %v2373, 16
        %v2448 = vrot.slane %v2446, 5
        %v2449 = vsel %vm2379, %v2444, %v2448
        %v2451 = vshrl.u32 %v2366, 16
        %v2453 = vrot.slane %v2451, 4
        %v2454 = vshll.u32 %v2366, 16
        %v2456 = vrot.slane %v2454, 5
        %v2457 = vor.u32 %v2453, %v2456
        %v2458 = vrot.slane %v2457, 4
        %v2460 = vshll.u32 %v2374, 16
        %v2462 = vrot.slane %v2460, 5
        %v2463 = vsel %vm2379, %v2458, %v2462
        %v2465 = vshrl.u32 %v2367, 16
        %v2467 = vrot.slane %v2465, 4
        %v2468 = vshll.u32 %v2367, 16
        %v2470 = vrot.slane %v2468, 5
        %v2471 = vor.u32 %v2467, %v2470
        %v2472 = vrot.slane %v2471, 4
        %v2474 = vshll.u32 %v2375, 16
        %v2476 = vrot.slane %v2474, 5
        %v2477 = vsel %vm2379, %v2472, %v2476
        %v2479 = vshrl.u32 %v2368, 16
        %v2481 = vrot.slane %v2479, 4
        %v2482 = vshll.u32 %v2368, 16
        %v2484 = vrot.slane %v2482, 5
        %v2485 = vor.u32 %v2481, %v2484
        %v2486 = vrot.slane %v2485, 4
        %v2488 = vshll.u32 %v2376, 16
        %v2490 = vrot.slane %v2488, 5
        %v2491 = vsel %vm2379, %v2486, %v2490
        %v2492 = vld [vmem:[#allocation2] sm:$0xe]
        %v2493 = vld [vmem:[#allocation2 + $0x8] sm:$0xe]
        %v2494 = vld [vmem:[#allocation2 + $0x10] sm:$0xe]
        %v2495 = vld [vmem:[#allocation2 + $0x18] sm:$0xe]
        %v2496 = vld [vmem:[#allocation2 + $0x20] sm:$0xe]
        %v2497 = vld [vmem:[#allocation2 + $0x28] sm:$0xe]
        %v2498 = vld [vmem:[#allocation2 + $0x30] sm:$0xe]
        %v2499 = vld [vmem:[#allocation2 + $0x38] sm:$0xe]
        %vm2516 = vcmask 1042432
        %vm2517 = vcmask 1046532
        %vm2518 = vmor %vm2516, %vm2517
        %v2519 = vrot.slane %v2492, 5
        %v2520 = vrot.slane %v2519, 4
        %v2521 = vrot.slane %v2369, 5
        %v2522 = vsel %vm2518, %v2520, %v2521
        %v2523 = vrot.slane %v2493, 5
        %v2524 = vrot.slane %v2523, 4
        %v2525 = vrot.slane %v2370, 5
        %v2526 = vsel %vm2518, %v2524, %v2525
        %v2527 = vrot.slane %v2494, 5
        %v2528 = vrot.slane %v2527, 4
        %v2529 = vrot.slane %v2371, 5
        %v2530 = vsel %vm2518, %v2528, %v2529
        %v2531 = vrot.slane %v2495, 5
        %v2532 = vrot.slane %v2531, 4
        %v2533 = vrot.slane %v2372, 5
        %v2534 = vsel %vm2518, %v2532, %v2533
        %v2535 = vrot.slane %v2496, 5
        %v2536 = vrot.slane %v2535, 4
        %v2537 = vrot.slane %v2373, 5
        %v2538 = vsel %vm2518, %v2536, %v2537
        %v2539 = vrot.slane %v2497, 5
        %v2540 = vrot.slane %v2539, 4
        %v2541 = vrot.slane %v2374, 5
        %v2542 = vsel %vm2518, %v2540, %v2541
        %v2543 = vrot.slane %v2498, 5
        %v2544 = vrot.slane %v2543, 4
        %v2545 = vrot.slane %v2375, 5
        %v2546 = vsel %vm2518, %v2544, %v2545
        %v2547 = vrot.slane %v2499, 5
        %v2548 = vrot.slane %v2547, 4
        %v2549 = vrot.slane %v2376, 5
        %v2550 = vsel %vm2518, %v2548, %v2549
        %v2551 = vld [vmem:[%s1473] sm:$0xf]
        %v2552 = vld [vmem:[%s1473 + $0x8] sm:$0xf]
        %v2553 = vld [vmem:[%s1473 + $0x10] sm:$0xf]
        %v2554 = vld [vmem:[%s1473 + $0x18] sm:$0xf]
        %v2555 = vld [vmem:[%s1473 + $0x20] sm:$0xf]
        %v2556 = vld [vmem:[%s1473 + $0x28] sm:$0xf]
        %v2557 = vld [vmem:[%s1473 + $0x30] sm:$0xf]
        %v2558 = vld [vmem:[%s1473 + $0x38] sm:$0xf]
        %v2559 = vld [vmem:[%s1473 + $0x4] sm:$0x1]
        %v2560 = vld [vmem:[%s1473 + $0xc] sm:$0x1]
        %v2561 = vld [vmem:[%s1473 + $0x14] sm:$0x1]
        %v2562 = vld [vmem:[%s1473 + $0x1c] sm:$0x1]
        %v2563 = vld [vmem:[%s1473 + $0x24] sm:$0x1]
        %v2564 = vld [vmem:[%s1473 + $0x2c] sm:$0x1]
        %v2565 = vld [vmem:[%s1473 + $0x34] sm:$0x1]
        %v2566 = vld [vmem:[%s1473 + $0x3c] sm:$0x1]
        %v2568 = vshrl.u32 %v2551, 16
        %v2570 = vrot.slane %v2568, 4
        %v2571 = vshll.u32 %v2551, 16
        %v2573 = vrot.slane %v2571, 5
        %v2574 = vor.u32 %v2570, %v2573
        %v2575 = vrot.slane %v2574, 4
        %v2577 = vshll.u32 %v2559, 16
        %v2579 = vrot.slane %v2577, 5
        %v2580 = vsel %vm2379, %v2575, %v2579
        %v2582 = vshrl.u32 %v2552, 16
        %v2584 = vrot.slane %v2582, 4
        %v2585 = vshll.u32 %v2552, 16
        %v2587 = vrot.slane %v2585, 5
        %v2588 = vor.u32 %v2584, %v2587
        %v2589 = vrot.slane %v2588, 4
        %v2591 = vshll.u32 %v2560, 16
        %v2593 = vrot.slane %v2591, 5
        %v2594 = vsel %vm2379, %v2589, %v2593
        %v2596 = vshrl.u32 %v2553, 16
        %v2598 = vrot.slane %v2596, 4
        %v2599 = vshll.u32 %v2553, 16
        %v2601 = vrot.slane %v2599, 5
        %v2602 = vor.u32 %v2598, %v2601
        %v2603 = vrot.slane %v2602, 4
        %v2605 = vshll.u32 %v2561, 16
        %v2607 = vrot.slane %v2605, 5
        %v2608 = vsel %vm2379, %v2603, %v2607
        %v2610 = vshrl.u32 %v2554, 16
        %v2612 = vrot.slane %v2610, 4
        %v2613 = vshll.u32 %v2554, 16
        %v2615 = vrot.slane %v2613, 5
        %v2616 = vor.u32 %v2612, %v2615
        %v2617 = vrot.slane %v2616, 4
        %v2619 = vshll.u32 %v2562, 16
        %v2621 = vrot.slane %v2619, 5
        %v2622 = vsel %vm2379, %v2617, %v2621
        %v2624 = vshrl.u32 %v2555, 16
        %v2626 = vrot.slane %v2624, 4
        %v2627 = vshll.u32 %v2555, 16
        %v2629 = vrot.slane %v2627, 5
        %v2630 = vor.u32 %v2626, %v2629
        %v2631 = vrot.slane %v2630, 4
        %v2633 = vshll.u32 %v2563, 16
        %v2635 = vrot.slane %v2633, 5
        %v2636 = vsel %vm2379, %v2631, %v2635
        %v2638 = vshrl.u32 %v2556, 16
        %v2640 = vrot.slane %v2638, 4
        %v2641 = vshll.u32 %v2556, 16
        %v2643 = vrot.slane %v2641, 5
        %v2644 = vor.u32 %v2640, %v2643
        %v2645 = vrot.slane %v2644, 4
        %v2647 = vshll.u32 %v2564, 16
        %v2649 = vrot.slane %v2647, 5
        %v2650 = vsel %vm2379, %v2645, %v2649
        %v2652 = vshrl.u32 %v2557, 16
        %v2654 = vrot.slane %v2652, 4
        %v2655 = vshll.u32 %v2557, 16
        %v2657 = vrot.slane %v2655, 5
        %v2658 = vor.u32 %v2654, %v2657
        %v2659 = vrot.slane %v2658, 4
        %v2661 = vshll.u32 %v2565, 16
        %v2663 = vrot.slane %v2661, 5
        %v2664 = vsel %vm2379, %v2659, %v2663
        %v2666 = vshrl.u32 %v2558, 16
        %v2668 = vrot.slane %v2666, 4
        %v2669 = vshll.u32 %v2558, 16
        %v2671 = vrot.slane %v2669, 5
        %v2672 = vor.u32 %v2668, %v2671
        %v2673 = vrot.slane %v2672, 4
        %v2675 = vshll.u32 %v2566, 16
        %v2677 = vrot.slane %v2675, 5
        %v2678 = vsel %vm2379, %v2673, %v2677
        %v2679 = vld [vmem:[%s1473] sm:$0xe]
        %v2680 = vld [vmem:[%s1473 + $0x8] sm:$0xe]
        %v2681 = vld [vmem:[%s1473 + $0x10] sm:$0xe]
        %v2682 = vld [vmem:[%s1473 + $0x18] sm:$0xe]
        %v2683 = vld [vmem:[%s1473 + $0x20] sm:$0xe]
        %v2684 = vld [vmem:[%s1473 + $0x28] sm:$0xe]
        %v2685 = vld [vmem:[%s1473 + $0x30] sm:$0xe]
        %v2686 = vld [vmem:[%s1473 + $0x38] sm:$0xe]
        %v2703 = vrot.slane %v2679, 5
        %v2704 = vrot.slane %v2703, 4
        %v2705 = vrot.slane %v2559, 5
        %v2706 = vsel %vm2518, %v2704, %v2705
        %v2707 = vrot.slane %v2680, 5
        %v2708 = vrot.slane %v2707, 4
        %v2709 = vrot.slane %v2560, 5
        %v2710 = vsel %vm2518, %v2708, %v2709
        %v2711 = vrot.slane %v2681, 5
        %v2712 = vrot.slane %v2711, 4
        %v2713 = vrot.slane %v2561, 5
        %v2714 = vsel %vm2518, %v2712, %v2713
        %v2715 = vrot.slane %v2682, 5
        %v2716 = vrot.slane %v2715, 4
        %v2717 = vrot.slane %v2562, 5
        %v2718 = vsel %vm2518, %v2716, %v2717
        %v2719 = vrot.slane %v2683, 5
        %v2720 = vrot.slane %v2719, 4
        %v2721 = vrot.slane %v2563, 5
        %v2722 = vsel %vm2518, %v2720, %v2721
        %v2723 = vrot.slane %v2684, 5
        %v2724 = vrot.slane %v2723, 4
        %v2725 = vrot.slane %v2564, 5
        %v2726 = vsel %vm2518, %v2724, %v2725
        %v2727 = vrot.slane %v2685, 5
        %v2728 = vrot.slane %v2727, 4
        %v2729 = vrot.slane %v2565, 5
        %v2730 = vsel %vm2518, %v2728, %v2729
        %v2731 = vrot.slane %v2686, 5
        %v2732 = vrot.slane %v2731, 4
        %v2733 = vrot.slane %v2566, 5
        %v2734 = vsel %vm2518, %v2732, %v2733
        %s2735 = scalar_lea.vmem [#allocation2], 16
        %v2736 = vld [vmem:[%s2735] sm:$0xf]
        %v2737 = vld [vmem:[%s2735 + $0x8] sm:$0xf]
        %v2738 = vld [vmem:[%s2735 + $0x10] sm:$0xf]
        %v2739 = vld [vmem:[%s2735 + $0x18] sm:$0xf]
        %v2740 = vld [vmem:[%s2735 + $0x20] sm:$0xf]
        %v2741 = vld [vmem:[%s2735 + $0x28] sm:$0xf]
        %v2742 = vld [vmem:[%s2735 + $0x30] sm:$0xf]
        %v2743 = vld [vmem:[%s2735 + $0x38] sm:$0xf]
        %v2744 = vld [vmem:[%s2735 + $0x4] sm:$0x1]
        %v2745 = vld [vmem:[%s2735 + $0xc] sm:$0x1]
        %v2746 = vld [vmem:[%s2735 + $0x14] sm:$0x1]
        %v2747 = vld [vmem:[%s2735 + $0x1c] sm:$0x1]
        %v2748 = vld [vmem:[%s2735 + $0x24] sm:$0x1]
        %v2749 = vld [vmem:[%s2735 + $0x2c] sm:$0x1]
        %v2750 = vld [vmem:[%s2735 + $0x34] sm:$0x1]
        %v2751 = vld [vmem:[%s2735 + $0x3c] sm:$0x1]
        %v2753 = vshrl.u32 %v2736, 16
        %v2755 = vrot.slane %v2753, 4
        %v2756 = vshll.u32 %v2736, 16
        %v2758 = vrot.slane %v2756, 5
        %v2759 = vor.u32 %v2755, %v2758
        %v2760 = vrot.slane %v2759, 4
        %v2762 = vshll.u32 %v2744, 16
        %v2764 = vrot.slane %v2762, 5
        %v2765 = vsel %vm2379, %v2760, %v2764
        %v2767 = vshrl.u32 %v2737, 16
        %v2769 = vrot.slane %v2767, 4
        %v2770 = vshll.u32 %v2737, 16
        %v2772 = vrot.slane %v2770, 5
        %v2773 = vor.u32 %v2769, %v2772
        %v2774 = vrot.slane %v2773, 4
        %v2776 = vshll.u32 %v2745, 16
        %v2778 = vrot.slane %v2776, 5
        %v2779 = vsel %vm2379, %v2774, %v2778
        %v2781 = vshrl.u32 %v2738, 16
        %v2783 = vrot.slane %v2781, 4
        %v2784 = vshll.u32 %v2738, 16
        %v2786 = vrot.slane %v2784, 5
        %v2787 = vor.u32 %v2783, %v2786
        %v2788 = vrot.slane %v2787, 4
        %v2790 = vshll.u32 %v2746, 16
        %v2792 = vrot.slane %v2790, 5
        %v2793 = vsel %vm2379, %v2788, %v2792
        %v2795 = vshrl.u32 %v2739, 16
        %v2797 = vrot.slane %v2795, 4
        %v2798 = vshll.u32 %v2739, 16
        %v2800 = vrot.slane %v2798, 5
        %v2801 = vor.u32 %v2797, %v2800
        %v2802 = vrot.slane %v2801, 4
        %v2804 = vshll.u32 %v2747, 16
        %v2806 = vrot.slane %v2804, 5
        %v2807 = vsel %vm2379, %v2802, %v2806
        %v2809 = vshrl.u32 %v2740, 16
        %v2811 = vrot.slane %v2809, 4
        %v2812 = vshll.u32 %v2740, 16
        %v2814 = vrot.slane %v2812, 5
        %v2815 = vor.u32 %v2811, %v2814
        %v2816 = vrot.slane %v2815, 4
        %v2818 = vshll.u32 %v2748, 16
        %v2820 = vrot.slane %v2818, 5
        %v2821 = vsel %vm2379, %v2816, %v2820
        %v2823 = vshrl.u32 %v2741, 16
        %v2825 = vrot.slane %v2823, 4
        %v2826 = vshll.u32 %v2741, 16
        %v2828 = vrot.slane %v2826, 5
        %v2829 = vor.u32 %v2825, %v2828
        %v2830 = vrot.slane %v2829, 4
        %v2832 = vshll.u32 %v2749, 16
        %v2834 = vrot.slane %v2832, 5
        %v2835 = vsel %vm2379, %v2830, %v2834
        %v2837 = vshrl.u32 %v2742, 16
        %v2839 = vrot.slane %v2837, 4
        %v2840 = vshll.u32 %v2742, 16
        %v2842 = vrot.slane %v2840, 5
        %v2843 = vor.u32 %v2839, %v2842
        %v2844 = vrot.slane %v2843, 4
        %v2846 = vshll.u32 %v2750, 16
        %v2848 = vrot.slane %v2846, 5
        %v2849 = vsel %vm2379, %v2844, %v2848
        %v2851 = vshrl.u32 %v2743, 16
        %v2853 = vrot.slane %v2851, 4
        %v2854 = vshll.u32 %v2743, 16
        %v2856 = vrot.slane %v2854, 5
        %v2857 = vor.u32 %v2853, %v2856
        %v2858 = vrot.slane %v2857, 4
        %v2860 = vshll.u32 %v2751, 16
        %v2862 = vrot.slane %v2860, 5
        %v2863 = vsel %vm2379, %v2858, %v2862
        %v2864 = vld [vmem:[%s2735] sm:$0xe]
        %v2865 = vld [vmem:[%s2735 + $0x8] sm:$0xe]
        %v2866 = vld [vmem:[%s2735 + $0x10] sm:$0xe]
        %v2867 = vld [vmem:[%s2735 + $0x18] sm:$0xe]
        %v2868 = vld [vmem:[%s2735 + $0x20] sm:$0xe]
        %v2869 = vld [vmem:[%s2735 + $0x28] sm:$0xe]
        %v2870 = vld [vmem:[%s2735 + $0x30] sm:$0xe]
        %v2871 = vld [vmem:[%s2735 + $0x38] sm:$0xe]
        %v2888 = vrot.slane %v2864, 5
        %v2889 = vrot.slane %v2888, 4
        %v2890 = vrot.slane %v2744, 5
        %v2891 = vsel %vm2518, %v2889, %v2890
        %v2892 = vrot.slane %v2865, 5
        %v2893 = vrot.slane %v2892, 4
        %v2894 = vrot.slane %v2745, 5
        %v2895 = vsel %vm2518, %v2893, %v2894
        %v2896 = vrot.slane %v2866, 5
        %v2897 = vrot.slane %v2896, 4
        %v2898 = vrot.slane %v2746, 5
        %v2899 = vsel %vm2518, %v2897, %v2898
        %v2900 = vrot.slane %v2867, 5
        %v2901 = vrot.slane %v2900, 4
        %v2902 = vrot.slane %v2747, 5
        %v2903 = vsel %vm2518, %v2901, %v2902
        %v2904 = vrot.slane %v2868, 5
        %v2905 = vrot.slane %v2904, 4
        %v2906 = vrot.slane %v2748, 5
        %v2907 = vsel %vm2518, %v2905, %v2906
        %v2908 = vrot.slane %v2869, 5
        %v2909 = vrot.slane %v2908, 4
        %v2910 = vrot.slane %v2749, 5
        %v2911 = vsel %vm2518, %v2909, %v2910
        %v2912 = vrot.slane %v2870, 5
        %v2913 = vrot.slane %v2912, 4
        %v2914 = vrot.slane %v2750, 5
        %v2915 = vsel %vm2518, %v2913, %v2914
        %v2916 = vrot.slane %v2871, 5
        %v2917 = vrot.slane %v2916, 4
        %v2918 = vrot.slane %v2751, 5
        %v2919 = vsel %vm2518, %v2917, %v2918
        %v2928 = vunpack.c.l.b16 %v2361
        %v2929 = vunpack.c.l.b16 %v2362
        %v2930 = vunpack.c.l.b16 %v2363
        %v2931 = vunpack.c.l.b16 %v2364
        %v2932 = vunpack.c.l.b16 %v2365
        %v2933 = vunpack.c.l.b16 %v2366
        %v2934 = vunpack.c.l.b16 %v2367
        %v2935 = vunpack.c.l.b16 %v2368
        %v2936 = vpack.c.b16 %v2929, %v2928
        %v2937 = vpack.c.b16 %v2931, %v2930
        %v2938 = vpack.c.b16 %v2933, %v2932
        %v2939 = vpack.c.b16 %v2935, %v2934
        %v2944 = vunpack.c.l.b16 %v2393
        %v2945 = vunpack.c.l.b16 %v2407
        %v2946 = vunpack.c.l.b16 %v2421
        %v2947 = vunpack.c.l.b16 %v2435
        %v2948 = vunpack.c.l.b16 %v2449
        %v2949 = vunpack.c.l.b16 %v2463
        %v2950 = vunpack.c.l.b16 %v2477
        %v2951 = vunpack.c.l.b16 %v2491
        %v2952 = vpack.c.b16 %v2945, %v2944
        %v2953 = vpack.c.b16 %v2947, %v2946
        %v2954 = vpack.c.b16 %v2949, %v2948
        %v2955 = vpack.c.b16 %v2951, %v2950
        %v2960 = vunpack.c.l.b16 %v2522
        %v2961 = vunpack.c.l.b16 %v2526
        %v2962 = vunpack.c.l.b16 %v2530
        %v2963 = vunpack.c.l.b16 %v2534
        %v2964 = vunpack.c.l.b16 %v2538
        %v2965 = vunpack.c.l.b16 %v2542
        %v2966 = vunpack.c.l.b16 %v2546
        %v2967 = vunpack.c.l.b16 %v2550
        %v2968 = vpack.c.b16 %v2961, %v2960
        %v2969 = vpack.c.b16 %v2963, %v2962
        %v2970 = vpack.c.b16 %v2965, %v2964
        %v2971 = vpack.c.b16 %v2967, %v2966
        %v2984 = vunpack.c.l.b16 %v2551
        %v2985 = vunpack.c.l.b16 %v2552
        %v2986 = vunpack.c.l.b16 %v2553
        %v2987 = vunpack.c.l.b16 %v2554
        %v2988 = vunpack.c.l.b16 %v2555
        %v2989 = vunpack.c.l.b16 %v2556
        %v2990 = vunpack.c.l.b16 %v2557
        %v2991 = vunpack.c.l.b16 %v2558
        %v2992 = vpack.c.b16 %v2985, %v2984
        %v2993 = vpack.c.b16 %v2987, %v2986
        %v2994 = vpack.c.b16 %v2989, %v2988
        %v2995 = vpack.c.b16 %v2991, %v2990
        %v3000 = vunpack.c.l.b16 %v2580
        %v3001 = vunpack.c.l.b16 %v2594
        %v3002 = vunpack.c.l.b16 %v2608
        %v3003 = vunpack.c.l.b16 %v2622
        %v3004 = vunpack.c.l.b16 %v2636
        %v3005 = vunpack.c.l.b16 %v2650
        %v3006 = vunpack.c.l.b16 %v2664
        %v3007 = vunpack.c.l.b16 %v2678
        %v3008 = vpack.c.b16 %v3001, %v3000
        %v3009 = vpack.c.b16 %v3003, %v3002
        %v3010 = vpack.c.b16 %v3005, %v3004
        %v3011 = vpack.c.b16 %v3007, %v3006
        %v3016 = vunpack.c.l.b16 %v2706
        %v3017 = vunpack.c.l.b16 %v2710
        %v3018 = vunpack.c.l.b16 %v2714
        %v3019 = vunpack.c.l.b16 %v2718
        %v3020 = vunpack.c.l.b16 %v2722
        %v3021 = vunpack.c.l.b16 %v2726
        %v3022 = vunpack.c.l.b16 %v2730
        %v3023 = vunpack.c.l.b16 %v2734
        %v3024 = vpack.c.b16 %v3017, %v3016
        %v3025 = vpack.c.b16 %v3019, %v3018
        %v3026 = vpack.c.b16 %v3021, %v3020
        %v3027 = vpack.c.b16 %v3023, %v3022
        %v3040 = vunpack.c.l.b16 %v2736
        %v3041 = vunpack.c.l.b16 %v2737
        %v3042 = vunpack.c.l.b16 %v2738
        %v3043 = vunpack.c.l.b16 %v2739
        %v3044 = vunpack.c.l.b16 %v2740
        %v3045 = vunpack.c.l.b16 %v2741
        %v3046 = vunpack.c.l.b16 %v2742
        %v3047 = vunpack.c.l.b16 %v2743
        %v3048 = vpack.c.b16 %v3041, %v3040
        %v3049 = vpack.c.b16 %v3043, %v3042
        %v3050 = vpack.c.b16 %v3045, %v3044
        %v3051 = vpack.c.b16 %v3047, %v3046
        %v3056 = vunpack.c.l.b16 %v2765
        %v3057 = vunpack.c.l.b16 %v2779
        %v3058 = vunpack.c.l.b16 %v2793
        %v3059 = vunpack.c.l.b16 %v2807
        %v3060 = vunpack.c.l.b16 %v2821
        %v3061 = vunpack.c.l.b16 %v2835
        %v3062 = vunpack.c.l.b16 %v2849
        %v3063 = vunpack.c.l.b16 %v2863
        %v3064 = vpack.c.b16 %v3057, %v3056
        %v3065 = vpack.c.b16 %v3059, %v3058
        %v3066 = vpack.c.b16 %v3061, %v3060
        %v3067 = vpack.c.b16 %v3063, %v3062
        %v3072 = vunpack.c.l.b16 %v2891
        %v3073 = vunpack.c.l.b16 %v2895
        %v3074 = vunpack.c.l.b16 %v2899
        %v3075 = vunpack.c.l.b16 %v2903
        %v3076 = vunpack.c.l.b16 %v2907
        %v3077 = vunpack.c.l.b16 %v2911
        %v3078 = vunpack.c.l.b16 %v2915
        %v3079 = vunpack.c.l.b16 %v2919
        %v3080 = vpack.c.b16 %v3073, %v3072
        %v3081 = vpack.c.b16 %v3075, %v3074
        %v3082 = vpack.c.b16 %v3077, %v3076
        %v3083 = vpack.c.b16 %v3079, %v3078
        %v3088 = vld [vmem:[%s5] sm:$0xf]
        %v3089 = vld [vmem:[%s5 + $0x4] sm:$0xf]
        %v3090 = vld [vmem:[%s5 + $0x8] sm:$0xf]
        %v3091 = vld [vmem:[%s5 + $0xc] sm:$0xf]
        %v3092 = vld [vmem:[%s5 + $0x10] sm:$0xf]
        %v3093 = vld [vmem:[%s5 + $0x14] sm:$0xf]
        %v3094 = vld [vmem:[%s5 + $0x18] sm:$0xf]
        %v3095 = vld [vmem:[%s5 + $0x1c] sm:$0xf]
        %v3096 = vld [vmem:[%s5 + $0x20] sm:$0xf]
        %v3097 = vld [vmem:[%s5 + $0x24] sm:$0xf]
        %v3098 = vld [vmem:[%s5 + $0x28] sm:$0xf]
        %v3099 = vld [vmem:[%s5 + $0x2c] sm:$0xf]
        %v3100 = vld [vmem:[%s5 + $0x30] sm:$0xf]
        %v3101 = vld [vmem:[%s5 + $0x34] sm:$0xf]
        %v3102 = vld [vmem:[%s5 + $0x38] sm:$0xf]
        %v3103 = vld [vmem:[%s5 + $0x3c] sm:$0xf]
        %v3104 = vld [vmem:[%s5 + $0x40] sm:$0xf]
        %v3105 = vld [vmem:[%s5 + $0x44] sm:$0xf]
        %v3106 = vld [vmem:[%s5 + $0x48] sm:$0xf]
        %v3107 = vld [vmem:[%s5 + $0x4c] sm:$0xf]
        %v3108 = vld [vmem:[%s5 + $0x50] sm:$0xf]
        %v3109 = vld [vmem:[%s5 + $0x54] sm:$0xf]
        %v3110 = vld [vmem:[%s5 + $0x58] sm:$0xf]
        %v3111 = vld [vmem:[%s5 + $0x5c] sm:$0xf]
        %v3112 = vld [vmem:[%s5 + $0x60] sm:$0xf]
        %v3113 = vld [vmem:[%s5 + $0x64] sm:$0xf]
        %v3114 = vld [vmem:[%s5 + $0x68] sm:$0xf]
        %v3115 = vld [vmem:[%s5 + $0x6c] sm:$0xf]
        %v3116 = vld [vmem:[%s5 + $0x70] sm:$0xf]
        %v3117 = vld [vmem:[%s5 + $0x74] sm:$0xf]
        %v3118 = vld [vmem:[%s5 + $0x78] sm:$0xf]
        %v3119 = vld [vmem:[%s5 + $0x7c] sm:$0xf]
        %v3120 = vld [vmem:[%s5 + $0x80] sm:$0xf]
        %v3121 = vld [vmem:[%s5 + $0x84] sm:$0xf]
        %v3122 = vld [vmem:[%s5 + $0x88] sm:$0xf]
        %v3123 = vld [vmem:[%s5 + $0x8c] sm:$0xf]
        %v3124 = vld [vmem:[%s5 + $0x90] sm:$0xf]
        %v3125 = vld [vmem:[%s5 + $0x94] sm:$0xf]
        %v3126 = vld [vmem:[%s5 + $0x98] sm:$0xf]
        %v3127 = vld [vmem:[%s5 + $0x9c] sm:$0xf]
        %v3128 = vld [vmem:[%s5 + $0xa0] sm:$0xf]
        %v3129 = vld [vmem:[%s5 + $0xa4] sm:$0xf]
        %v3130 = vld [vmem:[%s5 + $0xa8] sm:$0xf]
        %v3131 = vld [vmem:[%s5 + $0xac] sm:$0xf]
        %v3132 = vld [vmem:[%s5 + $0xb0] sm:$0xf]
        %v3133 = vld [vmem:[%s5 + $0xb4] sm:$0xf]
        %v3134 = vld [vmem:[%s5 + $0xb8] sm:$0xf]
        %v3135 = vld [vmem:[%s5 + $0xbc] sm:$0xf]
        %v3136 = vld [vmem:[%s5 + $0xc0] sm:$0xf]
        %v3137 = vld [vmem:[%s5 + $0xc4] sm:$0xf]
        %v3138 = vld [vmem:[%s5 + $0xc8] sm:$0xf]
        %v3139 = vld [vmem:[%s5 + $0xcc] sm:$0xf]
        %v3140 = vld [vmem:[%s5 + $0xd0] sm:$0xf]
        %v3141 = vld [vmem:[%s5 + $0xd4] sm:$0xf]
        %v3142 = vld [vmem:[%s5 + $0xd8] sm:$0xf]
        %v3143 = vld [vmem:[%s5 + $0xdc] sm:$0xf]
        %v3144 = vld [vmem:[%s5 + $0xe0] sm:$0xf]
        %v3145 = vld [vmem:[%s5 + $0xe4] sm:$0xf]
        %v3146 = vld [vmem:[%s5 + $0xe8] sm:$0xf]
        %v3147 = vld [vmem:[%s5 + $0xec] sm:$0xf]
        %v3148 = vld [vmem:[%s5 + $0xf0] sm:$0xf]
        %v3149 = vld [vmem:[%s5 + $0xf4] sm:$0xf]
        %v3150 = vld [vmem:[%s5 + $0xf8] sm:$0xf]
        %v3151 = vld [vmem:[%s5 + $0xfc] sm:$0xf]
        %v3152 = vld [vmem:[%s5 + $0x100] sm:$0xf]
        %v3153 = vld [vmem:[%s5 + $0x104] sm:$0xf]
        %v3154 = vld [vmem:[%s5 + $0x108] sm:$0xf]
        %v3155 = vld [vmem:[%s5 + $0x10c] sm:$0xf]
        %v3156 = vld [vmem:[%s5 + $0x110] sm:$0xf]
        %v3157 = vld [vmem:[%s5 + $0x114] sm:$0xf]
        %v3158 = vld [vmem:[%s5 + $0x118] sm:$0xf]
        %v3159 = vld [vmem:[%s5 + $0x11c] sm:$0xf]
        %v3160 = vld [vmem:[%s5 + $0x120] sm:$0xf]
        %v3161 = vld [vmem:[%s5 + $0x124] sm:$0xf]
        %v3162 = vld [vmem:[%s5 + $0x128] sm:$0xf]
        %v3163 = vld [vmem:[%s5 + $0x12c] sm:$0xf]
        %v3164 = vld [vmem:[%s5 + $0x130] sm:$0xf]
        %v3165 = vld [vmem:[%s5 + $0x134] sm:$0xf]
        %v3166 = vld [vmem:[%s5 + $0x138] sm:$0xf]
        %v3167 = vld [vmem:[%s5 + $0x13c] sm:$0xf]
        %v3168 = vld [vmem:[%s5 + $0x140] sm:$0xf]
        %v3169 = vld [vmem:[%s5 + $0x144] sm:$0xf]
        %v3170 = vld [vmem:[%s5 + $0x148] sm:$0xf]
        %v3171 = vld [vmem:[%s5 + $0x14c] sm:$0xf]
        %v3172 = vld [vmem:[%s5 + $0x150] sm:$0xf]
        %v3173 = vld [vmem:[%s5 + $0x154] sm:$0xf]
        %v3174 = vld [vmem:[%s5 + $0x158] sm:$0xf]
        %v3175 = vld [vmem:[%s5 + $0x15c] sm:$0xf]
        %v3176 = vld [vmem:[%s5 + $0x160] sm:$0xf]
        %v3177 = vld [vmem:[%s5 + $0x164] sm:$0xf]
        %v3178 = vld [vmem:[%s5 + $0x168] sm:$0xf]
        %v3179 = vld [vmem:[%s5 + $0x16c] sm:$0xf]
        %v3180 = vld [vmem:[%s5 + $0x170] sm:$0xf]
        %v3181 = vld [vmem:[%s5 + $0x174] sm:$0xf]
        %v3182 = vld [vmem:[%s5 + $0x178] sm:$0xf]
        %v3183 = vld [vmem:[%s5 + $0x17c] sm:$0xf]
        %v3184 = vld [vmem:[%s5 + $0x180] sm:$0xf]
        %v3185 = vld [vmem:[%s5 + $0x184] sm:$0xf]
        %v3186 = vld [vmem:[%s5 + $0x188] sm:$0xf]
        %v3187 = vld [vmem:[%s5 + $0x18c] sm:$0xf]
        %v3188 = vld [vmem:[%s5 + $0x190] sm:$0xf]
        %v3189 = vld [vmem:[%s5 + $0x194] sm:$0xf]
        %v3190 = vld [vmem:[%s5 + $0x198] sm:$0xf]
        %v3191 = vld [vmem:[%s5 + $0x19c] sm:$0xf]
        %v3192 = vld [vmem:[%s5 + $0x1a0] sm:$0xf]
        %v3193 = vld [vmem:[%s5 + $0x1a4] sm:$0xf]
        %v3194 = vld [vmem:[%s5 + $0x1a8] sm:$0xf]
        %v3195 = vld [vmem:[%s5 + $0x1ac] sm:$0xf]
        %v3196 = vld [vmem:[%s5 + $0x1b0] sm:$0xf]
        %v3197 = vld [vmem:[%s5 + $0x1b4] sm:$0xf]
        %v3198 = vld [vmem:[%s5 + $0x1b8] sm:$0xf]
        %v3199 = vld [vmem:[%s5 + $0x1bc] sm:$0xf]
        %v3200 = vld [vmem:[%s5 + $0x1c0] sm:$0xf]
        %v3201 = vld [vmem:[%s5 + $0x1c4] sm:$0xf]
        %v3202 = vld [vmem:[%s5 + $0x1c8] sm:$0xf]
        %v3203 = vld [vmem:[%s5 + $0x1cc] sm:$0xf]
        %v3204 = vld [vmem:[%s5 + $0x1d0] sm:$0xf]
        %v3205 = vld [vmem:[%s5 + $0x1d4] sm:$0xf]
        %v3206 = vld [vmem:[%s5 + $0x1d8] sm:$0xf]
        %v3207 = vld [vmem:[%s5 + $0x1dc] sm:$0xf]
        %v3208 = vld [vmem:[%s5 + $0x1e0] sm:$0xf]
        %v3209 = vld [vmem:[%s5 + $0x1e4] sm:$0xf]
        %v3210 = vld [vmem:[%s5 + $0x1e8] sm:$0xf]
        %v3211 = vld [vmem:[%s5 + $0x1ec] sm:$0xf]
        %v3212 = vld [vmem:[%s5 + $0x1f0] sm:$0xf]
        %v3213 = vld [vmem:[%s5 + $0x1f4] sm:$0xf]
        %v3214 = vld [vmem:[%s5 + $0x1f8] sm:$0xf]
        %v3215 = vld [vmem:[%s5 + $0x1fc] sm:$0xf]
        %v3216 = vld [vmem:[%s5 + $0x200] sm:$0xf]
        %v3217 = vld [vmem:[%s5 + $0x204] sm:$0xf]
        %v3218 = vld [vmem:[%s5 + $0x208] sm:$0xf]
        %v3219 = vld [vmem:[%s5 + $0x20c] sm:$0xf]
        %v3220 = vld [vmem:[%s5 + $0x210] sm:$0xf]
        %v3221 = vld [vmem:[%s5 + $0x214] sm:$0xf]
        %v3222 = vld [vmem:[%s5 + $0x218] sm:$0xf]
        %v3223 = vld [vmem:[%s5 + $0x21c] sm:$0xf]
        %v3224 = vld [vmem:[%s5 + $0x220] sm:$0xf]
        %v3225 = vld [vmem:[%s5 + $0x224] sm:$0xf]
        %v3226 = vld [vmem:[%s5 + $0x228] sm:$0xf]
        %v3227 = vld [vmem:[%s5 + $0x22c] sm:$0xf]
        %v3228 = vld [vmem:[%s5 + $0x230] sm:$0xf]
        %v3229 = vld [vmem:[%s5 + $0x234] sm:$0xf]
        %v3230 = vld [vmem:[%s5 + $0x238] sm:$0xf]
        %v3231 = vld [vmem:[%s5 + $0x23c] sm:$0xf]
        %v3232 = vld [vmem:[%s6] sm:$0x1]
        %v3234 = vperm.slane %v3232, 0
        %v3380 = vunpack.c.l.b16 %v3088
        %v3381 = vunpack.c.l.b16 %v3089
        %v3382 = vunpack.c.l.b16 %v3090
        %v3383 = vunpack.c.l.b16 %v3091
        %v3384 = vunpack.c.l.b16 %v3092
        %v3385 = vunpack.c.l.b16 %v3093
        %v3386 = vunpack.c.l.b16 %v3094
        %v3387 = vunpack.c.l.b16 %v3095
        %v3388 = vunpack.c.l.b16 %v3096
        %v3389 = vunpack.c.l.b16 %v3097
        %v3390 = vunpack.c.l.b16 %v3098
        %v3391 = vunpack.c.l.b16 %v3099
        %v3392 = vunpack.c.l.b16 %v3100
        %v3393 = vunpack.c.l.b16 %v3101
        %v3394 = vunpack.c.l.b16 %v3102
        %v3395 = vunpack.c.l.b16 %v3103
        %v3396 = vunpack.c.l.b16 %v3104
        %v3397 = vunpack.c.l.b16 %v3105
        %v3398 = vunpack.c.l.b16 %v3106
        %v3399 = vunpack.c.l.b16 %v3107
        %v3400 = vunpack.c.l.b16 %v3108
        %v3401 = vunpack.c.l.b16 %v3109
        %v3402 = vunpack.c.l.b16 %v3110
        %v3403 = vunpack.c.l.b16 %v3111
        %v3404 = vunpack.c.l.b16 %v3112
        %v3405 = vunpack.c.l.b16 %v3113
        %v3406 = vunpack.c.l.b16 %v3114
        %v3407 = vunpack.c.l.b16 %v3115
        %v3408 = vunpack.c.l.b16 %v3116
        %v3409 = vunpack.c.l.b16 %v3117
        %v3410 = vunpack.c.l.b16 %v3118
        %v3411 = vunpack.c.l.b16 %v3119
        %v3412 = vunpack.c.l.b16 %v3120
        %v3413 = vunpack.c.l.b16 %v3121
        %v3414 = vunpack.c.l.b16 %v3122
        %v3415 = vunpack.c.l.b16 %v3123
        %v3416 = vunpack.c.l.b16 %v3124
        %v3417 = vunpack.c.l.b16 %v3125
        %v3418 = vunpack.c.l.b16 %v3126
        %v3419 = vunpack.c.l.b16 %v3127
        %v3420 = vunpack.c.l.b16 %v3128
        %v3421 = vunpack.c.l.b16 %v3129
        %v3422 = vunpack.c.l.b16 %v3130
        %v3423 = vunpack.c.l.b16 %v3131
        %v3424 = vunpack.c.l.b16 %v3132
        %v3425 = vunpack.c.l.b16 %v3133
        %v3426 = vunpack.c.l.b16 %v3134
        %v3427 = vunpack.c.l.b16 %v3135
        %v3428 = vunpack.c.l.b16 %v3136
        %v3429 = vunpack.c.l.b16 %v3137
        %v3430 = vunpack.c.l.b16 %v3138
        %v3431 = vunpack.c.l.b16 %v3139
        %v3432 = vunpack.c.l.b16 %v3140
        %v3433 = vunpack.c.l.b16 %v3141
        %v3434 = vunpack.c.l.b16 %v3142
        %v3435 = vunpack.c.l.b16 %v3143
        %v3436 = vunpack.c.l.b16 %v3144
        %v3437 = vunpack.c.l.b16 %v3145
        %v3438 = vunpack.c.l.b16 %v3146
        %v3439 = vunpack.c.l.b16 %v3147
        %v3440 = vunpack.c.l.b16 %v3148
        %v3441 = vunpack.c.l.b16 %v3149
        %v3442 = vunpack.c.l.b16 %v3150
        %v3443 = vunpack.c.l.b16 %v3151
        %v3444 = vunpack.c.l.b16 %v3152
        %v3445 = vunpack.c.l.b16 %v3153
        %v3446 = vunpack.c.l.b16 %v3154
        %v3447 = vunpack.c.l.b16 %v3155
        %v3448 = vunpack.c.l.b16 %v3156
        %v3449 = vunpack.c.l.b16 %v3157
        %v3450 = vunpack.c.l.b16 %v3158
        %v3451 = vunpack.c.l.b16 %v3159
        %v3452 = vunpack.c.l.b16 %v3160
        %v3453 = vunpack.c.l.b16 %v3161
        %v3454 = vunpack.c.l.b16 %v3162
        %v3455 = vunpack.c.l.b16 %v3163
        %v3456 = vunpack.c.l.b16 %v3164
        %v3457 = vunpack.c.l.b16 %v3165
        %v3458 = vunpack.c.l.b16 %v3166
        %v3459 = vunpack.c.l.b16 %v3167
        %v3460 = vunpack.c.l.b16 %v3168
        %v3461 = vunpack.c.l.b16 %v3169
        %v3462 = vunpack.c.l.b16 %v3170
        %v3463 = vunpack.c.l.b16 %v3171
        %v3464 = vunpack.c.l.b16 %v3172
        %v3465 = vunpack.c.l.b16 %v3173
        %v3466 = vunpack.c.l.b16 %v3174
        %v3467 = vunpack.c.l.b16 %v3175
        %v3468 = vunpack.c.l.b16 %v3176
        %v3469 = vunpack.c.l.b16 %v3177
        %v3470 = vunpack.c.l.b16 %v3178
        %v3471 = vunpack.c.l.b16 %v3179
        %v3472 = vunpack.c.l.b16 %v3180
        %v3473 = vunpack.c.l.b16 %v3181
        %v3474 = vunpack.c.l.b16 %v3182
        %v3475 = vunpack.c.l.b16 %v3183
        %v3476 = vunpack.c.l.b16 %v3184
        %v3477 = vunpack.c.l.b16 %v3185
        %v3478 = vunpack.c.l.b16 %v3186
        %v3479 = vunpack.c.l.b16 %v3187
        %v3480 = vunpack.c.l.b16 %v3188
        %v3481 = vunpack.c.l.b16 %v3189
        %v3482 = vunpack.c.l.b16 %v3190
        %v3483 = vunpack.c.l.b16 %v3191
        %v3484 = vunpack.c.l.b16 %v3192
        %v3485 = vunpack.c.l.b16 %v3193
        %v3486 = vunpack.c.l.b16 %v3194
        %v3487 = vunpack.c.l.b16 %v3195
        %v3488 = vunpack.c.l.b16 %v3196
        %v3489 = vunpack.c.l.b16 %v3197
        %v3490 = vunpack.c.l.b16 %v3198
        %v3491 = vunpack.c.l.b16 %v3199
        %v3492 = vunpack.c.l.b16 %v3200
        %v3493 = vunpack.c.l.b16 %v3201
        %v3494 = vunpack.c.l.b16 %v3202
        %v3495 = vunpack.c.l.b16 %v3203
        %v3496 = vunpack.c.l.b16 %v3204
        %v3497 = vunpack.c.l.b16 %v3205
        %v3498 = vunpack.c.l.b16 %v3206
        %v3499 = vunpack.c.l.b16 %v3207
        %v3500 = vunpack.c.l.b16 %v3208
        %v3501 = vunpack.c.l.b16 %v3209
        %v3502 = vunpack.c.l.b16 %v3210
        %v3503 = vunpack.c.l.b16 %v3211
        %v3504 = vunpack.c.l.b16 %v3212
        %v3505 = vunpack.c.l.b16 %v3213
        %v3506 = vunpack.c.l.b16 %v3214
        %v3507 = vunpack.c.l.b16 %v3215
        %v3508 = vunpack.c.l.b16 %v3216
        %v3509 = vunpack.c.l.b16 %v3217
        %v3510 = vunpack.c.l.b16 %v3218
        %v3511 = vunpack.c.l.b16 %v3219
        %v3512 = vunpack.c.l.b16 %v3220
        %v3513 = vunpack.c.l.b16 %v3221
        %v3514 = vunpack.c.l.b16 %v3222
        %v3515 = vunpack.c.l.b16 %v3223
        %v3516 = vunpack.c.l.b16 %v3224
        %v3517 = vunpack.c.l.b16 %v3225
        %v3518 = vunpack.c.l.b16 %v3226
        %v3519 = vunpack.c.l.b16 %v3227
        %v3520 = vunpack.c.l.b16 %v3228
        %v3521 = vunpack.c.l.b16 %v3229
        %v3522 = vunpack.c.l.b16 %v3230
        %v3523 = vunpack.c.l.b16 %v3231
        %v3524 = vpack.c.b16 %v3381, %v3380
        %v3525 = vpack.c.b16 %v3383, %v3382
        %v3526 = vpack.c.b16 %v3385, %v3384
        %v3527 = vpack.c.b16 %v3387, %v3386
        %v3528 = vpack.c.b16 %v3389, %v3388
        %v3529 = vpack.c.b16 %v3391, %v3390
        %v3530 = vpack.c.b16 %v3393, %v3392
        %v3531 = vpack.c.b16 %v3395, %v3394
        %v3532 = vpack.c.b16 %v3397, %v3396
        %v3533 = vpack.c.b16 %v3399, %v3398
        %v3534 = vpack.c.b16 %v3401, %v3400
        %v3535 = vpack.c.b16 %v3403, %v3402
        %v3536 = vpack.c.b16 %v3405, %v3404
        %v3537 = vpack.c.b16 %v3407, %v3406
        %v3538 = vpack.c.b16 %v3409, %v3408
        %v3539 = vpack.c.b16 %v3411, %v3410
        %v3540 = vpack.c.b16 %v3413, %v3412
        %v3541 = vpack.c.b16 %v3415, %v3414
        %v3542 = vpack.c.b16 %v3417, %v3416
        %v3543 = vpack.c.b16 %v3419, %v3418
        %v3544 = vpack.c.b16 %v3421, %v3420
        %v3545 = vpack.c.b16 %v3423, %v3422
        %v3546 = vpack.c.b16 %v3425, %v3424
        %v3547 = vpack.c.b16 %v3427, %v3426
        %v3548 = vpack.c.b16 %v3429, %v3428
        %v3549 = vpack.c.b16 %v3431, %v3430
        %v3550 = vpack.c.b16 %v3433, %v3432
        %v3551 = vpack.c.b16 %v3435, %v3434
        %v3552 = vpack.c.b16 %v3437, %v3436
        %v3553 = vpack.c.b16 %v3439, %v3438
        %v3554 = vpack.c.b16 %v3441, %v3440
        %v3555 = vpack.c.b16 %v3443, %v3442
        %v3556 = vpack.c.b16 %v3445, %v3444
        %v3557 = vpack.c.b16 %v3447, %v3446
        %v3558 = vpack.c.b16 %v3449, %v3448
        %v3559 = vpack.c.b16 %v3451, %v3450
        %v3560 = vpack.c.b16 %v3453, %v3452
        %v3561 = vpack.c.b16 %v3455, %v3454
        %v3562 = vpack.c.b16 %v3457, %v3456
        %v3563 = vpack.c.b16 %v3459, %v3458
        %v3564 = vpack.c.b16 %v3461, %v3460
        %v3565 = vpack.c.b16 %v3463, %v3462
        %v3566 = vpack.c.b16 %v3465, %v3464
        %v3567 = vpack.c.b16 %v3467, %v3466
        %v3568 = vpack.c.b16 %v3469, %v3468
        %v3569 = vpack.c.b16 %v3471, %v3470
        %v3570 = vpack.c.b16 %v3473, %v3472
        %v3571 = vpack.c.b16 %v3475, %v3474
        %v3572 = vpack.c.b16 %v3477, %v3476
        %v3573 = vpack.c.b16 %v3479, %v3478
        %v3574 = vpack.c.b16 %v3481, %v3480
        %v3575 = vpack.c.b16 %v3483, %v3482
        %v3576 = vpack.c.b16 %v3485, %v3484
        %v3577 = vpack.c.b16 %v3487, %v3486
        %v3578 = vpack.c.b16 %v3489, %v3488
        %v3579 = vpack.c.b16 %v3491, %v3490
        %v3580 = vpack.c.b16 %v3493, %v3492
        %v3581 = vpack.c.b16 %v3495, %v3494
        %v3582 = vpack.c.b16 %v3497, %v3496
        %v3583 = vpack.c.b16 %v3499, %v3498
        %v3584 = vpack.c.b16 %v3501, %v3500
        %v3585 = vpack.c.b16 %v3503, %v3502
        %v3586 = vpack.c.b16 %v3505, %v3504
        %v3587 = vpack.c.b16 %v3507, %v3506
        %v3588 = vpack.c.b16 %v3509, %v3508
        %v3589 = vpack.c.b16 %v3511, %v3510
        %v3590 = vpack.c.b16 %v3513, %v3512
        %v3591 = vpack.c.b16 %v3515, %v3514
        %v3592 = vpack.c.b16 %v3517, %v3516
        %v3593 = vpack.c.b16 %v3519, %v3518
        %v3594 = vpack.c.b16 %v3521, %v3520
        %v3595 = vpack.c.b16 %v3523, %v3522
        %3668 = vmatpush.bf16.msra.mxu0 %v3531
        %3669 = vmatpush.bf16.msra.mxu0 %v3530
        %3670 = vmatpush.bf16.msra.mxu0 %v3529
        %3671 = vmatpush.bf16.msra.mxu0 %v3528
        %3672 = vmatpush.bf16.msra.mxu0 %v3527
        %3673 = vmatpush.bf16.msra.mxu0 %v3526
        %3674 = vmatpush.bf16.msra.mxu0 %v3525
        %3675 = vmatpush.bf16.msra.mxu0 %v3524
        %3676 = vmatmul.bf16.gmra.mxu0 %v2936
        %v3677 = vpop.f32.mrf.mxu0
        %v3678 = vadd.f32 %v3234, %v3677
        %v3679 = vpop.f32.mrf.mxu0
        %v3680 = vadd.f32 %v3234, %v3679
        %3681 = vmatmul.bf16.gmra.mxu0 %v2937
        %v3682 = vpop.f32.mrf.mxu0
        %v3683 = vadd.f32 %v3234, %v3682
        %v3684 = vpop.f32.mrf.mxu0
        %v3685 = vadd.f32 %v3234, %v3684
        %3686 = vmatmul.bf16.gmra.mxu0 %v2938
        %v3687 = vpop.f32.mrf.mxu0
        %v3688 = vadd.f32 %v3234, %v3687
        %v3689 = vpop.f32.mrf.mxu0
        %v3690 = vadd.f32 %v3234, %v3689
        %3691 = vmatmul.bf16.gmra.mxu0 %v2939
        %v3692 = vpop.f32.mrf.mxu0
        %v3693 = vadd.f32 %v3234, %v3692
        %v3694 = vpop.f32.mrf.mxu0
        %v3695 = vadd.f32 %v3234, %v3694
        %3696 = vdwg.mxu0
        %3697 = vmatpush.bf16.msra.mxu0 %v3539
        %3698 = vmatpush.bf16.msra.mxu0 %v3538
        %3699 = vmatpush.bf16.msra.mxu0 %v3537
        %3700 = vmatpush.bf16.msra.mxu0 %v3536
        %3701 = vmatpush.bf16.msra.mxu0 %v3535
        %3702 = vmatpush.bf16.msra.mxu0 %v3534
        %3703 = vmatpush.bf16.msra.mxu0 %v3533
        %3704 = vmatpush.bf16.msra.mxu0 %v3532
        %3705 = vmatmul.bf16.gmra.mxu0 %v2952
        %v3706 = vpop.f32.mrf.mxu0
        %v3707 = vadd.f32 %v3678, %v3706
        %v3708 = vpop.f32.mrf.mxu0
        %v3709 = vadd.f32 %v3680, %v3708
        %3710 = vmatmul.bf16.gmra.mxu0 %v2953
        %v3711 = vpop.f32.mrf.mxu0
        %v3712 = vadd.f32 %v3683, %v3711
        %v3713 = vpop.f32.mrf.mxu0
        %v3714 = vadd.f32 %v3685, %v3713
        %3715 = vmatmul.bf16.gmra.mxu0 %v2954
        %v3716 = vpop.f32.mrf.mxu0
        %v3717 = vadd.f32 %v3688, %v3716
        %v3718 = vpop.f32.mrf.mxu0
        %v3719 = vadd.f32 %v3690, %v3718
        %3720 = vmatmul.bf16.gmra.mxu0 %v2955
        %v3721 = vpop.f32.mrf.mxu0
        %v3722 = vadd.f32 %v3693, %v3721
        %v3723 = vpop.f32.mrf.mxu0
        %v3724 = vadd.f32 %v3695, %v3723
        %3725 = vdwg.mxu0
        %3726 = vmatpush.bf16.msra.mxu0 %v3547
        %3727 = vmatpush.bf16.msra.mxu0 %v3546
        %3728 = vmatpush.bf16.msra.mxu0 %v3545
        %3729 = vmatpush.bf16.msra.mxu0 %v3544
        %3730 = vmatpush.bf16.msra.mxu0 %v3543
        %3731 = vmatpush.bf16.msra.mxu0 %v3542
        %3732 = vmatpush.bf16.msra.mxu0 %v3541
        %3733 = vmatpush.bf16.msra.mxu0 %v3540
        %3734 = vmatmul.bf16.gmra.mxu0 %v2968
        %v3735 = vpop.f32.mrf.mxu0
        %v3736 = vadd.f32 %v3707, %v3735
        %v3737 = vpop.f32.mrf.mxu0
        %v3738 = vadd.f32 %v3709, %v3737
        %3739 = vmatmul.bf16.gmra.mxu0 %v2969
        %v3740 = vpop.f32.mrf.mxu0
        %v3741 = vadd.f32 %v3712, %v3740
        %v3742 = vpop.f32.mrf.mxu0
        %v3743 = vadd.f32 %v3714, %v3742
        %3744 = vmatmul.bf16.gmra.mxu0 %v2970
        %v3745 = vpop.f32.mrf.mxu0
        %v3746 = vadd.f32 %v3717, %v3745
        %v3747 = vpop.f32.mrf.mxu0
        %v3748 = vadd.f32 %v3719, %v3747
        %3749 = vmatmul.bf16.gmra.mxu0 %v2971
        %v3750 = vpop.f32.mrf.mxu0
        %v3751 = vadd.f32 %v3722, %v3750
        %v3752 = vpop.f32.mrf.mxu0
        %v3753 = vadd.f32 %v3724, %v3752
        %3754 = vdwg.mxu0
        %3755 = vmatpush.bf16.msra.mxu0 %v3555
        %3756 = vmatpush.bf16.msra.mxu0 %v3554
        %3757 = vmatpush.bf16.msra.mxu0 %v3553
        %3758 = vmatpush.bf16.msra.mxu0 %v3552
        %3759 = vmatpush.bf16.msra.mxu0 %v3551
        %3760 = vmatpush.bf16.msra.mxu0 %v3550
        %3761 = vmatpush.bf16.msra.mxu0 %v3549
        %3762 = vmatpush.bf16.msra.mxu0 %v3548
        %3763 = vmatmul.bf16.gmra.mxu0 %v2992
        %v3764 = vpop.f32.mrf.mxu0
        %v3765 = vadd.f32 %v3736, %v3764
        %v3766 = vpop.f32.mrf.mxu0
        %v3767 = vadd.f32 %v3738, %v3766
        %3768 = vmatmul.bf16.gmra.mxu0 %v2993
        %v3769 = vpop.f32.mrf.mxu0
        %v3770 = vadd.f32 %v3741, %v3769
        %v3771 = vpop.f32.mrf.mxu0
        %v3772 = vadd.f32 %v3743, %v3771
        %3773 = vmatmul.bf16.gmra.mxu0 %v2994
        %v3774 = vpop.f32.mrf.mxu0
        %v3775 = vadd.f32 %v3746, %v3774
        %v3776 = vpop.f32.mrf.mxu0
        %v3777 = vadd.f32 %v3748, %v3776
        %3778 = vmatmul.bf16.gmra.mxu0 %v2995
        %v3779 = vpop.f32.mrf.mxu0
        %v3780 = vadd.f32 %v3751, %v3779
        %v3781 = vpop.f32.mrf.mxu0
        %v3782 = vadd.f32 %v3753, %v3781
        %3783 = vdwg.mxu0
        %3784 = vmatpush.bf16.msra.mxu0 %v3563
        %3785 = vmatpush.bf16.msra.mxu0 %v3562
        %3786 = vmatpush.bf16.msra.mxu0 %v3561
        %3787 = vmatpush.bf16.msra.mxu0 %v3560
        %3788 = vmatpush.bf16.msra.mxu0 %v3559
        %3789 = vmatpush.bf16.msra.mxu0 %v3558
        %3790 = vmatpush.bf16.msra.mxu0 %v3557
        %3791 = vmatpush.bf16.msra.mxu0 %v3556
        %3792 = vmatmul.bf16.gmra.mxu0 %v3008
        %v3793 = vpop.f32.mrf.mxu0
        %v3794 = vadd.f32 %v3765, %v3793
        %v3795 = vpop.f32.mrf.mxu0
        %v3796 = vadd.f32 %v3767, %v3795
        %3797 = vmatmul.bf16.gmra.mxu0 %v3009
        %v3798 = vpop.f32.mrf.mxu0
        %v3799 = vadd.f32 %v3770, %v3798
        %v3800 = vpop.f32.mrf.mxu0
        %v3801 = vadd.f32 %v3772, %v3800
        %3802 = vmatmul.bf16.gmra.mxu0 %v3010
        %v3803 = vpop.f32.mrf.mxu0
        %v3804 = vadd.f32 %v3775, %v3803
        %v3805 = vpop.f32.mrf.mxu0
        %v3806 = vadd.f32 %v3777, %v3805
        %3807 = vmatmul.bf16.gmra.mxu0 %v3011
        %v3808 = vpop.f32.mrf.mxu0
        %v3809 = vadd.f32 %v3780, %v3808
        %v3810 = vpop.f32.mrf.mxu0
        %v3811 = vadd.f32 %v3782, %v3810
        %3812 = vdwg.mxu0
        %3813 = vmatpush.bf16.msra.mxu0 %v3571
        %3814 = vmatpush.bf16.msra.mxu0 %v3570
        %3815 = vmatpush.bf16.msra.mxu0 %v3569
        %3816 = vmatpush.bf16.msra.mxu0 %v3568
        %3817 = vmatpush.bf16.msra.mxu0 %v3567
        %3818 = vmatpush.bf16.msra.mxu0 %v3566
        %3819 = vmatpush.bf16.msra.mxu0 %v3565
        %3820 = vmatpush.bf16.msra.mxu0 %v3564
        %3821 = vmatmul.bf16.gmra.mxu0 %v3024
        %v3822 = vpop.f32.mrf.mxu0
        %v3823 = vadd.f32 %v3794, %v3822
        %v3824 = vpop.f32.mrf.mxu0
        %v3825 = vadd.f32 %v3796, %v3824
        %3826 = vmatmul.bf16.gmra.mxu0 %v3025
        %v3827 = vpop.f32.mrf.mxu0
        %v3828 = vadd.f32 %v3799, %v3827
        %v3829 = vpop.f32.mrf.mxu0
        %v3830 = vadd.f32 %v3801, %v3829
        %3831 = vmatmul.bf16.gmra.mxu0 %v3026
        %v3832 = vpop.f32.mrf.mxu0
        %v3833 = vadd.f32 %v3804, %v3832
        %v3834 = vpop.f32.mrf.mxu0
        %v3835 = vadd.f32 %v3806, %v3834
        %3836 = vmatmul.bf16.gmra.mxu0 %v3027
        %v3837 = vpop.f32.mrf.mxu0
        %v3838 = vadd.f32 %v3809, %v3837
        %v3839 = vpop.f32.mrf.mxu0
        %v3840 = vadd.f32 %v3811, %v3839
        %3841 = vdwg.mxu0
        %3842 = vmatpush.bf16.msra.mxu0 %v3579
        %3843 = vmatpush.bf16.msra.mxu0 %v3578
        %3844 = vmatpush.bf16.msra.mxu0 %v3577
        %3845 = vmatpush.bf16.msra.mxu0 %v3576
        %3846 = vmatpush.bf16.msra.mxu0 %v3575
        %3847 = vmatpush.bf16.msra.mxu0 %v3574
        %3848 = vmatpush.bf16.msra.mxu0 %v3573
        %3849 = vmatpush.bf16.msra.mxu0 %v3572
        %3850 = vmatmul.bf16.gmra.mxu0 %v3048
        %v3851 = vpop.f32.mrf.mxu0
        %v3852 = vadd.f32 %v3823, %v3851
        %v3853 = vpop.f32.mrf.mxu0
        %v3854 = vadd.f32 %v3825, %v3853
        %3855 = vmatmul.bf16.gmra.mxu0 %v3049
        %v3856 = vpop.f32.mrf.mxu0
        %v3857 = vadd.f32 %v3828, %v3856
        %v3858 = vpop.f32.mrf.mxu0
        %v3859 = vadd.f32 %v3830, %v3858
        %3860 = vmatmul.bf16.gmra.mxu0 %v3050
        %v3861 = vpop.f32.mrf.mxu0
        %v3862 = vadd.f32 %v3833, %v3861
        %v3863 = vpop.f32.mrf.mxu0
        %v3864 = vadd.f32 %v3835, %v3863
        %3865 = vmatmul.bf16.gmra.mxu0 %v3051
        %v3866 = vpop.f32.mrf.mxu0
        %v3867 = vadd.f32 %v3838, %v3866
        %v3868 = vpop.f32.mrf.mxu0
        %v3869 = vadd.f32 %v3840, %v3868
        %3870 = vdwg.mxu0
        %3871 = vmatpush.bf16.msra.mxu0 %v3587
        %3872 = vmatpush.bf16.msra.mxu0 %v3586
        %3873 = vmatpush.bf16.msra.mxu0 %v3585
        %3874 = vmatpush.bf16.msra.mxu0 %v3584
        %3875 = vmatpush.bf16.msra.mxu0 %v3583
        %3876 = vmatpush.bf16.msra.mxu0 %v3582
        %3877 = vmatpush.bf16.msra.mxu0 %v3581
        %3878 = vmatpush.bf16.msra.mxu0 %v3580
        %3879 = vmatmul.bf16.gmra.mxu0 %v3064
        %v3880 = vpop.f32.mrf.mxu0
        %v3881 = vadd.f32 %v3852, %v3880
        %v3882 = vpop.f32.mrf.mxu0
        %v3883 = vadd.f32 %v3854, %v3882
        %3884 = vmatmul.bf16.gmra.mxu0 %v3065
        %v3885 = vpop.f32.mrf.mxu0
        %v3886 = vadd.f32 %v3857, %v3885
        %v3887 = vpop.f32.mrf.mxu0
        %v3888 = vadd.f32 %v3859, %v3887
        %3889 = vmatmul.bf16.gmra.mxu0 %v3066
        %v3890 = vpop.f32.mrf.mxu0
        %v3891 = vadd.f32 %v3862, %v3890
        %v3892 = vpop.f32.mrf.mxu0
        %v3893 = vadd.f32 %v3864, %v3892
        %3894 = vmatmul.bf16.gmra.mxu0 %v3067
        %v3895 = vpop.f32.mrf.mxu0
        %v3896 = vadd.f32 %v3867, %v3895
        %v3897 = vpop.f32.mrf.mxu0
        %v3898 = vadd.f32 %v3869, %v3897
        %3899 = vdwg.mxu0
        %3900 = vmatpush.bf16.msra.mxu0 %v3595
        %3901 = vmatpush.bf16.msra.mxu0 %v3594
        %3902 = vmatpush.bf16.msra.mxu0 %v3593
        %3903 = vmatpush.bf16.msra.mxu0 %v3592
        %3904 = vmatpush.bf16.msra.mxu0 %v3591
        %3905 = vmatpush.bf16.msra.mxu0 %v3590
        %3906 = vmatpush.bf16.msra.mxu0 %v3589
        %3907 = vmatpush.bf16.msra.mxu0 %v3588
        %3908 = vmatmul.bf16.gmra.mxu0 %v3080
        %v3909 = vpop.f32.mrf.mxu0
        %v3910 = vadd.f32 %v3881, %v3909
        %v3911 = vpop.f32.mrf.mxu0
        %v3912 = vadd.f32 %v3883, %v3911
        %3913 = vmatmul.bf16.gmra.mxu0 %v3081
        %v3914 = vpop.f32.mrf.mxu0
        %v3915 = vadd.f32 %v3886, %v3914
        %v3916 = vpop.f32.mrf.mxu0
        %v3917 = vadd.f32 %v3888, %v3916
        %3918 = vmatmul.bf16.gmra.mxu0 %v3082
        %v3919 = vpop.f32.mrf.mxu0
        %v3920 = vadd.f32 %v3891, %v3919
        %v3921 = vpop.f32.mrf.mxu0
        %v3922 = vadd.f32 %v3893, %v3921
        %3923 = vmatmul.bf16.gmra.mxu0 %v3083
        %v3924 = vpop.f32.mrf.mxu0
        %v3925 = vadd.f32 %v3896, %v3924
        %v3926 = vpop.f32.mrf.mxu0
        %v3927 = vadd.f32 %v3898, %v3926
        %3928 = vdwg.mxu0
        %v3929 = vmax.f32 %v3910, 0.0
        %v3930 = vmax.f32 %v3912, 0.0
        %v3931 = vmax.f32 %v3915, 0.0
        %v3932 = vmax.f32 %v3917, 0.0
        %v3933 = vmax.f32 %v3920, 0.0
        %v3934 = vmax.f32 %v3922, 0.0
        %v3935 = vmax.f32 %v3925, 0.0
        %v3936 = vmax.f32 %v3927, 0.0
        %v3937 = vpack.c.bf16 %v3930, %v3929
        %v3938 = vpack.c.bf16 %v3932, %v3931
        %v3939 = vpack.c.bf16 %v3934, %v3933
        %v3940 = vpack.c.bf16 %v3936, %v3935
        %v3941 = vld [vmem:[%s7] sm:$0xff]
        %v3942 = vld [vmem:[%s7 + $0x8] sm:$0xff]
        %v3943 = vld [vmem:[%s7 + $0x10] sm:$0xff]
        %v3944 = vld [vmem:[%s7 + $0x18] sm:$0xff]
        %v3945 = vld [vmem:[%s7 + $0x20] sm:$0xff]
        %v3946 = vld [vmem:[%s7 + $0x28] sm:$0xff]
        %v3947 = vld [vmem:[%s7 + $0x30] sm:$0xff]
        %v3948 = vld [vmem:[%s7 + $0x38] sm:$0xff]
        %v3949 = vld [vmem:[%s7 + $0x40] sm:$0xff]
        %v3950 = vld [vmem:[%s7 + $0x48] sm:$0xff]
        %v3951 = vld [vmem:[%s7 + $0x50] sm:$0xff]
        %v3952 = vld [vmem:[%s7 + $0x58] sm:$0xff]
        %v3953 = vld [vmem:[%s7 + $0x60] sm:$0xff]
        %v3954 = vld [vmem:[%s7 + $0x68] sm:$0xff]
        %v3955 = vld [vmem:[%s7 + $0x70] sm:$0xff]
        %v3956 = vld [vmem:[%s7 + $0x78] sm:$0xff]
        %v3957 = vld [vmem:[%s8] sm:$0x3]
        %v3959 = vperm.slane %v3957, 0
        %v3960 = vperm.slane %v3957, 1
        %v3979 = vunpack.c.l.b16 %v3941
        %v3980 = vunpack.c.h.b16 %v3941
        %v3981 = vunpack.c.l.b16 %v3942
        %v3982 = vunpack.c.h.b16 %v3942
        %v3983 = vunpack.c.l.b16 %v3943
        %v3984 = vunpack.c.h.b16 %v3943
        %v3985 = vunpack.c.l.b16 %v3944
        %v3986 = vunpack.c.h.b16 %v3944
        %v3987 = vunpack.c.l.b16 %v3945
        %v3988 = vunpack.c.h.b16 %v3945
        %v3989 = vunpack.c.l.b16 %v3946
        %v3990 = vunpack.c.h.b16 %v3946
        %v3991 = vunpack.c.l.b16 %v3947
        %v3992 = vunpack.c.h.b16 %v3947
        %v3993 = vunpack.c.l.b16 %v3948
        %v3994 = vunpack.c.h.b16 %v3948
        %v3995 = vunpack.c.l.b16 %v3949
        %v3996 = vunpack.c.h.b16 %v3949
        %v3997 = vunpack.c.l.b16 %v3950
        %v3998 = vunpack.c.h.b16 %v3950
        %v3999 = vunpack.c.l.b16 %v3951
        %v4000 = vunpack.c.h.b16 %v3951
        %v4001 = vunpack.c.l.b16 %v3952
        %v4002 = vunpack.c.h.b16 %v3952
        %v4003 = vunpack.c.l.b16 %v3953
        %v4004 = vunpack.c.h.b16 %v3953
        %v4005 = vunpack.c.l.b16 %v3954
        %v4006 = vunpack.c.h.b16 %v3954
        %v4007 = vunpack.c.l.b16 %v3955
        %v4008 = vunpack.c.h.b16 %v3955
        %v4009 = vunpack.c.l.b16 %v3956
        %v4010 = vunpack.c.h.b16 %v3956
        %v4011 = vpack.c.b16 %v3981, %v3979
        %v4012 = vpack.c.b16 %v3982, %v3980
        %v4013 = vpack.c.b16 %v3985, %v3983
        %v4014 = vpack.c.b16 %v3986, %v3984
        %v4015 = vpack.c.b16 %v3989, %v3987
        %v4016 = vpack.c.b16 %v3990, %v3988
        %v4017 = vpack.c.b16 %v3993, %v3991
        %v4018 = vpack.c.b16 %v3994, %v3992
        %v4019 = vpack.c.b16 %v3997, %v3995
        %v4020 = vpack.c.b16 %v3998, %v3996
        %v4021 = vpack.c.b16 %v4001, %v3999
        %v4022 = vpack.c.b16 %v4002, %v4000
        %v4023 = vpack.c.b16 %v4005, %v4003
        %v4024 = vpack.c.b16 %v4006, %v4004
        %v4025 = vpack.c.b16 %v4009, %v4007
        %v4026 = vpack.c.b16 %v4010, %v4008
        %4043 = vmatpush.bf16.msra.mxu0 %v4025
        %4044 = vmatpush.bf16.msra.mxu0 %v4023
        %4045 = vmatpush.bf16.msra.mxu0 %v4021
        %4046 = vmatpush.bf16.msra.mxu0 %v4019
        %4047 = vmatpush.bf16.msra.mxu0 %v4017
        %4048 = vmatpush.bf16.msra.mxu0 %v4015
        %4049 = vmatpush.bf16.msra.mxu0 %v4013
        %4050 = vmatpush.bf16.msra.mxu0 %v4011
        %4051 = vmatmul.bf16.gmra.mxu0 %v3937
        %v4052 = vpop.f32.mrf.mxu0
        %v4053 = vadd.f32 %v3959, %v4052
        %v4054 = vpop.f32.mrf.mxu0
        %v4055 = vadd.f32 %v3959, %v4054
        %4056 = vmatmul.bf16.gmra.mxu0 %v3938
        %v4057 = vpop.f32.mrf.mxu0
        %v4058 = vadd.f32 %v3959, %v4057
        %v4059 = vpop.f32.mrf.mxu0
        %v4060 = vadd.f32 %v3959, %v4059
        %4061 = vmatmul.bf16.gmra.mxu0 %v3939
        %v4062 = vpop.f32.mrf.mxu0
        %v4063 = vadd.f32 %v3959, %v4062
        %v4064 = vpop.f32.mrf.mxu0
        %v4065 = vadd.f32 %v3959, %v4064
        %4066 = vmatmul.bf16.gmra.mxu0 %v3940
        %v4067 = vpop.f32.mrf.mxu0
        %v4068 = vadd.f32 %v3959, %v4067
        %v4069 = vpop.f32.mrf.mxu0
        %v4070 = vadd.f32 %v3959, %v4069
        %4071 = vdwg.mxu0
        %4072 = vmatpush.bf16.msra.mxu0 %v4026
        %4073 = vmatpush.bf16.msra.mxu0 %v4024
        %4074 = vmatpush.bf16.msra.mxu0 %v4022
        %4075 = vmatpush.bf16.msra.mxu0 %v4020
        %4076 = vmatpush.bf16.msra.mxu0 %v4018
        %4077 = vmatpush.bf16.msra.mxu0 %v4016
        %4078 = vmatpush.bf16.msra.mxu0 %v4014
        %4079 = vmatpush.bf16.msra.mxu0 %v4012
        %4080 = vmatmul.bf16.gmra.mxu0 %v3937
        %v4081 = vpop.f32.mrf.mxu0
        %v4082 = vadd.f32 %v3960, %v4081
        %v4083 = vpop.f32.mrf.mxu0
        %v4084 = vadd.f32 %v3960, %v4083
        %4085 = vmatmul.bf16.gmra.mxu0 %v3938
        %v4086 = vpop.f32.mrf.mxu0
        %v4087 = vadd.f32 %v3960, %v4086
        %v4088 = vpop.f32.mrf.mxu0
        %v4089 = vadd.f32 %v3960, %v4088
        %4090 = vmatmul.bf16.gmra.mxu0 %v3939
        %v4091 = vpop.f32.mrf.mxu0
        %v4092 = vadd.f32 %v3960, %v4091
        %v4093 = vpop.f32.mrf.mxu0
        %v4094 = vadd.f32 %v3960, %v4093
        %4095 = vmatmul.bf16.gmra.mxu0 %v3940
        %v4096 = vpop.f32.mrf.mxu0
        %v4097 = vadd.f32 %v3960, %v4096
        %v4098 = vpop.f32.mrf.mxu0
        %v4099 = vadd.f32 %v3960, %v4098
        %4100 = vdwg.mxu0
        %v4101 = vld [vmem:[%s9] sm:$0xff]
        %v4102 = vld [vmem:[%s9 + $0x8] sm:$0xff]
        %v4103 = vld [vmem:[%s9 + $0x10] sm:$0xff]
        %v4104 = vld [vmem:[%s9 + $0x18] sm:$0xff]
        %v4105 = vld [vmem:[%s9 + $0x20] sm:$0xff]
        %v4106 = vld [vmem:[%s9 + $0x28] sm:$0xff]
        %v4107 = vld [vmem:[%s9 + $0x30] sm:$0xff]
        %v4108 = vld [vmem:[%s9 + $0x38] sm:$0xff]
        %v4109 = vld [vmem:[%s9 + $0x40] sm:$0xff]
        %v4110 = vld [vmem:[%s9 + $0x48] sm:$0xff]
        %v4111 = vld [vmem:[%s9 + $0x50] sm:$0xff]
        %v4112 = vld [vmem:[%s9 + $0x58] sm:$0xff]
        %v4113 = vld [vmem:[%s9 + $0x60] sm:$0xff]
        %v4114 = vld [vmem:[%s9 + $0x68] sm:$0xff]
        %v4115 = vld [vmem:[%s9 + $0x70] sm:$0xff]
        %v4116 = vld [vmem:[%s9 + $0x78] sm:$0xff]
        %v4117 = vld [vmem:[%s10] sm:$0x3]
        %v4119 = vperm.slane %v4117, 0
        %v4120 = vperm.slane %v4117, 1
        %v4139 = vunpack.c.l.b16 %v4101
        %v4140 = vunpack.c.h.b16 %v4101
        %v4141 = vunpack.c.l.b16 %v4102
        %v4142 = vunpack.c.h.b16 %v4102
        %v4143 = vunpack.c.l.b16 %v4103
        %v4144 = vunpack.c.h.b16 %v4103
        %v4145 = vunpack.c.l.b16 %v4104
        %v4146 = vunpack.c.h.b16 %v4104
        %v4147 = vunpack.c.l.b16 %v4105
        %v4148 = vunpack.c.h.b16 %v4105
        %v4149 = vunpack.c.l.b16 %v4106
        %v4150 = vunpack.c.h.b16 %v4106
        %v4151 = vunpack.c.l.b16 %v4107
        %v4152 = vunpack.c.h.b16 %v4107
        %v4153 = vunpack.c.l.b16 %v4108
        %v4154 = vunpack.c.h.b16 %v4108
        %v4155 = vunpack.c.l.b16 %v4109
        %v4156 = vunpack.c.h.b16 %v4109
        %v4157 = vunpack.c.l.b16 %v4110
        %v4158 = vunpack.c.h.b16 %v4110
        %v4159 = vunpack.c.l.b16 %v4111
        %v4160 = vunpack.c.h.b16 %v4111
        %v4161 = vunpack.c.l.b16 %v4112
        %v4162 = vunpack.c.h.b16 %v4112
        %v4163 = vunpack.c.l.b16 %v4113
        %v4164 = vunpack.c.h.b16 %v4113
        %v4165 = vunpack.c.l.b16 %v4114
        %v4166 = vunpack.c.h.b16 %v4114
        %v4167 = vunpack.c.l.b16 %v4115
        %v4168 = vunpack.c.h.b16 %v4115
        %v4169 = vunpack.c.l.b16 %v4116
        %v4170 = vunpack.c.h.b16 %v4116
        %v4171 = vpack.c.b16 %v4141, %v4139
        %v4172 = vpack.c.b16 %v4142, %v4140
        %v4173 = vpack.c.b16 %v4145, %v4143
        %v4174 = vpack.c.b16 %v4146, %v4144
        %v4175 = vpack.c.b16 %v4149, %v4147
        %v4176 = vpack.c.b16 %v4150, %v4148
        %v4177 = vpack.c.b16 %v4153, %v4151
        %v4178 = vpack.c.b16 %v4154, %v4152
        %v4179 = vpack.c.b16 %v4157, %v4155
        %v4180 = vpack.c.b16 %v4158, %v4156
        %v4181 = vpack.c.b16 %v4161, %v4159
        %v4182 = vpack.c.b16 %v4162, %v4160
        %v4183 = vpack.c.b16 %v4165, %v4163
        %v4184 = vpack.c.b16 %v4166, %v4164
        %v4185 = vpack.c.b16 %v4169, %v4167
        %v4186 = vpack.c.b16 %v4170, %v4168
        %4203 = vmatpush.bf16.msra.mxu0 %v4185
        %4204 = vmatpush.bf16.msra.mxu0 %v4183
        %4205 = vmatpush.bf16.msra.mxu0 %v4181
        %4206 = vmatpush.bf16.msra.mxu0 %v4179
        %4207 = vmatpush.bf16.msra.mxu0 %v4177
        %4208 = vmatpush.bf16.msra.mxu0 %v4175
        %4209 = vmatpush.bf16.msra.mxu0 %v4173
        %4210 = vmatpush.bf16.msra.mxu0 %v4171
        %4211 = vmatmul.bf16.gmra.mxu0 %v2132
        %v4212 = vpop.f32.mrf.mxu0
        %v4213 = vadd.f32 %v4119, %v4212
        %v4214 = vpop.f32.mrf.mxu0
        %v4215 = vadd.f32 %v4119, %v4214
        %4216 = vmatmul.bf16.gmra.mxu0 %v2133
        %v4217 = vpop.f32.mrf.mxu0
        %v4218 = vadd.f32 %v4119, %v4217
        %v4219 = vpop.f32.mrf.mxu0
        %v4220 = vadd.f32 %v4119, %v4219
        %4221 = vmatmul.bf16.gmra.mxu0 %v2134
        %v4222 = vpop.f32.mrf.mxu0
        %v4223 = vadd.f32 %v4119, %v4222
        %v4224 = vpop.f32.mrf.mxu0
        %v4225 = vadd.f32 %v4119, %v4224
        %4226 = vmatmul.bf16.gmra.mxu0 %v2135
        %v4227 = vpop.f32.mrf.mxu0
        %v4228 = vadd.f32 %v4119, %v4227
        %v4229 = vpop.f32.mrf.mxu0
        %v4230 = vadd.f32 %v4119, %v4229
        %4231 = vdwg.mxu0
        %4232 = vmatpush.bf16.msra.mxu0 %v4186
        %4233 = vmatpush.bf16.msra.mxu0 %v4184
        %4234 = vmatpush.bf16.msra.mxu0 %v4182
        %4235 = vmatpush.bf16.msra.mxu0 %v4180
        %4236 = vmatpush.bf16.msra.mxu0 %v4178
        %4237 = vmatpush.bf16.msra.mxu0 %v4176
        %4238 = vmatpush.bf16.msra.mxu0 %v4174
        %4239 = vmatpush.bf16.msra.mxu0 %v4172
        %4240 = vmatmul.bf16.gmra.mxu0 %v2132
        %v4241 = vpop.f32.mrf.mxu0
        %v4242 = vadd.f32 %v4120, %v4241
        %v4243 = vpop.f32.mrf.mxu0
        %v4244 = vadd.f32 %v4120, %v4243
        %4245 = vmatmul.bf16.gmra.mxu0 %v2133
        %v4246 = vpop.f32.mrf.mxu0
        %v4247 = vadd.f32 %v4120, %v4246
        %v4248 = vpop.f32.mrf.mxu0
        %v4249 = vadd.f32 %v4120, %v4248
        %4250 = vmatmul.bf16.gmra.mxu0 %v2134
        %v4251 = vpop.f32.mrf.mxu0
        %v4252 = vadd.f32 %v4120, %v4251
        %v4253 = vpop.f32.mrf.mxu0
        %v4254 = vadd.f32 %v4120, %v4253
        %4255 = vmatmul.bf16.gmra.mxu0 %v2135
        %v4256 = vpop.f32.mrf.mxu0
        %v4257 = vadd.f32 %v4120, %v4256
        %v4258 = vpop.f32.mrf.mxu0
        %v4259 = vadd.f32 %v4120, %v4258
        %4260 = vdwg.mxu0
        %v4261 = vadd.f32 %v4053, %v4213
        %v4262 = vadd.f32 %v4082, %v4242
        %v4263 = vadd.f32 %v4055, %v4215
        %v4264 = vadd.f32 %v4084, %v4244
        %v4265 = vadd.f32 %v4058, %v4218
        %v4266 = vadd.f32 %v4087, %v4247
        %v4267 = vadd.f32 %v4060, %v4220
        %v4268 = vadd.f32 %v4089, %v4249
        %v4269 = vadd.f32 %v4063, %v4223
        %v4270 = vadd.f32 %v4092, %v4252
        %v4271 = vadd.f32 %v4065, %v4225
        %v4272 = vadd.f32 %v4094, %v4254
        %v4273 = vadd.f32 %v4068, %v4228
        %v4274 = vadd.f32 %v4097, %v4257
        %v4275 = vadd.f32 %v4070, %v4230
        %v4276 = vadd.f32 %v4099, %v4259
        %v4277 = vmax.f32 %v4261, 0.0
        %v4278 = vmax.f32 %v4262, 0.0
        %v4279 = vmax.f32 %v4263, 0.0
        %v4280 = vmax.f32 %v4264, 0.0
        %v4281 = vmax.f32 %v4265, 0.0
        %v4282 = vmax.f32 %v4266, 0.0
        %v4283 = vmax.f32 %v4267, 0.0
        %v4284 = vmax.f32 %v4268, 0.0
        %v4285 = vmax.f32 %v4269, 0.0
        %v4286 = vmax.f32 %v4270, 0.0
        %v4287 = vmax.f32 %v4271, 0.0
        %v4288 = vmax.f32 %v4272, 0.0
        %v4289 = vmax.f32 %v4273, 0.0
        %v4290 = vmax.f32 %v4274, 0.0
        %v4291 = vmax.f32 %v4275, 0.0
        %v4292 = vmax.f32 %v4276, 0.0
        %v4293 = vpack.c.bf16 %v4278, %v4277
        %v4294 = vpack.c.bf16 %v4280, %v4279
        %v4295 = vpack.c.bf16 %v4282, %v4281
        %v4296 = vpack.c.bf16 %v4284, %v4283
        %v4297 = vpack.c.bf16 %v4286, %v4285
        %v4298 = vpack.c.bf16 %v4288, %v4287
        %v4299 = vpack.c.bf16 %v4290, %v4289
        %v4300 = vpack.c.bf16 %v4292, %v4291
        %v4301 = vld [vmem:[%s11] sm:$0xf]
        %v4302 = vld [vmem:[%s11 + $0x4] sm:$0xf]
        %v4303 = vld [vmem:[%s11 + $0x8] sm:$0xf]
        %v4304 = vld [vmem:[%s11 + $0xc] sm:$0xf]
        %v4305 = vld [vmem:[%s11 + $0x10] sm:$0xf]
        %v4306 = vld [vmem:[%s11 + $0x14] sm:$0xf]
        %v4307 = vld [vmem:[%s11 + $0x18] sm:$0xf]
        %v4308 = vld [vmem:[%s11 + $0x1c] sm:$0xf]
        %v4309 = vld [vmem:[%s11 + $0x20] sm:$0xf]
        %v4310 = vld [vmem:[%s11 + $0x24] sm:$0xf]
        %v4311 = vld [vmem:[%s11 + $0x28] sm:$0xf]
        %v4312 = vld [vmem:[%s11 + $0x2c] sm:$0xf]
        %v4313 = vld [vmem:[%s11 + $0x30] sm:$0xf]
        %v4314 = vld [vmem:[%s11 + $0x34] sm:$0xf]
        %v4315 = vld [vmem:[%s11 + $0x38] sm:$0xf]
        %v4316 = vld [vmem:[%s11 + $0x3c] sm:$0xf]
        %v4317 = vld [vmem:[%s11 + $0x40] sm:$0xf]
        %v4318 = vld [vmem:[%s11 + $0x44] sm:$0xf]
        %v4319 = vld [vmem:[%s11 + $0x48] sm:$0xf]
        %v4320 = vld [vmem:[%s11 + $0x4c] sm:$0xf]
        %v4321 = vld [vmem:[%s11 + $0x50] sm:$0xf]
        %v4322 = vld [vmem:[%s11 + $0x54] sm:$0xf]
        %v4323 = vld [vmem:[%s11 + $0x58] sm:$0xf]
        %v4324 = vld [vmem:[%s11 + $0x5c] sm:$0xf]
        %v4325 = vld [vmem:[%s11 + $0x60] sm:$0xf]
        %v4326 = vld [vmem:[%s11 + $0x64] sm:$0xf]
        %v4327 = vld [vmem:[%s11 + $0x68] sm:$0xf]
        %v4328 = vld [vmem:[%s11 + $0x6c] sm:$0xf]
        %v4329 = vld [vmem:[%s11 + $0x70] sm:$0xf]
        %v4330 = vld [vmem:[%s11 + $0x74] sm:$0xf]
        %v4331 = vld [vmem:[%s11 + $0x78] sm:$0xf]
        %v4332 = vld [vmem:[%s11 + $0x7c] sm:$0xf]
        %v4333 = vld [vmem:[%s12] sm:$0x1]
        %v4335 = vperm.slane %v4333, 0
        %v4345 = vunpack.c.l.b16 %v4293
        %v4346 = vunpack.c.h.b16 %v4293
        %v4347 = vunpack.c.l.b16 %v4294
        %v4348 = vunpack.c.h.b16 %v4294
        %v4349 = vunpack.c.l.b16 %v4295
        %v4350 = vunpack.c.h.b16 %v4295
        %v4351 = vunpack.c.l.b16 %v4296
        %v4352 = vunpack.c.h.b16 %v4296
        %v4353 = vunpack.c.l.b16 %v4297
        %v4354 = vunpack.c.h.b16 %v4297
        %v4355 = vunpack.c.l.b16 %v4298
        %v4356 = vunpack.c.h.b16 %v4298
        %v4357 = vunpack.c.l.b16 %v4299
        %v4358 = vunpack.c.h.b16 %v4299
        %v4359 = vunpack.c.l.b16 %v4300
        %v4360 = vunpack.c.h.b16 %v4300
        %v4361 = vpack.c.b16 %v4347, %v4345
        %v4362 = vpack.c.b16 %v4348, %v4346
        %v4363 = vpack.c.b16 %v4351, %v4349
        %v4364 = vpack.c.b16 %v4352, %v4350
        %v4365 = vpack.c.b16 %v4355, %v4353
        %v4366 = vpack.c.b16 %v4356, %v4354
        %v4367 = vpack.c.b16 %v4359, %v4357
        %v4368 = vpack.c.b16 %v4360, %v4358
        %v4409 = vunpack.c.l.b16 %v4301
        %v4410 = vunpack.c.l.b16 %v4302
        %v4411 = vunpack.c.l.b16 %v4303
        %v4412 = vunpack.c.l.b16 %v4304
        %v4413 = vunpack.c.l.b16 %v4305
        %v4414 = vunpack.c.l.b16 %v4306
        %v4415 = vunpack.c.l.b16 %v4307
        %v4416 = vunpack.c.l.b16 %v4308
        %v4417 = vunpack.c.l.b16 %v4309
        %v4418 = vunpack.c.l.b16 %v4310
        %v4419 = vunpack.c.l.b16 %v4311
        %v4420 = vunpack.c.l.b16 %v4312
        %v4421 = vunpack.c.l.b16 %v4313
        %v4422 = vunpack.c.l.b16 %v4314
        %v4423 = vunpack.c.l.b16 %v4315
        %v4424 = vunpack.c.l.b16 %v4316
        %v4425 = vunpack.c.l.b16 %v4317
        %v4426 = vunpack.c.l.b16 %v4318
        %v4427 = vunpack.c.l.b16 %v4319
        %v4428 = vunpack.c.l.b16 %v4320
        %v4429 = vunpack.c.l.b16 %v4321
        %v4430 = vunpack.c.l.b16 %v4322
        %v4431 = vunpack.c.l.b16 %v4323
        %v4432 = vunpack.c.l.b16 %v4324
        %v4433 = vunpack.c.l.b16 %v4325
        %v4434 = vunpack.c.l.b16 %v4326
        %v4435 = vunpack.c.l.b16 %v4327
        %v4436 = vunpack.c.l.b16 %v4328
        %v4437 = vunpack.c.l.b16 %v4329
        %v4438 = vunpack.c.l.b16 %v4330
        %v4439 = vunpack.c.l.b16 %v4331
        %v4440 = vunpack.c.l.b16 %v4332
        %v4441 = vpack.c.b16 %v4410, %v4409
        %v4442 = vpack.c.b16 %v4412, %v4411
        %v4443 = vpack.c.b16 %v4414, %v4413
        %v4444 = vpack.c.b16 %v4416, %v4415
        %v4445 = vpack.c.b16 %v4418, %v4417
        %v4446 = vpack.c.b16 %v4420, %v4419
        %v4447 = vpack.c.b16 %v4422, %v4421
        %v4448 = vpack.c.b16 %v4424, %v4423
        %v4449 = vpack.c.b16 %v4426, %v4425
        %v4450 = vpack.c.b16 %v4428, %v4427
        %v4451 = vpack.c.b16 %v4430, %v4429
        %v4452 = vpack.c.b16 %v4432, %v4431
        %v4453 = vpack.c.b16 %v4434, %v4433
        %v4454 = vpack.c.b16 %v4436, %v4435
        %v4455 = vpack.c.b16 %v4438, %v4437
        %v4456 = vpack.c.b16 %v4440, %v4439
        %4473 = vmatpush.bf16.msra.mxu0 %v4448
        %4474 = vmatpush.bf16.msra.mxu0 %v4447
        %4475 = vmatpush.bf16.msra.mxu0 %v4446
        %4476 = vmatpush.bf16.msra.mxu0 %v4445
        %4477 = vmatpush.bf16.msra.mxu0 %v4444
        %4478 = vmatpush.bf16.msra.mxu0 %v4443
        %4479 = vmatpush.bf16.msra.mxu0 %v4442
        %4480 = vmatpush.bf16.msra.mxu0 %v4441
        %4481 = vmatmul.bf16.gmra.mxu0 %v4361
        %v4482 = vpop.f32.mrf.mxu0
        %v4483 = vadd.f32 %v4335, %v4482
        %v4484 = vpop.f32.mrf.mxu0
        %v4485 = vadd.f32 %v4335, %v4484
        %4486 = vmatmul.bf16.gmra.mxu0 %v4363
        %v4487 = vpop.f32.mrf.mxu0
        %v4488 = vadd.f32 %v4335, %v4487
        %v4489 = vpop.f32.mrf.mxu0
        %v4490 = vadd.f32 %v4335, %v4489
        %4491 = vmatmul.bf16.gmra.mxu0 %v4365
        %v4492 = vpop.f32.mrf.mxu0
        %v4493 = vadd.f32 %v4335, %v4492
        %v4494 = vpop.f32.mrf.mxu0
        %v4495 = vadd.f32 %v4335, %v4494
        %4496 = vmatmul.bf16.gmra.mxu0 %v4367
        %v4497 = vpop.f32.mrf.mxu0
        %v4498 = vadd.f32 %v4335, %v4497
        %v4499 = vpop.f32.mrf.mxu0
        %v4500 = vadd.f32 %v4335, %v4499
        %4501 = vdwg.mxu0
        %4502 = vmatpush.bf16.msra.mxu0 %v4456
        %4503 = vmatpush.bf16.msra.mxu0 %v4455
        %4504 = vmatpush.bf16.msra.mxu0 %v4454
        %4505 = vmatpush.bf16.msra.mxu0 %v4453
        %4506 = vmatpush.bf16.msra.mxu0 %v4452
        %4507 = vmatpush.bf16.msra.mxu0 %v4451
        %4508 = vmatpush.bf16.msra.mxu0 %v4450
        %4509 = vmatpush.bf16.msra.mxu0 %v4449
        %4510 = vmatmul.bf16.gmra.mxu0 %v4362
        %v4511 = vpop.f32.mrf.mxu0
        %v4512 = vadd.f32 %v4483, %v4511
        %v4513 = vpop.f32.mrf.mxu0
        %v4514 = vadd.f32 %v4485, %v4513
        %4515 = vmatmul.bf16.gmra.mxu0 %v4364
        %v4516 = vpop.f32.mrf.mxu0
        %v4517 = vadd.f32 %v4488, %v4516
        %v4518 = vpop.f32.mrf.mxu0
        %v4519 = vadd.f32 %v4490, %v4518
        %4520 = vmatmul.bf16.gmra.mxu0 %v4366
        %v4521 = vpop.f32.mrf.mxu0
        %v4522 = vadd.f32 %v4493, %v4521
        %v4523 = vpop.f32.mrf.mxu0
        %v4524 = vadd.f32 %v4495, %v4523
        %4525 = vmatmul.bf16.gmra.mxu0 %v4368
        %v4526 = vpop.f32.mrf.mxu0
        %v4527 = vadd.f32 %v4498, %v4526
        %v4528 = vpop.f32.mrf.mxu0
        %v4529 = vadd.f32 %v4500, %v4528
        %4530 = vdwg.mxu0
        %v4531 = vmax.f32 %v4512, 0.0
        %v4532 = vmax.f32 %v4514, 0.0
        %v4533 = vmax.f32 %v4517, 0.0
        %v4534 = vmax.f32 %v4519, 0.0
        %v4535 = vmax.f32 %v4522, 0.0
        %v4536 = vmax.f32 %v4524, 0.0
        %v4537 = vmax.f32 %v4527, 0.0
        %v4538 = vmax.f32 %v4529, 0.0
        %v4539 = vpack.c.bf16 %v4531, %v4531
        %v4540 = vpack.c.bf16 %v4532, %v4532
        %v4541 = vpack.c.bf16 %v4533, %v4533
        %v4542 = vpack.c.bf16 %v4534, %v4534
        %v4543 = vpack.c.bf16 %v4535, %v4535
        %v4544 = vpack.c.bf16 %v4536, %v4536
        %v4545 = vpack.c.bf16 %v4537, %v4537
        %v4546 = vpack.c.bf16 %v4538, %v4538
        %v4548 = vshrl.u32 %v4539, 16
        %v4550 = vrot.slane %v4548, 7
        %v4551 = vshll.u32 %v4539, 16
        %v4553 = vor.u32 %v4550, %v4551
        %v4554 = vrot.slane %v4550, 4
        %v4556 = vshrl.u32 %v4540, 16
        %v4558 = vrot.slane %v4556, 7
        %v4559 = vshll.u32 %v4540, 16
        %v4561 = vor.u32 %v4558, %v4559
        %v4562 = vrot.slane %v4558, 4
        %v4564 = vshrl.u32 %v4541, 16
        %v4566 = vrot.slane %v4564, 7
        %v4567 = vshll.u32 %v4541, 16
        %v4569 = vor.u32 %v4566, %v4567
        %v4570 = vrot.slane %v4566, 4
        %v4572 = vshrl.u32 %v4542, 16
        %v4574 = vrot.slane %v4572, 7
        %v4575 = vshll.u32 %v4542, 16
        %v4577 = vor.u32 %v4574, %v4575
        %v4578 = vrot.slane %v4574, 4
        %v4580 = vshrl.u32 %v4543, 16
        %v4582 = vrot.slane %v4580, 7
        %v4583 = vshll.u32 %v4543, 16
        %v4585 = vor.u32 %v4582, %v4583
        %v4586 = vrot.slane %v4582, 4
        %v4588 = vshrl.u32 %v4544, 16
        %v4590 = vrot.slane %v4588, 7
        %v4591 = vshll.u32 %v4544, 16
        %v4593 = vor.u32 %v4590, %v4591
        %v4594 = vrot.slane %v4590, 4
        %v4596 = vshrl.u32 %v4545, 16
        %v4598 = vrot.slane %v4596, 7
        %v4599 = vshll.u32 %v4545, 16
        %v4601 = vor.u32 %v4598, %v4599
        %v4602 = vrot.slane %v4598, 4
        %v4604 = vshrl.u32 %v4546, 16
        %v4606 = vrot.slane %v4604, 7
        %v4607 = vshll.u32 %v4546, 16
        %v4609 = vor.u32 %v4606, %v4607
        %v4610 = vrot.slane %v4606, 4
        %v4627 = vsel %vm1476, %v4553, %v2551
        %4628 = vst [vmem:[%s1473] sm:$0xf] %v4627
        %v4629 = vld [vmem:[%s1473 + $0x4] sm:$0x1]
        %v4630 = vsel %vm1482, %v4554, %v4629
        %4631 = vst [vmem:[%s1473 + $0x4] sm:$0x1] %v4630
        %v4632 = vld [vmem:[%s1473 + $0x8] sm:$0xf]
        %v4633 = vsel %vm1476, %v4561, %v4632
        %4634 = vst [vmem:[%s1473 + $0x8] sm:$0xf] %v4633
        %v4635 = vld [vmem:[%s1473 + $0xc] sm:$0x1]
        %v4636 = vsel %vm1482, %v4562, %v4635
        %4637 = vst [vmem:[%s1473 + $0xc] sm:$0x1] %v4636
        %v4638 = vld [vmem:[%s1473 + $0x10] sm:$0xf]
        %v4639 = vsel %vm1476, %v4569, %v4638
        %4640 = vst [vmem:[%s1473 + $0x10] sm:$0xf] %v4639
        %v4641 = vld [vmem:[%s1473 + $0x14] sm:$0x1]
        %v4642 = vsel %vm1482, %v4570, %v4641
        %4643 = vst [vmem:[%s1473 + $0x14] sm:$0x1] %v4642
        %v4644 = vld [vmem:[%s1473 + $0x18] sm:$0xf]
        %v4645 = vsel %vm1476, %v4577, %v4644
        %4646 = vst [vmem:[%s1473 + $0x18] sm:$0xf] %v4645
        %v4647 = vld [vmem:[%s1473 + $0x1c] sm:$0x1]
        %v4648 = vsel %vm1482, %v4578, %v4647
        %4649 = vst [vmem:[%s1473 + $0x1c] sm:$0x1] %v4648
        %v4650 = vld [vmem:[%s1473 + $0x20] sm:$0xf]
        %v4651 = vsel %vm1476, %v4585, %v4650
        %4652 = vst [vmem:[%s1473 + $0x20] sm:$0xf] %v4651
        %v4653 = vld [vmem:[%s1473 + $0x24] sm:$0x1]
        %v4654 = vsel %vm1482, %v4586, %v4653
        %4655 = vst [vmem:[%s1473 + $0x24] sm:$0x1] %v4654
        %v4656 = vld [vmem:[%s1473 + $0x28] sm:$0xf]
        %v4657 = vsel %vm1476, %v4593, %v4656
        %4658 = vst [vmem:[%s1473 + $0x28] sm:$0xf] %v4657
        %v4659 = vld [vmem:[%s1473 + $0x2c] sm:$0x1]
        %v4660 = vsel %vm1482, %v4594, %v4659
        %4661 = vst [vmem:[%s1473 + $0x2c] sm:$0x1] %v4660
        %v4662 = vld [vmem:[%s1473 + $0x30] sm:$0xf]
        %v4663 = vsel %vm1476, %v4601, %v4662
        %4664 = vst [vmem:[%s1473 + $0x30] sm:$0xf] %v4663
        %v4665 = vld [vmem:[%s1473 + $0x34] sm:$0x1]
        %v4666 = vsel %vm1482, %v4602, %v4665
        %4667 = vst [vmem:[%s1473 + $0x34] sm:$0x1] %v4666
        %v4668 = vld [vmem:[%s1473 + $0x38] sm:$0xf]
        %v4669 = vsel %vm1476, %v4609, %v4668
        %4670 = vst [vmem:[%s1473 + $0x38] sm:$0xf] %v4669
        %v4671 = vld [vmem:[%s1473 + $0x3c] sm:$0x1]
        %v4672 = vsel %vm1482, %v4610, %v4671
        %4673 = vst [vmem:[%s1473 + $0x3c] sm:$0x1] %v4672
        %v4674 = vld [vmem:[#allocation2] sm:$0xf]
        %v4675 = vld [vmem:[#allocation2 + $0x8] sm:$0xf]
        %v4676 = vld [vmem:[#allocation2 + $0x10] sm:$0xf]
        %v4677 = vld [vmem:[#allocation2 + $0x18] sm:$0xf]
        %v4678 = vld [vmem:[#allocation2 + $0x20] sm:$0xf]
        %v4679 = vld [vmem:[#allocation2 + $0x28] sm:$0xf]
        %v4680 = vld [vmem:[#allocation2 + $0x30] sm:$0xf]
        %v4681 = vld [vmem:[#allocation2 + $0x38] sm:$0xf]
        %v4682 = vld [vmem:[#allocation2 + $0x4] sm:$0x1]
        %v4683 = vld [vmem:[#allocation2 + $0xc] sm:$0x1]
        %v4684 = vld [vmem:[#allocation2 + $0x14] sm:$0x1]
        %v4685 = vld [vmem:[#allocation2 + $0x1c] sm:$0x1]
        %v4686 = vld [vmem:[#allocation2 + $0x24] sm:$0x1]
        %v4687 = vld [vmem:[#allocation2 + $0x2c] sm:$0x1]
        %v4688 = vld [vmem:[#allocation2 + $0x34] sm:$0x1]
        %v4689 = vld [vmem:[#allocation2 + $0x3c] sm:$0x1]
        %v4691 = vshrl.u32 %v4674, 16
        %v4693 = vrot.slane %v4691, 4
        %v4694 = vshll.u32 %v4674, 16
        %v4696 = vrot.slane %v4694, 5
        %v4697 = vor.u32 %v4693, %v4696
        %v4698 = vrot.slane %v4697, 4
        %v4700 = vshll.u32 %v4682, 16
        %v4702 = vrot.slane %v4700, 5
        %v4703 = vsel %vm2379, %v4698, %v4702
        %v4705 = vshrl.u32 %v4675, 16
        %v4707 = vrot.slane %v4705, 4
        %v4708 = vshll.u32 %v4675, 16
        %v4710 = vrot.slane %v4708, 5
        %v4711 = vor.u32 %v4707, %v4710
        %v4712 = vrot.slane %v4711, 4
        %v4714 = vshll.u32 %v4683, 16
        %v4716 = vrot.slane %v4714, 5
        %v4717 = vsel %vm2379, %v4712, %v4716
        %v4719 = vshrl.u32 %v4676, 16
        %v4721 = vrot.slane %v4719, 4
        %v4722 = vshll.u32 %v4676, 16
        %v4724 = vrot.slane %v4722, 5
        %v4725 = vor.u32 %v4721, %v4724
        %v4726 = vrot.slane %v4725, 4
        %v4728 = vshll.u32 %v4684, 16
        %v4730 = vrot.slane %v4728, 5
        %v4731 = vsel %vm2379, %v4726, %v4730
        %v4733 = vshrl.u32 %v4677, 16
        %v4735 = vrot.slane %v4733, 4
        %v4736 = vshll.u32 %v4677, 16
        %v4738 = vrot.slane %v4736, 5
        %v4739 = vor.u32 %v4735, %v4738
        %v4740 = vrot.slane %v4739, 4
        %v4742 = vshll.u32 %v4685, 16
        %v4744 = vrot.slane %v4742, 5
        %v4745 = vsel %vm2379, %v4740, %v4744
        %v4747 = vshrl.u32 %v4678, 16
        %v4749 = vrot.slane %v4747, 4
        %v4750 = vshll.u32 %v4678, 16
        %v4752 = vrot.slane %v4750, 5
        %v4753 = vor.u32 %v4749, %v4752
        %v4754 = vrot.slane %v4753, 4
        %v4756 = vshll.u32 %v4686, 16
        %v4758 = vrot.slane %v4756, 5
        %v4759 = vsel %vm2379, %v4754, %v4758
        %v4761 = vshrl.u32 %v4679, 16
        %v4763 = vrot.slane %v4761, 4
        %v4764 = vshll.u32 %v4679, 16
        %v4766 = vrot.slane %v4764, 5
        %v4767 = vor.u32 %v4763, %v4766
        %v4768 = vrot.slane %v4767, 4
        %v4770 = vshll.u32 %v4687, 16
        %v4772 = vrot.slane %v4770, 5
        %v4773 = vsel %vm2379, %v4768, %v4772
        %v4775 = vshrl.u32 %v4680, 16
        %v4777 = vrot.slane %v4775, 4
        %v4778 = vshll.u32 %v4680, 16
        %v4780 = vrot.slane %v4778, 5
        %v4781 = vor.u32 %v4777, %v4780
        %v4782 = vrot.slane %v4781, 4
        %v4784 = vshll.u32 %v4688, 16
        %v4786 = vrot.slane %v4784, 5
        %v4787 = vsel %vm2379, %v4782, %v4786
        %v4789 = vshrl.u32 %v4681, 16
        %v4791 = vrot.slane %v4789, 4
        %v4792 = vshll.u32 %v4681, 16
        %v4794 = vrot.slane %v4792, 5
        %v4795 = vor.u32 %v4791, %v4794
        %v4796 = vrot.slane %v4795, 4
        %v4798 = vshll.u32 %v4689, 16
        %v4800 = vrot.slane %v4798, 5
        %v4801 = vsel %vm2379, %v4796, %v4800
        %v4802 = vld [vmem:[#allocation2] sm:$0xe]
        %v4803 = vld [vmem:[#allocation2 + $0x8] sm:$0xe]
        %v4804 = vld [vmem:[#allocation2 + $0x10] sm:$0xe]
        %v4805 = vld [vmem:[#allocation2 + $0x18] sm:$0xe]
        %v4806 = vld [vmem:[#allocation2 + $0x20] sm:$0xe]
        %v4807 = vld [vmem:[#allocation2 + $0x28] sm:$0xe]
        %v4808 = vld [vmem:[#allocation2 + $0x30] sm:$0xe]
        %v4809 = vld [vmem:[#allocation2 + $0x38] sm:$0xe]
        %v4826 = vrot.slane %v4802, 5
        %v4827 = vrot.slane %v4826, 4
        %v4828 = vrot.slane %v4682, 5
        %v4829 = vsel %vm2518, %v4827, %v4828
        %v4830 = vrot.slane %v4803, 5
        %v4831 = vrot.slane %v4830, 4
        %v4832 = vrot.slane %v4683, 5
        %v4833 = vsel %vm2518, %v4831, %v4832
        %v4834 = vrot.slane %v4804, 5
        %v4835 = vrot.slane %v4834, 4
        %v4836 = vrot.slane %v4684, 5
        %v4837 = vsel %vm2518, %v4835, %v4836
        %v4838 = vrot.slane %v4805, 5
        %v4839 = vrot.slane %v4838, 4
        %v4840 = vrot.slane %v4685, 5
        %v4841 = vsel %vm2518, %v4839, %v4840
        %v4842 = vrot.slane %v4806, 5
        %v4843 = vrot.slane %v4842, 4
        %v4844 = vrot.slane %v4686, 5
        %v4845 = vsel %vm2518, %v4843, %v4844
        %v4846 = vrot.slane %v4807, 5
        %v4847 = vrot.slane %v4846, 4
        %v4848 = vrot.slane %v4687, 5
        %v4849 = vsel %vm2518, %v4847, %v4848
        %v4850 = vrot.slane %v4808, 5
        %v4851 = vrot.slane %v4850, 4
        %v4852 = vrot.slane %v4688, 5
        %v4853 = vsel %vm2518, %v4851, %v4852
        %v4854 = vrot.slane %v4809, 5
        %v4855 = vrot.slane %v4854, 4
        %v4856 = vrot.slane %v4689, 5
        %v4857 = vsel %vm2518, %v4855, %v4856
        %v4858 = vld [vmem:[%s1473] sm:$0xf]
        %v4859 = vld [vmem:[%s1473 + $0x8] sm:$0xf]
        %v4860 = vld [vmem:[%s1473 + $0x10] sm:$0xf]
        %v4861 = vld [vmem:[%s1473 + $0x18] sm:$0xf]
        %v4862 = vld [vmem:[%s1473 + $0x20] sm:$0xf]
        %v4863 = vld [vmem:[%s1473 + $0x28] sm:$0xf]
        %v4864 = vld [vmem:[%s1473 + $0x30] sm:$0xf]
        %v4865 = vld [vmem:[%s1473 + $0x38] sm:$0xf]
        %v4866 = vld [vmem:[%s1473 + $0x4] sm:$0x1]
        %v4867 = vld [vmem:[%s1473 + $0xc] sm:$0x1]
        %v4868 = vld [vmem:[%s1473 + $0x14] sm:$0x1]
        %v4869 = vld [vmem:[%s1473 + $0x1c] sm:$0x1]
        %v4870 = vld [vmem:[%s1473 + $0x24] sm:$0x1]
        %v4871 = vld [vmem:[%s1473 + $0x2c] sm:$0x1]
        %v4872 = vld [vmem:[%s1473 + $0x34] sm:$0x1]
        %v4873 = vld [vmem:[%s1473 + $0x3c] sm:$0x1]
        %v4875 = vshrl.u32 %v4858, 16
        %v4877 = vrot.slane %v4875, 4
        %v4878 = vshll.u32 %v4858, 16
        %v4880 = vrot.slane %v4878, 5
        %v4881 = vor.u32 %v4877, %v4880
        %v4882 = vrot.slane %v4881, 4
        %v4884 = vshll.u32 %v4866, 16
        %v4886 = vrot.slane %v4884, 5
        %v4887 = vsel %vm2379, %v4882, %v4886
        %v4889 = vshrl.u32 %v4859, 16
        %v4891 = vrot.slane %v4889, 4
        %v4892 = vshll.u32 %v4859, 16
        %v4894 = vrot.slane %v4892, 5
        %v4895 = vor.u32 %v4891, %v4894
        %v4896 = vrot.slane %v4895, 4
        %v4898 = vshll.u32 %v4867, 16
        %v4900 = vrot.slane %v4898, 5
        %v4901 = vsel %vm2379, %v4896, %v4900
        %v4903 = vshrl.u32 %v4860, 16
        %v4905 = vrot.slane %v4903, 4
        %v4906 = vshll.u32 %v4860, 16
        %v4908 = vrot.slane %v4906, 5
        %v4909 = vor.u32 %v4905, %v4908
        %v4910 = vrot.slane %v4909, 4
        %v4912 = vshll.u32 %v4868, 16
        %v4914 = vrot.slane %v4912, 5
        %v4915 = vsel %vm2379, %v4910, %v4914
        %v4917 = vshrl.u32 %v4861, 16
        %v4919 = vrot.slane %v4917, 4
        %v4920 = vshll.u32 %v4861, 16
        %v4922 = vrot.slane %v4920, 5
        %v4923 = vor.u32 %v4919, %v4922
        %v4924 = vrot.slane %v4923, 4
        %v4926 = vshll.u32 %v4869, 16
        %v4928 = vrot.slane %v4926, 5
        %v4929 = vsel %vm2379, %v4924, %v4928
        %v4931 = vshrl.u32 %v4862, 16
        %v4933 = vrot.slane %v4931, 4
        %v4934 = vshll.u32 %v4862, 16
        %v4936 = vrot.slane %v4934, 5
        %v4937 = vor.u32 %v4933, %v4936
        %v4938 = vrot.slane %v4937, 4
        %v4940 = vshll.u32 %v4870, 16
        %v4942 = vrot.slane %v4940, 5
        %v4943 = vsel %vm2379, %v4938, %v4942
        %v4945 = vshrl.u32 %v4863, 16
        %v4947 = vrot.slane %v4945, 4
        %v4948 = vshll.u32 %v4863, 16
        %v4950 = vrot.slane %v4948, 5
        %v4951 = vor.u32 %v4947, %v4950
        %v4952 = vrot.slane %v4951, 4
        %v4954 = vshll.u32 %v4871, 16
        %v4956 = vrot.slane %v4954, 5
        %v4957 = vsel %vm2379, %v4952, %v4956
        %v4959 = vshrl.u32 %v4864, 16
        %v4961 = vrot.slane %v4959, 4
        %v4962 = vshll.u32 %v4864, 16
        %v4964 = vrot.slane %v4962, 5
        %v4965 = vor.u32 %v4961, %v4964
        %v4966 = vrot.slane %v4965, 4
        %v4968 = vshll.u32 %v4872, 16
        %v4970 = vrot.slane %v4968, 5
        %v4971 = vsel %vm2379, %v4966, %v4970
        %v4973 = vshrl.u32 %v4865, 16
        %v4975 = vrot.slane %v4973, 4
        %v4976 = vshll.u32 %v4865, 16
        %v4978 = vrot.slane %v4976, 5
        %v4979 = vor.u32 %v4975, %v4978
        %v4980 = vrot.slane %v4979, 4
        %v4982 = vshll.u32 %v4873, 16
        %v4984 = vrot.slane %v4982, 5
        %v4985 = vsel %vm2379, %v4980, %v4984
        %v4986 = vld [vmem:[%s1473] sm:$0xe]
        %v4987 = vld [vmem:[%s1473 + $0x8] sm:$0xe]
        %v4988 = vld [vmem:[%s1473 + $0x10] sm:$0xe]
        %v4989 = vld [vmem:[%s1473 + $0x18] sm:$0xe]
        %v4990 = vld [vmem:[%s1473 + $0x20] sm:$0xe]
        %v4991 = vld [vmem:[%s1473 + $0x28] sm:$0xe]
        %v4992 = vld [vmem:[%s1473 + $0x30] sm:$0xe]
        %v4993 = vld [vmem:[%s1473 + $0x38] sm:$0xe]
        %v5010 = vrot.slane %v4986, 5
        %v5011 = vrot.slane %v5010, 4
        %v5012 = vrot.slane %v4866, 5
        %v5013 = vsel %vm2518, %v5011, %v5012
        %v5014 = vrot.slane %v4987, 5
        %v5015 = vrot.slane %v5014, 4
        %v5016 = vrot.slane %v4867, 5
        %v5017 = vsel %vm2518, %v5015, %v5016
        %v5018 = vrot.slane %v4988, 5
        %v5019 = vrot.slane %v5018, 4
        %v5020 = vrot.slane %v4868, 5
        %v5021 = vsel %vm2518, %v5019, %v5020
        %v5022 = vrot.slane %v4989, 5
        %v5023 = vrot.slane %v5022, 4
        %v5024 = vrot.slane %v4869, 5
        %v5025 = vsel %vm2518, %v5023, %v5024
        %v5026 = vrot.slane %v4990, 5
        %v5027 = vrot.slane %v5026, 4
        %v5028 = vrot.slane %v4870, 5
        %v5029 = vsel %vm2518, %v5027, %v5028
        %v5030 = vrot.slane %v4991, 5
        %v5031 = vrot.slane %v5030, 4
        %v5032 = vrot.slane %v4871, 5
        %v5033 = vsel %vm2518, %v5031, %v5032
        %v5034 = vrot.slane %v4992, 5
        %v5035 = vrot.slane %v5034, 4
        %v5036 = vrot.slane %v4872, 5
        %v5037 = vsel %vm2518, %v5035, %v5036
        %v5038 = vrot.slane %v4993, 5
        %v5039 = vrot.slane %v5038, 4
        %v5040 = vrot.slane %v4873, 5
        %v5041 = vsel %vm2518, %v5039, %v5040
        %v5042 = vld [vmem:[%s2735] sm:$0xf]
        %v5043 = vld [vmem:[%s2735 + $0x8] sm:$0xf]
        %v5044 = vld [vmem:[%s2735 + $0x10] sm:$0xf]
        %v5045 = vld [vmem:[%s2735 + $0x18] sm:$0xf]
        %v5046 = vld [vmem:[%s2735 + $0x20] sm:$0xf]
        %v5047 = vld [vmem:[%s2735 + $0x28] sm:$0xf]
        %v5048 = vld [vmem:[%s2735 + $0x30] sm:$0xf]
        %v5049 = vld [vmem:[%s2735 + $0x38] sm:$0xf]
        %v5050 = vld [vmem:[%s2735 + $0x4] sm:$0x1]
        %v5051 = vld [vmem:[%s2735 + $0xc] sm:$0x1]
        %v5052 = vld [vmem:[%s2735 + $0x14] sm:$0x1]
        %v5053 = vld [vmem:[%s2735 + $0x1c] sm:$0x1]
        %v5054 = vld [vmem:[%s2735 + $0x24] sm:$0x1]
        %v5055 = vld [vmem:[%s2735 + $0x2c] sm:$0x1]
        %v5056 = vld [vmem:[%s2735 + $0x34] sm:$0x1]
        %v5057 = vld [vmem:[%s2735 + $0x3c] sm:$0x1]
        %v5059 = vshrl.u32 %v5042, 16
        %v5061 = vrot.slane %v5059, 4
        %v5062 = vshll.u32 %v5042, 16
        %v5064 = vrot.slane %v5062, 5
        %v5065 = vor.u32 %v5061, %v5064
        %v5066 = vrot.slane %v5065, 4
        %v5068 = vshll.u32 %v5050, 16
        %v5070 = vrot.slane %v5068, 5
        %v5071 = vsel %vm2379, %v5066, %v5070
        %v5073 = vshrl.u32 %v5043, 16
        %v5075 = vrot.slane %v5073, 4
        %v5076 = vshll.u32 %v5043, 16
        %v5078 = vrot.slane %v5076, 5
        %v5079 = vor.u32 %v5075, %v5078
        %v5080 = vrot.slane %v5079, 4
        %v5082 = vshll.u32 %v5051, 16
        %v5084 = vrot.slane %v5082, 5
        %v5085 = vsel %vm2379, %v5080, %v5084
        %v5087 = vshrl.u32 %v5044, 16
        %v5089 = vrot.slane %v5087, 4
        %v5090 = vshll.u32 %v5044, 16
        %v5092 = vrot.slane %v5090, 5
        %v5093 = vor.u32 %v5089, %v5092
        %v5094 = vrot.slane %v5093, 4
        %v5096 = vshll.u32 %v5052, 16
        %v5098 = vrot.slane %v5096, 5
        %v5099 = vsel %vm2379, %v5094, %v5098
        %v5101 = vshrl.u32 %v5045, 16
        %v5103 = vrot.slane %v5101, 4
        %v5104 = vshll.u32 %v5045, 16
        %v5106 = vrot.slane %v5104, 5
        %v5107 = vor.u32 %v5103, %v5106
        %v5108 = vrot.slane %v5107, 4
        %v5110 = vshll.u32 %v5053, 16
        %v5112 = vrot.slane %v5110, 5
        %v5113 = vsel %vm2379, %v5108, %v5112
        %v5115 = vshrl.u32 %v5046, 16
        %v5117 = vrot.slane %v5115, 4
        %v5118 = vshll.u32 %v5046, 16
        %v5120 = vrot.slane %v5118, 5
        %v5121 = vor.u32 %v5117, %v5120
        %v5122 = vrot.slane %v5121, 4
        %v5124 = vshll.u32 %v5054, 16
        %v5126 = vrot.slane %v5124, 5
        %v5127 = vsel %vm2379, %v5122, %v5126
        %v5129 = vshrl.u32 %v5047, 16
        %v5131 = vrot.slane %v5129, 4
        %v5132 = vshll.u32 %v5047, 16
        %v5134 = vrot.slane %v5132, 5
        %v5135 = vor.u32 %v5131, %v5134
        %v5136 = vrot.slane %v5135, 4
        %v5138 = vshll.u32 %v5055, 16
        %v5140 = vrot.slane %v5138, 5
        %v5141 = vsel %vm2379, %v5136, %v5140
        %v5143 = vshrl.u32 %v5048, 16
        %v5145 = vrot.slane %v5143, 4
        %v5146 = vshll.u32 %v5048, 16
        %v5148 = vrot.slane %v5146, 5
        %v5149 = vor.u32 %v5145, %v5148
        %v5150 = vrot.slane %v5149, 4
        %v5152 = vshll.u32 %v5056, 16
        %v5154 = vrot.slane %v5152, 5
        %v5155 = vsel %vm2379, %v5150, %v5154
        %v5157 = vshrl.u32 %v5049, 16
        %v5159 = vrot.slane %v5157, 4
        %v5160 = vshll.u32 %v5049, 16
        %v5162 = vrot.slane %v5160, 5
        %v5163 = vor.u32 %v5159, %v5162
        %v5164 = vrot.slane %v5163, 4
        %v5166 = vshll.u32 %v5057, 16
        %v5168 = vrot.slane %v5166, 5
        %v5169 = vsel %vm2379, %v5164, %v5168
        %v5170 = vld [vmem:[%s2735] sm:$0xe]
        %v5171 = vld [vmem:[%s2735 + $0x8] sm:$0xe]
        %v5172 = vld [vmem:[%s2735 + $0x10] sm:$0xe]
        %v5173 = vld [vmem:[%s2735 + $0x18] sm:$0xe]
        %v5174 = vld [vmem:[%s2735 + $0x20] sm:$0xe]
        %v5175 = vld [vmem:[%s2735 + $0x28] sm:$0xe]
        %v5176 = vld [vmem:[%s2735 + $0x30] sm:$0xe]
        %v5177 = vld [vmem:[%s2735 + $0x38] sm:$0xe]
        %v5194 = vrot.slane %v5170, 5
        %v5195 = vrot.slane %v5194, 4
        %v5196 = vrot.slane %v5050, 5
        %v5197 = vsel %vm2518, %v5195, %v5196
        %v5198 = vrot.slane %v5171, 5
        %v5199 = vrot.slane %v5198, 4
        %v5200 = vrot.slane %v5051, 5
        %v5201 = vsel %vm2518, %v5199, %v5200
        %v5202 = vrot.slane %v5172, 5
        %v5203 = vrot.slane %v5202, 4
        %v5204 = vrot.slane %v5052, 5
        %v5205 = vsel %vm2518, %v5203, %v5204
        %v5206 = vrot.slane %v5173, 5
        %v5207 = vrot.slane %v5206, 4
        %v5208 = vrot.slane %v5053, 5
        %v5209 = vsel %vm2518, %v5207, %v5208
        %v5210 = vrot.slane %v5174, 5
        %v5211 = vrot.slane %v5210, 4
        %v5212 = vrot.slane %v5054, 5
        %v5213 = vsel %vm2518, %v5211, %v5212
        %v5214 = vrot.slane %v5175, 5
        %v5215 = vrot.slane %v5214, 4
        %v5216 = vrot.slane %v5055, 5
        %v5217 = vsel %vm2518, %v5215, %v5216
        %v5218 = vrot.slane %v5176, 5
        %v5219 = vrot.slane %v5218, 4
        %v5220 = vrot.slane %v5056, 5
        %v5221 = vsel %vm2518, %v5219, %v5220
        %v5222 = vrot.slane %v5177, 5
        %v5223 = vrot.slane %v5222, 4
        %v5224 = vrot.slane %v5057, 5
        %v5225 = vsel %vm2518, %v5223, %v5224
        %v5234 = vunpack.c.l.b16 %v4674
        %v5235 = vunpack.c.l.b16 %v4675
        %v5236 = vunpack.c.l.b16 %v4676
        %v5237 = vunpack.c.l.b16 %v4677
        %v5238 = vunpack.c.l.b16 %v4678
        %v5239 = vunpack.c.l.b16 %v4679
        %v5240 = vunpack.c.l.b16 %v4680
        %v5241 = vunpack.c.l.b16 %v4681
        %v5242 = vpack.c.b16 %v5235, %v5234
        %v5243 = vpack.c.b16 %v5237, %v5236
        %v5244 = vpack.c.b16 %v5239, %v5238
        %v5245 = vpack.c.b16 %v5241, %v5240
        %v5250 = vunpack.c.l.b16 %v4703
        %v5251 = vunpack.c.l.b16 %v4717
        %v5252 = vunpack.c.l.b16 %v4731
        %v5253 = vunpack.c.l.b16 %v4745
        %v5254 = vunpack.c.l.b16 %v4759
        %v5255 = vunpack.c.l.b16 %v4773
        %v5256 = vunpack.c.l.b16 %v4787
        %v5257 = vunpack.c.l.b16 %v4801
        %v5258 = vpack.c.b16 %v5251, %v5250
        %v5259 = vpack.c.b16 %v5253, %v5252
        %v5260 = vpack.c.b16 %v5255, %v5254
        %v5261 = vpack.c.b16 %v5257, %v5256
        %v5266 = vunpack.c.l.b16 %v4829
        %v5267 = vunpack.c.l.b16 %v4833
        %v5268 = vunpack.c.l.b16 %v4837
        %v5269 = vunpack.c.l.b16 %v4841
        %v5270 = vunpack.c.l.b16 %v4845
        %v5271 = vunpack.c.l.b16 %v4849
        %v5272 = vunpack.c.l.b16 %v4853
        %v5273 = vunpack.c.l.b16 %v4857
        %v5274 = vpack.c.b16 %v5267, %v5266
        %v5275 = vpack.c.b16 %v5269, %v5268
        %v5276 = vpack.c.b16 %v5271, %v5270
        %v5277 = vpack.c.b16 %v5273, %v5272
        %v5290 = vunpack.c.l.b16 %v4858
        %v5291 = vunpack.c.l.b16 %v4859
        %v5292 = vunpack.c.l.b16 %v4860
        %v5293 = vunpack.c.l.b16 %v4861
        %v5294 = vunpack.c.l.b16 %v4862
        %v5295 = vunpack.c.l.b16 %v4863
        %v5296 = vunpack.c.l.b16 %v4864
        %v5297 = vunpack.c.l.b16 %v4865
        %v5298 = vpack.c.b16 %v5291, %v5290
        %v5299 = vpack.c.b16 %v5293, %v5292
        %v5300 = vpack.c.b16 %v5295, %v5294
        %v5301 = vpack.c.b16 %v5297, %v5296
        %v5306 = vunpack.c.l.b16 %v4887
        %v5307 = vunpack.c.l.b16 %v4901
        %v5308 = vunpack.c.l.b16 %v4915
        %v5309 = vunpack.c.l.b16 %v4929
        %v5310 = vunpack.c.l.b16 %v4943
        %v5311 = vunpack.c.l.b16 %v4957
        %v5312 = vunpack.c.l.b16 %v4971
        %v5313 = vunpack.c.l.b16 %v4985
        %v5314 = vpack.c.b16 %v5307, %v5306
        %v5315 = vpack.c.b16 %v5309, %v5308
        %v5316 = vpack.c.b16 %v5311, %v5310
        %v5317 = vpack.c.b16 %v5313, %v5312
        %v5322 = vunpack.c.l.b16 %v5013
        %v5323 = vunpack.c.l.b16 %v5017
        %v5324 = vunpack.c.l.b16 %v5021
        %v5325 = vunpack.c.l.b16 %v5025
        %v5326 = vunpack.c.l.b16 %v5029
        %v5327 = vunpack.c.l.b16 %v5033
        %v5328 = vunpack.c.l.b16 %v5037
        %v5329 = vunpack.c.l.b16 %v5041
        %v5330 = vpack.c.b16 %v5323, %v5322
        %v5331 = vpack.c.b16 %v5325, %v5324
        %v5332 = vpack.c.b16 %v5327, %v5326
        %v5333 = vpack.c.b16 %v5329, %v5328
        %v5346 = vunpack.c.l.b16 %v5042
        %v5347 = vunpack.c.l.b16 %v5043
        %v5348 = vunpack.c.l.b16 %v5044
        %v5349 = vunpack.c.l.b16 %v5045
        %v5350 = vunpack.c.l.b16 %v5046
        %v5351 = vunpack.c.l.b16 %v5047
        %v5352 = vunpack.c.l.b16 %v5048
        %v5353 = vunpack.c.l.b16 %v5049
        %v5354 = vpack.c.b16 %v5347, %v5346
        %v5355 = vpack.c.b16 %v5349, %v5348
        %v5356 = vpack.c.b16 %v5351, %v5350
        %v5357 = vpack.c.b16 %v5353, %v5352
        %v5362 = vunpack.c.l.b16 %v5071
        %v5363 = vunpack.c.l.b16 %v5085
        %v5364 = vunpack.c.l.b16 %v5099
        %v5365 = vunpack.c.l.b16 %v5113
        %v5366 = vunpack.c.l.b16 %v5127
        %v5367 = vunpack.c.l.b16 %v5141
        %v5368 = vunpack.c.l.b16 %v5155
        %v5369 = vunpack.c.l.b16 %v5169
        %v5370 = vpack.c.b16 %v5363, %v5362
        %v5371 = vpack.c.b16 %v5365, %v5364
        %v5372 = vpack.c.b16 %v5367, %v5366
        %v5373 = vpack.c.b16 %v5369, %v5368
        %v5378 = vunpack.c.l.b16 %v5197
        %v5379 = vunpack.c.l.b16 %v5201
        %v5380 = vunpack.c.l.b16 %v5205
        %v5381 = vunpack.c.l.b16 %v5209
        %v5382 = vunpack.c.l.b16 %v5213
        %v5383 = vunpack.c.l.b16 %v5217
        %v5384 = vunpack.c.l.b16 %v5221
        %v5385 = vunpack.c.l.b16 %v5225
        %v5386 = vpack.c.b16 %v5379, %v5378
        %v5387 = vpack.c.b16 %v5381, %v5380
        %v5388 = vpack.c.b16 %v5383, %v5382
        %v5389 = vpack.c.b16 %v5385, %v5384
        %v5394 = vld [vmem:[%s13] sm:$0xf]
        %v5395 = vld [vmem:[%s13 + $0x4] sm:$0xf]
        %v5396 = vld [vmem:[%s13 + $0x8] sm:$0xf]
        %v5397 = vld [vmem:[%s13 + $0xc] sm:$0xf]
        %v5398 = vld [vmem:[%s13 + $0x10] sm:$0xf]
        %v5399 = vld [vmem:[%s13 + $0x14] sm:$0xf]
        %v5400 = vld [vmem:[%s13 + $0x18] sm:$0xf]
        %v5401 = vld [vmem:[%s13 + $0x1c] sm:$0xf]
        %v5402 = vld [vmem:[%s13 + $0x20] sm:$0xf]
        %v5403 = vld [vmem:[%s13 + $0x24] sm:$0xf]
        %v5404 = vld [vmem:[%s13 + $0x28] sm:$0xf]
        %v5405 = vld [vmem:[%s13 + $0x2c] sm:$0xf]
        %v5406 = vld [vmem:[%s13 + $0x30] sm:$0xf]
        %v5407 = vld [vmem:[%s13 + $0x34] sm:$0xf]
        %v5408 = vld [vmem:[%s13 + $0x38] sm:$0xf]
        %v5409 = vld [vmem:[%s13 + $0x3c] sm:$0xf]
        %v5410 = vld [vmem:[%s13 + $0x40] sm:$0xf]
        %v5411 = vld [vmem:[%s13 + $0x44] sm:$0xf]
        %v5412 = vld [vmem:[%s13 + $0x48] sm:$0xf]
        %v5413 = vld [vmem:[%s13 + $0x4c] sm:$0xf]
        %v5414 = vld [vmem:[%s13 + $0x50] sm:$0xf]
        %v5415 = vld [vmem:[%s13 + $0x54] sm:$0xf]
        %v5416 = vld [vmem:[%s13 + $0x58] sm:$0xf]
        %v5417 = vld [vmem:[%s13 + $0x5c] sm:$0xf]
        %v5418 = vld [vmem:[%s13 + $0x60] sm:$0xf]
        %v5419 = vld [vmem:[%s13 + $0x64] sm:$0xf]
        %v5420 = vld [vmem:[%s13 + $0x68] sm:$0xf]
        %v5421 = vld [vmem:[%s13 + $0x6c] sm:$0xf]
        %v5422 = vld [vmem:[%s13 + $0x70] sm:$0xf]
        %v5423 = vld [vmem:[%s13 + $0x74] sm:$0xf]
        %v5424 = vld [vmem:[%s13 + $0x78] sm:$0xf]
        %v5425 = vld [vmem:[%s13 + $0x7c] sm:$0xf]
        %v5426 = vld [vmem:[%s13 + $0x80] sm:$0xf]
        %v5427 = vld [vmem:[%s13 + $0x84] sm:$0xf]
        %v5428 = vld [vmem:[%s13 + $0x88] sm:$0xf]
        %v5429 = vld [vmem:[%s13 + $0x8c] sm:$0xf]
        %v5430 = vld [vmem:[%s13 + $0x90] sm:$0xf]
        %v5431 = vld [vmem:[%s13 + $0x94] sm:$0xf]
        %v5432 = vld [vmem:[%s13 + $0x98] sm:$0xf]
        %v5433 = vld [vmem:[%s13 + $0x9c] sm:$0xf]
        %v5434 = vld [vmem:[%s13 + $0xa0] sm:$0xf]
        %v5435 = vld [vmem:[%s13 + $0xa4] sm:$0xf]
        %v5436 = vld [vmem:[%s13 + $0xa8] sm:$0xf]
        %v5437 = vld [vmem:[%s13 + $0xac] sm:$0xf]
        %v5438 = vld [vmem:[%s13 + $0xb0] sm:$0xf]
        %v5439 = vld [vmem:[%s13 + $0xb4] sm:$0xf]
        %v5440 = vld [vmem:[%s13 + $0xb8] sm:$0xf]
        %v5441 = vld [vmem:[%s13 + $0xbc] sm:$0xf]
        %v5442 = vld [vmem:[%s13 + $0xc0] sm:$0xf]
        %v5443 = vld [vmem:[%s13 + $0xc4] sm:$0xf]
        %v5444 = vld [vmem:[%s13 + $0xc8] sm:$0xf]
        %v5445 = vld [vmem:[%s13 + $0xcc] sm:$0xf]
        %v5446 = vld [vmem:[%s13 + $0xd0] sm:$0xf]
        %v5447 = vld [vmem:[%s13 + $0xd4] sm:$0xf]
        %v5448 = vld [vmem:[%s13 + $0xd8] sm:$0xf]
        %v5449 = vld [vmem:[%s13 + $0xdc] sm:$0xf]
        %v5450 = vld [vmem:[%s13 + $0xe0] sm:$0xf]
        %v5451 = vld [vmem:[%s13 + $0xe4] sm:$0xf]
        %v5452 = vld [vmem:[%s13 + $0xe8] sm:$0xf]
        %v5453 = vld [vmem:[%s13 + $0xec] sm:$0xf]
        %v5454 = vld [vmem:[%s13 + $0xf0] sm:$0xf]
        %v5455 = vld [vmem:[%s13 + $0xf4] sm:$0xf]
        %v5456 = vld [vmem:[%s13 + $0xf8] sm:$0xf]
        %v5457 = vld [vmem:[%s13 + $0xfc] sm:$0xf]
        %v5458 = vld [vmem:[%s13 + $0x100] sm:$0xf]
        %v5459 = vld [vmem:[%s13 + $0x104] sm:$0xf]
        %v5460 = vld [vmem:[%s13 + $0x108] sm:$0xf]
        %v5461 = vld [vmem:[%s13 + $0x10c] sm:$0xf]
        %v5462 = vld [vmem:[%s13 + $0x110] sm:$0xf]
        %v5463 = vld [vmem:[%s13 + $0x114] sm:$0xf]
        %v5464 = vld [vmem:[%s13 + $0x118] sm:$0xf]
        %v5465 = vld [vmem:[%s13 + $0x11c] sm:$0xf]
        %v5466 = vld [vmem:[%s13 + $0x120] sm:$0xf]
        %v5467 = vld [vmem:[%s13 + $0x124] sm:$0xf]
        %v5468 = vld [vmem:[%s13 + $0x128] sm:$0xf]
        %v5469 = vld [vmem:[%s13 + $0x12c] sm:$0xf]
        %v5470 = vld [vmem:[%s13 + $0x130] sm:$0xf]
        %v5471 = vld [vmem:[%s13 + $0x134] sm:$0xf]
        %v5472 = vld [vmem:[%s13 + $0x138] sm:$0xf]
        %v5473 = vld [vmem:[%s13 + $0x13c] sm:$0xf]
        %v5474 = vld [vmem:[%s13 + $0x140] sm:$0xf]
        %v5475 = vld [vmem:[%s13 + $0x144] sm:$0xf]
        %v5476 = vld [vmem:[%s13 + $0x148] sm:$0xf]
        %v5477 = vld [vmem:[%s13 + $0x14c] sm:$0xf]
        %v5478 = vld [vmem:[%s13 + $0x150] sm:$0xf]
        %v5479 = vld [vmem:[%s13 + $0x154] sm:$0xf]
        %v5480 = vld [vmem:[%s13 + $0x158] sm:$0xf]
        %v5481 = vld [vmem:[%s13 + $0x15c] sm:$0xf]
        %v5482 = vld [vmem:[%s13 + $0x160] sm:$0xf]
        %v5483 = vld [vmem:[%s13 + $0x164] sm:$0xf]
        %v5484 = vld [vmem:[%s13 + $0x168] sm:$0xf]
        %v5485 = vld [vmem:[%s13 + $0x16c] sm:$0xf]
        %v5486 = vld [vmem:[%s13 + $0x170] sm:$0xf]
        %v5487 = vld [vmem:[%s13 + $0x174] sm:$0xf]
        %v5488 = vld [vmem:[%s13 + $0x178] sm:$0xf]
        %v5489 = vld [vmem:[%s13 + $0x17c] sm:$0xf]
        %v5490 = vld [vmem:[%s13 + $0x180] sm:$0xf]
        %v5491 = vld [vmem:[%s13 + $0x184] sm:$0xf]
        %v5492 = vld [vmem:[%s13 + $0x188] sm:$0xf]
        %v5493 = vld [vmem:[%s13 + $0x18c] sm:$0xf]
        %v5494 = vld [vmem:[%s13 + $0x190] sm:$0xf]
        %v5495 = vld [vmem:[%s13 + $0x194] sm:$0xf]
        %v5496 = vld [vmem:[%s13 + $0x198] sm:$0xf]
        %v5497 = vld [vmem:[%s13 + $0x19c] sm:$0xf]
        %v5498 = vld [vmem:[%s13 + $0x1a0] sm:$0xf]
        %v5499 = vld [vmem:[%s13 + $0x1a4] sm:$0xf]
        %v5500 = vld [vmem:[%s13 + $0x1a8] sm:$0xf]
        %v5501 = vld [vmem:[%s13 + $0x1ac] sm:$0xf]
        %v5502 = vld [vmem:[%s13 + $0x1b0] sm:$0xf]
        %v5503 = vld [vmem:[%s13 + $0x1b4] sm:$0xf]
        %v5504 = vld [vmem:[%s13 + $0x1b8] sm:$0xf]
        %v5505 = vld [vmem:[%s13 + $0x1bc] sm:$0xf]
        %v5506 = vld [vmem:[%s13 + $0x1c0] sm:$0xf]
        %v5507 = vld [vmem:[%s13 + $0x1c4] sm:$0xf]
        %v5508 = vld [vmem:[%s13 + $0x1c8] sm:$0xf]
        %v5509 = vld [vmem:[%s13 + $0x1cc] sm:$0xf]
        %v5510 = vld [vmem:[%s13 + $0x1d0] sm:$0xf]
        %v5511 = vld [vmem:[%s13 + $0x1d4] sm:$0xf]
        %v5512 = vld [vmem:[%s13 + $0x1d8] sm:$0xf]
        %v5513 = vld [vmem:[%s13 + $0x1dc] sm:$0xf]
        %v5514 = vld [vmem:[%s13 + $0x1e0] sm:$0xf]
        %v5515 = vld [vmem:[%s13 + $0x1e4] sm:$0xf]
        %v5516 = vld [vmem:[%s13 + $0x1e8] sm:$0xf]
        %v5517 = vld [vmem:[%s13 + $0x1ec] sm:$0xf]
        %v5518 = vld [vmem:[%s13 + $0x1f0] sm:$0xf]
        %v5519 = vld [vmem:[%s13 + $0x1f4] sm:$0xf]
        %v5520 = vld [vmem:[%s13 + $0x1f8] sm:$0xf]
        %v5521 = vld [vmem:[%s13 + $0x1fc] sm:$0xf]
        %v5522 = vld [vmem:[%s13 + $0x200] sm:$0xf]
        %v5523 = vld [vmem:[%s13 + $0x204] sm:$0xf]
        %v5524 = vld [vmem:[%s13 + $0x208] sm:$0xf]
        %v5525 = vld [vmem:[%s13 + $0x20c] sm:$0xf]
        %v5526 = vld [vmem:[%s13 + $0x210] sm:$0xf]
        %v5527 = vld [vmem:[%s13 + $0x214] sm:$0xf]
        %v5528 = vld [vmem:[%s13 + $0x218] sm:$0xf]
        %v5529 = vld [vmem:[%s13 + $0x21c] sm:$0xf]
        %v5530 = vld [vmem:[%s13 + $0x220] sm:$0xf]
        %v5531 = vld [vmem:[%s13 + $0x224] sm:$0xf]
        %v5532 = vld [vmem:[%s13 + $0x228] sm:$0xf]
        %v5533 = vld [vmem:[%s13 + $0x22c] sm:$0xf]
        %v5534 = vld [vmem:[%s13 + $0x230] sm:$0xf]
        %v5535 = vld [vmem:[%s13 + $0x234] sm:$0xf]
        %v5536 = vld [vmem:[%s13 + $0x238] sm:$0xf]
        %v5537 = vld [vmem:[%s13 + $0x23c] sm:$0xf]
        %v5538 = vld [vmem:[%s14] sm:$0x1]
        %v5540 = vperm.slane %v5538, 0
        %v5686 = vunpack.c.l.b16 %v5394
        %v5687 = vunpack.c.l.b16 %v5395
        %v5688 = vunpack.c.l.b16 %v5396
        %v5689 = vunpack.c.l.b16 %v5397
        %v5690 = vunpack.c.l.b16 %v5398
        %v5691 = vunpack.c.l.b16 %v5399
        %v5692 = vunpack.c.l.b16 %v5400
        %v5693 = vunpack.c.l.b16 %v5401
        %v5694 = vunpack.c.l.b16 %v5402
        %v5695 = vunpack.c.l.b16 %v5403
        %v5696 = vunpack.c.l.b16 %v5404
        %v5697 = vunpack.c.l.b16 %v5405
        %v5698 = vunpack.c.l.b16 %v5406
        %v5699 = vunpack.c.l.b16 %v5407
        %v5700 = vunpack.c.l.b16 %v5408
        %v5701 = vunpack.c.l.b16 %v5409
        %v5702 = vunpack.c.l.b16 %v5410
        %v5703 = vunpack.c.l.b16 %v5411
        %v5704 = vunpack.c.l.b16 %v5412
        %v5705 = vunpack.c.l.b16 %v5413
        %v5706 = vunpack.c.l.b16 %v5414
        %v5707 = vunpack.c.l.b16 %v5415
        %v5708 = vunpack.c.l.b16 %v5416
        %v5709 = vunpack.c.l.b16 %v5417
        %v5710 = vunpack.c.l.b16 %v5418
        %v5711 = vunpack.c.l.b16 %v5419
        %v5712 = vunpack.c.l.b16 %v5420
        %v5713 = vunpack.c.l.b16 %v5421
        %v5714 = vunpack.c.l.b16 %v5422
        %v5715 = vunpack.c.l.b16 %v5423
        %v5716 = vunpack.c.l.b16 %v5424
        %v5717 = vunpack.c.l.b16 %v5425
        %v5718 = vunpack.c.l.b16 %v5426
        %v5719 = vunpack.c.l.b16 %v5427
        %v5720 = vunpack.c.l.b16 %v5428
        %v5721 = vunpack.c.l.b16 %v5429
        %v5722 = vunpack.c.l.b16 %v5430
        %v5723 = vunpack.c.l.b16 %v5431
        %v5724 = vunpack.c.l.b16 %v5432
        %v5725 = vunpack.c.l.b16 %v5433
        %v5726 = vunpack.c.l.b16 %v5434
        %v5727 = vunpack.c.l.b16 %v5435
        %v5728 = vunpack.c.l.b16 %v5436
        %v5729 = vunpack.c.l.b16 %v5437
        %v5730 = vunpack.c.l.b16 %v5438
        %v5731 = vunpack.c.l.b16 %v5439
        %v5732 = vunpack.c.l.b16 %v5440
        %v5733 = vunpack.c.l.b16 %v5441
        %v5734 = vunpack.c.l.b16 %v5442
        %v5735 = vunpack.c.l.b16 %v5443
        %v5736 = vunpack.c.l.b16 %v5444
        %v5737 = vunpack.c.l.b16 %v5445
        %v5738 = vunpack.c.l.b16 %v5446
        %v5739 = vunpack.c.l.b16 %v5447
        %v5740 = vunpack.c.l.b16 %v5448
        %v5741 = vunpack.c.l.b16 %v5449
        %v5742 = vunpack.c.l.b16 %v5450
        %v5743 = vunpack.c.l.b16 %v5451
        %v5744 = vunpack.c.l.b16 %v5452
        %v5745 = vunpack.c.l.b16 %v5453
        %v5746 = vunpack.c.l.b16 %v5454
        %v5747 = vunpack.c.l.b16 %v5455
        %v5748 = vunpack.c.l.b16 %v5456
        %v5749 = vunpack.c.l.b16 %v5457
        %v5750 = vunpack.c.l.b16 %v5458
        %v5751 = vunpack.c.l.b16 %v5459
        %v5752 = vunpack.c.l.b16 %v5460
        %v5753 = vunpack.c.l.b16 %v5461
        %v5754 = vunpack.c.l.b16 %v5462
        %v5755 = vunpack.c.l.b16 %v5463
        %v5756 = vunpack.c.l.b16 %v5464
        %v5757 = vunpack.c.l.b16 %v5465
        %v5758 = vunpack.c.l.b16 %v5466
        %v5759 = vunpack.c.l.b16 %v5467
        %v5760 = vunpack.c.l.b16 %v5468
        %v5761 = vunpack.c.l.b16 %v5469
        %v5762 = vunpack.c.l.b16 %v5470
        %v5763 = vunpack.c.l.b16 %v5471
        %v5764 = vunpack.c.l.b16 %v5472
        %v5765 = vunpack.c.l.b16 %v5473
        %v5766 = vunpack.c.l.b16 %v5474
        %v5767 = vunpack.c.l.b16 %v5475
        %v5768 = vunpack.c.l.b16 %v5476
        %v5769 = vunpack.c.l.b16 %v5477
        %v5770 = vunpack.c.l.b16 %v5478
        %v5771 = vunpack.c.l.b16 %v5479
        %v5772 = vunpack.c.l.b16 %v5480
        %v5773 = vunpack.c.l.b16 %v5481
        %v5774 = vunpack.c.l.b16 %v5482
        %v5775 = vunpack.c.l.b16 %v5483
        %v5776 = vunpack.c.l.b16 %v5484
        %v5777 = vunpack.c.l.b16 %v5485
        %v5778 = vunpack.c.l.b16 %v5486
        %v5779 = vunpack.c.l.b16 %v5487
        %v5780 = vunpack.c.l.b16 %v5488
        %v5781 = vunpack.c.l.b16 %v5489
        %v5782 = vunpack.c.l.b16 %v5490
        %v5783 = vunpack.c.l.b16 %v5491
        %v5784 = vunpack.c.l.b16 %v5492
        %v5785 = vunpack.c.l.b16 %v5493
        %v5786 = vunpack.c.l.b16 %v5494
        %v5787 = vunpack.c.l.b16 %v5495
        %v5788 = vunpack.c.l.b16 %v5496
        %v5789 = vunpack.c.l.b16 %v5497
        %v5790 = vunpack.c.l.b16 %v5498
        %v5791 = vunpack.c.l.b16 %v5499
        %v5792 = vunpack.c.l.b16 %v5500
        %v5793 = vunpack.c.l.b16 %v5501
        %v5794 = vunpack.c.l.b16 %v5502
        %v5795 = vunpack.c.l.b16 %v5503
        %v5796 = vunpack.c.l.b16 %v5504
        %v5797 = vunpack.c.l.b16 %v5505
        %v5798 = vunpack.c.l.b16 %v5506
        %v5799 = vunpack.c.l.b16 %v5507
        %v5800 = vunpack.c.l.b16 %v5508
        %v5801 = vunpack.c.l.b16 %v5509
        %v5802 = vunpack.c.l.b16 %v5510
        %v5803 = vunpack.c.l.b16 %v5511
        %v5804 = vunpack.c.l.b16 %v5512
        %v5805 = vunpack.c.l.b16 %v5513
        %v5806 = vunpack.c.l.b16 %v5514
        %v5807 = vunpack.c.l.b16 %v5515
        %v5808 = vunpack.c.l.b16 %v5516
        %v5809 = vunpack.c.l.b16 %v5517
        %v5810 = vunpack.c.l.b16 %v5518
        %v5811 = vunpack.c.l.b16 %v5519
        %v5812 = vunpack.c.l.b16 %v5520
        %v5813 = vunpack.c.l.b16 %v5521
        %v5814 = vunpack.c.l.b16 %v5522
        %v5815 = vunpack.c.l.b16 %v5523
        %v5816 = vunpack.c.l.b16 %v5524
        %v5817 = vunpack.c.l.b16 %v5525
        %v5818 = vunpack.c.l.b16 %v5526
        %v5819 = vunpack.c.l.b16 %v5527
        %v5820 = vunpack.c.l.b16 %v5528
        %v5821 = vunpack.c.l.b16 %v5529
        %v5822 = vunpack.c.l.b16 %v5530
        %v5823 = vunpack.c.l.b16 %v5531
        %v5824 = vunpack.c.l.b16 %v5532
        %v5825 = vunpack.c.l.b16 %v5533
        %v5826 = vunpack.c.l.b16 %v5534
        %v5827 = vunpack.c.l.b16 %v5535
        %v5828 = vunpack.c.l.b16 %v5536
        %v5829 = vunpack.c.l.b16 %v5537
        %v5830 = vpack.c.b16 %v5687, %v5686
        %v5831 = vpack.c.b16 %v5689, %v5688
        %v5832 = vpack.c.b16 %v5691, %v5690
        %v5833 = vpack.c.b16 %v5693, %v5692
        %v5834 = vpack.c.b16 %v5695, %v5694
        %v5835 = vpack.c.b16 %v5697, %v5696
        %v5836 = vpack.c.b16 %v5699, %v5698
        %v5837 = vpack.c.b16 %v5701, %v5700
        %v5838 = vpack.c.b16 %v5703, %v5702
        %v5839 = vpack.c.b16 %v5705, %v5704
        %v5840 = vpack.c.b16 %v5707, %v5706
        %v5841 = vpack.c.b16 %v5709, %v5708
        %v5842 = vpack.c.b16 %v5711, %v5710
        %v5843 = vpack.c.b16 %v5713, %v5712
        %v5844 = vpack.c.b16 %v5715, %v5714
        %v5845 = vpack.c.b16 %v5717, %v5716
        %v5846 = vpack.c.b16 %v5719, %v5718
        %v5847 = vpack.c.b16 %v5721, %v5720
        %v5848 = vpack.c.b16 %v5723, %v5722
        %v5849 = vpack.c.b16 %v5725, %v5724
        %v5850 = vpack.c.b16 %v5727, %v5726
        %v5851 = vpack.c.b16 %v5729, %v5728
        %v5852 = vpack.c.b16 %v5731, %v5730
        %v5853 = vpack.c.b16 %v5733, %v5732
        %v5854 = vpack.c.b16 %v5735, %v5734
        %v5855 = vpack.c.b16 %v5737, %v5736
        %v5856 = vpack.c.b16 %v5739, %v5738
        %v5857 = vpack.c.b16 %v5741, %v5740
        %v5858 = vpack.c.b16 %v5743, %v5742
        %v5859 = vpack.c.b16 %v5745, %v5744
        %v5860 = vpack.c.b16 %v5747, %v5746
        %v5861 = vpack.c.b16 %v5749, %v5748
        %v5862 = vpack.c.b16 %v5751, %v5750
        %v5863 = vpack.c.b16 %v5753, %v5752
        %v5864 = vpack.c.b16 %v5755, %v5754
        %v5865 = vpack.c.b16 %v5757, %v5756
        %v5866 = vpack.c.b16 %v5759, %v5758
        %v5867 = vpack.c.b16 %v5761, %v5760
        %v5868 = vpack.c.b16 %v5763, %v5762
        %v5869 = vpack.c.b16 %v5765, %v5764
        %v5870 = vpack.c.b16 %v5767, %v5766
        %v5871 = vpack.c.b16 %v5769, %v5768
        %v5872 = vpack.c.b16 %v5771, %v5770
        %v5873 = vpack.c.b16 %v5773, %v5772
        %v5874 = vpack.c.b16 %v5775, %v5774
        %v5875 = vpack.c.b16 %v5777, %v5776
        %v5876 = vpack.c.b16 %v5779, %v5778
        %v5877 = vpack.c.b16 %v5781, %v5780
        %v5878 = vpack.c.b16 %v5783, %v5782
        %v5879 = vpack.c.b16 %v5785, %v5784
        %v5880 = vpack.c.b16 %v5787, %v5786
        %v5881 = vpack.c.b16 %v5789, %v5788
        %v5882 = vpack.c.b16 %v5791, %v5790
        %v5883 = vpack.c.b16 %v5793, %v5792
        %v5884 = vpack.c.b16 %v5795, %v5794
        %v5885 = vpack.c.b16 %v5797, %v5796
        %v5886 = vpack.c.b16 %v5799, %v5798
        %v5887 = vpack.c.b16 %v5801, %v5800
        %v5888 = vpack.c.b16 %v5803, %v5802
        %v5889 = vpack.c.b16 %v5805, %v5804
        %v5890 = vpack.c.b16 %v5807, %v5806
        %v5891 = vpack.c.b16 %v5809, %v5808
        %v5892 = vpack.c.b16 %v5811, %v5810
        %v5893 = vpack.c.b16 %v5813, %v5812
        %v5894 = vpack.c.b16 %v5815, %v5814
        %v5895 = vpack.c.b16 %v5817, %v5816
        %v5896 = vpack.c.b16 %v5819, %v5818
        %v5897 = vpack.c.b16 %v5821, %v5820
        %v5898 = vpack.c.b16 %v5823, %v5822
        %v5899 = vpack.c.b16 %v5825, %v5824
        %v5900 = vpack.c.b16 %v5827, %v5826
        %v5901 = vpack.c.b16 %v5829, %v5828
        %5974 = vmatpush.bf16.msra.mxu0 %v5837
        %5975 = vmatpush.bf16.msra.mxu0 %v5836
        %5976 = vmatpush.bf16.msra.mxu0 %v5835
        %5977 = vmatpush.bf16.msra.mxu0 %v5834
        %5978 = vmatpush.bf16.msra.mxu0 %v5833
        %5979 = vmatpush.bf16.msra.mxu0 %v5832
        %5980 = vmatpush.bf16.msra.mxu0 %v5831
        %5981 = vmatpush.bf16.msra.mxu0 %v5830
        %5982 = vmatmul.bf16.gmra.mxu0 %v5242
        %v5983 = vpop.f32.mrf.mxu0
        %v5984 = vadd.f32 %v5540, %v5983
        %v5985 = vpop.f32.mrf.mxu0
        %v5986 = vadd.f32 %v5540, %v5985
        %5987 = vmatmul.bf16.gmra.mxu0 %v5243
        %v5988 = vpop.f32.mrf.mxu0
        %v5989 = vadd.f32 %v5540, %v5988
        %v5990 = vpop.f32.mrf.mxu0
        %v5991 = vadd.f32 %v5540, %v5990
        %5992 = vmatmul.bf16.gmra.mxu0 %v5244
        %v5993 = vpop.f32.mrf.mxu0
        %v5994 = vadd.f32 %v5540, %v5993
        %v5995 = vpop.f32.mrf.mxu0
        %v5996 = vadd.f32 %v5540, %v5995
        %5997 = vmatmul.bf16.gmra.mxu0 %v5245
        %v5998 = vpop.f32.mrf.mxu0
        %v5999 = vadd.f32 %v5540, %v5998
        %v6000 = vpop.f32.mrf.mxu0
        %v6001 = vadd.f32 %v5540, %v6000
        %6002 = vdwg.mxu0
        %6003 = vmatpush.bf16.msra.mxu0 %v5845
        %6004 = vmatpush.bf16.msra.mxu0 %v5844
        %6005 = vmatpush.bf16.msra.mxu0 %v5843
        %6006 = vmatpush.bf16.msra.mxu0 %v5842
        %6007 = vmatpush.bf16.msra.mxu0 %v5841
        %6008 = vmatpush.bf16.msra.mxu0 %v5840
        %6009 = vmatpush.bf16.msra.mxu0 %v5839
        %6010 = vmatpush.bf16.msra.mxu0 %v5838
        %6011 = vmatmul.bf16.gmra.mxu0 %v5258
        %v6012 = vpop.f32.mrf.mxu0
        %v6013 = vadd.f32 %v5984, %v6012
        %v6014 = vpop.f32.mrf.mxu0
        %v6015 = vadd.f32 %v5986, %v6014
        %6016 = vmatmul.bf16.gmra.mxu0 %v5259
        %v6017 = vpop.f32.mrf.mxu0
        %v6018 = vadd.f32 %v5989, %v6017
        %v6019 = vpop.f32.mrf.mxu0
        %v6020 = vadd.f32 %v5991, %v6019
        %6021 = vmatmul.bf16.gmra.mxu0 %v5260
        %v6022 = vpop.f32.mrf.mxu0
        %v6023 = vadd.f32 %v5994, %v6022
        %v6024 = vpop.f32.mrf.mxu0
        %v6025 = vadd.f32 %v5996, %v6024
        %6026 = vmatmul.bf16.gmra.mxu0 %v5261
        %v6027 = vpop.f32.mrf.mxu0
        %v6028 = vadd.f32 %v5999, %v6027
        %v6029 = vpop.f32.mrf.mxu0
        %v6030 = vadd.f32 %v6001, %v6029
        %6031 = vdwg.mxu0
        %6032 = vmatpush.bf16.msra.mxu0 %v5853
        %6033 = vmatpush.bf16.msra.mxu0 %v5852
        %6034 = vmatpush.bf16.msra.mxu0 %v5851
        %6035 = vmatpush.bf16.msra.mxu0 %v5850
        %6036 = vmatpush.bf16.msra.mxu0 %v5849
        %6037 = vmatpush.bf16.msra.mxu0 %v5848
        %6038 = vmatpush.bf16.msra.mxu0 %v5847
        %6039 = vmatpush.bf16.msra.mxu0 %v5846
        %6040 = vmatmul.bf16.gmra.mxu0 %v5274
        %v6041 = vpop.f32.mrf.mxu0
        %v6042 = vadd.f32 %v6013, %v6041
        %v6043 = vpop.f32.mrf.mxu0
        %v6044 = vadd.f32 %v6015, %v6043
        %6045 = vmatmul.bf16.gmra.mxu0 %v5275
        %v6046 = vpop.f32.mrf.mxu0
        %v6047 = vadd.f32 %v6018, %v6046
        %v6048 = vpop.f32.mrf.mxu0
        %v6049 = vadd.f32 %v6020, %v6048
        %6050 = vmatmul.bf16.gmra.mxu0 %v5276
        %v6051 = vpop.f32.mrf.mxu0
        %v6052 = vadd.f32 %v6023, %v6051
        %v6053 = vpop.f32.mrf.mxu0
        %v6054 = vadd.f32 %v6025, %v6053
        %6055 = vmatmul.bf16.gmra.mxu0 %v5277
        %v6056 = vpop.f32.mrf.mxu0
        %v6057 = vadd.f32 %v6028, %v6056
        %v6058 = vpop.f32.mrf.mxu0
        %v6059 = vadd.f32 %v6030, %v6058
        %6060 = vdwg.mxu0
        %6061 = vmatpush.bf16.msra.mxu0 %v5861
        %6062 = vmatpush.bf16.msra.mxu0 %v5860
        %6063 = vmatpush.bf16.msra.mxu0 %v5859
        %6064 = vmatpush.bf16.msra.mxu0 %v5858
        %6065 = vmatpush.bf16.msra.mxu0 %v5857
        %6066 = vmatpush.bf16.msra.mxu0 %v5856
        %6067 = vmatpush.bf16.msra.mxu0 %v5855
        %6068 = vmatpush.bf16.msra.mxu0 %v5854
        %6069 = vmatmul.bf16.gmra.mxu0 %v5298
        %v6070 = vpop.f32.mrf.mxu0
        %v6071 = vadd.f32 %v6042, %v6070
        %v6072 = vpop.f32.mrf.mxu0
        %v6073 = vadd.f32 %v6044, %v6072
        %6074 = vmatmul.bf16.gmra.mxu0 %v5299
        %v6075 = vpop.f32.mrf.mxu0
        %v6076 = vadd.f32 %v6047, %v6075
        %v6077 = vpop.f32.mrf.mxu0
        %v6078 = vadd.f32 %v6049, %v6077
        %6079 = vmatmul.bf16.gmra.mxu0 %v5300
        %v6080 = vpop.f32.mrf.mxu0
        %v6081 = vadd.f32 %v6052, %v6080
        %v6082 = vpop.f32.mrf.mxu0
        %v6083 = vadd.f32 %v6054, %v6082
        %6084 = vmatmul.bf16.gmra.mxu0 %v5301
        %v6085 = vpop.f32.mrf.mxu0
        %v6086 = vadd.f32 %v6057, %v6085
        %v6087 = vpop.f32.mrf.mxu0
        %v6088 = vadd.f32 %v6059, %v6087
        %6089 = vdwg.mxu0
        %6090 = vmatpush.bf16.msra.mxu0 %v5869
        %6091 = vmatpush.bf16.msra.mxu0 %v5868
        %6092 = vmatpush.bf16.msra.mxu0 %v5867
        %6093 = vmatpush.bf16.msra.mxu0 %v5866
        %6094 = vmatpush.bf16.msra.mxu0 %v5865
        %6095 = vmatpush.bf16.msra.mxu0 %v5864
        %6096 = vmatpush.bf16.msra.mxu0 %v5863
        %6097 = vmatpush.bf16.msra.mxu0 %v5862
        %6098 = vmatmul.bf16.gmra.mxu0 %v5314
        %v6099 = vpop.f32.mrf.mxu0
        %v6100 = vadd.f32 %v6071, %v6099
        %v6101 = vpop.f32.mrf.mxu0
        %v6102 = vadd.f32 %v6073, %v6101
        %6103 = vmatmul.bf16.gmra.mxu0 %v5315
        %v6104 = vpop.f32.mrf.mxu0
        %v6105 = vadd.f32 %v6076, %v6104
        %v6106 = vpop.f32.mrf.mxu0
        %v6107 = vadd.f32 %v6078, %v6106
        %6108 = vmatmul.bf16.gmra.mxu0 %v5316
        %v6109 = vpop.f32.mrf.mxu0
        %v6110 = vadd.f32 %v6081, %v6109
        %v6111 = vpop.f32.mrf.mxu0
        %v6112 = vadd.f32 %v6083, %v6111
        %6113 = vmatmul.bf16.gmra.mxu0 %v5317
        %v6114 = vpop.f32.mrf.mxu0
        %v6115 = vadd.f32 %v6086, %v6114
        %v6116 = vpop.f32.mrf.mxu0
        %v6117 = vadd.f32 %v6088, %v6116
        %6118 = vdwg.mxu0
        %6119 = vmatpush.bf16.msra.mxu0 %v5877
        %6120 = vmatpush.bf16.msra.mxu0 %v5876
        %6121 = vmatpush.bf16.msra.mxu0 %v5875
        %6122 = vmatpush.bf16.msra.mxu0 %v5874
        %6123 = vmatpush.bf16.msra.mxu0 %v5873
        %6124 = vmatpush.bf16.msra.mxu0 %v5872
        %6125 = vmatpush.bf16.msra.mxu0 %v5871
        %6126 = vmatpush.bf16.msra.mxu0 %v5870
        %6127 = vmatmul.bf16.gmra.mxu0 %v5330
        %v6128 = vpop.f32.mrf.mxu0
        %v6129 = vadd.f32 %v6100, %v6128
        %v6130 = vpop.f32.mrf.mxu0
        %v6131 = vadd.f32 %v6102, %v6130
        %6132 = vmatmul.bf16.gmra.mxu0 %v5331
        %v6133 = vpop.f32.mrf.mxu0
        %v6134 = vadd.f32 %v6105, %v6133
        %v6135 = vpop.f32.mrf.mxu0
        %v6136 = vadd.f32 %v6107, %v6135
        %6137 = vmatmul.bf16.gmra.mxu0 %v5332
        %v6138 = vpop.f32.mrf.mxu0
        %v6139 = vadd.f32 %v6110, %v6138
        %v6140 = vpop.f32.mrf.mxu0
        %v6141 = vadd.f32 %v6112, %v6140
        %6142 = vmatmul.bf16.gmra.mxu0 %v5333
        %v6143 = vpop.f32.mrf.mxu0
        %v6144 = vadd.f32 %v6115, %v6143
        %v6145 = vpop.f32.mrf.mxu0
        %v6146 = vadd.f32 %v6117, %v6145
        %6147 = vdwg.mxu0
        %6148 = vmatpush.bf16.msra.mxu0 %v5885
        %6149 = vmatpush.bf16.msra.mxu0 %v5884
        %6150 = vmatpush.bf16.msra.mxu0 %v5883
        %6151 = vmatpush.bf16.msra.mxu0 %v5882
        %6152 = vmatpush.bf16.msra.mxu0 %v5881
        %6153 = vmatpush.bf16.msra.mxu0 %v5880
        %6154 = vmatpush.bf16.msra.mxu0 %v5879
        %6155 = vmatpush.bf16.msra.mxu0 %v5878
        %6156 = vmatmul.bf16.gmra.mxu0 %v5354
        %v6157 = vpop.f32.mrf.mxu0
        %v6158 = vadd.f32 %v6129, %v6157
        %v6159 = vpop.f32.mrf.mxu0
        %v6160 = vadd.f32 %v6131, %v6159
        %6161 = vmatmul.bf16.gmra.mxu0 %v5355
        %v6162 = vpop.f32.mrf.mxu0
        %v6163 = vadd.f32 %v6134, %v6162
        %v6164 = vpop.f32.mrf.mxu0
        %v6165 = vadd.f32 %v6136, %v6164
        %6166 = vmatmul.bf16.gmra.mxu0 %v5356
        %v6167 = vpop.f32.mrf.mxu0
        %v6168 = vadd.f32 %v6139, %v6167
        %v6169 = vpop.f32.mrf.mxu0
        %v6170 = vadd.f32 %v6141, %v6169
        %6171 = vmatmul.bf16.gmra.mxu0 %v5357
        %v6172 = vpop.f32.mrf.mxu0
        %v6173 = vadd.f32 %v6144, %v6172
        %v6174 = vpop.f32.mrf.mxu0
        %v6175 = vadd.f32 %v6146, %v6174
        %6176 = vdwg.mxu0
        %6177 = vmatpush.bf16.msra.mxu0 %v5893
        %6178 = vmatpush.bf16.msra.mxu0 %v5892
        %6179 = vmatpush.bf16.msra.mxu0 %v5891
        %6180 = vmatpush.bf16.msra.mxu0 %v5890
        %6181 = vmatpush.bf16.msra.mxu0 %v5889
        %6182 = vmatpush.bf16.msra.mxu0 %v5888
        %6183 = vmatpush.bf16.msra.mxu0 %v5887
        %6184 = vmatpush.bf16.msra.mxu0 %v5886
        %6185 = vmatmul.bf16.gmra.mxu0 %v5370
        %v6186 = vpop.f32.mrf.mxu0
        %v6187 = vadd.f32 %v6158, %v6186
        %v6188 = vpop.f32.mrf.mxu0
        %v6189 = vadd.f32 %v6160, %v6188
        %6190 = vmatmul.bf16.gmra.mxu0 %v5371
        %v6191 = vpop.f32.mrf.mxu0
        %v6192 = vadd.f32 %v6163, %v6191
        %v6193 = vpop.f32.mrf.mxu0
        %v6194 = vadd.f32 %v6165, %v6193
        %6195 = vmatmul.bf16.gmra.mxu0 %v5372
        %v6196 = vpop.f32.mrf.mxu0
        %v6197 = vadd.f32 %v6168, %v6196
        %v6198 = vpop.f32.mrf.mxu0
        %v6199 = vadd.f32 %v6170, %v6198
        %6200 = vmatmul.bf16.gmra.mxu0 %v5373
        %v6201 = vpop.f32.mrf.mxu0
        %v6202 = vadd.f32 %v6173, %v6201
        %v6203 = vpop.f32.mrf.mxu0
        %v6204 = vadd.f32 %v6175, %v6203
        %6205 = vdwg.mxu0
        %6206 = vmatpush.bf16.msra.mxu0 %v5901
        %6207 = vmatpush.bf16.msra.mxu0 %v5900
        %6208 = vmatpush.bf16.msra.mxu0 %v5899
        %6209 = vmatpush.bf16.msra.mxu0 %v5898
        %6210 = vmatpush.bf16.msra.mxu0 %v5897
        %6211 = vmatpush.bf16.msra.mxu0 %v5896
        %6212 = vmatpush.bf16.msra.mxu0 %v5895
        %6213 = vmatpush.bf16.msra.mxu0 %v5894
        %6214 = vmatmul.bf16.gmra.mxu0 %v5386
        %v6215 = vpop.f32.mrf.mxu0
        %v6216 = vadd.f32 %v6187, %v6215
        %v6217 = vpop.f32.mrf.mxu0
        %v6218 = vadd.f32 %v6189, %v6217
        %6219 = vmatmul.bf16.gmra.mxu0 %v5387
        %v6220 = vpop.f32.mrf.mxu0
        %v6221 = vadd.f32 %v6192, %v6220
        %v6222 = vpop.f32.mrf.mxu0
        %v6223 = vadd.f32 %v6194, %v6222
        %6224 = vmatmul.bf16.gmra.mxu0 %v5388
        %v6225 = vpop.f32.mrf.mxu0
        %v6226 = vadd.f32 %v6197, %v6225
        %v6227 = vpop.f32.mrf.mxu0
        %v6228 = vadd.f32 %v6199, %v6227
        %6229 = vmatmul.bf16.gmra.mxu0 %v5389
        %v6230 = vpop.f32.mrf.mxu0
        %v6231 = vadd.f32 %v6202, %v6230
        %v6232 = vpop.f32.mrf.mxu0
        %v6233 = vadd.f32 %v6204, %v6232
        %6234 = vdwg.mxu0
        %v6235 = vmax.f32 %v6216, 0.0
        %v6236 = vmax.f32 %v6218, 0.0
        %v6237 = vmax.f32 %v6221, 0.0
        %v6238 = vmax.f32 %v6223, 0.0
        %v6239 = vmax.f32 %v6226, 0.0
        %v6240 = vmax.f32 %v6228, 0.0
        %v6241 = vmax.f32 %v6231, 0.0
        %v6242 = vmax.f32 %v6233, 0.0
        %v6243 = vpack.c.bf16 %v6236, %v6235
        %v6244 = vpack.c.bf16 %v6238, %v6237
        %v6245 = vpack.c.bf16 %v6240, %v6239
        %v6246 = vpack.c.bf16 %v6242, %v6241
        %v6247 = vld [vmem:[%s15] sm:$0xff]
        %v6248 = vld [vmem:[%s15 + $0x8] sm:$0xff]
        %v6249 = vld [vmem:[%s15 + $0x10] sm:$0xff]
        %v6250 = vld [vmem:[%s15 + $0x18] sm:$0xff]
        %v6251 = vld [vmem:[%s15 + $0x20] sm:$0xff]
        %v6252 = vld [vmem:[%s15 + $0x28] sm:$0xff]
        %v6253 = vld [vmem:[%s15 + $0x30] sm:$0xff]
        %v6254 = vld [vmem:[%s15 + $0x38] sm:$0xff]
        %v6255 = vld [vmem:[%s15 + $0x40] sm:$0xff]
        %v6256 = vld [vmem:[%s15 + $0x48] sm:$0xff]
        %v6257 = vld [vmem:[%s15 + $0x50] sm:$0xff]
        %v6258 = vld [vmem:[%s15 + $0x58] sm:$0xff]
        %v6259 = vld [vmem:[%s15 + $0x60] sm:$0xff]
        %v6260 = vld [vmem:[%s15 + $0x68] sm:$0xff]
        %v6261 = vld [vmem:[%s15 + $0x70] sm:$0xff]
        %v6262 = vld [vmem:[%s15 + $0x78] sm:$0xff]
        %v6263 = vld [vmem:[%s16] sm:$0x3]
        %v6265 = vperm.slane %v6263, 0
        %v6266 = vperm.slane %v6263, 1
        %v6285 = vunpack.c.l.b16 %v6247
        %v6286 = vunpack.c.h.b16 %v6247
        %v6287 = vunpack.c.l.b16 %v6248
        %v6288 = vunpack.c.h.b16 %v6248
        %v6289 = vunpack.c.l.b16 %v6249
        %v6290 = vunpack.c.h.b16 %v6249
        %v6291 = vunpack.c.l.b16 %v6250
        %v6292 = vunpack.c.h.b16 %v6250
        %v6293 = vunpack.c.l.b16 %v6251
        %v6294 = vunpack.c.h.b16 %v6251
        %v6295 = vunpack.c.l.b16 %v6252
        %v6296 = vunpack.c.h.b16 %v6252
        %v6297 = vunpack.c.l.b16 %v6253
        %v6298 = vunpack.c.h.b16 %v6253
        %v6299 = vunpack.c.l.b16 %v6254
        %v6300 = vunpack.c.h.b16 %v6254
        %v6301 = vunpack.c.l.b16 %v6255
        %v6302 = vunpack.c.h.b16 %v6255
        %v6303 = vunpack.c.l.b16 %v6256
        %v6304 = vunpack.c.h.b16 %v6256
        %v6305 = vunpack.c.l.b16 %v6257
        %v6306 = vunpack.c.h.b16 %v6257
        %v6307 = vunpack.c.l.b16 %v6258
        %v6308 = vunpack.c.h.b16 %v6258
        %v6309 = vunpack.c.l.b16 %v6259
        %v6310 = vunpack.c.h.b16 %v6259
        %v6311 = vunpack.c.l.b16 %v6260
        %v6312 = vunpack.c.h.b16 %v6260
        %v6313 = vunpack.c.l.b16 %v6261
        %v6314 = vunpack.c.h.b16 %v6261
        %v6315 = vunpack.c.l.b16 %v6262
        %v6316 = vunpack.c.h.b16 %v6262
        %v6317 = vpack.c.b16 %v6287, %v6285
        %v6318 = vpack.c.b16 %v6288, %v6286
        %v6319 = vpack.c.b16 %v6291, %v6289
        %v6320 = vpack.c.b16 %v6292, %v6290
        %v6321 = vpack.c.b16 %v6295, %v6293
        %v6322 = vpack.c.b16 %v6296, %v6294
        %v6323 = vpack.c.b16 %v6299, %v6297
        %v6324 = vpack.c.b16 %v6300, %v6298
        %v6325 = vpack.c.b16 %v6303, %v6301
        %v6326 = vpack.c.b16 %v6304, %v6302
        %v6327 = vpack.c.b16 %v6307, %v6305
        %v6328 = vpack.c.b16 %v6308, %v6306
        %v6329 = vpack.c.b16 %v6311, %v6309
        %v6330 = vpack.c.b16 %v6312, %v6310
        %v6331 = vpack.c.b16 %v6315, %v6313
        %v6332 = vpack.c.b16 %v6316, %v6314
        %6349 = vmatpush.bf16.msra.mxu0 %v6331
        %6350 = vmatpush.bf16.msra.mxu0 %v6329
        %6351 = vmatpush.bf16.msra.mxu0 %v6327
        %6352 = vmatpush.bf16.msra.mxu0 %v6325
        %6353 = vmatpush.bf16.msra.mxu0 %v6323
        %6354 = vmatpush.bf16.msra.mxu0 %v6321
        %6355 = vmatpush.bf16.msra.mxu0 %v6319
        %6356 = vmatpush.bf16.msra.mxu0 %v6317
        %6357 = vmatmul.bf16.gmra.mxu0 %v6243
        %v6358 = vpop.f32.mrf.mxu0
        %v6359 = vadd.f32 %v6265, %v6358
        %v6360 = vpop.f32.mrf.mxu0
        %v6361 = vadd.f32 %v6265, %v6360
        %6362 = vmatmul.bf16.gmra.mxu0 %v6244
        %v6363 = vpop.f32.mrf.mxu0
        %v6364 = vadd.f32 %v6265, %v6363
        %v6365 = vpop.f32.mrf.mxu0
        %v6366 = vadd.f32 %v6265, %v6365
        %6367 = vmatmul.bf16.gmra.mxu0 %v6245
        %v6368 = vpop.f32.mrf.mxu0
        %v6369 = vadd.f32 %v6265, %v6368
        %v6370 = vpop.f32.mrf.mxu0
        %v6371 = vadd.f32 %v6265, %v6370
        %6372 = vmatmul.bf16.gmra.mxu0 %v6246
        %v6373 = vpop.f32.mrf.mxu0
        %v6374 = vadd.f32 %v6265, %v6373
        %v6375 = vpop.f32.mrf.mxu0
        %v6376 = vadd.f32 %v6265, %v6375
        %6377 = vdwg.mxu0
        %6378 = vmatpush.bf16.msra.mxu0 %v6332
        %6379 = vmatpush.bf16.msra.mxu0 %v6330
        %6380 = vmatpush.bf16.msra.mxu0 %v6328
        %6381 = vmatpush.bf16.msra.mxu0 %v6326
        %6382 = vmatpush.bf16.msra.mxu0 %v6324
        %6383 = vmatpush.bf16.msra.mxu0 %v6322
        %6384 = vmatpush.bf16.msra.mxu0 %v6320
        %6385 = vmatpush.bf16.msra.mxu0 %v6318
        %6386 = vmatmul.bf16.gmra.mxu0 %v6243
        %v6387 = vpop.f32.mrf.mxu0
        %v6388 = vadd.f32 %v6266, %v6387
        %v6389 = vpop.f32.mrf.mxu0
        %v6390 = vadd.f32 %v6266, %v6389
        %6391 = vmatmul.bf16.gmra.mxu0 %v6244
        %v6392 = vpop.f32.mrf.mxu0
        %v6393 = vadd.f32 %v6266, %v6392
        %v6394 = vpop.f32.mrf.mxu0
        %v6395 = vadd.f32 %v6266, %v6394
        %6396 = vmatmul.bf16.gmra.mxu0 %v6245
        %v6397 = vpop.f32.mrf.mxu0
        %v6398 = vadd.f32 %v6266, %v6397
        %v6399 = vpop.f32.mrf.mxu0
        %v6400 = vadd.f32 %v6266, %v6399
        %6401 = vmatmul.bf16.gmra.mxu0 %v6246
        %v6402 = vpop.f32.mrf.mxu0
        %v6403 = vadd.f32 %v6266, %v6402
        %v6404 = vpop.f32.mrf.mxu0
        %v6405 = vadd.f32 %v6266, %v6404
        %6406 = vdwg.mxu0
        %v6407 = vunpack.c.l.bf16 %v4293
        %v6408 = vunpack.c.h.bf16 %v4293
        %v6409 = vunpack.c.l.bf16 %v4294
        %v6410 = vunpack.c.h.bf16 %v4294
        %v6411 = vunpack.c.l.bf16 %v4295
        %v6412 = vunpack.c.h.bf16 %v4295
        %v6413 = vunpack.c.l.bf16 %v4296
        %v6414 = vunpack.c.h.bf16 %v4296
        %v6415 = vunpack.c.l.bf16 %v4297
        %v6416 = vunpack.c.h.bf16 %v4297
        %v6417 = vunpack.c.l.bf16 %v4298
        %v6418 = vunpack.c.h.bf16 %v4298
        %v6419 = vunpack.c.l.bf16 %v4299
        %v6420 = vunpack.c.h.bf16 %v4299
        %v6421 = vunpack.c.l.bf16 %v4300
        %v6422 = vunpack.c.h.bf16 %v4300
        %v6423 = vadd.f32 %v6359, %v6407
        %v6424 = vadd.f32 %v6388, %v6408
        %v6425 = vadd.f32 %v6361, %v6409
        %v6426 = vadd.f32 %v6390, %v6410
        %v6427 = vadd.f32 %v6364, %v6411
        %v6428 = vadd.f32 %v6393, %v6412
        %v6429 = vadd.f32 %v6366, %v6413
        %v6430 = vadd.f32 %v6395, %v6414
        %v6431 = vadd.f32 %v6369, %v6415
        %v6432 = vadd.f32 %v6398, %v6416
        %v6433 = vadd.f32 %v6371, %v6417
        %v6434 = vadd.f32 %v6400, %v6418
        %v6435 = vadd.f32 %v6374, %v6419
        %v6436 = vadd.f32 %v6403, %v6420
        %v6437 = vadd.f32 %v6376, %v6421
        %v6438 = vadd.f32 %v6405, %v6422
        %v6439 = vmax.f32 %v6423, 0.0
        %v6440 = vmax.f32 %v6424, 0.0
        %v6441 = vmax.f32 %v6425, 0.0
        %v6442 = vmax.f32 %v6426, 0.0
        %v6443 = vmax.f32 %v6427, 0.0
        %v6444 = vmax.f32 %v6428, 0.0
        %v6445 = vmax.f32 %v6429, 0.0
        %v6446 = vmax.f32 %v6430, 0.0
        %v6447 = vmax.f32 %v6431, 0.0
        %v6448 = vmax.f32 %v6432, 0.0
        %v6449 = vmax.f32 %v6433, 0.0
        %v6450 = vmax.f32 %v6434, 0.0
        %v6451 = vmax.f32 %v6435, 0.0
        %v6452 = vmax.f32 %v6436, 0.0
        %v6453 = vmax.f32 %v6437, 0.0
        %v6454 = vmax.f32 %v6438, 0.0
        %v6455 = vpack.c.bf16 %v6440, %v6439
        %v6456 = vpack.c.bf16 %v6442, %v6441
        %v6457 = vpack.c.bf16 %v6444, %v6443
        %v6458 = vpack.c.bf16 %v6446, %v6445
        %v6459 = vpack.c.bf16 %v6448, %v6447
        %v6460 = vpack.c.bf16 %v6450, %v6449
        %v6461 = vpack.c.bf16 %v6452, %v6451
        %v6462 = vpack.c.bf16 %v6454, %v6453
        %v6463 = vld [vmem:[%s17] sm:$0xf]
        %v6464 = vld [vmem:[%s17 + $0x4] sm:$0xf]
        %v6465 = vld [vmem:[%s17 + $0x8] sm:$0xf]
        %v6466 = vld [vmem:[%s17 + $0xc] sm:$0xf]
        %v6467 = vld [vmem:[%s17 + $0x10] sm:$0xf]
        %v6468 = vld [vmem:[%s17 + $0x14] sm:$0xf]
        %v6469 = vld [vmem:[%s17 + $0x18] sm:$0xf]
        %v6470 = vld [vmem:[%s17 + $0x1c] sm:$0xf]
        %v6471 = vld [vmem:[%s17 + $0x20] sm:$0xf]
        %v6472 = vld [vmem:[%s17 + $0x24] sm:$0xf]
        %v6473 = vld [vmem:[%s17 + $0x28] sm:$0xf]
        %v6474 = vld [vmem:[%s17 + $0x2c] sm:$0xf]
        %v6475 = vld [vmem:[%s17 + $0x30] sm:$0xf]
        %v6476 = vld [vmem:[%s17 + $0x34] sm:$0xf]
        %v6477 = vld [vmem:[%s17 + $0x38] sm:$0xf]
        %v6478 = vld [vmem:[%s17 + $0x3c] sm:$0xf]
        %v6479 = vld [vmem:[%s17 + $0x40] sm:$0xf]
        %v6480 = vld [vmem:[%s17 + $0x44] sm:$0xf]
        %v6481 = vld [vmem:[%s17 + $0x48] sm:$0xf]
        %v6482 = vld [vmem:[%s17 + $0x4c] sm:$0xf]
        %v6483 = vld [vmem:[%s17 + $0x50] sm:$0xf]
        %v6484 = vld [vmem:[%s17 + $0x54] sm:$0xf]
        %v6485 = vld [vmem:[%s17 + $0x58] sm:$0xf]
        %v6486 = vld [vmem:[%s17 + $0x5c] sm:$0xf]
        %v6487 = vld [vmem:[%s17 + $0x60] sm:$0xf]
        %v6488 = vld [vmem:[%s17 + $0x64] sm:$0xf]
        %v6489 = vld [vmem:[%s17 + $0x68] sm:$0xf]
        %v6490 = vld [vmem:[%s17 + $0x6c] sm:$0xf]
        %v6491 = vld [vmem:[%s17 + $0x70] sm:$0xf]
        %v6492 = vld [vmem:[%s17 + $0x74] sm:$0xf]
        %v6493 = vld [vmem:[%s17 + $0x78] sm:$0xf]
        %v6494 = vld [vmem:[%s17 + $0x7c] sm:$0xf]
        %v6495 = vld [vmem:[%s18] sm:$0x1]
        %v6497 = vperm.slane %v6495, 0
        %v6507 = vunpack.c.l.b16 %v6455
        %v6508 = vunpack.c.h.b16 %v6455
        %v6509 = vunpack.c.l.b16 %v6456
        %v6510 = vunpack.c.h.b16 %v6456
        %v6511 = vunpack.c.l.b16 %v6457
        %v6512 = vunpack.c.h.b16 %v6457
        %v6513 = vunpack.c.l.b16 %v6458
        %v6514 = vunpack.c.h.b16 %v6458
        %v6515 = vunpack.c.l.b16 %v6459
        %v6516 = vunpack.c.h.b16 %v6459
        %v6517 = vunpack.c.l.b16 %v6460
        %v6518 = vunpack.c.h.b16 %v6460
        %v6519 = vunpack.c.l.b16 %v6461
        %v6520 = vunpack.c.h.b16 %v6461
        %v6521 = vunpack.c.l.b16 %v6462
        %v6522 = vunpack.c.h.b16 %v6462
        %v6523 = vpack.c.b16 %v6509, %v6507
        %v6524 = vpack.c.b16 %v6510, %v6508
        %v6525 = vpack.c.b16 %v6513, %v6511
        %v6526 = vpack.c.b16 %v6514, %v6512
        %v6527 = vpack.c.b16 %v6517, %v6515
        %v6528 = vpack.c.b16 %v6518, %v6516
        %v6529 = vpack.c.b16 %v6521, %v6519
        %v6530 = vpack.c.b16 %v6522, %v6520
        %v6571 = vunpack.c.l.b16 %v6463
        %v6572 = vunpack.c.l.b16 %v6464
        %v6573 = vunpack.c.l.b16 %v6465
        %v6574 = vunpack.c.l.b16 %v6466
        %v6575 = vunpack.c.l.b16 %v6467
        %v6576 = vunpack.c.l.b16 %v6468
        %v6577 = vunpack.c.l.b16 %v6469
        %v6578 = vunpack.c.l.b16 %v6470
        %v6579 = vunpack.c.l.b16 %v6471
        %v6580 = vunpack.c.l.b16 %v6472
        %v6581 = vunpack.c.l.b16 %v6473
        %v6582 = vunpack.c.l.b16 %v6474
        %v6583 = vunpack.c.l.b16 %v6475
        %v6584 = vunpack.c.l.b16 %v6476
        %v6585 = vunpack.c.l.b16 %v6477
        %v6586 = vunpack.c.l.b16 %v6478
        %v6587 = vunpack.c.l.b16 %v6479
        %v6588 = vunpack.c.l.b16 %v6480
        %v6589 = vunpack.c.l.b16 %v6481
        %v6590 = vunpack.c.l.b16 %v6482
        %v6591 = vunpack.c.l.b16 %v6483
        %v6592 = vunpack.c.l.b16 %v6484
        %v6593 = vunpack.c.l.b16 %v6485
        %v6594 = vunpack.c.l.b16 %v6486
        %v6595 = vunpack.c.l.b16 %v6487
        %v6596 = vunpack.c.l.b16 %v6488
        %v6597 = vunpack.c.l.b16 %v6489
        %v6598 = vunpack.c.l.b16 %v6490
        %v6599 = vunpack.c.l.b16 %v6491
        %v6600 = vunpack.c.l.b16 %v6492
        %v6601 = vunpack.c.l.b16 %v6493
        %v6602 = vunpack.c.l.b16 %v6494
        %v6603 = vpack.c.b16 %v6572, %v6571
        %v6604 = vpack.c.b16 %v6574, %v6573
        %v6605 = vpack.c.b16 %v6576, %v6575
        %v6606 = vpack.c.b16 %v6578, %v6577
        %v6607 = vpack.c.b16 %v6580, %v6579
        %v6608 = vpack.c.b16 %v6582, %v6581
        %v6609 = vpack.c.b16 %v6584, %v6583
        %v6610 = vpack.c.b16 %v6586, %v6585
        %v6611 = vpack.c.b16 %v6588, %v6587
        %v6612 = vpack.c.b16 %v6590, %v6589
        %v6613 = vpack.c.b16 %v6592, %v6591
        %v6614 = vpack.c.b16 %v6594, %v6593
        %v6615 = vpack.c.b16 %v6596, %v6595
        %v6616 = vpack.c.b16 %v6598, %v6597
        %v6617 = vpack.c.b16 %v6600, %v6599
        %v6618 = vpack.c.b16 %v6602, %v6601
        %6635 = vmatpush.bf16.msra.mxu0 %v6610
        %6636 = vmatpush.bf16.msra.mxu0 %v6609
        %6637 = vmatpush.bf16.msra.mxu0 %v6608
        %6638 = vmatpush.bf16.msra.mxu0 %v6607
        %6639 = vmatpush.bf16.msra.mxu0 %v6606
        %6640 = vmatpush.bf16.msra.mxu0 %v6605
        %6641 = vmatpush.bf16.msra.mxu0 %v6604
        %6642 = vmatpush.bf16.msra.mxu0 %v6603
        %6643 = vmatmul.bf16.gmra.mxu0 %v6523
        %v6644 = vpop.f32.mrf.mxu0
        %v6645 = vadd.f32 %v6497, %v6644
        %v6646 = vpop.f32.mrf.mxu0
        %v6647 = vadd.f32 %v6497, %v6646
        %6648 = vmatmul.bf16.gmra.mxu0 %v6525
        %v6649 = vpop.f32.mrf.mxu0
        %v6650 = vadd.f32 %v6497, %v6649
        %v6651 = vpop.f32.mrf.mxu0
        %v6652 = vadd.f32 %v6497, %v6651
        %6653 = vmatmul.bf16.gmra.mxu0 %v6527
        %v6654 = vpop.f32.mrf.mxu0
        %v6655 = vadd.f32 %v6497, %v6654
        %v6656 = vpop.f32.mrf.mxu0
        %v6657 = vadd.f32 %v6497, %v6656
        %6658 = vmatmul.bf16.gmra.mxu0 %v6529
        %v6659 = vpop.f32.mrf.mxu0
        %v6660 = vadd.f32 %v6497, %v6659
        %v6661 = vpop.f32.mrf.mxu0
        %v6662 = vadd.f32 %v6497, %v6661
        %6663 = vdwg.mxu0
        %6664 = vmatpush.bf16.msra.mxu0 %v6618
        %6665 = vmatpush.bf16.msra.mxu0 %v6617
        %6666 = vmatpush.bf16.msra.mxu0 %v6616
        %6667 = vmatpush.bf16.msra.mxu0 %v6615
        %6668 = vmatpush.bf16.msra.mxu0 %v6614
        %6669 = vmatpush.bf16.msra.mxu0 %v6613
        %6670 = vmatpush.bf16.msra.mxu0 %v6612
        %6671 = vmatpush.bf16.msra.mxu0 %v6611
        %6672 = vmatmul.bf16.gmra.mxu0 %v6524
        %v6673 = vpop.f32.mrf.mxu0
        %v6674 = vadd.f32 %v6645, %v6673
        %v6675 = vpop.f32.mrf.mxu0
        %v6676 = vadd.f32 %v6647, %v6675
        %6677 = vmatmul.bf16.gmra.mxu0 %v6526
        %v6678 = vpop.f32.mrf.mxu0
        %v6679 = vadd.f32 %v6650, %v6678
        %v6680 = vpop.f32.mrf.mxu0
        %v6681 = vadd.f32 %v6652, %v6680
        %6682 = vmatmul.bf16.gmra.mxu0 %v6528
        %v6683 = vpop.f32.mrf.mxu0
        %v6684 = vadd.f32 %v6655, %v6683
        %v6685 = vpop.f32.mrf.mxu0
        %v6686 = vadd.f32 %v6657, %v6685
        %6687 = vmatmul.bf16.gmra.mxu0 %v6530
        %v6688 = vpop.f32.mrf.mxu0
        %v6689 = vadd.f32 %v6660, %v6688
        %v6690 = vpop.f32.mrf.mxu0
        %v6691 = vadd.f32 %v6662, %v6690
        %6692 = vdwg.mxu0
        %v6693 = vmax.f32 %v6674, 0.0
        %v6694 = vmax.f32 %v6676, 0.0
        %v6695 = vmax.f32 %v6679, 0.0
        %v6696 = vmax.f32 %v6681, 0.0
        %v6697 = vmax.f32 %v6684, 0.0
        %v6698 = vmax.f32 %v6686, 0.0
        %v6699 = vmax.f32 %v6689, 0.0
        %v6700 = vmax.f32 %v6691, 0.0
        %v6701 = vpack.c.bf16 %v6693, %v6693
        %v6702 = vpack.c.bf16 %v6694, %v6694
        %v6703 = vpack.c.bf16 %v6695, %v6695
        %v6704 = vpack.c.bf16 %v6696, %v6696
        %v6705 = vpack.c.bf16 %v6697, %v6697
        %v6706 = vpack.c.bf16 %v6698, %v6698
        %v6707 = vpack.c.bf16 %v6699, %v6699
        %v6708 = vpack.c.bf16 %v6700, %v6700
        %v6710 = vshrl.u32 %v6701, 16
        %v6712 = vrot.slane %v6710, 7
        %v6713 = vshll.u32 %v6701, 16
        %v6715 = vor.u32 %v6712, %v6713
        %v6716 = vrot.slane %v6712, 4
        %v6718 = vshrl.u32 %v6702, 16
        %v6720 = vrot.slane %v6718, 7
        %v6721 = vshll.u32 %v6702, 16
        %v6723 = vor.u32 %v6720, %v6721
        %v6724 = vrot.slane %v6720, 4
        %v6726 = vshrl.u32 %v6703, 16
        %v6728 = vrot.slane %v6726, 7
        %v6729 = vshll.u32 %v6703, 16
        %v6731 = vor.u32 %v6728, %v6729
        %v6732 = vrot.slane %v6728, 4
        %v6734 = vshrl.u32 %v6704, 16
        %v6736 = vrot.slane %v6734, 7
        %v6737 = vshll.u32 %v6704, 16
        %v6739 = vor.u32 %v6736, %v6737
        %v6740 = vrot.slane %v6736, 4
        %v6742 = vshrl.u32 %v6705, 16
        %v6744 = vrot.slane %v6742, 7
        %v6745 = vshll.u32 %v6705, 16
        %v6747 = vor.u32 %v6744, %v6745
        %v6748 = vrot.slane %v6744, 4
        %v6750 = vshrl.u32 %v6706, 16
        %v6752 = vrot.slane %v6750, 7
        %v6753 = vshll.u32 %v6706, 16
        %v6755 = vor.u32 %v6752, %v6753
        %v6756 = vrot.slane %v6752, 4
        %v6758 = vshrl.u32 %v6707, 16
        %v6760 = vrot.slane %v6758, 7
        %v6761 = vshll.u32 %v6707, 16
        %v6763 = vor.u32 %v6760, %v6761
        %v6764 = vrot.slane %v6760, 4
        %v6766 = vshrl.u32 %v6708, 16
        %v6768 = vrot.slane %v6766, 7
        %v6769 = vshll.u32 %v6708, 16
        %v6771 = vor.u32 %v6768, %v6769
        %v6772 = vrot.slane %v6768, 4
        %v6789 = vsel %vm1476, %v6715, %v4858
        %6790 = vst [vmem:[%s1473] sm:$0xf] %v6789
        %v6791 = vld [vmem:[%s1473 + $0x4] sm:$0x1]
        %v6792 = vsel %vm1482, %v6716, %v6791
        %6793 = vst [vmem:[%s1473 + $0x4] sm:$0x1] %v6792
        %v6794 = vld [vmem:[%s1473 + $0x8] sm:$0xf]
        %v6795 = vsel %vm1476, %v6723, %v6794
        %6796 = vst [vmem:[%s1473 + $0x8] sm:$0xf] %v6795
        %v6797 = vld [vmem:[%s1473 + $0xc] sm:$0x1]
        %v6798 = vsel %vm1482, %v6724, %v6797
        %6799 = vst [vmem:[%s1473 + $0xc] sm:$0x1] %v6798
        %v6800 = vld [vmem:[%s1473 + $0x10] sm:$0xf]
        %v6801 = vsel %vm1476, %v6731, %v6800
        %6802 = vst [vmem:[%s1473 + $0x10] sm:$0xf] %v6801
        %v6803 = vld [vmem:[%s1473 + $0x14] sm:$0x1]
        %v6804 = vsel %vm1482, %v6732, %v6803
        %6805 = vst [vmem:[%s1473 + $0x14] sm:$0x1] %v6804
        %v6806 = vld [vmem:[%s1473 + $0x18] sm:$0xf]
        %v6807 = vsel %vm1476, %v6739, %v6806
        %6808 = vst [vmem:[%s1473 + $0x18] sm:$0xf] %v6807
        %v6809 = vld [vmem:[%s1473 + $0x1c] sm:$0x1]
        %v6810 = vsel %vm1482, %v6740, %v6809
        %6811 = vst [vmem:[%s1473 + $0x1c] sm:$0x1] %v6810
        %v6812 = vld [vmem:[%s1473 + $0x20] sm:$0xf]
        %v6813 = vsel %vm1476, %v6747, %v6812
        %6814 = vst [vmem:[%s1473 + $0x20] sm:$0xf] %v6813
        %v6815 = vld [vmem:[%s1473 + $0x24] sm:$0x1]
        %v6816 = vsel %vm1482, %v6748, %v6815
        %6817 = vst [vmem:[%s1473 + $0x24] sm:$0x1] %v6816
        %v6818 = vld [vmem:[%s1473 + $0x28] sm:$0xf]
        %v6819 = vsel %vm1476, %v6755, %v6818
        %6820 = vst [vmem:[%s1473 + $0x28] sm:$0xf] %v6819
        %v6821 = vld [vmem:[%s1473 + $0x2c] sm:$0x1]
        %v6822 = vsel %vm1482, %v6756, %v6821
        %6823 = vst [vmem:[%s1473 + $0x2c] sm:$0x1] %v6822
        %v6824 = vld [vmem:[%s1473 + $0x30] sm:$0xf]
        %v6825 = vsel %vm1476, %v6763, %v6824
        %6826 = vst [vmem:[%s1473 + $0x30] sm:$0xf] %v6825
        %v6827 = vld [vmem:[%s1473 + $0x34] sm:$0x1]
        %v6828 = vsel %vm1482, %v6764, %v6827
        %6829 = vst [vmem:[%s1473 + $0x34] sm:$0x1] %v6828
        %v6830 = vld [vmem:[%s1473 + $0x38] sm:$0xf]
        %v6831 = vsel %vm1476, %v6771, %v6830
        %6832 = vst [vmem:[%s1473 + $0x38] sm:$0xf] %v6831
        %v6833 = vld [vmem:[%s1473 + $0x3c] sm:$0x1]
        %v6834 = vsel %vm1482, %v6772, %v6833
        %6835 = vst [vmem:[%s1473 + $0x3c] sm:$0x1] %v6834
        %v6836 = vld [vmem:[#allocation2] sm:$0xf]
        %v6837 = vld [vmem:[#allocation2 + $0x8] sm:$0xf]
        %v6838 = vld [vmem:[#allocation2 + $0x10] sm:$0xf]
        %v6839 = vld [vmem:[#allocation2 + $0x18] sm:$0xf]
        %v6840 = vld [vmem:[#allocation2 + $0x20] sm:$0xf]
        %v6841 = vld [vmem:[#allocation2 + $0x28] sm:$0xf]
        %v6842 = vld [vmem:[#allocation2 + $0x30] sm:$0xf]
        %v6843 = vld [vmem:[#allocation2 + $0x38] sm:$0xf]
        %v6844 = vld [vmem:[#allocation2 + $0x4] sm:$0x1]
        %v6845 = vld [vmem:[#allocation2 + $0xc] sm:$0x1]
        %v6846 = vld [vmem:[#allocation2 + $0x14] sm:$0x1]
        %v6847 = vld [vmem:[#allocation2 + $0x1c] sm:$0x1]
        %v6848 = vld [vmem:[#allocation2 + $0x24] sm:$0x1]
        %v6849 = vld [vmem:[#allocation2 + $0x2c] sm:$0x1]
        %v6850 = vld [vmem:[#allocation2 + $0x34] sm:$0x1]
        %v6851 = vld [vmem:[#allocation2 + $0x3c] sm:$0x1]
        %v6853 = vshrl.u32 %v6836, 16
        %v6855 = vrot.slane %v6853, 4
        %v6856 = vshll.u32 %v6836, 16
        %v6858 = vrot.slane %v6856, 5
        %v6859 = vor.u32 %v6855, %v6858
        %v6860 = vrot.slane %v6859, 4
        %v6862 = vshll.u32 %v6844, 16
        %v6864 = vrot.slane %v6862, 5
        %v6865 = vsel %vm2379, %v6860, %v6864
        %v6867 = vshrl.u32 %v6837, 16
        %v6869 = vrot.slane %v6867, 4
        %v6870 = vshll.u32 %v6837, 16
        %v6872 = vrot.slane %v6870, 5
        %v6873 = vor.u32 %v6869, %v6872
        %v6874 = vrot.slane %v6873, 4
        %v6876 = vshll.u32 %v6845, 16
        %v6878 = vrot.slane %v6876, 5
        %v6879 = vsel %vm2379, %v6874, %v6878
        %v6881 = vshrl.u32 %v6838, 16
        %v6883 = vrot.slane %v6881, 4
        %v6884 = vshll.u32 %v6838, 16
        %v6886 = vrot.slane %v6884, 5
        %v6887 = vor.u32 %v6883, %v6886
        %v6888 = vrot.slane %v6887, 4
        %v6890 = vshll.u32 %v6846, 16
        %v6892 = vrot.slane %v6890, 5
        %v6893 = vsel %vm2379, %v6888, %v6892
        %v6895 = vshrl.u32 %v6839, 16
        %v6897 = vrot.slane %v6895, 4
        %v6898 = vshll.u32 %v6839, 16
        %v6900 = vrot.slane %v6898, 5
        %v6901 = vor.u32 %v6897, %v6900
        %v6902 = vrot.slane %v6901, 4
        %v6904 = vshll.u32 %v6847, 16
        %v6906 = vrot.slane %v6904, 5
        %v6907 = vsel %vm2379, %v6902, %v6906
        %v6909 = vshrl.u32 %v6840, 16
        %v6911 = vrot.slane %v6909, 4
        %v6912 = vshll.u32 %v6840, 16
        %v6914 = vrot.slane %v6912, 5
        %v6915 = vor.u32 %v6911, %v6914
        %v6916 = vrot.slane %v6915, 4
        %v6918 = vshll.u32 %v6848, 16
        %v6920 = vrot.slane %v6918, 5
        %v6921 = vsel %vm2379, %v6916, %v6920
        %v6923 = vshrl.u32 %v6841, 16
        %v6925 = vrot.slane %v6923, 4
        %v6926 = vshll.u32 %v6841, 16
        %v6928 = vrot.slane %v6926, 5
        %v6929 = vor.u32 %v6925, %v6928
        %v6930 = vrot.slane %v6929, 4
        %v6932 = vshll.u32 %v6849, 16
        %v6934 = vrot.slane %v6932, 5
        %v6935 = vsel %vm2379, %v6930, %v6934
        %v6937 = vshrl.u32 %v6842, 16
        %v6939 = vrot.slane %v6937, 4
        %v6940 = vshll.u32 %v6842, 16
        %v6942 = vrot.slane %v6940, 5
        %v6943 = vor.u32 %v6939, %v6942
        %v6944 = vrot.slane %v6943, 4
        %v6946 = vshll.u32 %v6850, 16
        %v6948 = vrot.slane %v6946, 5
        %v6949 = vsel %vm2379, %v6944, %v6948
        %v6951 = vshrl.u32 %v6843, 16
        %v6953 = vrot.slane %v6951, 4
        %v6954 = vshll.u32 %v6843, 16
        %v6956 = vrot.slane %v6954, 5
        %v6957 = vor.u32 %v6953, %v6956
        %v6958 = vrot.slane %v6957, 4
        %v6960 = vshll.u32 %v6851, 16
        %v6962 = vrot.slane %v6960, 5
        %v6963 = vsel %vm2379, %v6958, %v6962
        %v6964 = vld [vmem:[#allocation2] sm:$0xe]
        %v6965 = vld [vmem:[#allocation2 + $0x8] sm:$0xe]
        %v6966 = vld [vmem:[#allocation2 + $0x10] sm:$0xe]
        %v6967 = vld [vmem:[#allocation2 + $0x18] sm:$0xe]
        %v6968 = vld [vmem:[#allocation2 + $0x20] sm:$0xe]
        %v6969 = vld [vmem:[#allocation2 + $0x28] sm:$0xe]
        %v6970 = vld [vmem:[#allocation2 + $0x30] sm:$0xe]
        %v6971 = vld [vmem:[#allocation2 + $0x38] sm:$0xe]
        %v6988 = vrot.slane %v6964, 5
        %v6989 = vrot.slane %v6988, 4
        %v6990 = vrot.slane %v6844, 5
        %v6991 = vsel %vm2518, %v6989, %v6990
        %v6992 = vrot.slane %v6965, 5
        %v6993 = vrot.slane %v6992, 4
        %v6994 = vrot.slane %v6845, 5
        %v6995 = vsel %vm2518, %v6993, %v6994
        %v6996 = vrot.slane %v6966, 5
        %v6997 = vrot.slane %v6996, 4
        %v6998 = vrot.slane %v6846, 5
        %v6999 = vsel %vm2518, %v6997, %v6998
        %v7000 = vrot.slane %v6967, 5
        %v7001 = vrot.slane %v7000, 4
        %v7002 = vrot.slane %v6847, 5
        %v7003 = vsel %vm2518, %v7001, %v7002
        %v7004 = vrot.slane %v6968, 5
        %v7005 = vrot.slane %v7004, 4
        %v7006 = vrot.slane %v6848, 5
        %v7007 = vsel %vm2518, %v7005, %v7006
        %v7008 = vrot.slane %v6969, 5
        %v7009 = vrot.slane %v7008, 4
        %v7010 = vrot.slane %v6849, 5
        %v7011 = vsel %vm2518, %v7009, %v7010
        %v7012 = vrot.slane %v6970, 5
        %v7013 = vrot.slane %v7012, 4
        %v7014 = vrot.slane %v6850, 5
        %v7015 = vsel %vm2518, %v7013, %v7014
        %v7016 = vrot.slane %v6971, 5
        %v7017 = vrot.slane %v7016, 4
        %v7018 = vrot.slane %v6851, 5
        %v7019 = vsel %vm2518, %v7017, %v7018
        %v7020 = vld [vmem:[%s1473] sm:$0xf]
        %v7021 = vld [vmem:[%s1473 + $0x8] sm:$0xf]
        %v7022 = vld [vmem:[%s1473 + $0x10] sm:$0xf]
        %v7023 = vld [vmem:[%s1473 + $0x18] sm:$0xf]
        %v7024 = vld [vmem:[%s1473 + $0x20] sm:$0xf]
        %v7025 = vld [vmem:[%s1473 + $0x28] sm:$0xf]
        %v7026 = vld [vmem:[%s1473 + $0x30] sm:$0xf]
        %v7027 = vld [vmem:[%s1473 + $0x38] sm:$0xf]
        %v7028 = vld [vmem:[%s1473 + $0x4] sm:$0x1]
        %v7029 = vld [vmem:[%s1473 + $0xc] sm:$0x1]
        %v7030 = vld [vmem:[%s1473 + $0x14] sm:$0x1]
        %v7031 = vld [vmem:[%s1473 + $0x1c] sm:$0x1]
        %v7032 = vld [vmem:[%s1473 + $0x24] sm:$0x1]
        %v7033 = vld [vmem:[%s1473 + $0x2c] sm:$0x1]
        %v7034 = vld [vmem:[%s1473 + $0x34] sm:$0x1]
        %v7035 = vld [vmem:[%s1473 + $0x3c] sm:$0x1]
        %v7037 = vshrl.u32 %v7020, 16
        %v7039 = vrot.slane %v7037, 4
        %v7040 = vshll.u32 %v7020, 16
        %v7042 = vrot.slane %v7040, 5
        %v7043 = vor.u32 %v7039, %v7042
        %v7044 = vrot.slane %v7043, 4
        %v7046 = vshll.u32 %v7028, 16
        %v7048 = vrot.slane %v7046, 5
        %v7049 = vsel %vm2379, %v7044, %v7048
        %v7051 = vshrl.u32 %v7021, 16
        %v7053 = vrot.slane %v7051, 4
        %v7054 = vshll.u32 %v7021, 16
        %v7056 = vrot.slane %v7054, 5
        %v7057 = vor.u32 %v7053, %v7056
        %v7058 = vrot.slane %v7057, 4
        %v7060 = vshll.u32 %v7029, 16
        %v7062 = vrot.slane %v7060, 5
        %v7063 = vsel %vm2379, %v7058, %v7062
        %v7065 = vshrl.u32 %v7022, 16
        %v7067 = vrot.slane %v7065, 4
        %v7068 = vshll.u32 %v7022, 16
        %v7070 = vrot.slane %v7068, 5
        %v7071 = vor.u32 %v7067, %v7070
        %v7072 = vrot.slane %v7071, 4
        %v7074 = vshll.u32 %v7030, 16
        %v7076 = vrot.slane %v7074, 5
        %v7077 = vsel %vm2379, %v7072, %v7076
        %v7079 = vshrl.u32 %v7023, 16
        %v7081 = vrot.slane %v7079, 4
        %v7082 = vshll.u32 %v7023, 16
        %v7084 = vrot.slane %v7082, 5
        %v7085 = vor.u32 %v7081, %v7084
        %v7086 = vrot.slane %v7085, 4
        %v7088 = vshll.u32 %v7031, 16
        %v7090 = vrot.slane %v7088, 5
        %v7091 = vsel %vm2379, %v7086, %v7090
        %v7093 = vshrl.u32 %v7024, 16
        %v7095 = vrot.slane %v7093, 4
        %v7096 = vshll.u32 %v7024, 16
        %v7098 = vrot.slane %v7096, 5
        %v7099 = vor.u32 %v7095, %v7098
        %v7100 = vrot.slane %v7099, 4
        %v7102 = vshll.u32 %v7032, 16
        %v7104 = vrot.slane %v7102, 5
        %v7105 = vsel %vm2379, %v7100, %v7104
        %v7107 = vshrl.u32 %v7025, 16
        %v7109 = vrot.slane %v7107, 4
        %v7110 = vshll.u32 %v7025, 16
        %v7112 = vrot.slane %v7110, 5
        %v7113 = vor.u32 %v7109, %v7112
        %v7114 = vrot.slane %v7113, 4
        %v7116 = vshll.u32 %v7033, 16
        %v7118 = vrot.slane %v7116, 5
        %v7119 = vsel %vm2379, %v7114, %v7118
        %v7121 = vshrl.u32 %v7026, 16
        %v7123 = vrot.slane %v7121, 4
        %v7124 = vshll.u32 %v7026, 16
        %v7126 = vrot.slane %v7124, 5
        %v7127 = vor.u32 %v7123, %v7126
        %v7128 = vrot.slane %v7127, 4
        %v7130 = vshll.u32 %v7034, 16
        %v7132 = vrot.slane %v7130, 5
        %v7133 = vsel %vm2379, %v7128, %v7132
        %v7135 = vshrl.u32 %v7027, 16
        %v7137 = vrot.slane %v7135, 4
        %v7138 = vshll.u32 %v7027, 16
        %v7140 = vrot.slane %v7138, 5
        %v7141 = vor.u32 %v7137, %v7140
        %v7142 = vrot.slane %v7141, 4
        %v7144 = vshll.u32 %v7035, 16
        %v7146 = vrot.slane %v7144, 5
        %v7147 = vsel %vm2379, %v7142, %v7146
        %v7148 = vld [vmem:[%s1473] sm:$0xe]
        %v7149 = vld [vmem:[%s1473 + $0x8] sm:$0xe]
        %v7150 = vld [vmem:[%s1473 + $0x10] sm:$0xe]
        %v7151 = vld [vmem:[%s1473 + $0x18] sm:$0xe]
        %v7152 = vld [vmem:[%s1473 + $0x20] sm:$0xe]
        %v7153 = vld [vmem:[%s1473 + $0x28] sm:$0xe]
        %v7154 = vld [vmem:[%s1473 + $0x30] sm:$0xe]
        %v7155 = vld [vmem:[%s1473 + $0x38] sm:$0xe]
        %v7172 = vrot.slane %v7148, 5
        %v7173 = vrot.slane %v7172, 4
        %v7174 = vrot.slane %v7028, 5
        %v7175 = vsel %vm2518, %v7173, %v7174
        %v7176 = vrot.slane %v7149, 5
        %v7177 = vrot.slane %v7176, 4
        %v7178 = vrot.slane %v7029, 5
        %v7179 = vsel %vm2518, %v7177, %v7178
        %v7180 = vrot.slane %v7150, 5
        %v7181 = vrot.slane %v7180, 4
        %v7182 = vrot.slane %v7030, 5
        %v7183 = vsel %vm2518, %v7181, %v7182
        %v7184 = vrot.slane %v7151, 5
        %v7185 = vrot.slane %v7184, 4
        %v7186 = vrot.slane %v7031, 5
        %v7187 = vsel %vm2518, %v7185, %v7186
        %v7188 = vrot.slane %v7152, 5
        %v7189 = vrot.slane %v7188, 4
        %v7190 = vrot.slane %v7032, 5
        %v7191 = vsel %vm2518, %v7189, %v7190
        %v7192 = vrot.slane %v7153, 5
        %v7193 = vrot.slane %v7192, 4
        %v7194 = vrot.slane %v7033, 5
        %v7195 = vsel %vm2518, %v7193, %v7194
        %v7196 = vrot.slane %v7154, 5
        %v7197 = vrot.slane %v7196, 4
        %v7198 = vrot.slane %v7034, 5
        %v7199 = vsel %vm2518, %v7197, %v7198
        %v7200 = vrot.slane %v7155, 5
        %v7201 = vrot.slane %v7200, 4
        %v7202 = vrot.slane %v7035, 5
        %v7203 = vsel %vm2518, %v7201, %v7202
        %v7204 = vld [vmem:[%s2735] sm:$0xf]
        %v7205 = vld [vmem:[%s2735 + $0x8] sm:$0xf]
        %v7206 = vld [vmem:[%s2735 + $0x10] sm:$0xf]
        %v7207 = vld [vmem:[%s2735 + $0x18] sm:$0xf]
        %v7208 = vld [vmem:[%s2735 + $0x20] sm:$0xf]
        %v7209 = vld [vmem:[%s2735 + $0x28] sm:$0xf]
        %v7210 = vld [vmem:[%s2735 + $0x30] sm:$0xf]
        %v7211 = vld [vmem:[%s2735 + $0x38] sm:$0xf]
        %v7212 = vld [vmem:[%s2735 + $0x4] sm:$0x1]
        %v7213 = vld [vmem:[%s2735 + $0xc] sm:$0x1]
        %v7214 = vld [vmem:[%s2735 + $0x14] sm:$0x1]
        %v7215 = vld [vmem:[%s2735 + $0x1c] sm:$0x1]
        %v7216 = vld [vmem:[%s2735 + $0x24] sm:$0x1]
        %v7217 = vld [vmem:[%s2735 + $0x2c] sm:$0x1]
        %v7218 = vld [vmem:[%s2735 + $0x34] sm:$0x1]
        %v7219 = vld [vmem:[%s2735 + $0x3c] sm:$0x1]
        %v7221 = vshrl.u32 %v7204, 16
        %v7223 = vrot.slane %v7221, 4
        %v7224 = vshll.u32 %v7204, 16
        %v7226 = vrot.slane %v7224, 5
        %v7227 = vor.u32 %v7223, %v7226
        %v7228 = vrot.slane %v7227, 4
        %v7230 = vshll.u32 %v7212, 16
        %v7232 = vrot.slane %v7230, 5
        %v7233 = vsel %vm2379, %v7228, %v7232
        %v7235 = vshrl.u32 %v7205, 16
        %v7237 = vrot.slane %v7235, 4
        %v7238 = vshll.u32 %v7205, 16
        %v7240 = vrot.slane %v7238, 5
        %v7241 = vor.u32 %v7237, %v7240
        %v7242 = vrot.slane %v7241, 4
        %v7244 = vshll.u32 %v7213, 16
        %v7246 = vrot.slane %v7244, 5
        %v7247 = vsel %vm2379, %v7242, %v7246
        %v7249 = vshrl.u32 %v7206, 16
        %v7251 = vrot.slane %v7249, 4
        %v7252 = vshll.u32 %v7206, 16
        %v7254 = vrot.slane %v7252, 5
        %v7255 = vor.u32 %v7251, %v7254
        %v7256 = vrot.slane %v7255, 4
        %v7258 = vshll.u32 %v7214, 16
        %v7260 = vrot.slane %v7258, 5
        %v7261 = vsel %vm2379, %v7256, %v7260
        %v7263 = vshrl.u32 %v7207, 16
        %v7265 = vrot.slane %v7263, 4
        %v7266 = vshll.u32 %v7207, 16
        %v7268 = vrot.slane %v7266, 5
        %v7269 = vor.u32 %v7265, %v7268
        %v7270 = vrot.slane %v7269, 4
        %v7272 = vshll.u32 %v7215, 16
        %v7274 = vrot.slane %v7272, 5
        %v7275 = vsel %vm2379, %v7270, %v7274
        %v7277 = vshrl.u32 %v7208, 16
        %v7279 = vrot.slane %v7277, 4
        %v7280 = vshll.u32 %v7208, 16
        %v7282 = vrot.slane %v7280, 5
        %v7283 = vor.u32 %v7279, %v7282
        %v7284 = vrot.slane %v7283, 4
        %v7286 = vshll.u32 %v7216, 16
        %v7288 = vrot.slane %v7286, 5
        %v7289 = vsel %vm2379, %v7284, %v7288
        %v7291 = vshrl.u32 %v7209, 16
        %v7293 = vrot.slane %v7291, 4
        %v7294 = vshll.u32 %v7209, 16
        %v7296 = vrot.slane %v7294, 5
        %v7297 = vor.u32 %v7293, %v7296
        %v7298 = vrot.slane %v7297, 4
        %v7300 = vshll.u32 %v7217, 16
        %v7302 = vrot.slane %v7300, 5
        %v7303 = vsel %vm2379, %v7298, %v7302
        %v7305 = vshrl.u32 %v7210, 16
        %v7307 = vrot.slane %v7305, 4
        %v7308 = vshll.u32 %v7210, 16
        %v7310 = vrot.slane %v7308, 5
        %v7311 = vor.u32 %v7307, %v7310
        %v7312 = vrot.slane %v7311, 4
        %v7314 = vshll.u32 %v7218, 16
        %v7316 = vrot.slane %v7314, 5
        %v7317 = vsel %vm2379, %v7312, %v7316
        %v7319 = vshrl.u32 %v7211, 16
        %v7321 = vrot.slane %v7319, 4
        %v7322 = vshll.u32 %v7211, 16
        %v7324 = vrot.slane %v7322, 5
        %v7325 = vor.u32 %v7321, %v7324
        %v7326 = vrot.slane %v7325, 4
        %v7328 = vshll.u32 %v7219, 16
        %v7330 = vrot.slane %v7328, 5
        %v7331 = vsel %vm2379, %v7326, %v7330
        %v7332 = vld [vmem:[%s2735] sm:$0xe]
        %v7333 = vld [vmem:[%s2735 + $0x8] sm:$0xe]
        %v7334 = vld [vmem:[%s2735 + $0x10] sm:$0xe]
        %v7335 = vld [vmem:[%s2735 + $0x18] sm:$0xe]
        %v7336 = vld [vmem:[%s2735 + $0x20] sm:$0xe]
        %v7337 = vld [vmem:[%s2735 + $0x28] sm:$0xe]
        %v7338 = vld [vmem:[%s2735 + $0x30] sm:$0xe]
        %v7339 = vld [vmem:[%s2735 + $0x38] sm:$0xe]
        %v7356 = vrot.slane %v7332, 5
        %v7357 = vrot.slane %v7356, 4
        %v7358 = vrot.slane %v7212, 5
        %v7359 = vsel %vm2518, %v7357, %v7358
        %v7360 = vrot.slane %v7333, 5
        %v7361 = vrot.slane %v7360, 4
        %v7362 = vrot.slane %v7213, 5
        %v7363 = vsel %vm2518, %v7361, %v7362
        %v7364 = vrot.slane %v7334, 5
        %v7365 = vrot.slane %v7364, 4
        %v7366 = vrot.slane %v7214, 5
        %v7367 = vsel %vm2518, %v7365, %v7366
        %v7368 = vrot.slane %v7335, 5
        %v7369 = vrot.slane %v7368, 4
        %v7370 = vrot.slane %v7215, 5
        %v7371 = vsel %vm2518, %v7369, %v7370
        %v7372 = vrot.slane %v7336, 5
        %v7373 = vrot.slane %v7372, 4
        %v7374 = vrot.slane %v7216, 5
        %v7375 = vsel %vm2518, %v7373, %v7374
        %v7376 = vrot.slane %v7337, 5
        %v7377 = vrot.slane %v7376, 4
        %v7378 = vrot.slane %v7217, 5
        %v7379 = vsel %vm2518, %v7377, %v7378
        %v7380 = vrot.slane %v7338, 5
        %v7381 = vrot.slane %v7380, 4
        %v7382 = vrot.slane %v7218, 5
        %v7383 = vsel %vm2518, %v7381, %v7382
        %v7384 = vrot.slane %v7339, 5
        %v7385 = vrot.slane %v7384, 4
        %v7386 = vrot.slane %v7219, 5
        %v7387 = vsel %vm2518, %v7385, %v7386
        %v7396 = vunpack.c.l.b16 %v6836
        %v7397 = vunpack.c.l.b16 %v6837
        %v7398 = vunpack.c.l.b16 %v6838
        %v7399 = vunpack.c.l.b16 %v6839
        %v7400 = vunpack.c.l.b16 %v6840
        %v7401 = vunpack.c.l.b16 %v6841
        %v7402 = vunpack.c.l.b16 %v6842
        %v7403 = vunpack.c.l.b16 %v6843
        %v7404 = vpack.c.b16 %v7397, %v7396
        %v7405 = vpack.c.b16 %v7399, %v7398
        %v7406 = vpack.c.b16 %v7401, %v7400
        %v7407 = vpack.c.b16 %v7403, %v7402
        %v7412 = vunpack.c.l.b16 %v6865
        %v7413 = vunpack.c.l.b16 %v6879
        %v7414 = vunpack.c.l.b16 %v6893
        %v7415 = vunpack.c.l.b16 %v6907
        %v7416 = vunpack.c.l.b16 %v6921
        %v7417 = vunpack.c.l.b16 %v6935
        %v7418 = vunpack.c.l.b16 %v6949
        %v7419 = vunpack.c.l.b16 %v6963
        %v7420 = vpack.c.b16 %v7413, %v7412
        %v7421 = vpack.c.b16 %v7415, %v7414
        %v7422 = vpack.c.b16 %v7417, %v7416
        %v7423 = vpack.c.b16 %v7419, %v7418
        %v7428 = vunpack.c.l.b16 %v6991
        %v7429 = vunpack.c.l.b16 %v6995
        %v7430 = vunpack.c.l.b16 %v6999
        %v7431 = vunpack.c.l.b16 %v7003
        %v7432 = vunpack.c.l.b16 %v7007
        %v7433 = vunpack.c.l.b16 %v7011
        %v7434 = vunpack.c.l.b16 %v7015
        %v7435 = vunpack.c.l.b16 %v7019
        %v7436 = vpack.c.b16 %v7429, %v7428
        %v7437 = vpack.c.b16 %v7431, %v7430
        %v7438 = vpack.c.b16 %v7433, %v7432
        %v7439 = vpack.c.b16 %v7435, %v7434
        %v7452 = vunpack.c.l.b16 %v7020
        %v7453 = vunpack.c.l.b16 %v7021
        %v7454 = vunpack.c.l.b16 %v7022
        %v7455 = vunpack.c.l.b16 %v7023
        %v7456 = vunpack.c.l.b16 %v7024
        %v7457 = vunpack.c.l.b16 %v7025
        %v7458 = vunpack.c.l.b16 %v7026
        %v7459 = vunpack.c.l.b16 %v7027
        %v7460 = vpack.c.b16 %v7453, %v7452
        %v7461 = vpack.c.b16 %v7455, %v7454
        %v7462 = vpack.c.b16 %v7457, %v7456
        %v7463 = vpack.c.b16 %v7459, %v7458
        %v7468 = vunpack.c.l.b16 %v7049
        %v7469 = vunpack.c.l.b16 %v7063
        %v7470 = vunpack.c.l.b16 %v7077
        %v7471 = vunpack.c.l.b16 %v7091
        %v7472 = vunpack.c.l.b16 %v7105
        %v7473 = vunpack.c.l.b16 %v7119
        %v7474 = vunpack.c.l.b16 %v7133
        %v7475 = vunpack.c.l.b16 %v7147
        %v7476 = vpack.c.b16 %v7469, %v7468
        %v7477 = vpack.c.b16 %v7471, %v7470
        %v7478 = vpack.c.b16 %v7473, %v7472
        %v7479 = vpack.c.b16 %v7475, %v7474
        %v7484 = vunpack.c.l.b16 %v7175
        %v7485 = vunpack.c.l.b16 %v7179
        %v7486 = vunpack.c.l.b16 %v7183
        %v7487 = vunpack.c.l.b16 %v7187
        %v7488 = vunpack.c.l.b16 %v7191
        %v7489 = vunpack.c.l.b16 %v7195
        %v7490 = vunpack.c.l.b16 %v7199
        %v7491 = vunpack.c.l.b16 %v7203
        %v7492 = vpack.c.b16 %v7485, %v7484
        %v7493 = vpack.c.b16 %v7487, %v7486
        %v7494 = vpack.c.b16 %v7489, %v7488
        %v7495 = vpack.c.b16 %v7491, %v7490
        %v7508 = vunpack.c.l.b16 %v7204
        %v7509 = vunpack.c.l.b16 %v7205
        %v7510 = vunpack.c.l.b16 %v7206
        %v7511 = vunpack.c.l.b16 %v7207
        %v7512 = vunpack.c.l.b16 %v7208
        %v7513 = vunpack.c.l.b16 %v7209
        %v7514 = vunpack.c.l.b16 %v7210
        %v7515 = vunpack.c.l.b16 %v7211
        %v7516 = vpack.c.b16 %v7509, %v7508
        %v7517 = vpack.c.b16 %v7511, %v7510
        %v7518 = vpack.c.b16 %v7513, %v7512
        %v7519 = vpack.c.b16 %v7515, %v7514
        %v7524 = vunpack.c.l.b16 %v7233
        %v7525 = vunpack.c.l.b16 %v7247
        %v7526 = vunpack.c.l.b16 %v7261
        %v7527 = vunpack.c.l.b16 %v7275
        %v7528 = vunpack.c.l.b16 %v7289
        %v7529 = vunpack.c.l.b16 %v7303
        %v7530 = vunpack.c.l.b16 %v7317
        %v7531 = vunpack.c.l.b16 %v7331
        %v7532 = vpack.c.b16 %v7525, %v7524
        %v7533 = vpack.c.b16 %v7527, %v7526
        %v7534 = vpack.c.b16 %v7529, %v7528
        %v7535 = vpack.c.b16 %v7531, %v7530
        %v7540 = vunpack.c.l.b16 %v7359
        %v7541 = vunpack.c.l.b16 %v7363
        %v7542 = vunpack.c.l.b16 %v7367
        %v7543 = vunpack.c.l.b16 %v7371
        %v7544 = vunpack.c.l.b16 %v7375
        %v7545 = vunpack.c.l.b16 %v7379
        %v7546 = vunpack.c.l.b16 %v7383
        %v7547 = vunpack.c.l.b16 %v7387
        %v7548 = vpack.c.b16 %v7541, %v7540
        %v7549 = vpack.c.b16 %v7543, %v7542
        %v7550 = vpack.c.b16 %v7545, %v7544
        %v7551 = vpack.c.b16 %v7547, %v7546
        %v7556 = vld [vmem:[%s19] sm:$0xf]
        %v7557 = vld [vmem:[%s19 + $0x4] sm:$0xf]
        %v7558 = vld [vmem:[%s19 + $0x8] sm:$0xf]
        %v7559 = vld [vmem:[%s19 + $0xc] sm:$0xf]
        %v7560 = vld [vmem:[%s19 + $0x10] sm:$0xf]
        %v7561 = vld [vmem:[%s19 + $0x14] sm:$0xf]
        %v7562 = vld [vmem:[%s19 + $0x18] sm:$0xf]
        %v7563 = vld [vmem:[%s19 + $0x1c] sm:$0xf]
        %v7564 = vld [vmem:[%s19 + $0x20] sm:$0xf]
        %v7565 = vld [vmem:[%s19 + $0x24] sm:$0xf]
        %v7566 = vld [vmem:[%s19 + $0x28] sm:$0xf]
        %v7567 = vld [vmem:[%s19 + $0x2c] sm:$0xf]
        %v7568 = vld [vmem:[%s19 + $0x30] sm:$0xf]
        %v7569 = vld [vmem:[%s19 + $0x34] sm:$0xf]
        %v7570 = vld [vmem:[%s19 + $0x38] sm:$0xf]
        %v7571 = vld [vmem:[%s19 + $0x3c] sm:$0xf]
        %v7572 = vld [vmem:[%s19 + $0x40] sm:$0xf]
        %v7573 = vld [vmem:[%s19 + $0x44] sm:$0xf]
        %v7574 = vld [vmem:[%s19 + $0x48] sm:$0xf]
        %v7575 = vld [vmem:[%s19 + $0x4c] sm:$0xf]
        %v7576 = vld [vmem:[%s19 + $0x50] sm:$0xf]
        %v7577 = vld [vmem:[%s19 + $0x54] sm:$0xf]
        %v7578 = vld [vmem:[%s19 + $0x58] sm:$0xf]
        %v7579 = vld [vmem:[%s19 + $0x5c] sm:$0xf]
        %v7580 = vld [vmem:[%s19 + $0x60] sm:$0xf]
        %v7581 = vld [vmem:[%s19 + $0x64] sm:$0xf]
        %v7582 = vld [vmem:[%s19 + $0x68] sm:$0xf]
        %v7583 = vld [vmem:[%s19 + $0x6c] sm:$0xf]
        %v7584 = vld [vmem:[%s19 + $0x70] sm:$0xf]
        %v7585 = vld [vmem:[%s19 + $0x74] sm:$0xf]
        %v7586 = vld [vmem:[%s19 + $0x78] sm:$0xf]
        %v7587 = vld [vmem:[%s19 + $0x7c] sm:$0xf]
        %v7588 = vld [vmem:[%s19 + $0x80] sm:$0xf]
        %v7589 = vld [vmem:[%s19 + $0x84] sm:$0xf]
        %v7590 = vld [vmem:[%s19 + $0x88] sm:$0xf]
        %v7591 = vld [vmem:[%s19 + $0x8c] sm:$0xf]
        %v7592 = vld [vmem:[%s19 + $0x90] sm:$0xf]
        %v7593 = vld [vmem:[%s19 + $0x94] sm:$0xf]
        %v7594 = vld [vmem:[%s19 + $0x98] sm:$0xf]
        %v7595 = vld [vmem:[%s19 + $0x9c] sm:$0xf]
        %v7596 = vld [vmem:[%s19 + $0xa0] sm:$0xf]
        %v7597 = vld [vmem:[%s19 + $0xa4] sm:$0xf]
        %v7598 = vld [vmem:[%s19 + $0xa8] sm:$0xf]
        %v7599 = vld [vmem:[%s19 + $0xac] sm:$0xf]
        %v7600 = vld [vmem:[%s19 + $0xb0] sm:$0xf]
        %v7601 = vld [vmem:[%s19 + $0xb4] sm:$0xf]
        %v7602 = vld [vmem:[%s19 + $0xb8] sm:$0xf]
        %v7603 = vld [vmem:[%s19 + $0xbc] sm:$0xf]
        %v7604 = vld [vmem:[%s19 + $0xc0] sm:$0xf]
        %v7605 = vld [vmem:[%s19 + $0xc4] sm:$0xf]
        %v7606 = vld [vmem:[%s19 + $0xc8] sm:$0xf]
        %v7607 = vld [vmem:[%s19 + $0xcc] sm:$0xf]
        %v7608 = vld [vmem:[%s19 + $0xd0] sm:$0xf]
        %v7609 = vld [vmem:[%s19 + $0xd4] sm:$0xf]
        %v7610 = vld [vmem:[%s19 + $0xd8] sm:$0xf]
        %v7611 = vld [vmem:[%s19 + $0xdc] sm:$0xf]
        %v7612 = vld [vmem:[%s19 + $0xe0] sm:$0xf]
        %v7613 = vld [vmem:[%s19 + $0xe4] sm:$0xf]
        %v7614 = vld [vmem:[%s19 + $0xe8] sm:$0xf]
        %v7615 = vld [vmem:[%s19 + $0xec] sm:$0xf]
        %v7616 = vld [vmem:[%s19 + $0xf0] sm:$0xf]
        %v7617 = vld [vmem:[%s19 + $0xf4] sm:$0xf]
        %v7618 = vld [vmem:[%s19 + $0xf8] sm:$0xf]
        %v7619 = vld [vmem:[%s19 + $0xfc] sm:$0xf]
        %v7620 = vld [vmem:[%s19 + $0x100] sm:$0xf]
        %v7621 = vld [vmem:[%s19 + $0x104] sm:$0xf]
        %v7622 = vld [vmem:[%s19 + $0x108] sm:$0xf]
        %v7623 = vld [vmem:[%s19 + $0x10c] sm:$0xf]
        %v7624 = vld [vmem:[%s19 + $0x110] sm:$0xf]
        %v7625 = vld [vmem:[%s19 + $0x114] sm:$0xf]
        %v7626 = vld [vmem:[%s19 + $0x118] sm:$0xf]
        %v7627 = vld [vmem:[%s19 + $0x11c] sm:$0xf]
        %v7628 = vld [vmem:[%s19 + $0x120] sm:$0xf]
        %v7629 = vld [vmem:[%s19 + $0x124] sm:$0xf]
        %v7630 = vld [vmem:[%s19 + $0x128] sm:$0xf]
        %v7631 = vld [vmem:[%s19 + $0x12c] sm:$0xf]
        %v7632 = vld [vmem:[%s19 + $0x130] sm:$0xf]
        %v7633 = vld [vmem:[%s19 + $0x134] sm:$0xf]
        %v7634 = vld [vmem:[%s19 + $0x138] sm:$0xf]
        %v7635 = vld [vmem:[%s19 + $0x13c] sm:$0xf]
        %v7636 = vld [vmem:[%s19 + $0x140] sm:$0xf]
        %v7637 = vld [vmem:[%s19 + $0x144] sm:$0xf]
        %v7638 = vld [vmem:[%s19 + $0x148] sm:$0xf]
        %v7639 = vld [vmem:[%s19 + $0x14c] sm:$0xf]
        %v7640 = vld [vmem:[%s19 + $0x150] sm:$0xf]
        %v7641 = vld [vmem:[%s19 + $0x154] sm:$0xf]
        %v7642 = vld [vmem:[%s19 + $0x158] sm:$0xf]
        %v7643 = vld [vmem:[%s19 + $0x15c] sm:$0xf]
        %v7644 = vld [vmem:[%s19 + $0x160] sm:$0xf]
        %v7645 = vld [vmem:[%s19 + $0x164] sm:$0xf]
        %v7646 = vld [vmem:[%s19 + $0x168] sm:$0xf]
        %v7647 = vld [vmem:[%s19 + $0x16c] sm:$0xf]
        %v7648 = vld [vmem:[%s19 + $0x170] sm:$0xf]
        %v7649 = vld [vmem:[%s19 + $0x174] sm:$0xf]
        %v7650 = vld [vmem:[%s19 + $0x178] sm:$0xf]
        %v7651 = vld [vmem:[%s19 + $0x17c] sm:$0xf]
        %v7652 = vld [vmem:[%s19 + $0x180] sm:$0xf]
        %v7653 = vld [vmem:[%s19 + $0x184] sm:$0xf]
        %v7654 = vld [vmem:[%s19 + $0x188] sm:$0xf]
        %v7655 = vld [vmem:[%s19 + $0x18c] sm:$0xf]
        %v7656 = vld [vmem:[%s19 + $0x190] sm:$0xf]
        %v7657 = vld [vmem:[%s19 + $0x194] sm:$0xf]
        %v7658 = vld [vmem:[%s19 + $0x198] sm:$0xf]
        %v7659 = vld [vmem:[%s19 + $0x19c] sm:$0xf]
        %v7660 = vld [vmem:[%s19 + $0x1a0] sm:$0xf]
        %v7661 = vld [vmem:[%s19 + $0x1a4] sm:$0xf]
        %v7662 = vld [vmem:[%s19 + $0x1a8] sm:$0xf]
        %v7663 = vld [vmem:[%s19 + $0x1ac] sm:$0xf]
        %v7664 = vld [vmem:[%s19 + $0x1b0] sm:$0xf]
        %v7665 = vld [vmem:[%s19 + $0x1b4] sm:$0xf]
        %v7666 = vld [vmem:[%s19 + $0x1b8] sm:$0xf]
        %v7667 = vld [vmem:[%s19 + $0x1bc] sm:$0xf]
        %v7668 = vld [vmem:[%s19 + $0x1c0] sm:$0xf]
        %v7669 = vld [vmem:[%s19 + $0x1c4] sm:$0xf]
        %v7670 = vld [vmem:[%s19 + $0x1c8] sm:$0xf]
        %v7671 = vld [vmem:[%s19 + $0x1cc] sm:$0xf]
        %v7672 = vld [vmem:[%s19 + $0x1d0] sm:$0xf]
        %v7673 = vld [vmem:[%s19 + $0x1d4] sm:$0xf]
        %v7674 = vld [vmem:[%s19 + $0x1d8] sm:$0xf]
        %v7675 = vld [vmem:[%s19 + $0x1dc] sm:$0xf]
        %v7676 = vld [vmem:[%s19 + $0x1e0] sm:$0xf]
        %v7677 = vld [vmem:[%s19 + $0x1e4] sm:$0xf]
        %v7678 = vld [vmem:[%s19 + $0x1e8] sm:$0xf]
        %v7679 = vld [vmem:[%s19 + $0x1ec] sm:$0xf]
        %v7680 = vld [vmem:[%s19 + $0x1f0] sm:$0xf]
        %v7681 = vld [vmem:[%s19 + $0x1f4] sm:$0xf]
        %v7682 = vld [vmem:[%s19 + $0x1f8] sm:$0xf]
        %v7683 = vld [vmem:[%s19 + $0x1fc] sm:$0xf]
        %v7684 = vld [vmem:[%s19 + $0x200] sm:$0xf]
        %v7685 = vld [vmem:[%s19 + $0x204] sm:$0xf]
        %v7686 = vld [vmem:[%s19 + $0x208] sm:$0xf]
        %v7687 = vld [vmem:[%s19 + $0x20c] sm:$0xf]
        %v7688 = vld [vmem:[%s19 + $0x210] sm:$0xf]
        %v7689 = vld [vmem:[%s19 + $0x214] sm:$0xf]
        %v7690 = vld [vmem:[%s19 + $0x218] sm:$0xf]
        %v7691 = vld [vmem:[%s19 + $0x21c] sm:$0xf]
        %v7692 = vld [vmem:[%s19 + $0x220] sm:$0xf]
        %v7693 = vld [vmem:[%s19 + $0x224] sm:$0xf]
        %v7694 = vld [vmem:[%s19 + $0x228] sm:$0xf]
        %v7695 = vld [vmem:[%s19 + $0x22c] sm:$0xf]
        %v7696 = vld [vmem:[%s19 + $0x230] sm:$0xf]
        %v7697 = vld [vmem:[%s19 + $0x234] sm:$0xf]
        %v7698 = vld [vmem:[%s19 + $0x238] sm:$0xf]
        %v7699 = vld [vmem:[%s19 + $0x23c] sm:$0xf]
        %v7700 = vld [vmem:[%s20] sm:$0x1]
        %v7702 = vperm.slane %v7700, 0
        %v7848 = vunpack.c.l.b16 %v7556
        %v7849 = vunpack.c.l.b16 %v7557
        %v7850 = vunpack.c.l.b16 %v7558
        %v7851 = vunpack.c.l.b16 %v7559
        %v7852 = vunpack.c.l.b16 %v7560
        %v7853 = vunpack.c.l.b16 %v7561
        %v7854 = vunpack.c.l.b16 %v7562
        %v7855 = vunpack.c.l.b16 %v7563
        %v7856 = vunpack.c.l.b16 %v7564
        %v7857 = vunpack.c.l.b16 %v7565
        %v7858 = vunpack.c.l.b16 %v7566
        %v7859 = vunpack.c.l.b16 %v7567
        %v7860 = vunpack.c.l.b16 %v7568
        %v7861 = vunpack.c.l.b16 %v7569
        %v7862 = vunpack.c.l.b16 %v7570
        %v7863 = vunpack.c.l.b16 %v7571
        %v7864 = vunpack.c.l.b16 %v7572
        %v7865 = vunpack.c.l.b16 %v7573
        %v7866 = vunpack.c.l.b16 %v7574
        %v7867 = vunpack.c.l.b16 %v7575
        %v7868 = vunpack.c.l.b16 %v7576
        %v7869 = vunpack.c.l.b16 %v7577
        %v7870 = vunpack.c.l.b16 %v7578
        %v7871 = vunpack.c.l.b16 %v7579
        %v7872 = vunpack.c.l.b16 %v7580
        %v7873 = vunpack.c.l.b16 %v7581
        %v7874 = vunpack.c.l.b16 %v7582
        %v7875 = vunpack.c.l.b16 %v7583
        %v7876 = vunpack.c.l.b16 %v7584
        %v7877 = vunpack.c.l.b16 %v7585
        %v7878 = vunpack.c.l.b16 %v7586
        %v7879 = vunpack.c.l.b16 %v7587
        %v7880 = vunpack.c.l.b16 %v7588
        %v7881 = vunpack.c.l.b16 %v7589
        %v7882 = vunpack.c.l.b16 %v7590
        %v7883 = vunpack.c.l.b16 %v7591
        %v7884 = vunpack.c.l.b16 %v7592
        %v7885 = vunpack.c.l.b16 %v7593
        %v7886 = vunpack.c.l.b16 %v7594
        %v7887 = vunpack.c.l.b16 %v7595
        %v7888 = vunpack.c.l.b16 %v7596
        %v7889 = vunpack.c.l.b16 %v7597
        %v7890 = vunpack.c.l.b16 %v7598
        %v7891 = vunpack.c.l.b16 %v7599
        %v7892 = vunpack.c.l.b16 %v7600
        %v7893 = vunpack.c.l.b16 %v7601
        %v7894 = vunpack.c.l.b16 %v7602
        %v7895 = vunpack.c.l.b16 %v7603
        %v7896 = vunpack.c.l.b16 %v7604
        %v7897 = vunpack.c.l.b16 %v7605
        %v7898 = vunpack.c.l.b16 %v7606
        %v7899 = vunpack.c.l.b16 %v7607
        %v7900 = vunpack.c.l.b16 %v7608
        %v7901 = vunpack.c.l.b16 %v7609
        %v7902 = vunpack.c.l.b16 %v7610
        %v7903 = vunpack.c.l.b16 %v7611
        %v7904 = vunpack.c.l.b16 %v7612
        %v7905 = vunpack.c.l.b16 %v7613
        %v7906 = vunpack.c.l.b16 %v7614
        %v7907 = vunpack.c.l.b16 %v7615
        %v7908 = vunpack.c.l.b16 %v7616
        %v7909 = vunpack.c.l.b16 %v7617
        %v7910 = vunpack.c.l.b16 %v7618
        %v7911 = vunpack.c.l.b16 %v7619
        %v7912 = vunpack.c.l.b16 %v7620
        %v7913 = vunpack.c.l.b16 %v7621
        %v7914 = vunpack.c.l.b16 %v7622
        %v7915 = vunpack.c.l.b16 %v7623
        %v7916 = vunpack.c.l.b16 %v7624
        %v7917 = vunpack.c.l.b16 %v7625
        %v7918 = vunpack.c.l.b16 %v7626
        %v7919 = vunpack.c.l.b16 %v7627
        %v7920 = vunpack.c.l.b16 %v7628
        %v7921 = vunpack.c.l.b16 %v7629
        %v7922 = vunpack.c.l.b16 %v7630
        %v7923 = vunpack.c.l.b16 %v7631
        %v7924 = vunpack.c.l.b16 %v7632
        %v7925 = vunpack.c.l.b16 %v7633
        %v7926 = vunpack.c.l.b16 %v7634
        %v7927 = vunpack.c.l.b16 %v7635
        %v7928 = vunpack.c.l.b16 %v7636
        %v7929 = vunpack.c.l.b16 %v7637
        %v7930 = vunpack.c.l.b16 %v7638
        %v7931 = vunpack.c.l.b16 %v7639
        %v7932 = vunpack.c.l.b16 %v7640
        %v7933 = vunpack.c.l.b16 %v7641
        %v7934 = vunpack.c.l.b16 %v7642
        %v7935 = vunpack.c.l.b16 %v7643
        %v7936 = vunpack.c.l.b16 %v7644
        %v7937 = vunpack.c.l.b16 %v7645
        %v7938 = vunpack.c.l.b16 %v7646
        %v7939 = vunpack.c.l.b16 %v7647
        %v7940 = vunpack.c.l.b16 %v7648
        %v7941 = vunpack.c.l.b16 %v7649
        %v7942 = vunpack.c.l.b16 %v7650
        %v7943 = vunpack.c.l.b16 %v7651
        %v7944 = vunpack.c.l.b16 %v7652
        %v7945 = vunpack.c.l.b16 %v7653
        %v7946 = vunpack.c.l.b16 %v7654
        %v7947 = vunpack.c.l.b16 %v7655
        %v7948 = vunpack.c.l.b16 %v7656
        %v7949 = vunpack.c.l.b16 %v7657
        %v7950 = vunpack.c.l.b16 %v7658
        %v7951 = vunpack.c.l.b16 %v7659
        %v7952 = vunpack.c.l.b16 %v7660
        %v7953 = vunpack.c.l.b16 %v7661
        %v7954 = vunpack.c.l.b16 %v7662
        %v7955 = vunpack.c.l.b16 %v7663
        %v7956 = vunpack.c.l.b16 %v7664
        %v7957 = vunpack.c.l.b16 %v7665
        %v7958 = vunpack.c.l.b16 %v7666
        %v7959 = vunpack.c.l.b16 %v7667
        %v7960 = vunpack.c.l.b16 %v7668
        %v7961 = vunpack.c.l.b16 %v7669
        %v7962 = vunpack.c.l.b16 %v7670
        %v7963 = vunpack.c.l.b16 %v7671
        %v7964 = vunpack.c.l.b16 %v7672
        %v7965 = vunpack.c.l.b16 %v7673
        %v7966 = vunpack.c.l.b16 %v7674
        %v7967 = vunpack.c.l.b16 %v7675
        %v7968 = vunpack.c.l.b16 %v7676
        %v7969 = vunpack.c.l.b16 %v7677
        %v7970 = vunpack.c.l.b16 %v7678
        %v7971 = vunpack.c.l.b16 %v7679
        %v7972 = vunpack.c.l.b16 %v7680
        %v7973 = vunpack.c.l.b16 %v7681
        %v7974 = vunpack.c.l.b16 %v7682
        %v7975 = vunpack.c.l.b16 %v7683
        %v7976 = vunpack.c.l.b16 %v7684
        %v7977 = vunpack.c.l.b16 %v7685
        %v7978 = vunpack.c.l.b16 %v7686
        %v7979 = vunpack.c.l.b16 %v7687
        %v7980 = vunpack.c.l.b16 %v7688
        %v7981 = vunpack.c.l.b16 %v7689
        %v7982 = vunpack.c.l.b16 %v7690
        %v7983 = vunpack.c.l.b16 %v7691
        %v7984 = vunpack.c.l.b16 %v7692
        %v7985 = vunpack.c.l.b16 %v7693
        %v7986 = vunpack.c.l.b16 %v7694
        %v7987 = vunpack.c.l.b16 %v7695
        %v7988 = vunpack.c.l.b16 %v7696
        %v7989 = vunpack.c.l.b16 %v7697
        %v7990 = vunpack.c.l.b16 %v7698
        %v7991 = vunpack.c.l.b16 %v7699
        %v7992 = vpack.c.b16 %v7849, %v7848
        %v7993 = vpack.c.b16 %v7851, %v7850
        %v7994 = vpack.c.b16 %v7853, %v7852
        %v7995 = vpack.c.b16 %v7855, %v7854
        %v7996 = vpack.c.b16 %v7857, %v7856
        %v7997 = vpack.c.b16 %v7859, %v7858
        %v7998 = vpack.c.b16 %v7861, %v7860
        %v7999 = vpack.c.b16 %v7863, %v7862
        %v8000 = vpack.c.b16 %v7865, %v7864
        %v8001 = vpack.c.b16 %v7867, %v7866
        %v8002 = vpack.c.b16 %v7869, %v7868
        %v8003 = vpack.c.b16 %v7871, %v7870
        %v8004 = vpack.c.b16 %v7873, %v7872
        %v8005 = vpack.c.b16 %v7875, %v7874
        %v8006 = vpack.c.b16 %v7877, %v7876
        %v8007 = vpack.c.b16 %v7879, %v7878
        %v8008 = vpack.c.b16 %v7881, %v7880
        %v8009 = vpack.c.b16 %v7883, %v7882
        %v8010 = vpack.c.b16 %v7885, %v7884
        %v8011 = vpack.c.b16 %v7887, %v7886
        %v8012 = vpack.c.b16 %v7889, %v7888
        %v8013 = vpack.c.b16 %v7891, %v7890
        %v8014 = vpack.c.b16 %v7893, %v7892
        %v8015 = vpack.c.b16 %v7895, %v7894
        %v8016 = vpack.c.b16 %v7897, %v7896
        %v8017 = vpack.c.b16 %v7899, %v7898
        %v8018 = vpack.c.b16 %v7901, %v7900
        %v8019 = vpack.c.b16 %v7903, %v7902
        %v8020 = vpack.c.b16 %v7905, %v7904
        %v8021 = vpack.c.b16 %v7907, %v7906
        %v8022 = vpack.c.b16 %v7909, %v7908
        %v8023 = vpack.c.b16 %v7911, %v7910
        %v8024 = vpack.c.b16 %v7913, %v7912
        %v8025 = vpack.c.b16 %v7915, %v7914
        %v8026 = vpack.c.b16 %v7917, %v7916
        %v8027 = vpack.c.b16 %v7919, %v7918
        %v8028 = vpack.c.b16 %v7921, %v7920
        %v8029 = vpack.c.b16 %v7923, %v7922
        %v8030 = vpack.c.b16 %v7925, %v7924
        %v8031 = vpack.c.b16 %v7927, %v7926
        %v8032 = vpack.c.b16 %v7929, %v7928
        %v8033 = vpack.c.b16 %v7931, %v7930
        %v8034 = vpack.c.b16 %v7933, %v7932
        %v8035 = vpack.c.b16 %v7935, %v7934
        %v8036 = vpack.c.b16 %v7937, %v7936
        %v8037 = vpack.c.b16 %v7939, %v7938
        %v8038 = vpack.c.b16 %v7941, %v7940
        %v8039 = vpack.c.b16 %v7943, %v7942
        %v8040 = vpack.c.b16 %v7945, %v7944
        %v8041 = vpack.c.b16 %v7947, %v7946
        %v8042 = vpack.c.b16 %v7949, %v7948
        %v8043 = vpack.c.b16 %v7951, %v7950
        %v8044 = vpack.c.b16 %v7953, %v7952
        %v8045 = vpack.c.b16 %v7955, %v7954
        %v8046 = vpack.c.b16 %v7957, %v7956
        %v8047 = vpack.c.b16 %v7959, %v7958
        %v8048 = vpack.c.b16 %v7961, %v7960
        %v8049 = vpack.c.b16 %v7963, %v7962
        %v8050 = vpack.c.b16 %v7965, %v7964
        %v8051 = vpack.c.b16 %v7967, %v7966
        %v8052 = vpack.c.b16 %v7969, %v7968
        %v8053 = vpack.c.b16 %v7971, %v7970
        %v8054 = vpack.c.b16 %v7973, %v7972
        %v8055 = vpack.c.b16 %v7975, %v7974
        %v8056 = vpack.c.b16 %v7977, %v7976
        %v8057 = vpack.c.b16 %v7979, %v7978
        %v8058 = vpack.c.b16 %v7981, %v7980
        %v8059 = vpack.c.b16 %v7983, %v7982
        %v8060 = vpack.c.b16 %v7985, %v7984
        %v8061 = vpack.c.b16 %v7987, %v7986
        %v8062 = vpack.c.b16 %v7989, %v7988
        %v8063 = vpack.c.b16 %v7991, %v7990
        %8136 = vmatpush.bf16.msra.mxu0 %v7999
        %8137 = vmatpush.bf16.msra.mxu0 %v7998
        %8138 = vmatpush.bf16.msra.mxu0 %v7997
        %8139 = vmatpush.bf16.msra.mxu0 %v7996
        %8140 = vmatpush.bf16.msra.mxu0 %v7995
        %8141 = vmatpush.bf16.msra.mxu0 %v7994
        %8142 = vmatpush.bf16.msra.mxu0 %v7993
        %8143 = vmatpush.bf16.msra.mxu0 %v7992
        %8144 = vmatmul.bf16.gmra.mxu0 %v7404
        %v8145 = vpop.f32.mrf.mxu0
        %v8146 = vadd.f32 %v7702, %v8145
        %v8147 = vpop.f32.mrf.mxu0
        %v8148 = vadd.f32 %v7702, %v8147
        %8149 = vmatmul.bf16.gmra.mxu0 %v7405
        %v8150 = vpop.f32.mrf.mxu0
        %v8151 = vadd.f32 %v7702, %v8150
        %v8152 = vpop.f32.mrf.mxu0
        %v8153 = vadd.f32 %v7702, %v8152
        %8154 = vmatmul.bf16.gmra.mxu0 %v7406
        %v8155 = vpop.f32.mrf.mxu0
        %v8156 = vadd.f32 %v7702, %v8155
        %v8157 = vpop.f32.mrf.mxu0
        %v8158 = vadd.f32 %v7702, %v8157
        %8159 = vmatmul.bf16.gmra.mxu0 %v7407
        %v8160 = vpop.f32.mrf.mxu0
        %v8161 = vadd.f32 %v7702, %v8160
        %v8162 = vpop.f32.mrf.mxu0
        %v8163 = vadd.f32 %v7702, %v8162
        %8164 = vdwg.mxu0
        %8165 = vmatpush.bf16.msra.mxu0 %v8007
        %8166 = vmatpush.bf16.msra.mxu0 %v8006
        %8167 = vmatpush.bf16.msra.mxu0 %v8005
        %8168 = vmatpush.bf16.msra.mxu0 %v8004
        %8169 = vmatpush.bf16.msra.mxu0 %v8003
        %8170 = vmatpush.bf16.msra.mxu0 %v8002
        %8171 = vmatpush.bf16.msra.mxu0 %v8001
        %8172 = vmatpush.bf16.msra.mxu0 %v8000
        %8173 = vmatmul.bf16.gmra.mxu0 %v7420
        %v8174 = vpop.f32.mrf.mxu0
        %v8175 = vadd.f32 %v8146, %v8174
        %v8176 = vpop.f32.mrf.mxu0
        %v8177 = vadd.f32 %v8148, %v8176
        %8178 = vmatmul.bf16.gmra.mxu0 %v7421
        %v8179 = vpop.f32.mrf.mxu0
        %v8180 = vadd.f32 %v8151, %v8179
        %v8181 = vpop.f32.mrf.mxu0
        %v8182 = vadd.f32 %v8153, %v8181
        %8183 = vmatmul.bf16.gmra.mxu0 %v7422
        %v8184 = vpop.f32.mrf.mxu0
        %v8185 = vadd.f32 %v8156, %v8184
        %v8186 = vpop.f32.mrf.mxu0
        %v8187 = vadd.f32 %v8158, %v8186
        %8188 = vmatmul.bf16.gmra.mxu0 %v7423
        %v8189 = vpop.f32.mrf.mxu0
        %v8190 = vadd.f32 %v8161, %v8189
        %v8191 = vpop.f32.mrf.mxu0
        %v8192 = vadd.f32 %v8163, %v8191
        %8193 = vdwg.mxu0
        %8194 = vmatpush.bf16.msra.mxu0 %v8015
        %8195 = vmatpush.bf16.msra.mxu0 %v8014
        %8196 = vmatpush.bf16.msra.mxu0 %v8013
        %8197 = vmatpush.bf16.msra.mxu0 %v8012
        %8198 = vmatpush.bf16.msra.mxu0 %v8011
        %8199 = vmatpush.bf16.msra.mxu0 %v8010
        %8200 = vmatpush.bf16.msra.mxu0 %v8009
        %8201 = vmatpush.bf16.msra.mxu0 %v8008
        %8202 = vmatmul.bf16.gmra.mxu0 %v7436
        %v8203 = vpop.f32.mrf.mxu0
        %v8204 = vadd.f32 %v8175, %v8203
        %v8205 = vpop.f32.mrf.mxu0
        %v8206 = vadd.f32 %v8177, %v8205
        %8207 = vmatmul.bf16.gmra.mxu0 %v7437
        %v8208 = vpop.f32.mrf.mxu0
        %v8209 = vadd.f32 %v8180, %v8208
        %v8210 = vpop.f32.mrf.mxu0
        %v8211 = vadd.f32 %v8182, %v8210
        %8212 = vmatmul.bf16.gmra.mxu0 %v7438
        %v8213 = vpop.f32.mrf.mxu0
        %v8214 = vadd.f32 %v8185, %v8213
        %v8215 = vpop.f32.mrf.mxu0
        %v8216 = vadd.f32 %v8187, %v8215
        %8217 = vmatmul.bf16.gmra.mxu0 %v7439
        %v8218 = vpop.f32.mrf.mxu0
        %v8219 = vadd.f32 %v8190, %v8218
        %v8220 = vpop.f32.mrf.mxu0
        %v8221 = vadd.f32 %v8192, %v8220
        %8222 = vdwg.mxu0
        %8223 = vmatpush.bf16.msra.mxu0 %v8023
        %8224 = vmatpush.bf16.msra.mxu0 %v8022
        %8225 = vmatpush.bf16.msra.mxu0 %v8021
        %8226 = vmatpush.bf16.msra.mxu0 %v8020
        %8227 = vmatpush.bf16.msra.mxu0 %v8019
        %8228 = vmatpush.bf16.msra.mxu0 %v8018
        %8229 = vmatpush.bf16.msra.mxu0 %v8017
        %8230 = vmatpush.bf16.msra.mxu0 %v8016
        %8231 = vmatmul.bf16.gmra.mxu0 %v7460
        %v8232 = vpop.f32.mrf.mxu0
        %v8233 = vadd.f32 %v8204, %v8232
        %v8234 = vpop.f32.mrf.mxu0
        %v8235 = vadd.f32 %v8206, %v8234
        %8236 = vmatmul.bf16.gmra.mxu0 %v7461
        %v8237 = vpop.f32.mrf.mxu0
        %v8238 = vadd.f32 %v8209, %v8237
        %v8239 = vpop.f32.mrf.mxu0
        %v8240 = vadd.f32 %v8211, %v8239
        %8241 = vmatmul.bf16.gmra.mxu0 %v7462
        %v8242 = vpop.f32.mrf.mxu0
        %v8243 = vadd.f32 %v8214, %v8242
        %v8244 = vpop.f32.mrf.mxu0
        %v8245 = vadd.f32 %v8216, %v8244
        %8246 = vmatmul.bf16.gmra.mxu0 %v7463
        %v8247 = vpop.f32.mrf.mxu0
        %v8248 = vadd.f32 %v8219, %v8247
        %v8249 = vpop.f32.mrf.mxu0
        %v8250 = vadd.f32 %v8221, %v8249
        %8251 = vdwg.mxu0
        %8252 = vmatpush.bf16.msra.mxu0 %v8031
        %8253 = vmatpush.bf16.msra.mxu0 %v8030
        %8254 = vmatpush.bf16.msra.mxu0 %v8029
        %8255 = vmatpush.bf16.msra.mxu0 %v8028
        %8256 = vmatpush.bf16.msra.mxu0 %v8027
        %8257 = vmatpush.bf16.msra.mxu0 %v8026
        %8258 = vmatpush.bf16.msra.mxu0 %v8025
        %8259 = vmatpush.bf16.msra.mxu0 %v8024
        %8260 = vmatmul.bf16.gmra.mxu0 %v7476
        %v8261 = vpop.f32.mrf.mxu0
        %v8262 = vadd.f32 %v8233, %v8261
        %v8263 = vpop.f32.mrf.mxu0
        %v8264 = vadd.f32 %v8235, %v8263
        %8265 = vmatmul.bf16.gmra.mxu0 %v7477
        %v8266 = vpop.f32.mrf.mxu0
        %v8267 = vadd.f32 %v8238, %v8266
        %v8268 = vpop.f32.mrf.mxu0
        %v8269 = vadd.f32 %v8240, %v8268
        %8270 = vmatmul.bf16.gmra.mxu0 %v7478
        %v8271 = vpop.f32.mrf.mxu0
        %v8272 = vadd.f32 %v8243, %v8271
        %v8273 = vpop.f32.mrf.mxu0
        %v8274 = vadd.f32 %v8245, %v8273
        %8275 = vmatmul.bf16.gmra.mxu0 %v7479
        %v8276 = vpop.f32.mrf.mxu0
        %v8277 = vadd.f32 %v8248, %v8276
        %v8278 = vpop.f32.mrf.mxu0
        %v8279 = vadd.f32 %v8250, %v8278
        %8280 = vdwg.mxu0
        %8281 = vmatpush.bf16.msra.mxu0 %v8039
        %8282 = vmatpush.bf16.msra.mxu0 %v8038
        %8283 = vmatpush.bf16.msra.mxu0 %v8037
        %8284 = vmatpush.bf16.msra.mxu0 %v8036
        %8285 = vmatpush.bf16.msra.mxu0 %v8035
        %8286 = vmatpush.bf16.msra.mxu0 %v8034
        %8287 = vmatpush.bf16.msra.mxu0 %v8033
        %8288 = vmatpush.bf16.msra.mxu0 %v8032
        %8289 = vmatmul.bf16.gmra.mxu0 %v7492
        %v8290 = vpop.f32.mrf.mxu0
        %v8291 = vadd.f32 %v8262, %v8290
        %v8292 = vpop.f32.mrf.mxu0
        %v8293 = vadd.f32 %v8264, %v8292
        %8294 = vmatmul.bf16.gmra.mxu0 %v7493
        %v8295 = vpop.f32.mrf.mxu0
        %v8296 = vadd.f32 %v8267, %v8295
        %v8297 = vpop.f32.mrf.mxu0
        %v8298 = vadd.f32 %v8269, %v8297
        %8299 = vmatmul.bf16.gmra.mxu0 %v7494
        %v8300 = vpop.f32.mrf.mxu0
        %v8301 = vadd.f32 %v8272, %v8300
        %v8302 = vpop.f32.mrf.mxu0
        %v8303 = vadd.f32 %v8274, %v8302
        %8304 = vmatmul.bf16.gmra.mxu0 %v7495
        %v8305 = vpop.f32.mrf.mxu0
        %v8306 = vadd.f32 %v8277, %v8305
        %v8307 = vpop.f32.mrf.mxu0
        %v8308 = vadd.f32 %v8279, %v8307
        %8309 = vdwg.mxu0
        %8310 = vmatpush.bf16.msra.mxu0 %v8047
        %8311 = vmatpush.bf16.msra.mxu0 %v8046
        %8312 = vmatpush.bf16.msra.mxu0 %v8045
        %8313 = vmatpush.bf16.msra.mxu0 %v8044
        %8314 = vmatpush.bf16.msra.mxu0 %v8043
        %8315 = vmatpush.bf16.msra.mxu0 %v8042
        %8316 = vmatpush.bf16.msra.mxu0 %v8041
        %8317 = vmatpush.bf16.msra.mxu0 %v8040
        %8318 = vmatmul.bf16.gmra.mxu0 %v7516
        %v8319 = vpop.f32.mrf.mxu0
        %v8320 = vadd.f32 %v8291, %v8319
        %v8321 = vpop.f32.mrf.mxu0
        %v8322 = vadd.f32 %v8293, %v8321
        %8323 = vmatmul.bf16.gmra.mxu0 %v7517
        %v8324 = vpop.f32.mrf.mxu0
        %v8325 = vadd.f32 %v8296, %v8324
        %v8326 = vpop.f32.mrf.mxu0
        %v8327 = vadd.f32 %v8298, %v8326
        %8328 = vmatmul.bf16.gmra.mxu0 %v7518
        %v8329 = vpop.f32.mrf.mxu0
        %v8330 = vadd.f32 %v8301, %v8329
        %v8331 = vpop.f32.mrf.mxu0
        %v8332 = vadd.f32 %v8303, %v8331
        %8333 = vmatmul.bf16.gmra.mxu0 %v7519
        %v8334 = vpop.f32.mrf.mxu0
        %v8335 = vadd.f32 %v8306, %v8334
        %v8336 = vpop.f32.mrf.mxu0
        %v8337 = vadd.f32 %v8308, %v8336
        %8338 = vdwg.mxu0
        %8339 = vmatpush.bf16.msra.mxu0 %v8055
        %8340 = vmatpush.bf16.msra.mxu0 %v8054
        %8341 = vmatpush.bf16.msra.mxu0 %v8053
        %8342 = vmatpush.bf16.msra.mxu0 %v8052
        %8343 = vmatpush.bf16.msra.mxu0 %v8051
        %8344 = vmatpush.bf16.msra.mxu0 %v8050
        %8345 = vmatpush.bf16.msra.mxu0 %v8049
        %8346 = vmatpush.bf16.msra.mxu0 %v8048
        %8347 = vmatmul.bf16.gmra.mxu0 %v7532
        %v8348 = vpop.f32.mrf.mxu0
        %v8349 = vadd.f32 %v8320, %v8348
        %v8350 = vpop.f32.mrf.mxu0
        %v8351 = vadd.f32 %v8322, %v8350
        %8352 = vmatmul.bf16.gmra.mxu0 %v7533
        %v8353 = vpop.f32.mrf.mxu0
        %v8354 = vadd.f32 %v8325, %v8353
        %v8355 = vpop.f32.mrf.mxu0
        %v8356 = vadd.f32 %v8327, %v8355
        %8357 = vmatmul.bf16.gmra.mxu0 %v7534
        %v8358 = vpop.f32.mrf.mxu0
        %v8359 = vadd.f32 %v8330, %v8358
        %v8360 = vpop.f32.mrf.mxu0
        %v8361 = vadd.f32 %v8332, %v8360
        %8362 = vmatmul.bf16.gmra.mxu0 %v7535
        %v8363 = vpop.f32.mrf.mxu0
        %v8364 = vadd.f32 %v8335, %v8363
        %v8365 = vpop.f32.mrf.mxu0
        %v8366 = vadd.f32 %v8337, %v8365
        %8367 = vdwg.mxu0
        %8368 = vmatpush.bf16.msra.mxu0 %v8063
        %8369 = vmatpush.bf16.msra.mxu0 %v8062
        %8370 = vmatpush.bf16.msra.mxu0 %v8061
        %8371 = vmatpush.bf16.msra.mxu0 %v8060
        %8372 = vmatpush.bf16.msra.mxu0 %v8059
        %8373 = vmatpush.bf16.msra.mxu0 %v8058
        %8374 = vmatpush.bf16.msra.mxu0 %v8057
        %8375 = vmatpush.bf16.msra.mxu0 %v8056
        %8376 = vmatmul.bf16.gmra.mxu0 %v7548
        %v8377 = vpop.f32.mrf.mxu0
        %v8378 = vadd.f32 %v8349, %v8377
        %v8379 = vpop.f32.mrf.mxu0
        %v8380 = vadd.f32 %v8351, %v8379
        %8381 = vmatmul.bf16.gmra.mxu0 %v7549
        %v8382 = vpop.f32.mrf.mxu0
        %v8383 = vadd.f32 %v8354, %v8382
        %v8384 = vpop.f32.mrf.mxu0
        %v8385 = vadd.f32 %v8356, %v8384
        %8386 = vmatmul.bf16.gmra.mxu0 %v7550
        %v8387 = vpop.f32.mrf.mxu0
        %v8388 = vadd.f32 %v8359, %v8387
        %v8389 = vpop.f32.mrf.mxu0
        %v8390 = vadd.f32 %v8361, %v8389
        %8391 = vmatmul.bf16.gmra.mxu0 %v7551
        %v8392 = vpop.f32.mrf.mxu0
        %v8393 = vadd.f32 %v8364, %v8392
        %v8394 = vpop.f32.mrf.mxu0
        %v8395 = vadd.f32 %v8366, %v8394
        %8396 = vdwg.mxu0
        %v8397 = vmax.f32 %v8378, 0.0
        %v8398 = vmax.f32 %v8380, 0.0
        %v8399 = vmax.f32 %v8383, 0.0
        %v8400 = vmax.f32 %v8385, 0.0
        %v8401 = vmax.f32 %v8388, 0.0
        %v8402 = vmax.f32 %v8390, 0.0
        %v8403 = vmax.f32 %v8393, 0.0
        %v8404 = vmax.f32 %v8395, 0.0
        %v8405 = vpack.c.bf16 %v8398, %v8397
        %v8406 = vpack.c.bf16 %v8400, %v8399
        %v8407 = vpack.c.bf16 %v8402, %v8401
        %v8408 = vpack.c.bf16 %v8404, %v8403
        %v8409 = vld [vmem:[%s21] sm:$0xff]
        %v8410 = vld [vmem:[%s21 + $0x8] sm:$0xff]
        %v8411 = vld [vmem:[%s21 + $0x10] sm:$0xff]
        %v8412 = vld [vmem:[%s21 + $0x18] sm:$0xff]
        %v8413 = vld [vmem:[%s21 + $0x20] sm:$0xff]
        %v8414 = vld [vmem:[%s21 + $0x28] sm:$0xff]
        %v8415 = vld [vmem:[%s21 + $0x30] sm:$0xff]
        %v8416 = vld [vmem:[%s21 + $0x38] sm:$0xff]
        %v8417 = vld [vmem:[%s21 + $0x40] sm:$0xff]
        %v8418 = vld [vmem:[%s21 + $0x48] sm:$0xff]
        %v8419 = vld [vmem:[%s21 + $0x50] sm:$0xff]
        %v8420 = vld [vmem:[%s21 + $0x58] sm:$0xff]
        %v8421 = vld [vmem:[%s21 + $0x60] sm:$0xff]
        %v8422 = vld [vmem:[%s21 + $0x68] sm:$0xff]
        %v8423 = vld [vmem:[%s21 + $0x70] sm:$0xff]
        %v8424 = vld [vmem:[%s21 + $0x78] sm:$0xff]
        %v8425 = vld [vmem:[%s22] sm:$0x3]
        %v8427 = vperm.slane %v8425, 0
        %v8428 = vperm.slane %v8425, 1
        %v8447 = vunpack.c.l.b16 %v8409
        %v8448 = vunpack.c.h.b16 %v8409
        %v8449 = vunpack.c.l.b16 %v8410
        %v8450 = vunpack.c.h.b16 %v8410
        %v8451 = vunpack.c.l.b16 %v8411
        %v8452 = vunpack.c.h.b16 %v8411
        %v8453 = vunpack.c.l.b16 %v8412
        %v8454 = vunpack.c.h.b16 %v8412
        %v8455 = vunpack.c.l.b16 %v8413
        %v8456 = vunpack.c.h.b16 %v8413
        %v8457 = vunpack.c.l.b16 %v8414
        %v8458 = vunpack.c.h.b16 %v8414
        %v8459 = vunpack.c.l.b16 %v8415
        %v8460 = vunpack.c.h.b16 %v8415
        %v8461 = vunpack.c.l.b16 %v8416
        %v8462 = vunpack.c.h.b16 %v8416
        %v8463 = vunpack.c.l.b16 %v8417
        %v8464 = vunpack.c.h.b16 %v8417
        %v8465 = vunpack.c.l.b16 %v8418
        %v8466 = vunpack.c.h.b16 %v8418
        %v8467 = vunpack.c.l.b16 %v8419
        %v8468 = vunpack.c.h.b16 %v8419
        %v8469 = vunpack.c.l.b16 %v8420
        %v8470 = vunpack.c.h.b16 %v8420
        %v8471 = vunpack.c.l.b16 %v8421
        %v8472 = vunpack.c.h.b16 %v8421
        %v8473 = vunpack.c.l.b16 %v8422
        %v8474 = vunpack.c.h.b16 %v8422
        %v8475 = vunpack.c.l.b16 %v8423
        %v8476 = vunpack.c.h.b16 %v8423
        %v8477 = vunpack.c.l.b16 %v8424
        %v8478 = vunpack.c.h.b16 %v8424
        %v8479 = vpack.c.b16 %v8449, %v8447
        %v8480 = vpack.c.b16 %v8450, %v8448
        %v8481 = vpack.c.b16 %v8453, %v8451
        %v8482 = vpack.c.b16 %v8454, %v8452
        %v8483 = vpack.c.b16 %v8457, %v8455
        %v8484 = vpack.c.b16 %v8458, %v8456
        %v8485 = vpack.c.b16 %v8461, %v8459
        %v8486 = vpack.c.b16 %v8462, %v8460
        %v8487 = vpack.c.b16 %v8465, %v8463
        %v8488 = vpack.c.b16 %v8466, %v8464
        %v8489 = vpack.c.b16 %v8469, %v8467
        %v8490 = vpack.c.b16 %v8470, %v8468
        %v8491 = vpack.c.b16 %v8473, %v8471
        %v8492 = vpack.c.b16 %v8474, %v8472
        %v8493 = vpack.c.b16 %v8477, %v8475
        %v8494 = vpack.c.b16 %v8478, %v8476
        %8511 = vmatpush.bf16.msra.mxu0 %v8493
        %8512 = vmatpush.bf16.msra.mxu0 %v8491
        %8513 = vmatpush.bf16.msra.mxu0 %v8489
        %8514 = vmatpush.bf16.msra.mxu0 %v8487
        %8515 = vmatpush.bf16.msra.mxu0 %v8485
        %8516 = vmatpush.bf16.msra.mxu0 %v8483
        %8517 = vmatpush.bf16.msra.mxu0 %v8481
        %8518 = vmatpush.bf16.msra.mxu0 %v8479
        %8519 = vmatmul.bf16.gmra.mxu0 %v8405
        %v8520 = vpop.f32.mrf.mxu0
        %v8521 = vadd.f32 %v8427, %v8520
        %v8522 = vpop.f32.mrf.mxu0
        %v8523 = vadd.f32 %v8427, %v8522
        %8524 = vmatmul.bf16.gmra.mxu0 %v8406
        %v8525 = vpop.f32.mrf.mxu0
        %v8526 = vadd.f32 %v8427, %v8525
        %v8527 = vpop.f32.mrf.mxu0
        %v8528 = vadd.f32 %v8427, %v8527
        %8529 = vmatmul.bf16.gmra.mxu0 %v8407
        %v8530 = vpop.f32.mrf.mxu0
        %v8531 = vadd.f32 %v8427, %v8530
        %v8532 = vpop.f32.mrf.mxu0
        %v8533 = vadd.f32 %v8427, %v8532
        %8534 = vmatmul.bf16.gmra.mxu0 %v8408
        %v8535 = vpop.f32.mrf.mxu0
        %v8536 = vadd.f32 %v8427, %v8535
        %v8537 = vpop.f32.mrf.mxu0
        %v8538 = vadd.f32 %v8427, %v8537
        %8539 = vdwg.mxu0
        %8540 = vmatpush.bf16.msra.mxu0 %v8494
        %8541 = vmatpush.bf16.msra.mxu0 %v8492
        %8542 = vmatpush.bf16.msra.mxu0 %v8490
        %8543 = vmatpush.bf16.msra.mxu0 %v8488
        %8544 = vmatpush.bf16.msra.mxu0 %v8486
        %8545 = vmatpush.bf16.msra.mxu0 %v8484
        %8546 = vmatpush.bf16.msra.mxu0 %v8482
        %8547 = vmatpush.bf16.msra.mxu0 %v8480
        %8548 = vmatmul.bf16.gmra.mxu0 %v8405
        %v8549 = vpop.f32.mrf.mxu0
        %v8550 = vadd.f32 %v8428, %v8549
        %v8551 = vpop.f32.mrf.mxu0
        %v8552 = vadd.f32 %v8428, %v8551
        %8553 = vmatmul.bf16.gmra.mxu0 %v8406
        %v8554 = vpop.f32.mrf.mxu0
        %v8555 = vadd.f32 %v8428, %v8554
        %v8556 = vpop.f32.mrf.mxu0
        %v8557 = vadd.f32 %v8428, %v8556
        %8558 = vmatmul.bf16.gmra.mxu0 %v8407
        %v8559 = vpop.f32.mrf.mxu0
        %v8560 = vadd.f32 %v8428, %v8559
        %v8561 = vpop.f32.mrf.mxu0
        %v8562 = vadd.f32 %v8428, %v8561
        %8563 = vmatmul.bf16.gmra.mxu0 %v8408
        %v8564 = vpop.f32.mrf.mxu0
        %v8565 = vadd.f32 %v8428, %v8564
        %v8566 = vpop.f32.mrf.mxu0
        %v8567 = vadd.f32 %v8428, %v8566
        %8568 = vdwg.mxu0
        %v8569 = vunpack.c.l.bf16 %v6455
        %v8570 = vunpack.c.h.bf16 %v6455
        %v8571 = vunpack.c.l.bf16 %v6456
        %v8572 = vunpack.c.h.bf16 %v6456
        %v8573 = vunpack.c.l.bf16 %v6457
        %v8574 = vunpack.c.h.bf16 %v6457
        %v8575 = vunpack.c.l.bf16 %v6458
        %v8576 = vunpack.c.h.bf16 %v6458
        %v8577 = vunpack.c.l.bf16 %v6459
        %v8578 = vunpack.c.h.bf16 %v6459
        %v8579 = vunpack.c.l.bf16 %v6460
        %v8580 = vunpack.c.h.bf16 %v6460
        %v8581 = vunpack.c.l.bf16 %v6461
        %v8582 = vunpack.c.h.bf16 %v6461
        %v8583 = vunpack.c.l.bf16 %v6462
        %v8584 = vunpack.c.h.bf16 %v6462
        %v8585 = vadd.f32 %v8521, %v8569
        %v8586 = vadd.f32 %v8550, %v8570
        %v8587 = vadd.f32 %v8523, %v8571
        %v8588 = vadd.f32 %v8552, %v8572
        %v8589 = vadd.f32 %v8526, %v8573
        %v8590 = vadd.f32 %v8555, %v8574
        %v8591 = vadd.f32 %v8528, %v8575
        %v8592 = vadd.f32 %v8557, %v8576
        %v8593 = vadd.f32 %v8531, %v8577
        %v8594 = vadd.f32 %v8560, %v8578
        %v8595 = vadd.f32 %v8533, %v8579
        %v8596 = vadd.f32 %v8562, %v8580
        %v8597 = vadd.f32 %v8536, %v8581
        %v8598 = vadd.f32 %v8565, %v8582
        %v8599 = vadd.f32 %v8538, %v8583
        %v8600 = vadd.f32 %v8567, %v8584
        %v8601 = vmax.f32 %v8585, 0.0
        %v8602 = vmax.f32 %v8586, 0.0
        %v8603 = vmax.f32 %v8587, 0.0
        %v8604 = vmax.f32 %v8588, 0.0
        %v8605 = vmax.f32 %v8589, 0.0
        %v8606 = vmax.f32 %v8590, 0.0
        %v8607 = vmax.f32 %v8591, 0.0
        %v8608 = vmax.f32 %v8592, 0.0
        %v8609 = vmax.f32 %v8593, 0.0
        %v8610 = vmax.f32 %v8594, 0.0
        %v8611 = vmax.f32 %v8595, 0.0
        %v8612 = vmax.f32 %v8596, 0.0
        %v8613 = vmax.f32 %v8597, 0.0
        %v8614 = vmax.f32 %v8598, 0.0
        %v8615 = vmax.f32 %v8599, 0.0
        %v8616 = vmax.f32 %v8600, 0.0
        %8617 = vst [vmem:[%s703] sm:$0xff] %v8601
        %8618 = vst [vmem:[%s703 + $0x8] sm:$0xff] %v8602
        %8619 = vst [vmem:[%s703 + $0x10] sm:$0xff] %v8603
        %8620 = vst [vmem:[%s703 + $0x18] sm:$0xff] %v8604
        %8621 = vst [vmem:[%s703 + $0x20] sm:$0xff] %v8605
        %8622 = vst [vmem:[%s703 + $0x28] sm:$0xff] %v8606
        %8623 = vst [vmem:[%s703 + $0x30] sm:$0xff] %v8607
        %8624 = vst [vmem:[%s703 + $0x38] sm:$0xff] %v8608
        %8625 = vst [vmem:[%s703 + $0x40] sm:$0xff] %v8609
        %8626 = vst [vmem:[%s703 + $0x48] sm:$0xff] %v8610
        %8627 = vst [vmem:[%s703 + $0x50] sm:$0xff] %v8611
        %8628 = vst [vmem:[%s703 + $0x58] sm:$0xff] %v8612
        %8629 = vst [vmem:[%s703 + $0x60] sm:$0xff] %v8613
        %8630 = vst [vmem:[%s703 + $0x68] sm:$0xff] %v8614
        %8631 = vst [vmem:[%s703 + $0x70] sm:$0xff] %v8615
        %8632 = vst [vmem:[%s703 + $0x78] sm:$0xff] %v8616
        %s8633 = sand.u32 %s533, 1
        %s8634 = scalar_lea.sflag [#allocation4], %s8633
        %s8635 = sand.u32 %s533, 1
        %s8636 = smul.addr %s8635, 128
        %s8637 = scalar_lea.vmem [#allocation3], %s8636
        // Predicated region
        $region113: #{head_forward.1} parent=111 // pred_check
          %p8638 = pneg %p543
        $region114: #{head_forward.1} parent=111 // pred_check_branch
          %8640 = sbr.rel (%p8638) target = $region116
        $region115: #{head_forward.1} parent=111 // pred_region
          %8642 = vsyncadd %s8634, 0
          %s8643 = smul.addr %s37, 16
          %s8644 = smul.addr %s8643, 8
          %s8645 = scalar_lea.hbm %s23, %s8644
          %s8646 = sshll.u32 %s8637, 4
          %s8647 = int_to_ptr.vmem [resolvable:$true] %s8646
          %s8648 = sshll.u32 %s8645, 4
          %s8649 = int_to_ptr.hbm [resolvable:$true] %s8648
          %8654 = dma.vmem_to_hbm [thread:$0]  %s8647, 2048, %s8649, %s8634, 256, 256, 16
        $region116: #{head_forward.1} parent=111 // pred_fallthru
          _
      $region112: #{head_forward.1} parent=5 // pred_fallthru
        _
      %p8655 = scmp.le.s32.totalorder 2, %s32
      // Predicated region
      $region117: #{head_forward.1} parent=5 // pred_check
        %p8656 = pneg %p8655
      $region118: #{head_forward.1} parent=5 // pred_check_branch
        %8658 = sbr.rel (%p8656) target = $region120
      $region119: #{head_forward.1} parent=5 // pred_region
        %s8659 = ssub.s32 %s32, 2
        // Predicated region
        $region121: #{head_forward.1} parent=119 // pred_check
          %p8660 = pneg %p549
        $region122: #{head_forward.1} parent=119 // pred_check_branch
          %8662 = sbr.rel (%p8660) target = $region124
        $region123: #{head_forward.1} parent=119 // pred_region
          %s8663 = sand.u32 %s534, 1
          %s8664 = scalar_lea.sflag [#allocation4], %s8663
          %s8665 = sand.u32 %s534, 1
          %s8666 = smul.addr %s8665, 128
          %s8667 = scalar_lea.vmem [#allocation3], %s8666
          %8669 = dma.done %s8664, 2048
        $region124: #{head_forward.1} parent=119 // pred_fallthru
          _
      $region120: #{head_forward.1} parent=5 // pred_fallthru
        _
    $region6: #{head_forward.1} parent=1 // loop_footer
      %s36 = sadd.s32 1, %s32
    $region7: #{head_forward.1} parent=1 // loop_footer_branch
      %31 = sbr.rel target = $region3
    $region8: #{head_forward.1} parent=1 // loop_exit
      _
    %8670 = vsyncpa [#allocation4], 1
    %s8671 = scalar_lea.sflag [#allocation4], 1
    %8672 = vsyncpa %s8671, 1

</llo_original>
